<compile_context>
chip_gen: v5e
topology: v5e:2x2
jax: 0.10.0
libtpu: 0.0.40
codegen_flags: <defaults>
</compile_context>

<pallas_src>
import jax
import jax.numpy as jnp
from jax import lax
from jax.experimental import pallas as pl
from jax.experimental.pallas import tpu as pltpu


# ---------------------------------------------------------------------------
# Wrapper-side parameter fusing helpers (plain JAX, run once)
# ---------------------------------------------------------------------------
_GATE_ORDER = (0, 1, 3, 2)   # PyTorch [i, f, g, o] -> fused [i, f, o, g]


def _fuse_gate_major(a_f, a_b, feat):
    """Interleave per-gate blocks of the two directions along the last axis.

    a_f, a_b: (..., 4F) in PyTorch gate order [i, f, g, o].
    Returns (..., 8F) ordered [i_f,i_b, f_f,f_b, o_f,o_b, g_f,g_b]: the three
    sigmoid gates occupy the first 6F columns, tanh's g-gate the last 2F.
    """
    blocks = []
    for g in _GATE_ORDER:
        blocks.append(a_f[..., g * feat:(g + 1) * feat])
        blocks.append(a_b[..., g * feat:(g + 1) * feat])
    return jnp.concatenate(blocks, axis=-1)


def _blockdiag_whh(whh_f, whh_b, feat):
    """Fused recurrence weights (2F, 8F): rows 0:F act on h_fwd, F:2F on h_bwd."""
    z = jnp.zeros_like(whh_f)
    top = _fuse_gate_major(whh_f, z, feat)
    bot = _fuse_gate_major(z, whh_b, feat)
    return jnp.concatenate([top, bot], axis=0)


def _split_wih1(wih1_f, wih1_b, feat):
    """Layer-1 input-projection weights for the *combined* (raw) layer-0 output.

    The fused layer-0 loop stores raw0[t] = [h0_fwd(t) | h0_bwd(T-1-t)].
    The combined layer-1 gate input needed by the fused layer-1 loop is
        gx1_comb[t] = raw0[t] @ W_A + raw0[T-1-t] @ W_B (+ b1),
    i.e. forward gates of timestep t and backward gates of timestep T-1-t.
    """
    z = jnp.zeros((feat, wih1_f.shape[1]), wih1_f.dtype)
    w_a = jnp.concatenate([_fuse_gate_major(wih1_f[:feat], z, feat),
                           _fuse_gate_major(z, wih1_b[feat:], feat)], axis=0)
    w_b = jnp.concatenate([_fuse_gate_major(z, wih1_b[:feat], feat),
                           _fuse_gate_major(wih1_f[feat:], z, feat)], axis=0)
    return w_a, w_b


# ---------------------------------------------------------------------------
# Pallas kernel
# ---------------------------------------------------------------------------
def _ch_lstm_kernel(gx0_ref, whh0_ref, wa_ref, wb_ref, b1_ref, whh1_ref,
                    o_ref, raw0_scr, gx1_scr, raw1_scr):
    T, NT, G = gx0_ref.shape                  # G = 8F (gate-major, both dirs)
    F = G // 8
    F2, F4, F6 = 2 * F, 4 * F, 6 * F
    # Full unroll only for modest T (instruction memory / compile time).
    unroll = True if T <= 32 else 8

    def fused_bilstm(gx_ref, whh_bf16, raw_ref):
        """Both directions of one LSTM layer in a single serial loop.

        Step t consumes gx_ref[t] (fwd gates of timestep t, bwd gates of
        timestep T-1-t, pre-combined) and does ONE full-width store:
        raw_ref[t] = [h_fwd(t) | h_bwd(T-1-t)].
        """
        def body(t, carry):
            h_bf, c = carry                               # (NT,2F) bf16 / f32
            gates = gx_ref[t].astype(jnp.float32) + jnp.dot(
                h_bf, whh_bf16, preferred_element_type=jnp.float32)
            sg = jax.nn.sigmoid(gates[:, :F6])            # i, f, o gates only
            g_g = jnp.tanh(gates[:, F6:])                 # g gate
            c_new = sg[:, F2:F4] * c + sg[:, :F2] * g_g
            h_new = (sg[:, F4:F6] * jnp.tanh(c_new)).astype(jnp.bfloat16)
            raw_ref[t] = h_new                            # single store / step
            return h_new, c_new

        lax.fori_loop(0, T, body,
                      (jnp.zeros((NT, F2), jnp.bfloat16),
                       jnp.zeros((NT, F2), jnp.float32)),
                      unroll=unroll)

    # ---- layer 0 (gate inputs precomputed & combined in the wrapper) ------
    fused_bilstm(gx0_ref, whh0_ref[...], raw0_scr)

    # ---- layer-1 combined gate inputs: batched MXU matmuls, off the chain --
    raw0_all = raw0_scr[...].reshape(T * NT, F2)          # bf16
    ga = (jnp.dot(raw0_all, wa_ref[...], preferred_element_type=jnp.float32)
          + b1_ref[...]).reshape(T, NT, G)
    gb = jnp.dot(raw0_all, wb_ref[...],
                 preferred_element_type=jnp.float32).reshape(T, NT, G)
    # TODO(synk): for very large T switch these static realignment loops to
    # pl.loop + dynamic slices to bound code size (T is small here).
    for t in range(T):                                    # static, vectorized
        gx1_scr[t] = (ga[t] + gb[T - 1 - t]).astype(jnp.bfloat16)

    # ---- layer 1 -----------------------------------------------------------
    fused_bilstm(gx1_scr, whh1_ref[...], raw1_scr)

    # ---- epilogue: realign bidirectional halves, emit bf16 h1 --------------
    for t in range(T):                                    # off the serial chain
        o_ref[t, :, 0:F] = raw1_scr[t, :, 0:F]            # fwd half already ok
        o_ref[t, :, F:F2] = raw1_scr[T - 1 - t, :, F:F2]  # bwd half: flip in T


# ---------------------------------------------------------------------------
# Wrapper
# ---------------------------------------------------------------------------
def ch_lstm_forward(e5, params, feat_ch, out_ch, *, n_tile=None):
    """JAX/Pallas equivalent of ch_lstm.forward.  e5: (B, C, H, W)."""
    B, C, H, W = e5.shape
    N, T, F = B * H, W, feat_ch
    G, F2 = 8 * F, 2 * F
    p = params

    x = jnp.transpose(e5, (0, 2, 3, 1)).reshape(N * T, C).astype(jnp.float32)

    # Layer-0 input projection in XLA (K = C = 4 is too narrow for the MXU),
    # already combined for the fused loop: fwd gates of t, bwd gates of T-1-t.
    gxf = (jnp.dot(x, p["wih0f"], preferred_element_type=jnp.float32)
           + p["b0f"]).reshape(N, T, 4 * F)
    gxb = (jnp.dot(x, p["wih0b"], preferred_element_type=jnp.float32)
           + p["b0b"]).reshape(N, T, 4 * F)
    gx0 = _fuse_gate_major(gxf, jnp.flip(gxb, axis=1), F).astype(jnp.bfloat16)

    # Fused / bf16 kernel parameters.
    whh0 = _blockdiag_whh(p["whh0f"], p["whh0b"], F).astype(jnp.bfloat16)
    whh1 = _blockdiag_whh(p["whh1f"], p["whh1b"], F).astype(jnp.bfloat16)
    wa, wb = _split_wih1(p["wih1f"], p["wih1b"], F)
    wa, wb = wa.astype(jnp.bfloat16), wb.astype(jnp.bfloat16)
    b1 = _fuse_gate_major(p["b1f"], p["b1b"], F)                 # (1, 8F) f32

    # N-tiling: large tiles (the serial recurrence cost is per grid block, not
    # per row), multiple of 16 sublanes for bf16, and >=2 blocks when possible
    # so v7x's two TensorCores both get work on the parallel grid axis.
    if n_tile is None:
        n_tile = 256
    n_tile = max(16, (min(n_tile, N) + 15) // 16 * 16)
    n_blocks = -(-N // n_tile)
    if n_blocks == 1 and N > 16:
        n_tile = max(16, (-(-N // 2) + 15) // 16 * 16)
        n_blocks = -(-N // n_tile)
    n_pad = n_blocks * n_tile

    if n_pad != N:
        gx0 = jnp.pad(gx0, ((0, n_pad - N), (0, 0), (0, 0)))
    gx0 = jnp.transpose(gx0, (1, 0, 2))                  # time-major (T, n_pad, 8F)

    full = lambda a: pl.BlockSpec(a.shape, lambda n, _r=a.ndim: (0,) * _r)
    h1 = pl.pallas_call(
        _ch_lstm_kernel,
        out_shape=jax.ShapeDtypeStruct((T, n_pad, F2), jnp.bfloat16),
        grid=(n_blocks,),
        in_specs=[
            pl.BlockSpec((T, n_tile, G), lambda n: (0, n, 0)),      # gx0
            full(whh0), full(wa), full(wb), full(b1), full(whh1),
        ],
        out_specs=pl.BlockSpec((T, n_tile, F2), lambda n: (0, n, 0)),
        scratch_shapes=[
            pltpu.VMEM((T, n_tile, F2), jnp.bfloat16),   # raw0 (layer-0 h)
            pltpu.VMEM((T, n_tile, G), jnp.bfloat16),    # gx1  (layer-1 gates)
            pltpu.VMEM((T, n_tile, F2), jnp.bfloat16),   # raw1 (layer-1 h)
        ],
        compiler_params=pltpu.CompilerParams(
            dimension_semantics=("parallel",),
            vmem_limit_bytes=48 * 1024 * 1024),
    )(gx0, whh0, wa, wb, b1, whh1)

    # Output Linear head in XLA: out_ch = 4 would force a 32x-padded lane-sparse
    # HBM write if emitted by the kernel; h1 (2F wide, bf16) is 8x cheaper.
    h1 = h1[:, :N, :].reshape(T * N, F2)
    out = jnp.dot(h1, p["wlin"].astype(jnp.bfloat16),
                  preferred_element_type=jnp.float32) + p["blin"]
    out = out.reshape(T, B, H, out_ch)
    return jnp.transpose(out, (1, 3, 2, 0))              # (B, out_ch, H, W)


# ---------------------------------------------------------------------------
# Pure-JAX reference (independent per-direction implementation with the same
# numerics as the kernel: f32 state, bf16 matmul operands, bf16 storage of the
# gate pre-activations and hidden states.  Drop the bf16 casts to recover the
# exact PyTorch f32 semantics; the deviation is covered by the 5e-3 tolerance.)
# ---------------------------------------------------------------------------
def _lstm_dir_ref(gx, w_hh, feat, reverse):
    N, T, _ = gx.shape
    w_hh_bf = w_hh.astype(jnp.bfloat16)
    h = jnp.zeros((N, feat), jnp.float32)
    c = jnp.zeros((N, feat), jnp.float32)
    outs = [None] * T
    order = range(T - 1, -1, -1) if reverse else range(T)
    for t in order:
        gates = gx[:, t, :] + jnp.dot(h.astype(jnp.bfloat16), w_hh_bf,
                                      preferred_element_type=jnp.float32)
        i_g = jax.nn.sigmoid(gates[:, 0 * feat:1 * feat])
        f_g = jax.nn.sigmoid(gates[:, 1 * feat:2 * feat])
        g_g = jnp.tanh(gates[:, 2 * feat:3 * feat])
        o_g = jax.nn.sigmoid(gates[:, 3 * feat:4 * feat])
        c = f_g * c + i_g * g_g
        h = o_g * jnp.tanh(c)
        outs[t] = h
    return jnp.stack(outs, axis=1)


def ch_lstm_reference(e5, p, feat, out_ch):
    B, C, H, W = e5.shape
    N, T = B * H, W
    x = jnp.transpose(e5, (0, 2, 3, 1)).reshape(N, T, C).astype(jnp.float32)

    def proj(inp, w, b, bf16_operands):
        a = inp.reshape(-1, inp.shape[-1])
        wd = w
        if bf16_operands:
            a, wd = a.astype(jnp.bfloat16), w.astype(jnp.bfloat16)
        r = jnp.dot(a, wd, preferred_element_type=jnp.float32) + b
        # The kernel stores gate pre-activations in bf16 (HBM gx0 / VMEM gx1).
        return r.astype(jnp.bfloat16).astype(jnp.float32).reshape(N, T, -1)

    h0 = jnp.concatenate(
        [_lstm_dir_ref(proj(x, p["wih0f"], p["b0f"], False), p["whh0f"], feat, False),
         _lstm_dir_ref(proj(x, p["wih0b"], p["b0b"], False), p["whh0b"], feat, True)],
        axis=-1)
    h1 = jnp.concatenate(
        [_lstm_dir_ref(proj(h0, p["wih1f"], p["b1f"], True), p["whh1f"], feat, False),
         _lstm_dir_ref(proj(h0, p["wih1b"], p["b1b"], True), p["whh1b"], feat, True)],
        axis=-1)
    out = jnp.dot(h1.reshape(N * T, 2 * feat).astype(jnp.bfloat16),
                  p["wlin"].astype(jnp.bfloat16),
                  preferred_element_type=jnp.float32) + p["blin"]
    return jnp.transpose(out.reshape(B, H, W, out_ch), (0, 3, 1, 2))


# ---------------------------------------------------------------------------
# Deterministic parameter init (shapes follow nn.LSTM(in_ch, feat_ch,
# num_layers=2, bidirectional=True) + nn.Linear(2*feat_ch, out_ch)).
# Weights are stored transposed (so math is x @ W) and the two LSTM biases
# (b_ih + b_hh) are pre-summed.  Gate order along 4F is PyTorch's i, f, g, o.
# ---------------------------------------------------------------------------
def init_params(key, in_ch, feat_ch, out_ch):
    s = 1.0 / float(feat_ch) ** 0.5
    ks = iter(jax.random.split(key, 16))

    def u(shape):
        return jax.random.uniform(next(ks), shape, jnp.float32, -s, s)

    p = {}
    p["wih0f"], p["whh0f"], p["b0f"] = u((in_ch, 4 * feat_ch)), u((feat_ch, 4 * feat_ch)), u((1, 4 * feat_ch))
    p["wih0b"], p["whh0b"], p["b0b"] = u((in_ch, 4 * feat_ch)), u((feat_ch, 4 * feat_ch)), u((1, 4 * feat_ch))
    p["wih1f"], p["whh1f"], p["b1f"] = u((2 * feat_ch, 4 * feat_ch)), u((feat_ch, 4 * feat_ch)), u((1, 4 * feat_ch))
    p["wih1b"], p["whh1b"], p["b1b"] = u((2 * feat_ch, 4 * feat_ch)), u((feat_ch, 4 * feat_ch)), u((1, 4 * feat_ch))
    p["wlin"], p["blin"] = u((2 * feat_ch, out_ch)), u((1, out_ch))
    return p


# ---------------------------------------------------------------------------
if __name__ == "__main__":
    key = jax.random.PRNGKey(0)
    B, C, H, W = 2, 4, 16, 16          # e5: (batch, in_ch, H, W); seq len = W
    feat_ch, out_ch = 32, 4

    k_x, k_p = jax.random.split(key)
    e5 = jax.random.normal(k_x, (B, C, H, W), jnp.float32)
    params = init_params(k_p, C, feat_ch, out_ch)

    # n_tile=16 -> grid=(2,) exercises the parallel multi-block path even at
    # toy size (production default is 256 rows per block).
    y = ch_lstm_forward(e5, params, feat_ch, out_ch, n_tile=16)
    y = jax.block_until_ready(y)

    y_ref = ch_lstm_reference(e5, params, feat_ch, out_ch)
    assert y.shape == (B, out_ch, H, W), y.shape
    err = float(jnp.max(jnp.abs(y - y_ref)))
    assert err < 5e-3, err
    print("KERNEL_OK")
</pallas_src>

<mosaic_0001>
module attributes {stable_mosaic.version = 11 : i64} {
  func.func @_ch_lstm_kernel(%arg0: i32, %arg1: memref<16x16x256xbf16, #tpu.memory_space<vmem>>, %arg2: memref<64x256xbf16, #tpu.memory_space<vmem>>, %arg3: memref<64x256xbf16, #tpu.memory_space<vmem>>, %arg4: memref<64x256xbf16, #tpu.memory_space<vmem>>, %arg5: memref<1x256xf32, #tpu.memory_space<vmem>>, %arg6: memref<64x256xbf16, #tpu.memory_space<vmem>>, %arg7: memref<16x16x64xbf16, #tpu.memory_space<vmem>>, %arg8: memref<16x16x64xbf16, #tpu.memory_space<vmem>>, %arg9: memref<16x16x256xbf16, #tpu.memory_space<vmem>>, %arg10: memref<16x16x64xbf16, #tpu.memory_space<vmem>>) attributes {dimension_semantics = [#tpu.dimension_semantics<parallel>], iteration_bounds = array<i64: 2>, scalar_prefetch = 0 : i64, scratch_operands = 3 : i64, tpu.core_type = #tpu.core_type<tc>, window_params = [{transform_indices = @transform_0, window_bounds = array<i64: 16, 16, 256>}, {pipeline_mode = #tpu.pipeline_mode<synchronous>, transform_indices = @transform_1, window_bounds = array<i64: 64, 256>}, {pipeline_mode = #tpu.pipeline_mode<synchronous>, transform_indices = @transform_2, window_bounds = array<i64: 64, 256>}, {pipeline_mode = #tpu.pipeline_mode<synchronous>, transform_indices = @transform_3, window_bounds = array<i64: 64, 256>}, {pipeline_mode = #tpu.pipeline_mode<synchronous>, transform_indices = @transform_4, window_bounds = array<i64: 1, 256>}, {pipeline_mode = #tpu.pipeline_mode<synchronous>, transform_indices = @transform_5, window_bounds = array<i64: 64, 256>}, {transform_indices = @transform_6, window_bounds = array<i64: 16, 16, 64>}]} {
    %c0 = arith.constant 0 : index
    %c0_0 = arith.constant 0 : index
    %0 = vector.load %arg2[%c0, %c0_0] : memref<64x256xbf16, #tpu.memory_space<vmem>>, vector<64x256xbf16>
    %cst = arith.constant 0.000000e+00 : bf16
    %1 = vector.broadcast %cst : bf16 to vector<16x64xbf16>
    %cst_1 = arith.constant 0.000000e+00 : f32
    %2 = vector.broadcast %cst_1 : f32 to vector<16x64xf32>
    %c0_i32 = arith.constant 0 : i32
    %3 = arith.index_cast %c0_i32 : i32 to index
    %c0_2 = arith.constant 0 : index
    %c0_3 = arith.constant 0 : index
    %4 = vector.load %arg1[%3, %c0_2, %c0_3] : memref<16x16x256xbf16, #tpu.memory_space<vmem>>, vector<1x16x256xbf16>
    %5 = vector.shape_cast %4 : vector<1x16x256xbf16> to vector<16x256xbf16>
    %6 = arith.extf %5 : vector<16x256xbf16> to vector<16x256xf32>
    %cst_4 = arith.constant dense<0.000000e+00> : vector<16x256xf32>
    %7 = tpu.matmul %1, %0, %cst_4 {dimension_numbers = #tpu.dot_dimension_numbers<[1], [0], [0], [1], [0, 0, 1, 1], [], []>} : vector<16x64xbf16>, vector<64x256xbf16>, vector<16x256xf32> -> vector<16x256xf32>
    %8 = arith.addf %6, %7 : vector<16x256xf32>
    %9 = vector.extract_strided_slice %8 {offsets = [0, 0], sizes = [16, 192], strides = [1, 1]} : vector<16x256xf32> to vector<16x192xf32>
    %10 = arith.negf %9 : vector<16x192xf32>
    %11 = math.exp %10 : vector<16x192xf32>
    %cst_5 = arith.constant 1.000000e+00 : f32
    %12 = vector.broadcast %cst_5 : f32 to vector<16x192xf32>
    %13 = arith.addf %12, %11 : vector<16x192xf32>
    %14 = arith.divf %12, %13 : vector<16x192xf32>
    %15 = vector.extract_strided_slice %8 {offsets = [0, 192], sizes = [16, 64], strides = [1, 1]} : vector<16x256xf32> to vector<16x64xf32>
    %16 = math.tanh %15 : vector<16x64xf32>
    %17 = vector.extract_strided_slice %14 {offsets = [0, 64], sizes = [16, 64], strides = [1, 1]} : vector<16x192xf32> to vector<16x64xf32>
    %18 = arith.mulf %17, %2 : vector<16x64xf32>
    %19 = vector.extract_strided_slice %14 {offsets = [0, 0], sizes = [16, 64], strides = [1, 1]} : vector<16x192xf32> to vector<16x64xf32>
    %20 = arith.mulf %19, %16 : vector<16x64xf32>
    %21 = arith.addf %18, %20 : vector<16x64xf32>
    %22 = vector.extract_strided_slice %14 {offsets = [0, 128], sizes = [16, 64], strides = [1, 1]} : vector<16x192xf32> to vector<16x64xf32>
    %23 = math.tanh %21 : vector<16x64xf32>
    %24 = arith.mulf %22, %23 : vector<16x64xf32>
    %25 = arith.truncf %24 : vector<16x64xf32> to vector<16x64xbf16>
    %26 = arith.index_cast %c0_i32 : i32 to index
    %c0_6 = arith.constant 0 : index
    %c0_7 = arith.constant 0 : index
    %27 = vector.load %arg8[%26, %c0_6, %c0_7] : memref<16x16x64xbf16, #tpu.memory_space<vmem>>, vector<1x16x64xbf16>
    %28 = vector.shape_cast %27 : vector<1x16x64xbf16> to vector<16x64xbf16>
    %29 = vector.shape_cast %25 : vector<16x64xbf16> to vector<1x16x64xbf16>
    tpu.vector_store %arg8[%26, %c0_6, %c0_7], %29 {strides = array<i32>} : memref<16x16x64xbf16, #tpu.memory_space<vmem>>, vector<1x16x64xbf16>,
    %c1_i32 = arith.constant 1 : i32
    %30 = arith.index_cast %c1_i32 : i32 to index
    %c0_8 = arith.constant 0 : index
    %c0_9 = arith.constant 0 : index
    %31 = vector.load %arg1[%30, %c0_8, %c0_9] : memref<16x16x256xbf16, #tpu.memory_space<vmem>>, vector<1x16x256xbf16>
    %32 = vector.shape_cast %31 : vector<1x16x256xbf16> to vector<16x256xbf16>
    %33 = arith.extf %32 : vector<16x256xbf16> to vector<16x256xf32>
    %cst_10 = arith.constant dense<0.000000e+00> : vector<16x256xf32>
    %34 = tpu.matmul %25, %0, %cst_10 {dimension_numbers = #tpu.dot_dimension_numbers<[1], [0], [0], [1], [0, 0, 1, 1], [], []>} : vector<16x64xbf16>, vector<64x256xbf16>, vector<16x256xf32> -> vector<16x256xf32>
    %35 = arith.addf %33, %34 : vector<16x256xf32>
    %36 = vector.extract_strided_slice %35 {offsets = [0, 0], sizes = [16, 192], strides = [1, 1]} : vector<16x256xf32> to vector<16x192xf32>
    %37 = arith.negf %36 : vector<16x192xf32>
    %38 = math.exp %37 : vector<16x192xf32>
    %cst_11 = arith.constant 1.000000e+00 : f32
    %39 = vector.broadcast %cst_11 : f32 to vector<16x192xf32>
    %40 = arith.addf %39, %38 : vector<16x192xf32>
    %41 = arith.divf %39, %40 : vector<16x192xf32>
    %42 = vector.extract_strided_slice %35 {offsets = [0, 192], sizes = [16, 64], strides = [1, 1]} : vector<16x256xf32> to vector<16x64xf32>
    %43 = math.tanh %42 : vector<16x64xf32>
    %44 = vector.extract_strided_slice %41 {offsets = [0, 64], sizes = [16, 64], strides = [1, 1]} : vector<16x192xf32> to vector<16x64xf32>
    %45 = arith.mulf %44, %21 : vector<16x64xf32>
    %46 = vector.extract_strided_slice %41 {offsets = [0, 0], sizes = [16, 64], strides = [1, 1]} : vector<16x192xf32> to vector<16x64xf32>
    %47 = arith.mulf %46, %43 : vector<16x64xf32>
    %48 = arith.addf %45, %47 : vector<16x64xf32>
    %49 = vector.extract_strided_slice %41 {offsets = [0, 128], sizes = [16, 64], strides = [1, 1]} : vector<16x192xf32> to vector<16x64xf32>
    %50 = math.tanh %48 : vector<16x64xf32>
    %51 = arith.mulf %49, %50 : vector<16x64xf32>
    %52 = arith.truncf %51 : vector<16x64xf32> to vector<16x64xbf16>
    %53 = arith.index_cast %c1_i32 : i32 to index
    %c0_12 = arith.constant 0 : index
    %c0_13 = arith.constant 0 : index
    %54 = vector.load %arg8[%53, %c0_12, %c0_13] : memref<16x16x64xbf16, #tpu.memory_space<vmem>>, vector<1x16x64xbf16>
    %55 = vector.shape_cast %54 : vector<1x16x64xbf16> to vector<16x64xbf16>
    %56 = vector.shape_cast %52 : vector<16x64xbf16> to vector<1x16x64xbf16>
    tpu.vector_store %arg8[%53, %c0_12, %c0_13], %56 {strides = array<i32>} : memref<16x16x64xbf16, #tpu.memory_space<vmem>>, vector<1x16x64xbf16>,
    %c2_i32 = arith.constant 2 : i32
    %57 = arith.index_cast %c2_i32 : i32 to index
    %c0_14 = arith.constant 0 : index
    %c0_15 = arith.constant 0 : index
    %58 = vector.load %arg1[%57, %c0_14, %c0_15] : memref<16x16x256xbf16, #tpu.memory_space<vmem>>, vector<1x16x256xbf16>
    %59 = vector.shape_cast %58 : vector<1x16x256xbf16> to vector<16x256xbf16>
    %60 = arith.extf %59 : vector<16x256xbf16> to vector<16x256xf32>
    %cst_16 = arith.constant dense<0.000000e+00> : vector<16x256xf32>
    %61 = tpu.matmul %52, %0, %cst_16 {dimension_numbers = #tpu.dot_dimension_numbers<[1], [0], [0], [1], [0, 0, 1, 1], [], []>} : vector<16x64xbf16>, vector<64x256xbf16>, vector<16x256xf32> -> vector<16x256xf32>
    %62 = arith.addf %60, %61 : vector<16x256xf32>
    %63 = vector.extract_strided_slice %62 {offsets = [0, 0], sizes = [16, 192], strides = [1, 1]} : vector<16x256xf32> to vector<16x192xf32>
    %64 = arith.negf %63 : vector<16x192xf32>
    %65 = math.exp %64 : vector<16x192xf32>
    %cst_17 = arith.constant 1.000000e+00 : f32
    %66 = vector.broadcast %cst_17 : f32 to vector<16x192xf32>
    %67 = arith.addf %66, %65 : vector<16x192xf32>
    %68 = arith.divf %66, %67 : vector<16x192xf32>
    %69 = vector.extract_strided_slice %62 {offsets = [0, 192], sizes = [16, 64], strides = [1, 1]} : vector<16x256xf32> to vector<16x64xf32>
    %70 = math.tanh %69 : vector<16x64xf32>
    %71 = vector.extract_strided_slice %68 {offsets = [0, 64], sizes = [16, 64], strides = [1, 1]} : vector<16x192xf32> to vector<16x64xf32>
    %72 = arith.mulf %71, %48 : vector<16x64xf32>
    %73 = vector.extract_strided_slice %68 {offsets = [0, 0], sizes = [16, 64], strides = [1, 1]} : vector<16x192xf32> to vector<16x64xf32>
    %74 = arith.mulf %73, %70 : vector<16x64xf32>
    %75 = arith.addf %72, %74 : vector<16x64xf32>
    %76 = vector.extract_strided_slice %68 {offsets = [0, 128], sizes = [16, 64], strides = [1, 1]} : vector<16x192xf32> to vector<16x64xf32>
    %77 = math.tanh %75 : vector<16x64xf32>
    %78 = arith.mulf %76, %77 : vector<16x64xf32>
    %79 = arith.truncf %78 : vector<16x64xf32> to vector<16x64xbf16>
    %80 = arith.index_cast %c2_i32 : i32 to index
    %c0_18 = arith.constant 0 : index
    %c0_19 = arith.constant 0 : index
    %81 = vector.load %arg8[%80, %c0_18, %c0_19] : memref<16x16x64xbf16, #tpu.memory_space<vmem>>, vector<1x16x64xbf16>
    %82 = vector.shape_cast %81 : vector<1x16x64xbf16> to vector<16x64xbf16>
    %83 = vector.shape_cast %79 : vector<16x64xbf16> to vector<1x16x64xbf16>
    tpu.vector_store %arg8[%80, %c0_18, %c0_19], %83 {strides = array<i32>} : memref<16x16x64xbf16, #tpu.memory_space<vmem>>, vector<1x16x64xbf16>,
    %c3_i32 = arith.constant 3 : i32
    %84 = arith.index_cast %c3_i32 : i32 to index
    %c0_20 = arith.constant 0 : index
    %c0_21 = arith.constant 0 : index
    %85 = vector.load %arg1[%84, %c0_20, %c0_21] : memref<16x16x256xbf16, #tpu.memory_space<vmem>>, vector<1x16x256xbf16>
    %86 = vector.shape_cast %85 : vector<1x16x256xbf16> to vector<16x256xbf16>
    %87 = arith.extf %86 : vector<16x256xbf16> to vector<16x256xf32>
    %cst_22 = arith.constant dense<0.000000e+00> : vector<16x256xf32>
    %88 = tpu.matmul %79, %0, %cst_22 {dimension_numbers = #tpu.dot_dimension_numbers<[1], [0], [0], [1], [0, 0, 1, 1], [], []>} : vector<16x64xbf16>, vector<64x256xbf16>, vector<16x256xf32> -> vector<16x256xf32>
    %89 = arith.addf %87, %88 : vector<16x256xf32>
    %90 = vector.extract_strided_slice %89 {offsets = [0, 0], sizes = [16, 192], strides = [1, 1]} : vector<16x256xf32> to vector<16x192xf32>
    %91 = arith.negf %90 : vector<16x192xf32>
    %92 = math.exp %91 : vector<16x192xf32>
    %cst_23 = arith.constant 1.000000e+00 : f32
    %93 = vector.broadcast %cst_23 : f32 to vector<16x192xf32>
    %94 = arith.addf %93, %92 : vector<16x192xf32>
    %95 = arith.divf %93, %94 : vector<16x192xf32>
    %96 = vector.extract_strided_slice %89 {offsets = [0, 192], sizes = [16, 64], strides = [1, 1]} : vector<16x256xf32> to vector<16x64xf32>
    %97 = math.tanh %96 : vector<16x64xf32>
    %98 = vector.extract_strided_slice %95 {offsets = [0, 64], sizes = [16, 64], strides = [1, 1]} : vector<16x192xf32> to vector<16x64xf32>
    %99 = arith.mulf %98, %75 : vector<16x64xf32>
    %100 = vector.extract_strided_slice %95 {offsets = [0, 0], sizes = [16, 64], strides = [1, 1]} : vector<16x192xf32> to vector<16x64xf32>
    %101 = arith.mulf %100, %97 : vector<16x64xf32>
    %102 = arith.addf %99, %101 : vector<16x64xf32>
    %103 = vector.extract_strided_slice %95 {offsets = [0, 128], sizes = [16, 64], strides = [1, 1]} : vector<16x192xf32> to vector<16x64xf32>
    %104 = math.tanh %102 : vector<16x64xf32>
    %105 = arith.mulf %103, %104 : vector<16x64xf32>
    %106 = arith.truncf %105 : vector<16x64xf32> to vector<16x64xbf16>
    %107 = arith.index_cast %c3_i32 : i32 to index
    %c0_24 = arith.constant 0 : index
    %c0_25 = arith.constant 0 : index
    %108 = vector.load %arg8[%107, %c0_24, %c0_25] : memref<16x16x64xbf16, #tpu.memory_space<vmem>>, vector<1x16x64xbf16>
    %109 = vector.shape_cast %108 : vector<1x16x64xbf16> to vector<16x64xbf16>
    %110 = vector.shape_cast %106 : vector<16x64xbf16> to vector<1x16x64xbf16>
    tpu.vector_store %arg8[%107, %c0_24, %c0_25], %110 {strides = array<i32>} : memref<16x16x64xbf16, #tpu.memory_space<vmem>>, vector<1x16x64xbf16>,
    %c4_i32 = arith.constant 4 : i32
    %111 = arith.index_cast %c4_i32 : i32 to index
    %c0_26 = arith.constant 0 : index
    %c0_27 = arith.constant 0 : index
    %112 = vector.load %arg1[%111, %c0_26, %c0_27] : memref<16x16x256xbf16, #tpu.memory_space<vmem>>, vector<1x16x256xbf16>
    %113 = vector.shape_cast %112 : vector<1x16x256xbf16> to vector<16x256xbf16>
    %114 = arith.extf %113 : vector<16x256xbf16> to vector<16x256xf32>
    %cst_28 = arith.constant dense<0.000000e+00> : vector<16x256xf32>
    %115 = tpu.matmul %106, %0, %cst_28 {dimension_numbers = #tpu.dot_dimension_numbers<[1], [0], [0], [1], [0, 0, 1, 1], [], []>} : vector<16x64xbf16>, vector<64x256xbf16>, vector<16x256xf32> -> vector<16x256xf32>
    %116 = arith.addf %114, %115 : vector<16x256xf32>
    %117 = vector.extract_strided_slice %116 {offsets = [0, 0], sizes = [16, 192], strides = [1, 1]} : vector<16x256xf32> to vector<16x192xf32>
    %118 = arith.negf %117 : vector<16x192xf32>
    %119 = math.exp %118 : vector<16x192xf32>
    %cst_29 = arith.constant 1.000000e+00 : f32
    %120 = vector.broadcast %cst_29 : f32 to vector<16x192xf32>
    %121 = arith.addf %120, %119 : vector<16x192xf32>
    %122 = arith.divf %120, %121 : vector<16x192xf32>
    %123 = vector.extract_strided_slice %116 {offsets = [0, 192], sizes = [16, 64], strides = [1, 1]} : vector<16x256xf32> to vector<16x64xf32>
    %124 = math.tanh %123 : vector<16x64xf32>
    %125 = vector.extract_strided_slice %122 {offsets = [0, 64], sizes = [16, 64], strides = [1, 1]} : vector<16x192xf32> to vector<16x64xf32>
    %126 = arith.mulf %125, %102 : vector<16x64xf32>
    %127 = vector.extract_strided_slice %122 {offsets = [0, 0], sizes = [16, 64], strides = [1, 1]} : vector<16x192xf32> to vector<16x64xf32>
    %128 = arith.mulf %127, %124 : vector<16x64xf32>
    %129 = arith.addf %126, %128 : vector<16x64xf32>
    %130 = vector.extract_strided_slice %122 {offsets = [0, 128], sizes = [16, 64], strides = [1, 1]} : vector<16x192xf32> to vector<16x64xf32>
    %131 = math.tanh %129 : vector<16x64xf32>
    %132 = arith.mulf %130, %131 : vector<16x64xf32>
    %133 = arith.truncf %132 : vector<16x64xf32> to vector<16x64xbf16>
    %134 = arith.index_cast %c4_i32 : i32 to index
    %c0_30 = arith.constant 0 : index
    %c0_31 = arith.constant 0 : index
    %135 = vector.load %arg8[%134, %c0_30, %c0_31] : memref<16x16x64xbf16, #tpu.memory_space<vmem>>, vector<1x16x64xbf16>
    %136 = vector.shape_cast %135 : vector<1x16x64xbf16> to vector<16x64xbf16>
    %137 = vector.shape_cast %133 : vector<16x64xbf16> to vector<1x16x64xbf16>
    tpu.vector_store %arg8[%134, %c0_30, %c0_31], %137 {strides = array<i32>} : memref<16x16x64xbf16, #tpu.memory_space<vmem>>, vector<1x16x64xbf16>,
    %c5_i32 = arith.constant 5 : i32
    %138 = arith.index_cast %c5_i32 : i32 to index
    %c0_32 = arith.constant 0 : index
    %c0_33 = arith.constant 0 : index
    %139 = vector.load %arg1[%138, %c0_32, %c0_33] : memref<16x16x256xbf16, #tpu.memory_space<vmem>>, vector<1x16x256xbf16>
    %140 = vector.shape_cast %139 : vector<1x16x256xbf16> to vector<16x256xbf16>
    %141 = arith.extf %140 : vector<16x256xbf16> to vector<16x256xf32>
    %cst_34 = arith.constant dense<0.000000e+00> : vector<16x256xf32>
    %142 = tpu.matmul %133, %0, %cst_34 {dimension_numbers = #tpu.dot_dimension_numbers<[1], [0], [0], [1], [0, 0, 1, 1], [], []>} : vector<16x64xbf16>, vector<64x256xbf16>, vector<16x256xf32> -> vector<16x256xf32>
    %143 = arith.addf %141, %142 : vector<16x256xf32>
    %144 = vector.extract_strided_slice %143 {offsets = [0, 0], sizes = [16, 192], strides = [1, 1]} : vector<16x256xf32> to vector<16x192xf32>
    %145 = arith.negf %144 : vector<16x192xf32>
    %146 = math.exp %145 : vector<16x192xf32>
    %cst_35 = arith.constant 1.000000e+00 : f32
    %147 = vector.broadcast %cst_35 : f32 to vector<16x192xf32>
    %148 = arith.addf %147, %146 : vector<16x192xf32>
    %149 = arith.divf %147, %148 : vector<16x192xf32>
    %150 = vector.extract_strided_slice %143 {offsets = [0, 192], sizes = [16, 64], strides = [1, 1]} : vector<16x256xf32> to vector<16x64xf32>
    %151 = math.tanh %150 : vector<16x64xf32>
    %152 = vector.extract_strided_slice %149 {offsets = [0, 64], sizes = [16, 64], strides = [1, 1]} : vector<16x192xf32> to vector<16x64xf32>
    %153 = arith.mulf %152, %129 : vector<16x64xf32>
    %154 = vector.extract_strided_slice %149 {offsets = [0, 0], sizes = [16, 64], strides = [1, 1]} : vector<16x192xf32> to vector<16x64xf32>
    %155 = arith.mulf %154, %151 : vector<16x64xf32>
    %156 = arith.addf %153, %155 : vector<16x64xf32>
    %157 = vector.extract_strided_slice %149 {offsets = [0, 128], sizes = [16, 64], strides = [1, 1]} : vector<16x192xf32> to vector<16x64xf32>
    %158 = math.tanh %156 : vector<16x64xf32>
    %159 = arith.mulf %157, %158 : vector<16x64xf32>
    %160 = arith.truncf %159 : vector<16x64xf32> to vector<16x64xbf16>
    %161 = arith.index_cast %c5_i32 : i32 to index
    %c0_36 = arith.constant 0 : index
    %c0_37 = arith.constant 0 : index
    %162 = vector.load %arg8[%161, %c0_36, %c0_37] : memref<16x16x64xbf16, #tpu.memory_space<vmem>>, vector<1x16x64xbf16>
    %163 = vector.shape_cast %162 : vector<1x16x64xbf16> to vector<16x64xbf16>
    %164 = vector.shape_cast %160 : vector<16x64xbf16> to vector<1x16x64xbf16>
    tpu.vector_store %arg8[%161, %c0_36, %c0_37], %164 {strides = array<i32>} : memref<16x16x64xbf16, #tpu.memory_space<vmem>>, vector<1x16x64xbf16>,
    %c6_i32 = arith.constant 6 : i32
    %165 = arith.index_cast %c6_i32 : i32 to index
    %c0_38 = arith.constant 0 : index
    %c0_39 = arith.constant 0 : index
    %166 = vector.load %arg1[%165, %c0_38, %c0_39] : memref<16x16x256xbf16, #tpu.memory_space<vmem>>, vector<1x16x256xbf16>
    %167 = vector.shape_cast %166 : vector<1x16x256xbf16> to vector<16x256xbf16>
    %168 = arith.extf %167 : vector<16x256xbf16> to vector<16x256xf32>
    %cst_40 = arith.constant dense<0.000000e+00> : vector<16x256xf32>
    %169 = tpu.matmul %160, %0, %cst_40 {dimension_numbers = #tpu.dot_dimension_numbers<[1], [0], [0], [1], [0, 0, 1, 1], [], []>} : vector<16x64xbf16>, vector<64x256xbf16>, vector<16x256xf32> -> vector<16x256xf32>
    %170 = arith.addf %168, %169 : vector<16x256xf32>
    %171 = vector.extract_strided_slice %170 {offsets = [0, 0], sizes = [16, 192], strides = [1, 1]} : vector<16x256xf32> to vector<16x192xf32>
    %172 = arith.negf %171 : vector<16x192xf32>
    %173 = math.exp %172 : vector<16x192xf32>
    %cst_41 = arith.constant 1.000000e+00 : f32
    %174 = vector.broadcast %cst_41 : f32 to vector<16x192xf32>
    %175 = arith.addf %174, %173 : vector<16x192xf32>
    %176 = arith.divf %174, %175 : vector<16x192xf32>
    %177 = vector.extract_strided_slice %170 {offsets = [0, 192], sizes = [16, 64], strides = [1, 1]} : vector<16x256xf32> to vector<16x64xf32>
    %178 = math.tanh %177 : vector<16x64xf32>
    %179 = vector.extract_strided_slice %176 {offsets = [0, 64], sizes = [16, 64], strides = [1, 1]} : vector<16x192xf32> to vector<16x64xf32>
    %180 = arith.mulf %179, %156 : vector<16x64xf32>
    %181 = vector.extract_strided_slice %176 {offsets = [0, 0], sizes = [16, 64], strides = [1, 1]} : vector<16x192xf32> to vector<16x64xf32>
    %182 = arith.mulf %181, %178 : vector<16x64xf32>
    %183 = arith.addf %180, %182 : vector<16x64xf32>
    %184 = vector.extract_strided_slice %176 {offsets = [0, 128], sizes = [16, 64], strides = [1, 1]} : vector<16x192xf32> to vector<16x64xf32>
    %185 = math.tanh %183 : vector<16x64xf32>
    %186 = arith.mulf %184, %185 : vector<16x64xf32>
    %187 = arith.truncf %186 : vector<16x64xf32> to vector<16x64xbf16>
    %188 = arith.index_cast %c6_i32 : i32 to index
    %c0_42 = arith.constant 0 : index
    %c0_43 = arith.constant 0 : index
    %189 = vector.load %arg8[%188, %c0_42, %c0_43] : memref<16x16x64xbf16, #tpu.memory_space<vmem>>, vector<1x16x64xbf16>
    %190 = vector.shape_cast %189 : vector<1x16x64xbf16> to vector<16x64xbf16>
    %191 = vector.shape_cast %187 : vector<16x64xbf16> to vector<1x16x64xbf16>
    tpu.vector_store %arg8[%188, %c0_42, %c0_43], %191 {strides = array<i32>} : memref<16x16x64xbf16, #tpu.memory_space<vmem>>, vector<1x16x64xbf16>,
    %c7_i32 = arith.constant 7 : i32
    %192 = arith.index_cast %c7_i32 : i32 to index
    %c0_44 = arith.constant 0 : index
    %c0_45 = arith.constant 0 : index
    %193 = vector.load %arg1[%192, %c0_44, %c0_45] : memref<16x16x256xbf16, #tpu.memory_space<vmem>>, vector<1x16x256xbf16>
    %194 = vector.shape_cast %193 : vector<1x16x256xbf16> to vector<16x256xbf16>
    %195 = arith.extf %194 : vector<16x256xbf16> to vector<16x256xf32>
    %cst_46 = arith.constant dense<0.000000e+00> : vector<16x256xf32>
    %196 = tpu.matmul %187, %0, %cst_46 {dimension_numbers = #tpu.dot_dimension_numbers<[1], [0], [0], [1], [0, 0, 1, 1], [], []>} : vector<16x64xbf16>, vector<64x256xbf16>, vector<16x256xf32> -> vector<16x256xf32>
    %197 = arith.addf %195, %196 : vector<16x256xf32>
    %198 = vector.extract_strided_slice %197 {offsets = [0, 0], sizes = [16, 192], strides = [1, 1]} : vector<16x256xf32> to vector<16x192xf32>
    %199 = arith.negf %198 : vector<16x192xf32>
    %200 = math.exp %199 : vector<16x192xf32>
    %cst_47 = arith.constant 1.000000e+00 : f32
    %201 = vector.broadcast %cst_47 : f32 to vector<16x192xf32>
    %202 = arith.addf %201, %200 : vector<16x192xf32>
    %203 = arith.divf %201, %202 : vector<16x192xf32>
    %204 = vector.extract_strided_slice %197 {offsets = [0, 192], sizes = [16, 64], strides = [1, 1]} : vector<16x256xf32> to vector<16x64xf32>
    %205 = math.tanh %204 : vector<16x64xf32>
    %206 = vector.extract_strided_slice %203 {offsets = [0, 64], sizes = [16, 64], strides = [1, 1]} : vector<16x192xf32> to vector<16x64xf32>
    %207 = arith.mulf %206, %183 : vector<16x64xf32>
    %208 = vector.extract_strided_slice %203 {offsets = [0, 0], sizes = [16, 64], strides = [1, 1]} : vector<16x192xf32> to vector<16x64xf32>
    %209 = arith.mulf %208, %205 : vector<16x64xf32>
    %210 = arith.addf %207, %209 : vector<16x64xf32>
    %211 = vector.extract_strided_slice %203 {offsets = [0, 128], sizes = [16, 64], strides = [1, 1]} : vector<16x192xf32> to vector<16x64xf32>
    %212 = math.tanh %210 : vector<16x64xf32>
    %213 = arith.mulf %211, %212 : vector<16x64xf32>
    %214 = arith.truncf %213 : vector<16x64xf32> to vector<16x64xbf16>
    %215 = arith.index_cast %c7_i32 : i32 to index
    %c0_48 = arith.constant 0 : index
    %c0_49 = arith.constant 0 : index
    %216 = vector.load %arg8[%215, %c0_48, %c0_49] : memref<16x16x64xbf16, #tpu.memory_space<vmem>>, vector<1x16x64xbf16>
    %217 = vector.shape_cast %216 : vector<1x16x64xbf16> to vector<16x64xbf16>
    %218 = vector.shape_cast %214 : vector<16x64xbf16> to vector<1x16x64xbf16>
    tpu.vector_store %arg8[%215, %c0_48, %c0_49], %218 {strides = array<i32>} : memref<16x16x64xbf16, #tpu.memory_space<vmem>>, vector<1x16x64xbf16>,
    %c8_i32 = arith.constant 8 : i32
    %219 = arith.index_cast %c8_i32 : i32 to index
    %c0_50 = arith.constant 0 : index
    %c0_51 = arith.constant 0 : index
    %220 = vector.load %arg1[%219, %c0_50, %c0_51] : memref<16x16x256xbf16, #tpu.memory_space<vmem>>, vector<1x16x256xbf16>
    %221 = vector.shape_cast %220 : vector<1x16x256xbf16> to vector<16x256xbf16>
    %222 = arith.extf %221 : vector<16x256xbf16> to vector<16x256xf32>
    %cst_52 = arith.constant dense<0.000000e+00> : vector<16x256xf32>
    %223 = tpu.matmul %214, %0, %cst_52 {dimension_numbers = #tpu.dot_dimension_numbers<[1], [0], [0], [1], [0, 0, 1, 1], [], []>} : vector<16x64xbf16>, vector<64x256xbf16>, vector<16x256xf32> -> vector<16x256xf32>
    %224 = arith.addf %222, %223 : vector<16x256xf32>
    %225 = vector.extract_strided_slice %224 {offsets = [0, 0], sizes = [16, 192], strides = [1, 1]} : vector<16x256xf32> to vector<16x192xf32>
    %226 = arith.negf %225 : vector<16x192xf32>
    %227 = math.exp %226 : vector<16x192xf32>
    %cst_53 = arith.constant 1.000000e+00 : f32
    %228 = vector.broadcast %cst_53 : f32 to vector<16x192xf32>
    %229 = arith.addf %228, %227 : vector<16x192xf32>
    %230 = arith.divf %228, %229 : vector<16x192xf32>
    %231 = vector.extract_strided_slice %224 {offsets = [0, 192], sizes = [16, 64], strides = [1, 1]} : vector<16x256xf32> to vector<16x64xf32>
    %232 = math.tanh %231 : vector<16x64xf32>
    %233 = vector.extract_strided_slice %230 {offsets = [0, 64], sizes = [16, 64], strides = [1, 1]} : vector<16x192xf32> to vector<16x64xf32>
    %234 = arith.mulf %233, %210 : vector<16x64xf32>
    %235 = vector.extract_strided_slice %230 {offsets = [0, 0], sizes = [16, 64], strides = [1, 1]} : vector<16x192xf32> to vector<16x64xf32>
    %236 = arith.mulf %235, %232 : vector<16x64xf32>
    %237 = arith.addf %234, %236 : vector<16x64xf32>
    %238 = vector.extract_strided_slice %230 {offsets = [0, 128], sizes = [16, 64], strides = [1, 1]} : vector<16x192xf32> to vector<16x64xf32>
    %239 = math.tanh %237 : vector<16x64xf32>
    %240 = arith.mulf %238, %239 : vector<16x64xf32>
    %241 = arith.truncf %240 : vector<16x64xf32> to vector<16x64xbf16>
    %242 = arith.index_cast %c8_i32 : i32 to index
    %c0_54 = arith.constant 0 : index
    %c0_55 = arith.constant 0 : index
    %243 = vector.load %arg8[%242, %c0_54, %c0_55] : memref<16x16x64xbf16, #tpu.memory_space<vmem>>, vector<1x16x64xbf16>
    %244 = vector.shape_cast %243 : vector<1x16x64xbf16> to vector<16x64xbf16>
    %245 = vector.shape_cast %241 : vector<16x64xbf16> to vector<1x16x64xbf16>
    tpu.vector_store %arg8[%242, %c0_54, %c0_55], %245 {strides = array<i32>} : memref<16x16x64xbf16, #tpu.memory_space<vmem>>, vector<1x16x64xbf16>,
    %c9_i32 = arith.constant 9 : i32
    %246 = arith.index_cast %c9_i32 : i32 to index
    %c0_56 = arith.constant 0 : index
    %c0_57 = arith.constant 0 : index
    %247 = vector.load %arg1[%246, %c0_56, %c0_57] : memref<16x16x256xbf16, #tpu.memory_space<vmem>>, vector<1x16x256xbf16>
    %248 = vector.shape_cast %247 : vector<1x16x256xbf16> to vector<16x256xbf16>
    %249 = arith.extf %248 : vector<16x256xbf16> to vector<16x256xf32>
    %cst_58 = arith.constant dense<0.000000e+00> : vector<16x256xf32>
    %250 = tpu.matmul %241, %0, %cst_58 {dimension_numbers = #tpu.dot_dimension_numbers<[1], [0], [0], [1], [0, 0, 1, 1], [], []>} : vector<16x64xbf16>, vector<64x256xbf16>, vector<16x256xf32> -> vector<16x256xf32>
    %251 = arith.addf %249, %250 : vector<16x256xf32>
    %252 = vector.extract_strided_slice %251 {offsets = [0, 0], sizes = [16, 192], strides = [1, 1]} : vector<16x256xf32> to vector<16x192xf32>
    %253 = arith.negf %252 : vector<16x192xf32>
    %254 = math.exp %253 : vector<16x192xf32>
    %cst_59 = arith.constant 1.000000e+00 : f32
    %255 = vector.broadcast %cst_59 : f32 to vector<16x192xf32>
    %256 = arith.addf %255, %254 : vector<16x192xf32>
    %257 = arith.divf %255, %256 : vector<16x192xf32>
    %258 = vector.extract_strided_slice %251 {offsets = [0, 192], sizes = [16, 64], strides = [1, 1]} : vector<16x256xf32> to vector<16x64xf32>
    %259 = math.tanh %258 : vector<16x64xf32>
    %260 = vector.extract_strided_slice %257 {offsets = [0, 64], sizes = [16, 64], strides = [1, 1]} : vector<16x192xf32> to vector<16x64xf32>
    %261 = arith.mulf %260, %237 : vector<16x64xf32>
    %262 = vector.extract_strided_slice %257 {offsets = [0, 0], sizes = [16, 64], strides = [1, 1]} : vector<16x192xf32> to vector<16x64xf32>
    %263 = arith.mulf %262, %259 : vector<16x64xf32>
    %264 = arith.addf %261, %263 : vector<16x64xf32>
    %265 = vector.extract_strided_slice %257 {offsets = [0, 128], sizes = [16, 64], strides = [1, 1]} : vector<16x192xf32> to vector<16x64xf32>
    %266 = math.tanh %264 : vector<16x64xf32>
    %267 = arith.mulf %265, %266 : vector<16x64xf32>
    %268 = arith.truncf %267 : vector<16x64xf32> to vector<16x64xbf16>
    %269 = arith.index_cast %c9_i32 : i32 to index
    %c0_60 = arith.constant 0 : index
    %c0_61 = arith.constant 0 : index
    %270 = vector.load %arg8[%269, %c0_60, %c0_61] : memref<16x16x64xbf16, #tpu.memory_space<vmem>>, vector<1x16x64xbf16>
    %271 = vector.shape_cast %270 : vector<1x16x64xbf16> to vector<16x64xbf16>
    %272 = vector.shape_cast %268 : vector<16x64xbf16> to vector<1x16x64xbf16>
    tpu.vector_store %arg8[%269, %c0_60, %c0_61], %272 {strides = array<i32>} : memref<16x16x64xbf16, #tpu.memory_space<vmem>>, vector<1x16x64xbf16>,
    %c10_i32 = arith.constant 10 : i32
    %273 = arith.index_cast %c10_i32 : i32 to index
    %c0_62 = arith.constant 0 : index
    %c0_63 = arith.constant 0 : index
    %274 = vector.load %arg1[%273, %c0_62, %c0_63] : memref<16x16x256xbf16, #tpu.memory_space<vmem>>, vector<1x16x256xbf16>
    %275 = vector.shape_cast %274 : vector<1x16x256xbf16> to vector<16x256xbf16>
    %276 = arith.extf %275 : vector<16x256xbf16> to vector<16x256xf32>
    %cst_64 = arith.constant dense<0.000000e+00> : vector<16x256xf32>
    %277 = tpu.matmul %268, %0, %cst_64 {dimension_numbers = #tpu.dot_dimension_numbers<[1], [0], [0], [1], [0, 0, 1, 1], [], []>} : vector<16x64xbf16>, vector<64x256xbf16>, vector<16x256xf32> -> vector<16x256xf32>
    %278 = arith.addf %276, %277 : vector<16x256xf32>
    %279 = vector.extract_strided_slice %278 {offsets = [0, 0], sizes = [16, 192], strides = [1, 1]} : vector<16x256xf32> to vector<16x192xf32>
    %280 = arith.negf %279 : vector<16x192xf32>
    %281 = math.exp %280 : vector<16x192xf32>
    %cst_65 = arith.constant 1.000000e+00 : f32
    %282 = vector.broadcast %cst_65 : f32 to vector<16x192xf32>
    %283 = arith.addf %282, %281 : vector<16x192xf32>
    %284 = arith.divf %282, %283 : vector<16x192xf32>
    %285 = vector.extract_strided_slice %278 {offsets = [0, 192], sizes = [16, 64], strides = [1, 1]} : vector<16x256xf32> to vector<16x64xf32>
    %286 = math.tanh %285 : vector<16x64xf32>
    %287 = vector.extract_strided_slice %284 {offsets = [0, 64], sizes = [16, 64], strides = [1, 1]} : vector<16x192xf32> to vector<16x64xf32>
    %288 = arith.mulf %287, %264 : vector<16x64xf32>
    %289 = vector.extract_strided_slice %284 {offsets = [0, 0], sizes = [16, 64], strides = [1, 1]} : vector<16x192xf32> to vector<16x64xf32>
    %290 = arith.mulf %289, %286 : vector<16x64xf32>
    %291 = arith.addf %288, %290 : vector<16x64xf32>
    %292 = vector.extract_strided_slice %284 {offsets = [0, 128], sizes = [16, 64], strides = [1, 1]} : vector<16x192xf32> to vector<16x64xf32>
    %293 = math.tanh %291 : vector<16x64xf32>
    %294 = arith.mulf %292, %293 : vector<16x64xf32>
    %295 = arith.truncf %294 : vector<16x64xf32> to vector<16x64xbf16>
    %296 = arith.index_cast %c10_i32 : i32 to index
    %c0_66 = arith.constant 0 : index
    %c0_67 = arith.constant 0 : index
    %297 = vector.load %arg8[%296, %c0_66, %c0_67] : memref<16x16x64xbf16, #tpu.memory_space<vmem>>, vector<1x16x64xbf16>
    %298 = vector.shape_cast %297 : vector<1x16x64xbf16> to vector<16x64xbf16>
    %299 = vector.shape_cast %295 : vector<16x64xbf16> to vector<1x16x64xbf16>
    tpu.vector_store %arg8[%296, %c0_66, %c0_67], %299 {strides = array<i32>} : memref<16x16x64xbf16, #tpu.memory_space<vmem>>, vector<1x16x64xbf16>,
    %c11_i32 = arith.constant 11 : i32
    %300 = arith.index_cast %c11_i32 : i32 to index
    %c0_68 = arith.constant 0 : index
    %c0_69 = arith.constant 0 : index
    %301 = vector.load %arg1[%300, %c0_68, %c0_69] : memref<16x16x256xbf16, #tpu.memory_space<vmem>>, vector<1x16x256xbf16>
    %302 = vector.shape_cast %301 : vector<1x16x256xbf16> to vector<16x256xbf16>
    %303 = arith.extf %302 : vector<16x256xbf16> to vector<16x256xf32>
    %cst_70 = arith.constant dense<0.000000e+00> : vector<16x256xf32>
    %304 = tpu.matmul %295, %0, %cst_70 {dimension_numbers = #tpu.dot_dimension_numbers<[1], [0], [0], [1], [0, 0, 1, 1], [], []>} : vector<16x64xbf16>, vector<64x256xbf16>, vector<16x256xf32> -> vector<16x256xf32>
    %305 = arith.addf %303, %304 : vector<16x256xf32>
    %306 = vector.extract_strided_slice %305 {offsets = [0, 0], sizes = [16, 192], strides = [1, 1]} : vector<16x256xf32> to vector<16x192xf32>
    %307 = arith.negf %306 : vector<16x192xf32>
    %308 = math.exp %307 : vector<16x192xf32>
    %cst_71 = arith.constant 1.000000e+00 : f32
    %309 = vector.broadcast %cst_71 : f32 to vector<16x192xf32>
    %310 = arith.addf %309, %308 : vector<16x192xf32>
    %311 = arith.divf %309, %310 : vector<16x192xf32>
    %312 = vector.extract_strided_slice %305 {offsets = [0, 192], sizes = [16, 64], strides = [1, 1]} : vector<16x256xf32> to vector<16x64xf32>
    %313 = math.tanh %312 : vector<16x64xf32>
    %314 = vector.extract_strided_slice %311 {offsets = [0, 64], sizes = [16, 64], strides = [1, 1]} : vector<16x192xf32> to vector<16x64xf32>
    %315 = arith.mulf %314, %291 : vector<16x64xf32>
    %316 = vector.extract_strided_slice %311 {offsets = [0, 0], sizes = [16, 64], strides = [1, 1]} : vector<16x192xf32> to vector<16x64xf32>
    %317 = arith.mulf %316, %313 : vector<16x64xf32>
    %318 = arith.addf %315, %317 : vector<16x64xf32>
    %319 = vector.extract_strided_slice %311 {offsets = [0, 128], sizes = [16, 64], strides = [1, 1]} : vector<16x192xf32> to vector<16x64xf32>
    %320 = math.tanh %318 : vector<16x64xf32>
    %321 = arith.mulf %319, %320 : vector<16x64xf32>
    %322 = arith.truncf %321 : vector<16x64xf32> to vector<16x64xbf16>
    %323 = arith.index_cast %c11_i32 : i32 to index
    %c0_72 = arith.constant 0 : index
    %c0_73 = arith.constant 0 : index
    %324 = vector.load %arg8[%323, %c0_72, %c0_73] : memref<16x16x64xbf16, #tpu.memory_space<vmem>>, vector<1x16x64xbf16>
    %325 = vector.shape_cast %324 : vector<1x16x64xbf16> to vector<16x64xbf16>
    %326 = vector.shape_cast %322 : vector<16x64xbf16> to vector<1x16x64xbf16>
    tpu.vector_store %arg8[%323, %c0_72, %c0_73], %326 {strides = array<i32>} : memref<16x16x64xbf16, #tpu.memory_space<vmem>>, vector<1x16x64xbf16>,
    %c12_i32 = arith.constant 12 : i32
    %327 = arith.index_cast %c12_i32 : i32 to index
    %c0_74 = arith.constant 0 : index
    %c0_75 = arith.constant 0 : index
    %328 = vector.load %arg1[%327, %c0_74, %c0_75] : memref<16x16x256xbf16, #tpu.memory_space<vmem>>, vector<1x16x256xbf16>
    %329 = vector.shape_cast %328 : vector<1x16x256xbf16> to vector<16x256xbf16>
    %330 = arith.extf %329 : vector<16x256xbf16> to vector<16x256xf32>
    %cst_76 = arith.constant dense<0.000000e+00> : vector<16x256xf32>
    %331 = tpu.matmul %322, %0, %cst_76 {dimension_numbers = #tpu.dot_dimension_numbers<[1], [0], [0], [1], [0, 0, 1, 1], [], []>} : vector<16x64xbf16>, vector<64x256xbf16>, vector<16x256xf32> -> vector<16x256xf32>
    %332 = arith.addf %330, %331 : vector<16x256xf32>
    %333 = vector.extract_strided_slice %332 {offsets = [0, 0], sizes = [16, 192], strides = [1, 1]} : vector<16x256xf32> to vector<16x192xf32>
    %334 = arith.negf %333 : vector<16x192xf32>
    %335 = math.exp %334 : vector<16x192xf32>
    %cst_77 = arith.constant 1.000000e+00 : f32
    %336 = vector.broadcast %cst_77 : f32 to vector<16x192xf32>
    %337 = arith.addf %336, %335 : vector<16x192xf32>
    %338 = arith.divf %336, %337 : vector<16x192xf32>
    %339 = vector.extract_strided_slice %332 {offsets = [0, 192], sizes = [16, 64], strides = [1, 1]} : vector<16x256xf32> to vector<16x64xf32>
    %340 = math.tanh %339 : vector<16x64xf32>
    %341 = vector.extract_strided_slice %338 {offsets = [0, 64], sizes = [16, 64], strides = [1, 1]} : vector<16x192xf32> to vector<16x64xf32>
    %342 = arith.mulf %341, %318 : vector<16x64xf32>
    %343 = vector.extract_strided_slice %338 {offsets = [0, 0], sizes = [16, 64], strides = [1, 1]} : vector<16x192xf32> to vector<16x64xf32>
    %344 = arith.mulf %343, %340 : vector<16x64xf32>
    %345 = arith.addf %342, %344 : vector<16x64xf32>
    %346 = vector.extract_strided_slice %338 {offsets = [0, 128], sizes = [16, 64], strides = [1, 1]} : vector<16x192xf32> to vector<16x64xf32>
    %347 = math.tanh %345 : vector<16x64xf32>
    %348 = arith.mulf %346, %347 : vector<16x64xf32>
    %349 = arith.truncf %348 : vector<16x64xf32> to vector<16x64xbf16>
    %350 = arith.index_cast %c12_i32 : i32 to index
    %c0_78 = arith.constant 0 : index
    %c0_79 = arith.constant 0 : index
    %351 = vector.load %arg8[%350, %c0_78, %c0_79] : memref<16x16x64xbf16, #tpu.memory_space<vmem>>, vector<1x16x64xbf16>
    %352 = vector.shape_cast %351 : vector<1x16x64xbf16> to vector<16x64xbf16>
    %353 = vector.shape_cast %349 : vector<16x64xbf16> to vector<1x16x64xbf16>
    tpu.vector_store %arg8[%350, %c0_78, %c0_79], %353 {strides = array<i32>} : memref<16x16x64xbf16, #tpu.memory_space<vmem>>, vector<1x16x64xbf16>,
    %c13_i32 = arith.constant 13 : i32
    %354 = arith.index_cast %c13_i32 : i32 to index
    %c0_80 = arith.constant 0 : index
    %c0_81 = arith.constant 0 : index
    %355 = vector.load %arg1[%354, %c0_80, %c0_81] : memref<16x16x256xbf16, #tpu.memory_space<vmem>>, vector<1x16x256xbf16>
    %356 = vector.shape_cast %355 : vector<1x16x256xbf16> to vector<16x256xbf16>
    %357 = arith.extf %356 : vector<16x256xbf16> to vector<16x256xf32>
    %cst_82 = arith.constant dense<0.000000e+00> : vector<16x256xf32>
    %358 = tpu.matmul %349, %0, %cst_82 {dimension_numbers = #tpu.dot_dimension_numbers<[1], [0], [0], [1], [0, 0, 1, 1], [], []>} : vector<16x64xbf16>, vector<64x256xbf16>, vector<16x256xf32> -> vector<16x256xf32>
    %359 = arith.addf %357, %358 : vector<16x256xf32>
    %360 = vector.extract_strided_slice %359 {offsets = [0, 0], sizes = [16, 192], strides = [1, 1]} : vector<16x256xf32> to vector<16x192xf32>
    %361 = arith.negf %360 : vector<16x192xf32>
    %362 = math.exp %361 : vector<16x192xf32>
    %cst_83 = arith.constant 1.000000e+00 : f32
    %363 = vector.broadcast %cst_83 : f32 to vector<16x192xf32>
    %364 = arith.addf %363, %362 : vector<16x192xf32>
    %365 = arith.divf %363, %364 : vector<16x192xf32>
    %366 = vector.extract_strided_slice %359 {offsets = [0, 192], sizes = [16, 64], strides = [1, 1]} : vector<16x256xf32> to vector<16x64xf32>
    %367 = math.tanh %366 : vector<16x64xf32>
    %368 = vector.extract_strided_slice %365 {offsets = [0, 64], sizes = [16, 64], strides = [1, 1]} : vector<16x192xf32> to vector<16x64xf32>
    %369 = arith.mulf %368, %345 : vector<16x64xf32>
    %370 = vector.extract_strided_slice %365 {offsets = [0, 0], sizes = [16, 64], strides = [1, 1]} : vector<16x192xf32> to vector<16x64xf32>
    %371 = arith.mulf %370, %367 : vector<16x64xf32>
    %372 = arith.addf %369, %371 : vector<16x64xf32>
    %373 = vector.extract_strided_slice %365 {offsets = [0, 128], sizes = [16, 64], strides = [1, 1]} : vector<16x192xf32> to vector<16x64xf32>
    %374 = math.tanh %372 : vector<16x64xf32>
    %375 = arith.mulf %373, %374 : vector<16x64xf32>
    %376 = arith.truncf %375 : vector<16x64xf32> to vector<16x64xbf16>
    %377 = arith.index_cast %c13_i32 : i32 to index
    %c0_84 = arith.constant 0 : index
    %c0_85 = arith.constant 0 : index
    %378 = vector.load %arg8[%377, %c0_84, %c0_85] : memref<16x16x64xbf16, #tpu.memory_space<vmem>>, vector<1x16x64xbf16>
    %379 = vector.shape_cast %378 : vector<1x16x64xbf16> to vector<16x64xbf16>
    %380 = vector.shape_cast %376 : vector<16x64xbf16> to vector<1x16x64xbf16>
    tpu.vector_store %arg8[%377, %c0_84, %c0_85], %380 {strides = array<i32>} : memref<16x16x64xbf16, #tpu.memory_space<vmem>>, vector<1x16x64xbf16>,
    %c14_i32 = arith.constant 14 : i32
    %381 = arith.index_cast %c14_i32 : i32 to index
    %c0_86 = arith.constant 0 : index
    %c0_87 = arith.constant 0 : index
    %382 = vector.load %arg1[%381, %c0_86, %c0_87] : memref<16x16x256xbf16, #tpu.memory_space<vmem>>, vector<1x16x256xbf16>
    %383 = vector.shape_cast %382 : vector<1x16x256xbf16> to vector<16x256xbf16>
    %384 = arith.extf %383 : vector<16x256xbf16> to vector<16x256xf32>
    %cst_88 = arith.constant dense<0.000000e+00> : vector<16x256xf32>
    %385 = tpu.matmul %376, %0, %cst_88 {dimension_numbers = #tpu.dot_dimension_numbers<[1], [0], [0], [1], [0, 0, 1, 1], [], []>} : vector<16x64xbf16>, vector<64x256xbf16>, vector<16x256xf32> -> vector<16x256xf32>
    %386 = arith.addf %384, %385 : vector<16x256xf32>
    %387 = vector.extract_strided_slice %386 {offsets = [0, 0], sizes = [16, 192], strides = [1, 1]} : vector<16x256xf32> to vector<16x192xf32>
    %388 = arith.negf %387 : vector<16x192xf32>
    %389 = math.exp %388 : vector<16x192xf32>
    %cst_89 = arith.constant 1.000000e+00 : f32
    %390 = vector.broadcast %cst_89 : f32 to vector<16x192xf32>
    %391 = arith.addf %390, %389 : vector<16x192xf32>
    %392 = arith.divf %390, %391 : vector<16x192xf32>
    %393 = vector.extract_strided_slice %386 {offsets = [0, 192], sizes = [16, 64], strides = [1, 1]} : vector<16x256xf32> to vector<16x64xf32>
    %394 = math.tanh %393 : vector<16x64xf32>
    %395 = vector.extract_strided_slice %392 {offsets = [0, 64], sizes = [16, 64], strides = [1, 1]} : vector<16x192xf32> to vector<16x64xf32>
    %396 = arith.mulf %395, %372 : vector<16x64xf32>
    %397 = vector.extract_strided_slice %392 {offsets = [0, 0], sizes = [16, 64], strides = [1, 1]} : vector<16x192xf32> to vector<16x64xf32>
    %398 = arith.mulf %397, %394 : vector<16x64xf32>
    %399 = arith.addf %396, %398 : vector<16x64xf32>
    %400 = vector.extract_strided_slice %392 {offsets = [0, 128], sizes = [16, 64], strides = [1, 1]} : vector<16x192xf32> to vector<16x64xf32>
    %401 = math.tanh %399 : vector<16x64xf32>
    %402 = arith.mulf %400, %401 : vector<16x64xf32>
    %403 = arith.truncf %402 : vector<16x64xf32> to vector<16x64xbf16>
    %404 = arith.index_cast %c14_i32 : i32 to index
    %c0_90 = arith.constant 0 : index
    %c0_91 = arith.constant 0 : index
    %405 = vector.load %arg8[%404, %c0_90, %c0_91] : memref<16x16x64xbf16, #tpu.memory_space<vmem>>, vector<1x16x64xbf16>
    %406 = vector.shape_cast %405 : vector<1x16x64xbf16> to vector<16x64xbf16>
    %407 = vector.shape_cast %403 : vector<16x64xbf16> to vector<1x16x64xbf16>
    tpu.vector_store %arg8[%404, %c0_90, %c0_91], %407 {strides = array<i32>} : memref<16x16x64xbf16, #tpu.memory_space<vmem>>, vector<1x16x64xbf16>,
    %c15_i32 = arith.constant 15 : i32
    %408 = arith.index_cast %c15_i32 : i32 to index
    %c0_92 = arith.constant 0 : index
    %c0_93 = arith.constant 0 : index
    %409 = vector.load %arg1[%408, %c0_92, %c0_93] : memref<16x16x256xbf16, #tpu.memory_space<vmem>>, vector<1x16x256xbf16>
    %410 = vector.shape_cast %409 : vector<1x16x256xbf16> to vector<16x256xbf16>
    %411 = arith.extf %410 : vector<16x256xbf16> to vector<16x256xf32>
    %cst_94 = arith.constant dense<0.000000e+00> : vector<16x256xf32>
    %412 = tpu.matmul %403, %0, %cst_94 {dimension_numbers = #tpu.dot_dimension_numbers<[1], [0], [0], [1], [0, 0, 1, 1], [], []>} : vector<16x64xbf16>, vector<64x256xbf16>, vector<16x256xf32> -> vector<16x256xf32>
    %413 = arith.addf %411, %412 : vector<16x256xf32>
    %414 = vector.extract_strided_slice %413 {offsets = [0, 0], sizes = [16, 192], strides = [1, 1]} : vector<16x256xf32> to vector<16x192xf32>
    %415 = arith.negf %414 : vector<16x192xf32>
    %416 = math.exp %415 : vector<16x192xf32>
    %cst_95 = arith.constant 1.000000e+00 : f32
    %417 = vector.broadcast %cst_95 : f32 to vector<16x192xf32>
    %418 = arith.addf %417, %416 : vector<16x192xf32>
    %419 = arith.divf %417, %418 : vector<16x192xf32>
    %420 = vector.extract_strided_slice %413 {offsets = [0, 192], sizes = [16, 64], strides = [1, 1]} : vector<16x256xf32> to vector<16x64xf32>
    %421 = math.tanh %420 : vector<16x64xf32>
    %422 = vector.extract_strided_slice %419 {offsets = [0, 64], sizes = [16, 64], strides = [1, 1]} : vector<16x192xf32> to vector<16x64xf32>
    %423 = arith.mulf %422, %399 : vector<16x64xf32>
    %424 = vector.extract_strided_slice %419 {offsets = [0, 0], sizes = [16, 64], strides = [1, 1]} : vector<16x192xf32> to vector<16x64xf32>
    %425 = arith.mulf %424, %421 : vector<16x64xf32>
    %426 = arith.addf %423, %425 : vector<16x64xf32>
    %427 = vector.extract_strided_slice %419 {offsets = [0, 128], sizes = [16, 64], strides = [1, 1]} : vector<16x192xf32> to vector<16x64xf32>
    %428 = math.tanh %426 : vector<16x64xf32>
    %429 = arith.mulf %427, %428 : vector<16x64xf32>
    %430 = arith.truncf %429 : vector<16x64xf32> to vector<16x64xbf16>
    %431 = arith.index_cast %c15_i32 : i32 to index
    %c0_96 = arith.constant 0 : index
    %c0_97 = arith.constant 0 : index
    %432 = vector.load %arg8[%431, %c0_96, %c0_97] : memref<16x16x64xbf16, #tpu.memory_space<vmem>>, vector<1x16x64xbf16>
    %433 = vector.shape_cast %432 : vector<1x16x64xbf16> to vector<16x64xbf16>
    %434 = vector.shape_cast %430 : vector<16x64xbf16> to vector<1x16x64xbf16>
    tpu.vector_store %arg8[%431, %c0_96, %c0_97], %434 {strides = array<i32>} : memref<16x16x64xbf16, #tpu.memory_space<vmem>>, vector<1x16x64xbf16>,
    %c16_i32 = arith.constant 16 : i32
    %c0_98 = arith.constant 0 : index
    %c0_99 = arith.constant 0 : index
    %c0_100 = arith.constant 0 : index
    %435 = vector.load %arg8[%c0_98, %c0_99, %c0_100] : memref<16x16x64xbf16, #tpu.memory_space<vmem>>, vector<16x16x64xbf16>
    %436 = vector.shape_cast %435 : vector<16x16x64xbf16> to vector<256x64xbf16>
    %c0_101 = arith.constant 0 : index
    %c0_102 = arith.constant 0 : index
    %437 = vector.load %arg3[%c0_101, %c0_102] : memref<64x256xbf16, #tpu.memory_space<vmem>>, vector<64x256xbf16>
    %cst_103 = arith.constant dense<0.000000e+00> : vector<256x256xf32>
    %438 = tpu.matmul %436, %437, %cst_103 {dimension_numbers = #tpu.dot_dimension_numbers<[1], [0], [0], [1], [0, 0, 1, 1], [], []>} : vector<256x64xbf16>, vector<64x256xbf16>, vector<256x256xf32> -> vector<256x256xf32>
    %c0_104 = arith.constant 0 : index
    %c0_105 = arith.constant 0 : index
    %439 = vector.load %arg5[%c0_104, %c0_105] : memref<1x256xf32, #tpu.memory_space<vmem>>, vector<1x256xf32>
    %440 = vector.broadcast %439 : vector<1x256xf32> to vector<256x256xf32>
    %441 = arith.addf %438, %440 : vector<256x256xf32>
    %442 = vector.shape_cast %441 : vector<256x256xf32> to vector<16x16x256xf32>
    %c0_106 = arith.constant 0 : index
    %c0_107 = arith.constant 0 : index
    %443 = vector.load %arg4[%c0_106, %c0_107] : memref<64x256xbf16, #tpu.memory_space<vmem>>, vector<64x256xbf16>
    %cst_108 = arith.constant dense<0.000000e+00> : vector<256x256xf32>
    %444 = tpu.matmul %436, %443, %cst_108 {dimension_numbers = #tpu.dot_dimension_numbers<[1], [0], [0], [1], [0, 0, 1, 1], [], []>} : vector<256x64xbf16>, vector<64x256xbf16>, vector<256x256xf32> -> vector<256x256xf32>
    %445 = vector.shape_cast %444 : vector<256x256xf32> to vector<16x16x256xf32>
    %446 = vector.extract_strided_slice %442 {offsets = [0, 0, 0], sizes = [1, 16, 256], strides = [1, 1, 1]} : vector<16x16x256xf32> to vector<1x16x256xf32>
    %447 = vector.shape_cast %446 : vector<1x16x256xf32> to vector<16x256xf32>
    %448 = vector.extract_strided_slice %445 {offsets = [15, 0, 0], sizes = [1, 16, 256], strides = [1, 1, 1]} : vector<16x16x256xf32> to vector<1x16x256xf32>
    %449 = vector.shape_cast %448 : vector<1x16x256xf32> to vector<16x256xf32>
    %450 = arith.addf %447, %449 : vector<16x256xf32>
    %451 = arith.truncf %450 : vector<16x256xf32> to vector<16x256xbf16>
    %c0_109 = arith.constant 0 : index
    %c0_110 = arith.constant 0 : index
    %c0_111 = arith.constant 0 : index
    %452 = vector.load %arg9[%c0_109, %c0_110, %c0_111] : memref<16x16x256xbf16, #tpu.memory_space<vmem>>, vector<1x16x256xbf16>
    %453 = vector.shape_cast %452 : vector<1x16x256xbf16> to vector<16x256xbf16>
    %454 = vector.shape_cast %451 : vector<16x256xbf16> to vector<1x16x256xbf16>
    tpu.vector_store %arg9[%c0_109, %c0_110, %c0_111], %454 {strides = array<i32>} : memref<16x16x256xbf16, #tpu.memory_space<vmem>>, vector<1x16x256xbf16>,
    %455 = vector.extract_strided_slice %442 {offsets = [1, 0, 0], sizes = [1, 16, 256], strides = [1, 1, 1]} : vector<16x16x256xf32> to vector<1x16x256xf32>
    %456 = vector.shape_cast %455 : vector<1x16x256xf32> to vector<16x256xf32>
    %457 = vector.extract_strided_slice %445 {offsets = [14, 0, 0], sizes = [1, 16, 256], strides = [1, 1, 1]} : vector<16x16x256xf32> to vector<1x16x256xf32>
    %458 = vector.shape_cast %457 : vector<1x16x256xf32> to vector<16x256xf32>
    %459 = arith.addf %456, %458 : vector<16x256xf32>
    %460 = arith.truncf %459 : vector<16x256xf32> to vector<16x256xbf16>
    %c1 = arith.constant 1 : index
    %c0_112 = arith.constant 0 : index
    %c0_113 = arith.constant 0 : index
    %461 = vector.load %arg9[%c1, %c0_112, %c0_113] : memref<16x16x256xbf16, #tpu.memory_space<vmem>>, vector<1x16x256xbf16>
    %462 = vector.shape_cast %461 : vector<1x16x256xbf16> to vector<16x256xbf16>
    %463 = vector.shape_cast %460 : vector<16x256xbf16> to vector<1x16x256xbf16>
    tpu.vector_store %arg9[%c1, %c0_112, %c0_113], %463 {strides = array<i32>} : memref<16x16x256xbf16, #tpu.memory_space<vmem>>, vector<1x16x256xbf16>,
    %464 = vector.extract_strided_slice %442 {offsets = [2, 0, 0], sizes = [1, 16, 256], strides = [1, 1, 1]} : vector<16x16x256xf32> to vector<1x16x256xf32>
    %465 = vector.shape_cast %464 : vector<1x16x256xf32> to vector<16x256xf32>
    %466 = vector.extract_strided_slice %445 {offsets = [13, 0, 0], sizes = [1, 16, 256], strides = [1, 1, 1]} : vector<16x16x256xf32> to vector<1x16x256xf32>
    %467 = vector.shape_cast %466 : vector<1x16x256xf32> to vector<16x256xf32>
    %468 = arith.addf %465, %467 : vector<16x256xf32>
    %469 = arith.truncf %468 : vector<16x256xf32> to vector<16x256xbf16>
    %c2 = arith.constant 2 : index
    %c0_114 = arith.constant 0 : index
    %c0_115 = arith.constant 0 : index
    %470 = vector.load %arg9[%c2, %c0_114, %c0_115] : memref<16x16x256xbf16, #tpu.memory_space<vmem>>, vector<1x16x256xbf16>
    %471 = vector.shape_cast %470 : vector<1x16x256xbf16> to vector<16x256xbf16>
    %472 = vector.shape_cast %469 : vector<16x256xbf16> to vector<1x16x256xbf16>
    tpu.vector_store %arg9[%c2, %c0_114, %c0_115], %472 {strides = array<i32>} : memref<16x16x256xbf16, #tpu.memory_space<vmem>>, vector<1x16x256xbf16>,
    %473 = vector.extract_strided_slice %442 {offsets = [3, 0, 0], sizes = [1, 16, 256], strides = [1, 1, 1]} : vector<16x16x256xf32> to vector<1x16x256xf32>
    %474 = vector.shape_cast %473 : vector<1x16x256xf32> to vector<16x256xf32>
    %475 = vector.extract_strided_slice %445 {offsets = [12, 0, 0], sizes = [1, 16, 256], strides = [1, 1, 1]} : vector<16x16x256xf32> to vector<1x16x256xf32>
    %476 = vector.shape_cast %475 : vector<1x16x256xf32> to vector<16x256xf32>
    %477 = arith.addf %474, %476 : vector<16x256xf32>
    %478 = arith.truncf %477 : vector<16x256xf32> to vector<16x256xbf16>
    %c3 = arith.constant 3 : index
    %c0_116 = arith.constant 0 : index
    %c0_117 = arith.constant 0 : index
    %479 = vector.load %arg9[%c3, %c0_116, %c0_117] : memref<16x16x256xbf16, #tpu.memory_space<vmem>>, vector<1x16x256xbf16>
    %480 = vector.shape_cast %479 : vector<1x16x256xbf16> to vector<16x256xbf16>
    %481 = vector.shape_cast %478 : vector<16x256xbf16> to vector<1x16x256xbf16>
    tpu.vector_store %arg9[%c3, %c0_116, %c0_117], %481 {strides = array<i32>} : memref<16x16x256xbf16, #tpu.memory_space<vmem>>, vector<1x16x256xbf16>,
    %482 = vector.extract_strided_slice %442 {offsets = [4, 0, 0], sizes = [1, 16, 256], strides = [1, 1, 1]} : vector<16x16x256xf32> to vector<1x16x256xf32>
    %483 = vector.shape_cast %482 : vector<1x16x256xf32> to vector<16x256xf32>
    %484 = vector.extract_strided_slice %445 {offsets = [11, 0, 0], sizes = [1, 16, 256], strides = [1, 1, 1]} : vector<16x16x256xf32> to vector<1x16x256xf32>
    %485 = vector.shape_cast %484 : vector<1x16x256xf32> to vector<16x256xf32>
    %486 = arith.addf %483, %485 : vector<16x256xf32>
    %487 = arith.truncf %486 : vector<16x256xf32> to vector<16x256xbf16>
    %c4 = arith.constant 4 : index
    %c0_118 = arith.constant 0 : index
    %c0_119 = arith.constant 0 : index
    %488 = vector.load %arg9[%c4, %c0_118, %c0_119] : memref<16x16x256xbf16, #tpu.memory_space<vmem>>, vector<1x16x256xbf16>
    %489 = vector.shape_cast %488 : vector<1x16x256xbf16> to vector<16x256xbf16>
    %490 = vector.shape_cast %487 : vector<16x256xbf16> to vector<1x16x256xbf16>
    tpu.vector_store %arg9[%c4, %c0_118, %c0_119], %490 {strides = array<i32>} : memref<16x16x256xbf16, #tpu.memory_space<vmem>>, vector<1x16x256xbf16>,
    %491 = vector.extract_strided_slice %442 {offsets = [5, 0, 0], sizes = [1, 16, 256], strides = [1, 1, 1]} : vector<16x16x256xf32> to vector<1x16x256xf32>
    %492 = vector.shape_cast %491 : vector<1x16x256xf32> to vector<16x256xf32>
    %493 = vector.extract_strided_slice %445 {offsets = [10, 0, 0], sizes = [1, 16, 256], strides = [1, 1, 1]} : vector<16x16x256xf32> to vector<1x16x256xf32>
    %494 = vector.shape_cast %493 : vector<1x16x256xf32> to vector<16x256xf32>
    %495 = arith.addf %492, %494 : vector<16x256xf32>
    %496 = arith.truncf %495 : vector<16x256xf32> to vector<16x256xbf16>
    %c5 = arith.constant 5 : index
    %c0_120 = arith.constant 0 : index
    %c0_121 = arith.constant 0 : index
    %497 = vector.load %arg9[%c5, %c0_120, %c0_121] : memref<16x16x256xbf16, #tpu.memory_space<vmem>>, vector<1x16x256xbf16>
    %498 = vector.shape_cast %497 : vector<1x16x256xbf16> to vector<16x256xbf16>
    %499 = vector.shape_cast %496 : vector<16x256xbf16> to vector<1x16x256xbf16>
    tpu.vector_store %arg9[%c5, %c0_120, %c0_121], %499 {strides = array<i32>} : memref<16x16x256xbf16, #tpu.memory_space<vmem>>, vector<1x16x256xbf16>,
    %500 = vector.extract_strided_slice %442 {offsets = [6, 0, 0], sizes = [1, 16, 256], strides = [1, 1, 1]} : vector<16x16x256xf32> to vector<1x16x256xf32>
    %501 = vector.shape_cast %500 : vector<1x16x256xf32> to vector<16x256xf32>
    %502 = vector.extract_strided_slice %445 {offsets = [9, 0, 0], sizes = [1, 16, 256], strides = [1, 1, 1]} : vector<16x16x256xf32> to vector<1x16x256xf32>
    %503 = vector.shape_cast %502 : vector<1x16x256xf32> to vector<16x256xf32>
    %504 = arith.addf %501, %503 : vector<16x256xf32>
    %505 = arith.truncf %504 : vector<16x256xf32> to vector<16x256xbf16>
    %c6 = arith.constant 6 : index
    %c0_122 = arith.constant 0 : index
    %c0_123 = arith.constant 0 : index
    %506 = vector.load %arg9[%c6, %c0_122, %c0_123] : memref<16x16x256xbf16, #tpu.memory_space<vmem>>, vector<1x16x256xbf16>
    %507 = vector.shape_cast %506 : vector<1x16x256xbf16> to vector<16x256xbf16>
    %508 = vector.shape_cast %505 : vector<16x256xbf16> to vector<1x16x256xbf16>
    tpu.vector_store %arg9[%c6, %c0_122, %c0_123], %508 {strides = array<i32>} : memref<16x16x256xbf16, #tpu.memory_space<vmem>>, vector<1x16x256xbf16>,
    %509 = vector.extract_strided_slice %442 {offsets = [7, 0, 0], sizes = [1, 16, 256], strides = [1, 1, 1]} : vector<16x16x256xf32> to vector<1x16x256xf32>
    %510 = vector.shape_cast %509 : vector<1x16x256xf32> to vector<16x256xf32>
    %511 = vector.extract_strided_slice %445 {offsets = [8, 0, 0], sizes = [1, 16, 256], strides = [1, 1, 1]} : vector<16x16x256xf32> to vector<1x16x256xf32>
    %512 = vector.shape_cast %511 : vector<1x16x256xf32> to vector<16x256xf32>
    %513 = arith.addf %510, %512 : vector<16x256xf32>
    %514 = arith.truncf %513 : vector<16x256xf32> to vector<16x256xbf16>
    %c7 = arith.constant 7 : index
    %c0_124 = arith.constant 0 : index
    %c0_125 = arith.constant 0 : index
    %515 = vector.load %arg9[%c7, %c0_124, %c0_125] : memref<16x16x256xbf16, #tpu.memory_space<vmem>>, vector<1x16x256xbf16>
    %516 = vector.shape_cast %515 : vector<1x16x256xbf16> to vector<16x256xbf16>
    %517 = vector.shape_cast %514 : vector<16x256xbf16> to vector<1x16x256xbf16>
    tpu.vector_store %arg9[%c7, %c0_124, %c0_125], %517 {strides = array<i32>} : memref<16x16x256xbf16, #tpu.memory_space<vmem>>, vector<1x16x256xbf16>,
    %518 = vector.extract_strided_slice %442 {offsets = [8, 0, 0], sizes = [1, 16, 256], strides = [1, 1, 1]} : vector<16x16x256xf32> to vector<1x16x256xf32>
    %519 = vector.shape_cast %518 : vector<1x16x256xf32> to vector<16x256xf32>
    %520 = vector.extract_strided_slice %445 {offsets = [7, 0, 0], sizes = [1, 16, 256], strides = [1, 1, 1]} : vector<16x16x256xf32> to vector<1x16x256xf32>
    %521 = vector.shape_cast %520 : vector<1x16x256xf32> to vector<16x256xf32>
    %522 = arith.addf %519, %521 : vector<16x256xf32>
    %523 = arith.truncf %522 : vector<16x256xf32> to vector<16x256xbf16>
    %c8 = arith.constant 8 : index
    %c0_126 = arith.constant 0 : index
    %c0_127 = arith.constant 0 : index
    %524 = vector.load %arg9[%c8, %c0_126, %c0_127] : memref<16x16x256xbf16, #tpu.memory_space<vmem>>, vector<1x16x256xbf16>
    %525 = vector.shape_cast %524 : vector<1x16x256xbf16> to vector<16x256xbf16>
    %526 = vector.shape_cast %523 : vector<16x256xbf16> to vector<1x16x256xbf16>
    tpu.vector_store %arg9[%c8, %c0_126, %c0_127], %526 {strides = array<i32>} : memref<16x16x256xbf16, #tpu.memory_space<vmem>>, vector<1x16x256xbf16>,
    %527 = vector.extract_strided_slice %442 {offsets = [9, 0, 0], sizes = [1, 16, 256], strides = [1, 1, 1]} : vector<16x16x256xf32> to vector<1x16x256xf32>
    %528 = vector.shape_cast %527 : vector<1x16x256xf32> to vector<16x256xf32>
    %529 = vector.extract_strided_slice %445 {offsets = [6, 0, 0], sizes = [1, 16, 256], strides = [1, 1, 1]} : vector<16x16x256xf32> to vector<1x16x256xf32>
    %530 = vector.shape_cast %529 : vector<1x16x256xf32> to vector<16x256xf32>
    %531 = arith.addf %528, %530 : vector<16x256xf32>
    %532 = arith.truncf %531 : vector<16x256xf32> to vector<16x256xbf16>
    %c9 = arith.constant 9 : index
    %c0_128 = arith.constant 0 : index
    %c0_129 = arith.constant 0 : index
    %533 = vector.load %arg9[%c9, %c0_128, %c0_129] : memref<16x16x256xbf16, #tpu.memory_space<vmem>>, vector<1x16x256xbf16>
    %534 = vector.shape_cast %533 : vector<1x16x256xbf16> to vector<16x256xbf16>
    %535 = vector.shape_cast %532 : vector<16x256xbf16> to vector<1x16x256xbf16>
    tpu.vector_store %arg9[%c9, %c0_128, %c0_129], %535 {strides = array<i32>} : memref<16x16x256xbf16, #tpu.memory_space<vmem>>, vector<1x16x256xbf16>,
    %536 = vector.extract_strided_slice %442 {offsets = [10, 0, 0], sizes = [1, 16, 256], strides = [1, 1, 1]} : vector<16x16x256xf32> to vector<1x16x256xf32>
    %537 = vector.shape_cast %536 : vector<1x16x256xf32> to vector<16x256xf32>
    %538 = vector.extract_strided_slice %445 {offsets = [5, 0, 0], sizes = [1, 16, 256], strides = [1, 1, 1]} : vector<16x16x256xf32> to vector<1x16x256xf32>
    %539 = vector.shape_cast %538 : vector<1x16x256xf32> to vector<16x256xf32>
    %540 = arith.addf %537, %539 : vector<16x256xf32>
    %541 = arith.truncf %540 : vector<16x256xf32> to vector<16x256xbf16>
    %c10 = arith.constant 10 : index
    %c0_130 = arith.constant 0 : index
    %c0_131 = arith.constant 0 : index
    %542 = vector.load %arg9[%c10, %c0_130, %c0_131] : memref<16x16x256xbf16, #tpu.memory_space<vmem>>, vector<1x16x256xbf16>
    %543 = vector.shape_cast %542 : vector<1x16x256xbf16> to vector<16x256xbf16>
    %544 = vector.shape_cast %541 : vector<16x256xbf16> to vector<1x16x256xbf16>
    tpu.vector_store %arg9[%c10, %c0_130, %c0_131], %544 {strides = array<i32>} : memref<16x16x256xbf16, #tpu.memory_space<vmem>>, vector<1x16x256xbf16>,
    %545 = vector.extract_strided_slice %442 {offsets = [11, 0, 0], sizes = [1, 16, 256], strides = [1, 1, 1]} : vector<16x16x256xf32> to vector<1x16x256xf32>
    %546 = vector.shape_cast %545 : vector<1x16x256xf32> to vector<16x256xf32>
    %547 = vector.extract_strided_slice %445 {offsets = [4, 0, 0], sizes = [1, 16, 256], strides = [1, 1, 1]} : vector<16x16x256xf32> to vector<1x16x256xf32>
    %548 = vector.shape_cast %547 : vector<1x16x256xf32> to vector<16x256xf32>
    %549 = arith.addf %546, %548 : vector<16x256xf32>
    %550 = arith.truncf %549 : vector<16x256xf32> to vector<16x256xbf16>
    %c11 = arith.constant 11 : index
    %c0_132 = arith.constant 0 : index
    %c0_133 = arith.constant 0 : index
    %551 = vector.load %arg9[%c11, %c0_132, %c0_133] : memref<16x16x256xbf16, #tpu.memory_space<vmem>>, vector<1x16x256xbf16>
    %552 = vector.shape_cast %551 : vector<1x16x256xbf16> to vector<16x256xbf16>
    %553 = vector.shape_cast %550 : vector<16x256xbf16> to vector<1x16x256xbf16>
    tpu.vector_store %arg9[%c11, %c0_132, %c0_133], %553 {strides = array<i32>} : memref<16x16x256xbf16, #tpu.memory_space<vmem>>, vector<1x16x256xbf16>,
    %554 = vector.extract_strided_slice %442 {offsets = [12, 0, 0], sizes = [1, 16, 256], strides = [1, 1, 1]} : vector<16x16x256xf32> to vector<1x16x256xf32>
    %555 = vector.shape_cast %554 : vector<1x16x256xf32> to vector<16x256xf32>
    %556 = vector.extract_strided_slice %445 {offsets = [3, 0, 0], sizes = [1, 16, 256], strides = [1, 1, 1]} : vector<16x16x256xf32> to vector<1x16x256xf32>
    %557 = vector.shape_cast %556 : vector<1x16x256xf32> to vector<16x256xf32>
    %558 = arith.addf %555, %557 : vector<16x256xf32>
    %559 = arith.truncf %558 : vector<16x256xf32> to vector<16x256xbf16>
    %c12 = arith.constant 12 : index
    %c0_134 = arith.constant 0 : index
    %c0_135 = arith.constant 0 : index
    %560 = vector.load %arg9[%c12, %c0_134, %c0_135] : memref<16x16x256xbf16, #tpu.memory_space<vmem>>, vector<1x16x256xbf16>
    %561 = vector.shape_cast %560 : vector<1x16x256xbf16> to vector<16x256xbf16>
    %562 = vector.shape_cast %559 : vector<16x256xbf16> to vector<1x16x256xbf16>
    tpu.vector_store %arg9[%c12, %c0_134, %c0_135], %562 {strides = array<i32>} : memref<16x16x256xbf16, #tpu.memory_space<vmem>>, vector<1x16x256xbf16>,
    %563 = vector.extract_strided_slice %442 {offsets = [13, 0, 0], sizes = [1, 16, 256], strides = [1, 1, 1]} : vector<16x16x256xf32> to vector<1x16x256xf32>
    %564 = vector.shape_cast %563 : vector<1x16x256xf32> to vector<16x256xf32>
    %565 = vector.extract_strided_slice %445 {offsets = [2, 0, 0], sizes = [1, 16, 256], strides = [1, 1, 1]} : vector<16x16x256xf32> to vector<1x16x256xf32>
    %566 = vector.shape_cast %565 : vector<1x16x256xf32> to vector<16x256xf32>
    %567 = arith.addf %564, %566 : vector<16x256xf32>
    %568 = arith.truncf %567 : vector<16x256xf32> to vector<16x256xbf16>
    %c13 = arith.constant 13 : index
    %c0_136 = arith.constant 0 : index
    %c0_137 = arith.constant 0 : index
    %569 = vector.load %arg9[%c13, %c0_136, %c0_137] : memref<16x16x256xbf16, #tpu.memory_space<vmem>>, vector<1x16x256xbf16>
    %570 = vector.shape_cast %569 : vector<1x16x256xbf16> to vector<16x256xbf16>
    %571 = vector.shape_cast %568 : vector<16x256xbf16> to vector<1x16x256xbf16>
    tpu.vector_store %arg9[%c13, %c0_136, %c0_137], %571 {strides = array<i32>} : memref<16x16x256xbf16, #tpu.memory_space<vmem>>, vector<1x16x256xbf16>,
    %572 = vector.extract_strided_slice %442 {offsets = [14, 0, 0], sizes = [1, 16, 256], strides = [1, 1, 1]} : vector<16x16x256xf32> to vector<1x16x256xf32>
    %573 = vector.shape_cast %572 : vector<1x16x256xf32> to vector<16x256xf32>
    %574 = vector.extract_strided_slice %445 {offsets = [1, 0, 0], sizes = [1, 16, 256], strides = [1, 1, 1]} : vector<16x16x256xf32> to vector<1x16x256xf32>
    %575 = vector.shape_cast %574 : vector<1x16x256xf32> to vector<16x256xf32>
    %576 = arith.addf %573, %575 : vector<16x256xf32>
    %577 = arith.truncf %576 : vector<16x256xf32> to vector<16x256xbf16>
    %c14 = arith.constant 14 : index
    %c0_138 = arith.constant 0 : index
    %c0_139 = arith.constant 0 : index
    %578 = vector.load %arg9[%c14, %c0_138, %c0_139] : memref<16x16x256xbf16, #tpu.memory_space<vmem>>, vector<1x16x256xbf16>
    %579 = vector.shape_cast %578 : vector<1x16x256xbf16> to vector<16x256xbf16>
    %580 = vector.shape_cast %577 : vector<16x256xbf16> to vector<1x16x256xbf16>
    tpu.vector_store %arg9[%c14, %c0_138, %c0_139], %580 {strides = array<i32>} : memref<16x16x256xbf16, #tpu.memory_space<vmem>>, vector<1x16x256xbf16>,
    %581 = vector.extract_strided_slice %442 {offsets = [15, 0, 0], sizes = [1, 16, 256], strides = [1, 1, 1]} : vector<16x16x256xf32> to vector<1x16x256xf32>
    %582 = vector.shape_cast %581 : vector<1x16x256xf32> to vector<16x256xf32>
    %583 = vector.extract_strided_slice %445 {offsets = [0, 0, 0], sizes = [1, 16, 256], strides = [1, 1, 1]} : vector<16x16x256xf32> to vector<1x16x256xf32>
    %584 = vector.shape_cast %583 : vector<1x16x256xf32> to vector<16x256xf32>
    %585 = arith.addf %582, %584 : vector<16x256xf32>
    %586 = arith.truncf %585 : vector<16x256xf32> to vector<16x256xbf16>
    %c15 = arith.constant 15 : index
    %c0_140 = arith.constant 0 : index
    %c0_141 = arith.constant 0 : index
    %587 = vector.load %arg9[%c15, %c0_140, %c0_141] : memref<16x16x256xbf16, #tpu.memory_space<vmem>>, vector<1x16x256xbf16>
    %588 = vector.shape_cast %587 : vector<1x16x256xbf16> to vector<16x256xbf16>
    %589 = vector.shape_cast %586 : vector<16x256xbf16> to vector<1x16x256xbf16>
    tpu.vector_store %arg9[%c15, %c0_140, %c0_141], %589 {strides = array<i32>} : memref<16x16x256xbf16, #tpu.memory_space<vmem>>, vector<1x16x256xbf16>,
    %c0_142 = arith.constant 0 : index
    %c0_143 = arith.constant 0 : index
    %590 = vector.load %arg6[%c0_142, %c0_143] : memref<64x256xbf16, #tpu.memory_space<vmem>>, vector<64x256xbf16>
    %cst_144 = arith.constant 0.000000e+00 : bf16
    %591 = vector.broadcast %cst_144 : bf16 to vector<16x64xbf16>
    %cst_145 = arith.constant 0.000000e+00 : f32
    %592 = vector.broadcast %cst_145 : f32 to vector<16x64xf32>
    %c0_i32_146 = arith.constant 0 : i32
    %593 = arith.index_cast %c0_i32_146 : i32 to index
    %c0_147 = arith.constant 0 : index
    %c0_148 = arith.constant 0 : index
    %594 = vector.load %arg9[%593, %c0_147, %c0_148] : memref<16x16x256xbf16, #tpu.memory_space<vmem>>, vector<1x16x256xbf16>
    %595 = vector.shape_cast %594 : vector<1x16x256xbf16> to vector<16x256xbf16>
    %596 = arith.extf %595 : vector<16x256xbf16> to vector<16x256xf32>
    %cst_149 = arith.constant dense<0.000000e+00> : vector<16x256xf32>
    %597 = tpu.matmul %591, %590, %cst_149 {dimension_numbers = #tpu.dot_dimension_numbers<[1], [0], [0], [1], [0, 0, 1, 1], [], []>} : vector<16x64xbf16>, vector<64x256xbf16>, vector<16x256xf32> -> vector<16x256xf32>
    %598 = arith.addf %596, %597 : vector<16x256xf32>
    %599 = vector.extract_strided_slice %598 {offsets = [0, 0], sizes = [16, 192], strides = [1, 1]} : vector<16x256xf32> to vector<16x192xf32>
    %600 = arith.negf %599 : vector<16x192xf32>
    %601 = math.exp %600 : vector<16x192xf32>
    %cst_150 = arith.constant 1.000000e+00 : f32
    %602 = vector.broadcast %cst_150 : f32 to vector<16x192xf32>
    %603 = arith.addf %602, %601 : vector<16x192xf32>
    %604 = arith.divf %602, %603 : vector<16x192xf32>
    %605 = vector.extract_strided_slice %598 {offsets = [0, 192], sizes = [16, 64], strides = [1, 1]} : vector<16x256xf32> to vector<16x64xf32>
    %606 = math.tanh %605 : vector<16x64xf32>
    %607 = vector.extract_strided_slice %604 {offsets = [0, 64], sizes = [16, 64], strides = [1, 1]} : vector<16x192xf32> to vector<16x64xf32>
    %608 = arith.mulf %607, %592 : vector<16x64xf32>
    %609 = vector.extract_strided_slice %604 {offsets = [0, 0], sizes = [16, 64], strides = [1, 1]} : vector<16x192xf32> to vector<16x64xf32>
    %610 = arith.mulf %609, %606 : vector<16x64xf32>
    %611 = arith.addf %608, %610 : vector<16x64xf32>
    %612 = vector.extract_strided_slice %604 {offsets = [0, 128], sizes = [16, 64], strides = [1, 1]} : vector<16x192xf32> to vector<16x64xf32>
    %613 = math.tanh %611 : vector<16x64xf32>
    %614 = arith.mulf %612, %613 : vector<16x64xf32>
    %615 = arith.truncf %614 : vector<16x64xf32> to vector<16x64xbf16>
    %616 = arith.index_cast %c0_i32_146 : i32 to index
    %c0_151 = arith.constant 0 : index
    %c0_152 = arith.constant 0 : index
    %617 = vector.load %arg10[%616, %c0_151, %c0_152] : memref<16x16x64xbf16, #tpu.memory_space<vmem>>, vector<1x16x64xbf16>
    %618 = vector.shape_cast %617 : vector<1x16x64xbf16> to vector<16x64xbf16>
    %619 = vector.shape_cast %615 : vector<16x64xbf16> to vector<1x16x64xbf16>
    tpu.vector_store %arg10[%616, %c0_151, %c0_152], %619 {strides = array<i32>} : memref<16x16x64xbf16, #tpu.memory_space<vmem>>, vector<1x16x64xbf16>,
    %c1_i32_153 = arith.constant 1 : i32
    %620 = arith.index_cast %c1_i32_153 : i32 to index
    %c0_154 = arith.constant 0 : index
    %c0_155 = arith.constant 0 : index
    %621 = vector.load %arg9[%620, %c0_154, %c0_155] : memref<16x16x256xbf16, #tpu.memory_space<vmem>>, vector<1x16x256xbf16>
    %622 = vector.shape_cast %621 : vector<1x16x256xbf16> to vector<16x256xbf16>
    %623 = arith.extf %622 : vector<16x256xbf16> to vector<16x256xf32>
    %cst_156 = arith.constant dense<0.000000e+00> : vector<16x256xf32>
    %624 = tpu.matmul %615, %590, %cst_156 {dimension_numbers = #tpu.dot_dimension_numbers<[1], [0], [0], [1], [0, 0, 1, 1], [], []>} : vector<16x64xbf16>, vector<64x256xbf16>, vector<16x256xf32> -> vector<16x256xf32>
    %625 = arith.addf %623, %624 : vector<16x256xf32>
    %626 = vector.extract_strided_slice %625 {offsets = [0, 0], sizes = [16, 192], strides = [1, 1]} : vector<16x256xf32> to vector<16x192xf32>
    %627 = arith.negf %626 : vector<16x192xf32>
    %628 = math.exp %627 : vector<16x192xf32>
    %cst_157 = arith.constant 1.000000e+00 : f32
    %629 = vector.broadcast %cst_157 : f32 to vector<16x192xf32>
    %630 = arith.addf %629, %628 : vector<16x192xf32>
    %631 = arith.divf %629, %630 : vector<16x192xf32>
    %632 = vector.extract_strided_slice %625 {offsets = [0, 192], sizes = [16, 64], strides = [1, 1]} : vector<16x256xf32> to vector<16x64xf32>
    %633 = math.tanh %632 : vector<16x64xf32>
    %634 = vector.extract_strided_slice %631 {offsets = [0, 64], sizes = [16, 64], strides = [1, 1]} : vector<16x192xf32> to vector<16x64xf32>
    %635 = arith.mulf %634, %611 : vector<16x64xf32>
    %636 = vector.extract_strided_slice %631 {offsets = [0, 0], sizes = [16, 64], strides = [1, 1]} : vector<16x192xf32> to vector<16x64xf32>
    %637 = arith.mulf %636, %633 : vector<16x64xf32>
    %638 = arith.addf %635, %637 : vector<16x64xf32>
    %639 = vector.extract_strided_slice %631 {offsets = [0, 128], sizes = [16, 64], strides = [1, 1]} : vector<16x192xf32> to vector<16x64xf32>
    %640 = math.tanh %638 : vector<16x64xf32>
    %641 = arith.mulf %639, %640 : vector<16x64xf32>
    %642 = arith.truncf %641 : vector<16x64xf32> to vector<16x64xbf16>
    %643 = arith.index_cast %c1_i32_153 : i32 to index
    %c0_158 = arith.constant 0 : index
    %c0_159 = arith.constant 0 : index
    %644 = vector.load %arg10[%643, %c0_158, %c0_159] : memref<16x16x64xbf16, #tpu.memory_space<vmem>>, vector<1x16x64xbf16>
    %645 = vector.shape_cast %644 : vector<1x16x64xbf16> to vector<16x64xbf16>
    %646 = vector.shape_cast %642 : vector<16x64xbf16> to vector<1x16x64xbf16>
    tpu.vector_store %arg10[%643, %c0_158, %c0_159], %646 {strides = array<i32>} : memref<16x16x64xbf16, #tpu.memory_space<vmem>>, vector<1x16x64xbf16>,
    %c2_i32_160 = arith.constant 2 : i32
    %647 = arith.index_cast %c2_i32_160 : i32 to index
    %c0_161 = arith.constant 0 : index
    %c0_162 = arith.constant 0 : index
    %648 = vector.load %arg9[%647, %c0_161, %c0_162] : memref<16x16x256xbf16, #tpu.memory_space<vmem>>, vector<1x16x256xbf16>
    %649 = vector.shape_cast %648 : vector<1x16x256xbf16> to vector<16x256xbf16>
    %650 = arith.extf %649 : vector<16x256xbf16> to vector<16x256xf32>
    %cst_163 = arith.constant dense<0.000000e+00> : vector<16x256xf32>
    %651 = tpu.matmul %642, %590, %cst_163 {dimension_numbers = #tpu.dot_dimension_numbers<[1], [0], [0], [1], [0, 0, 1, 1], [], []>} : vector<16x64xbf16>, vector<64x256xbf16>, vector<16x256xf32> -> vector<16x256xf32>
    %652 = arith.addf %650, %651 : vector<16x256xf32>
    %653 = vector.extract_strided_slice %652 {offsets = [0, 0], sizes = [16, 192], strides = [1, 1]} : vector<16x256xf32> to vector<16x192xf32>
    %654 = arith.negf %653 : vector<16x192xf32>
    %655 = math.exp %654 : vector<16x192xf32>
    %cst_164 = arith.constant 1.000000e+00 : f32
    %656 = vector.broadcast %cst_164 : f32 to vector<16x192xf32>
    %657 = arith.addf %656, %655 : vector<16x192xf32>
    %658 = arith.divf %656, %657 : vector<16x192xf32>
    %659 = vector.extract_strided_slice %652 {offsets = [0, 192], sizes = [16, 64], strides = [1, 1]} : vector<16x256xf32> to vector<16x64xf32>
    %660 = math.tanh %659 : vector<16x64xf32>
    %661 = vector.extract_strided_slice %658 {offsets = [0, 64], sizes = [16, 64], strides = [1, 1]} : vector<16x192xf32> to vector<16x64xf32>
    %662 = arith.mulf %661, %638 : vector<16x64xf32>
    %663 = vector.extract_strided_slice %658 {offsets = [0, 0], sizes = [16, 64], strides = [1, 1]} : vector<16x192xf32> to vector<16x64xf32>
    %664 = arith.mulf %663, %660 : vector<16x64xf32>
    %665 = arith.addf %662, %664 : vector<16x64xf32>
    %666 = vector.extract_strided_slice %658 {offsets = [0, 128], sizes = [16, 64], strides = [1, 1]} : vector<16x192xf32> to vector<16x64xf32>
    %667 = math.tanh %665 : vector<16x64xf32>
    %668 = arith.mulf %666, %667 : vector<16x64xf32>
    %669 = arith.truncf %668 : vector<16x64xf32> to vector<16x64xbf16>
    %670 = arith.index_cast %c2_i32_160 : i32 to index
    %c0_165 = arith.constant 0 : index
    %c0_166 = arith.constant 0 : index
    %671 = vector.load %arg10[%670, %c0_165, %c0_166] : memref<16x16x64xbf16, #tpu.memory_space<vmem>>, vector<1x16x64xbf16>
    %672 = vector.shape_cast %671 : vector<1x16x64xbf16> to vector<16x64xbf16>
    %673 = vector.shape_cast %669 : vector<16x64xbf16> to vector<1x16x64xbf16>
    tpu.vector_store %arg10[%670, %c0_165, %c0_166], %673 {strides = array<i32>} : memref<16x16x64xbf16, #tpu.memory_space<vmem>>, vector<1x16x64xbf16>,
    %c3_i32_167 = arith.constant 3 : i32
    %674 = arith.index_cast %c3_i32_167 : i32 to index
    %c0_168 = arith.constant 0 : index
    %c0_169 = arith.constant 0 : index
    %675 = vector.load %arg9[%674, %c0_168, %c0_169] : memref<16x16x256xbf16, #tpu.memory_space<vmem>>, vector<1x16x256xbf16>
    %676 = vector.shape_cast %675 : vector<1x16x256xbf16> to vector<16x256xbf16>
    %677 = arith.extf %676 : vector<16x256xbf16> to vector<16x256xf32>
    %cst_170 = arith.constant dense<0.000000e+00> : vector<16x256xf32>
    %678 = tpu.matmul %669, %590, %cst_170 {dimension_numbers = #tpu.dot_dimension_numbers<[1], [0], [0], [1], [0, 0, 1, 1], [], []>} : vector<16x64xbf16>, vector<64x256xbf16>, vector<16x256xf32> -> vector<16x256xf32>
    %679 = arith.addf %677, %678 : vector<16x256xf32>
    %680 = vector.extract_strided_slice %679 {offsets = [0, 0], sizes = [16, 192], strides = [1, 1]} : vector<16x256xf32> to vector<16x192xf32>
    %681 = arith.negf %680 : vector<16x192xf32>
    %682 = math.exp %681 : vector<16x192xf32>
    %cst_171 = arith.constant 1.000000e+00 : f32
    %683 = vector.broadcast %cst_171 : f32 to vector<16x192xf32>
    %684 = arith.addf %683, %682 : vector<16x192xf32>
    %685 = arith.divf %683, %684 : vector<16x192xf32>
    %686 = vector.extract_strided_slice %679 {offsets = [0, 192], sizes = [16, 64], strides = [1, 1]} : vector<16x256xf32> to vector<16x64xf32>
    %687 = math.tanh %686 : vector<16x64xf32>
    %688 = vector.extract_strided_slice %685 {offsets = [0, 64], sizes = [16, 64], strides = [1, 1]} : vector<16x192xf32> to vector<16x64xf32>
    %689 = arith.mulf %688, %665 : vector<16x64xf32>
    %690 = vector.extract_strided_slice %685 {offsets = [0, 0], sizes = [16, 64], strides = [1, 1]} : vector<16x192xf32> to vector<16x64xf32>
    %691 = arith.mulf %690, %687 : vector<16x64xf32>
    %692 = arith.addf %689, %691 : vector<16x64xf32>
    %693 = vector.extract_strided_slice %685 {offsets = [0, 128], sizes = [16, 64], strides = [1, 1]} : vector<16x192xf32> to vector<16x64xf32>
    %694 = math.tanh %692 : vector<16x64xf32>
    %695 = arith.mulf %693, %694 : vector<16x64xf32>
    %696 = arith.truncf %695 : vector<16x64xf32> to vector<16x64xbf16>
    %697 = arith.index_cast %c3_i32_167 : i32 to index
    %c0_172 = arith.constant 0 : index
    %c0_173 = arith.constant 0 : index
    %698 = vector.load %arg10[%697, %c0_172, %c0_173] : memref<16x16x64xbf16, #tpu.memory_space<vmem>>, vector<1x16x64xbf16>
    %699 = vector.shape_cast %698 : vector<1x16x64xbf16> to vector<16x64xbf16>
    %700 = vector.shape_cast %696 : vector<16x64xbf16> to vector<1x16x64xbf16>
    tpu.vector_store %arg10[%697, %c0_172, %c0_173], %700 {strides = array<i32>} : memref<16x16x64xbf16, #tpu.memory_space<vmem>>, vector<1x16x64xbf16>,
    %c4_i32_174 = arith.constant 4 : i32
    %701 = arith.index_cast %c4_i32_174 : i32 to index
    %c0_175 = arith.constant 0 : index
    %c0_176 = arith.constant 0 : index
    %702 = vector.load %arg9[%701, %c0_175, %c0_176] : memref<16x16x256xbf16, #tpu.memory_space<vmem>>, vector<1x16x256xbf16>
    %703 = vector.shape_cast %702 : vector<1x16x256xbf16> to vector<16x256xbf16>
    %704 = arith.extf %703 : vector<16x256xbf16> to vector<16x256xf32>
    %cst_177 = arith.constant dense<0.000000e+00> : vector<16x256xf32>
    %705 = tpu.matmul %696, %590, %cst_177 {dimension_numbers = #tpu.dot_dimension_numbers<[1], [0], [0], [1], [0, 0, 1, 1], [], []>} : vector<16x64xbf16>, vector<64x256xbf16>, vector<16x256xf32> -> vector<16x256xf32>
    %706 = arith.addf %704, %705 : vector<16x256xf32>
    %707 = vector.extract_strided_slice %706 {offsets = [0, 0], sizes = [16, 192], strides = [1, 1]} : vector<16x256xf32> to vector<16x192xf32>
    %708 = arith.negf %707 : vector<16x192xf32>
    %709 = math.exp %708 : vector<16x192xf32>
    %cst_178 = arith.constant 1.000000e+00 : f32
    %710 = vector.broadcast %cst_178 : f32 to vector<16x192xf32>
    %711 = arith.addf %710, %709 : vector<16x192xf32>
    %712 = arith.divf %710, %711 : vector<16x192xf32>
    %713 = vector.extract_strided_slice %706 {offsets = [0, 192], sizes = [16, 64], strides = [1, 1]} : vector<16x256xf32> to vector<16x64xf32>
    %714 = math.tanh %713 : vector<16x64xf32>
    %715 = vector.extract_strided_slice %712 {offsets = [0, 64], sizes = [16, 64], strides = [1, 1]} : vector<16x192xf32> to vector<16x64xf32>
    %716 = arith.mulf %715, %692 : vector<16x64xf32>
    %717 = vector.extract_strided_slice %712 {offsets = [0, 0], sizes = [16, 64], strides = [1, 1]} : vector<16x192xf32> to vector<16x64xf32>
    %718 = arith.mulf %717, %714 : vector<16x64xf32>
    %719 = arith.addf %716, %718 : vector<16x64xf32>
    %720 = vector.extract_strided_slice %712 {offsets = [0, 128], sizes = [16, 64], strides = [1, 1]} : vector<16x192xf32> to vector<16x64xf32>
    %721 = math.tanh %719 : vector<16x64xf32>
    %722 = arith.mulf %720, %721 : vector<16x64xf32>
    %723 = arith.truncf %722 : vector<16x64xf32> to vector<16x64xbf16>
    %724 = arith.index_cast %c4_i32_174 : i32 to index
    %c0_179 = arith.constant 0 : index
    %c0_180 = arith.constant 0 : index
    %725 = vector.load %arg10[%724, %c0_179, %c0_180] : memref<16x16x64xbf16, #tpu.memory_space<vmem>>, vector<1x16x64xbf16>
    %726 = vector.shape_cast %725 : vector<1x16x64xbf16> to vector<16x64xbf16>
    %727 = vector.shape_cast %723 : vector<16x64xbf16> to vector<1x16x64xbf16>
    tpu.vector_store %arg10[%724, %c0_179, %c0_180], %727 {strides = array<i32>} : memref<16x16x64xbf16, #tpu.memory_space<vmem>>, vector<1x16x64xbf16>,
    %c5_i32_181 = arith.constant 5 : i32
    %728 = arith.index_cast %c5_i32_181 : i32 to index
    %c0_182 = arith.constant 0 : index
    %c0_183 = arith.constant 0 : index
    %729 = vector.load %arg9[%728, %c0_182, %c0_183] : memref<16x16x256xbf16, #tpu.memory_space<vmem>>, vector<1x16x256xbf16>
    %730 = vector.shape_cast %729 : vector<1x16x256xbf16> to vector<16x256xbf16>
    %731 = arith.extf %730 : vector<16x256xbf16> to vector<16x256xf32>
    %cst_184 = arith.constant dense<0.000000e+00> : vector<16x256xf32>
    %732 = tpu.matmul %723, %590, %cst_184 {dimension_numbers = #tpu.dot_dimension_numbers<[1], [0], [0], [1], [0, 0, 1, 1], [], []>} : vector<16x64xbf16>, vector<64x256xbf16>, vector<16x256xf32> -> vector<16x256xf32>
    %733 = arith.addf %731, %732 : vector<16x256xf32>
    %734 = vector.extract_strided_slice %733 {offsets = [0, 0], sizes = [16, 192], strides = [1, 1]} : vector<16x256xf32> to vector<16x192xf32>
    %735 = arith.negf %734 : vector<16x192xf32>
    %736 = math.exp %735 : vector<16x192xf32>
    %cst_185 = arith.constant 1.000000e+00 : f32
    %737 = vector.broadcast %cst_185 : f32 to vector<16x192xf32>
    %738 = arith.addf %737, %736 : vector<16x192xf32>
    %739 = arith.divf %737, %738 : vector<16x192xf32>
    %740 = vector.extract_strided_slice %733 {offsets = [0, 192], sizes = [16, 64], strides = [1, 1]} : vector<16x256xf32> to vector<16x64xf32>
    %741 = math.tanh %740 : vector<16x64xf32>
    %742 = vector.extract_strided_slice %739 {offsets = [0, 64], sizes = [16, 64], strides = [1, 1]} : vector<16x192xf32> to vector<16x64xf32>
    %743 = arith.mulf %742, %719 : vector<16x64xf32>
    %744 = vector.extract_strided_slice %739 {offsets = [0, 0], sizes = [16, 64], strides = [1, 1]} : vector<16x192xf32> to vector<16x64xf32>
    %745 = arith.mulf %744, %741 : vector<16x64xf32>
    %746 = arith.addf %743, %745 : vector<16x64xf32>
    %747 = vector.extract_strided_slice %739 {offsets = [0, 128], sizes = [16, 64], strides = [1, 1]} : vector<16x192xf32> to vector<16x64xf32>
    %748 = math.tanh %746 : vector<16x64xf32>
    %749 = arith.mulf %747, %748 : vector<16x64xf32>
    %750 = arith.truncf %749 : vector<16x64xf32> to vector<16x64xbf16>
    %751 = arith.index_cast %c5_i32_181 : i32 to index
    %c0_186 = arith.constant 0 : index
    %c0_187 = arith.constant 0 : index
    %752 = vector.load %arg10[%751, %c0_186, %c0_187] : memref<16x16x64xbf16, #tpu.memory_space<vmem>>, vector<1x16x64xbf16>
    %753 = vector.shape_cast %752 : vector<1x16x64xbf16> to vector<16x64xbf16>
    %754 = vector.shape_cast %750 : vector<16x64xbf16> to vector<1x16x64xbf16>
    tpu.vector_store %arg10[%751, %c0_186, %c0_187], %754 {strides = array<i32>} : memref<16x16x64xbf16, #tpu.memory_space<vmem>>, vector<1x16x64xbf16>,
    %c6_i32_188 = arith.constant 6 : i32
    %755 = arith.index_cast %c6_i32_188 : i32 to index
    %c0_189 = arith.constant 0 : index
    %c0_190 = arith.constant 0 : index
    %756 = vector.load %arg9[%755, %c0_189, %c0_190] : memref<16x16x256xbf16, #tpu.memory_space<vmem>>, vector<1x16x256xbf16>
    %757 = vector.shape_cast %756 : vector<1x16x256xbf16> to vector<16x256xbf16>
    %758 = arith.extf %757 : vector<16x256xbf16> to vector<16x256xf32>
    %cst_191 = arith.constant dense<0.000000e+00> : vector<16x256xf32>
    %759 = tpu.matmul %750, %590, %cst_191 {dimension_numbers = #tpu.dot_dimension_numbers<[1], [0], [0], [1], [0, 0, 1, 1], [], []>} : vector<16x64xbf16>, vector<64x256xbf16>, vector<16x256xf32> -> vector<16x256xf32>
    %760 = arith.addf %758, %759 : vector<16x256xf32>
    %761 = vector.extract_strided_slice %760 {offsets = [0, 0], sizes = [16, 192], strides = [1, 1]} : vector<16x256xf32> to vector<16x192xf32>
    %762 = arith.negf %761 : vector<16x192xf32>
    %763 = math.exp %762 : vector<16x192xf32>
    %cst_192 = arith.constant 1.000000e+00 : f32
    %764 = vector.broadcast %cst_192 : f32 to vector<16x192xf32>
    %765 = arith.addf %764, %763 : vector<16x192xf32>
    %766 = arith.divf %764, %765 : vector<16x192xf32>
    %767 = vector.extract_strided_slice %760 {offsets = [0, 192], sizes = [16, 64], strides = [1, 1]} : vector<16x256xf32> to vector<16x64xf32>
    %768 = math.tanh %767 : vector<16x64xf32>
    %769 = vector.extract_strided_slice %766 {offsets = [0, 64], sizes = [16, 64], strides = [1, 1]} : vector<16x192xf32> to vector<16x64xf32>
    %770 = arith.mulf %769, %746 : vector<16x64xf32>
    %771 = vector.extract_strided_slice %766 {offsets = [0, 0], sizes = [16, 64], strides = [1, 1]} : vector<16x192xf32> to vector<16x64xf32>
    %772 = arith.mulf %771, %768 : vector<16x64xf32>
    %773 = arith.addf %770, %772 : vector<16x64xf32>
    %774 = vector.extract_strided_slice %766 {offsets = [0, 128], sizes = [16, 64], strides = [1, 1]} : vector<16x192xf32> to vector<16x64xf32>
    %775 = math.tanh %773 : vector<16x64xf32>
    %776 = arith.mulf %774, %775 : vector<16x64xf32>
    %777 = arith.truncf %776 : vector<16x64xf32> to vector<16x64xbf16>
    %778 = arith.index_cast %c6_i32_188 : i32 to index
    %c0_193 = arith.constant 0 : index
    %c0_194 = arith.constant 0 : index
    %779 = vector.load %arg10[%778, %c0_193, %c0_194] : memref<16x16x64xbf16, #tpu.memory_space<vmem>>, vector<1x16x64xbf16>
    %780 = vector.shape_cast %779 : vector<1x16x64xbf16> to vector<16x64xbf16>
    %781 = vector.shape_cast %777 : vector<16x64xbf16> to vector<1x16x64xbf16>
    tpu.vector_store %arg10[%778, %c0_193, %c0_194], %781 {strides = array<i32>} : memref<16x16x64xbf16, #tpu.memory_space<vmem>>, vector<1x16x64xbf16>,
    %c7_i32_195 = arith.constant 7 : i32
    %782 = arith.index_cast %c7_i32_195 : i32 to index
    %c0_196 = arith.constant 0 : index
    %c0_197 = arith.constant 0 : index
    %783 = vector.load %arg9[%782, %c0_196, %c0_197] : memref<16x16x256xbf16, #tpu.memory_space<vmem>>, vector<1x16x256xbf16>
    %784 = vector.shape_cast %783 : vector<1x16x256xbf16> to vector<16x256xbf16>
    %785 = arith.extf %784 : vector<16x256xbf16> to vector<16x256xf32>
    %cst_198 = arith.constant dense<0.000000e+00> : vector<16x256xf32>
    %786 = tpu.matmul %777, %590, %cst_198 {dimension_numbers = #tpu.dot_dimension_numbers<[1], [0], [0], [1], [0, 0, 1, 1], [], []>} : vector<16x64xbf16>, vector<64x256xbf16>, vector<16x256xf32> -> vector<16x256xf32>
    %787 = arith.addf %785, %786 : vector<16x256xf32>
    %788 = vector.extract_strided_slice %787 {offsets = [0, 0], sizes = [16, 192], strides = [1, 1]} : vector<16x256xf32> to vector<16x192xf32>
    %789 = arith.negf %788 : vector<16x192xf32>
    %790 = math.exp %789 : vector<16x192xf32>
    %cst_199 = arith.constant 1.000000e+00 : f32
    %791 = vector.broadcast %cst_199 : f32 to vector<16x192xf32>
    %792 = arith.addf %791, %790 : vector<16x192xf32>
    %793 = arith.divf %791, %792 : vector<16x192xf32>
    %794 = vector.extract_strided_slice %787 {offsets = [0, 192], sizes = [16, 64], strides = [1, 1]} : vector<16x256xf32> to vector<16x64xf32>
    %795 = math.tanh %794 : vector<16x64xf32>
    %796 = vector.extract_strided_slice %793 {offsets = [0, 64], sizes = [16, 64], strides = [1, 1]} : vector<16x192xf32> to vector<16x64xf32>
    %797 = arith.mulf %796, %773 : vector<16x64xf32>
    %798 = vector.extract_strided_slice %793 {offsets = [0, 0], sizes = [16, 64], strides = [1, 1]} : vector<16x192xf32> to vector<16x64xf32>
    %799 = arith.mulf %798, %795 : vector<16x64xf32>
    %800 = arith.addf %797, %799 : vector<16x64xf32>
    %801 = vector.extract_strided_slice %793 {offsets = [0, 128], sizes = [16, 64], strides = [1, 1]} : vector<16x192xf32> to vector<16x64xf32>
    %802 = math.tanh %800 : vector<16x64xf32>
    %803 = arith.mulf %801, %802 : vector<16x64xf32>
    %804 = arith.truncf %803 : vector<16x64xf32> to vector<16x64xbf16>
    %805 = arith.index_cast %c7_i32_195 : i32 to index
    %c0_200 = arith.constant 0 : index
    %c0_201 = arith.constant 0 : index
    %806 = vector.load %arg10[%805, %c0_200, %c0_201] : memref<16x16x64xbf16, #tpu.memory_space<vmem>>, vector<1x16x64xbf16>
    %807 = vector.shape_cast %806 : vector<1x16x64xbf16> to vector<16x64xbf16>
    %808 = vector.shape_cast %804 : vector<16x64xbf16> to vector<1x16x64xbf16>
    tpu.vector_store %arg10[%805, %c0_200, %c0_201], %808 {strides = array<i32>} : memref<16x16x64xbf16, #tpu.memory_space<vmem>>, vector<1x16x64xbf16>,
    %c8_i32_202 = arith.constant 8 : i32
    %809 = arith.index_cast %c8_i32_202 : i32 to index
    %c0_203 = arith.constant 0 : index
    %c0_204 = arith.constant 0 : index
    %810 = vector.load %arg9[%809, %c0_203, %c0_204] : memref<16x16x256xbf16, #tpu.memory_space<vmem>>, vector<1x16x256xbf16>
    %811 = vector.shape_cast %810 : vector<1x16x256xbf16> to vector<16x256xbf16>
    %812 = arith.extf %811 : vector<16x256xbf16> to vector<16x256xf32>
    %cst_205 = arith.constant dense<0.000000e+00> : vector<16x256xf32>
    %813 = tpu.matmul %804, %590, %cst_205 {dimension_numbers = #tpu.dot_dimension_numbers<[1], [0], [0], [1], [0, 0, 1, 1], [], []>} : vector<16x64xbf16>, vector<64x256xbf16>, vector<16x256xf32> -> vector<16x256xf32>
    %814 = arith.addf %812, %813 : vector<16x256xf32>
    %815 = vector.extract_strided_slice %814 {offsets = [0, 0], sizes = [16, 192], strides = [1, 1]} : vector<16x256xf32> to vector<16x192xf32>
    %816 = arith.negf %815 : vector<16x192xf32>
    %817 = math.exp %816 : vector<16x192xf32>
    %cst_206 = arith.constant 1.000000e+00 : f32
    %818 = vector.broadcast %cst_206 : f32 to vector<16x192xf32>
    %819 = arith.addf %818, %817 : vector<16x192xf32>
    %820 = arith.divf %818, %819 : vector<16x192xf32>
    %821 = vector.extract_strided_slice %814 {offsets = [0, 192], sizes = [16, 64], strides = [1, 1]} : vector<16x256xf32> to vector<16x64xf32>
    %822 = math.tanh %821 : vector<16x64xf32>
    %823 = vector.extract_strided_slice %820 {offsets = [0, 64], sizes = [16, 64], strides = [1, 1]} : vector<16x192xf32> to vector<16x64xf32>
    %824 = arith.mulf %823, %800 : vector<16x64xf32>
    %825 = vector.extract_strided_slice %820 {offsets = [0, 0], sizes = [16, 64], strides = [1, 1]} : vector<16x192xf32> to vector<16x64xf32>
    %826 = arith.mulf %825, %822 : vector<16x64xf32>
    %827 = arith.addf %824, %826 : vector<16x64xf32>
    %828 = vector.extract_strided_slice %820 {offsets = [0, 128], sizes = [16, 64], strides = [1, 1]} : vector<16x192xf32> to vector<16x64xf32>
    %829 = math.tanh %827 : vector<16x64xf32>
    %830 = arith.mulf %828, %829 : vector<16x64xf32>
    %831 = arith.truncf %830 : vector<16x64xf32> to vector<16x64xbf16>
    %832 = arith.index_cast %c8_i32_202 : i32 to index
    %c0_207 = arith.constant 0 : index
    %c0_208 = arith.constant 0 : index
    %833 = vector.load %arg10[%832, %c0_207, %c0_208] : memref<16x16x64xbf16, #tpu.memory_space<vmem>>, vector<1x16x64xbf16>
    %834 = vector.shape_cast %833 : vector<1x16x64xbf16> to vector<16x64xbf16>
    %835 = vector.shape_cast %831 : vector<16x64xbf16> to vector<1x16x64xbf16>
    tpu.vector_store %arg10[%832, %c0_207, %c0_208], %835 {strides = array<i32>} : memref<16x16x64xbf16, #tpu.memory_space<vmem>>, vector<1x16x64xbf16>,
    %c9_i32_209 = arith.constant 9 : i32
    %836 = arith.index_cast %c9_i32_209 : i32 to index
    %c0_210 = arith.constant 0 : index
    %c0_211 = arith.constant 0 : index
    %837 = vector.load %arg9[%836, %c0_210, %c0_211] : memref<16x16x256xbf16, #tpu.memory_space<vmem>>, vector<1x16x256xbf16>
    %838 = vector.shape_cast %837 : vector<1x16x256xbf16> to vector<16x256xbf16>
    %839 = arith.extf %838 : vector<16x256xbf16> to vector<16x256xf32>
    %cst_212 = arith.constant dense<0.000000e+00> : vector<16x256xf32>
    %840 = tpu.matmul %831, %590, %cst_212 {dimension_numbers = #tpu.dot_dimension_numbers<[1], [0], [0], [1], [0, 0, 1, 1], [], []>} : vector<16x64xbf16>, vector<64x256xbf16>, vector<16x256xf32> -> vector<16x256xf32>
    %841 = arith.addf %839, %840 : vector<16x256xf32>
    %842 = vector.extract_strided_slice %841 {offsets = [0, 0], sizes = [16, 192], strides = [1, 1]} : vector<16x256xf32> to vector<16x192xf32>
    %843 = arith.negf %842 : vector<16x192xf32>
    %844 = math.exp %843 : vector<16x192xf32>
    %cst_213 = arith.constant 1.000000e+00 : f32
    %845 = vector.broadcast %cst_213 : f32 to vector<16x192xf32>
    %846 = arith.addf %845, %844 : vector<16x192xf32>
    %847 = arith.divf %845, %846 : vector<16x192xf32>
    %848 = vector.extract_strided_slice %841 {offsets = [0, 192], sizes = [16, 64], strides = [1, 1]} : vector<16x256xf32> to vector<16x64xf32>
    %849 = math.tanh %848 : vector<16x64xf32>
    %850 = vector.extract_strided_slice %847 {offsets = [0, 64], sizes = [16, 64], strides = [1, 1]} : vector<16x192xf32> to vector<16x64xf32>
    %851 = arith.mulf %850, %827 : vector<16x64xf32>
    %852 = vector.extract_strided_slice %847 {offsets = [0, 0], sizes = [16, 64], strides = [1, 1]} : vector<16x192xf32> to vector<16x64xf32>
    %853 = arith.mulf %852, %849 : vector<16x64xf32>
    %854 = arith.addf %851, %853 : vector<16x64xf32>
    %855 = vector.extract_strided_slice %847 {offsets = [0, 128], sizes = [16, 64], strides = [1, 1]} : vector<16x192xf32> to vector<16x64xf32>
    %856 = math.tanh %854 : vector<16x64xf32>
    %857 = arith.mulf %855, %856 : vector<16x64xf32>
    %858 = arith.truncf %857 : vector<16x64xf32> to vector<16x64xbf16>
    %859 = arith.index_cast %c9_i32_209 : i32 to index
    %c0_214 = arith.constant 0 : index
    %c0_215 = arith.constant 0 : index
    %860 = vector.load %arg10[%859, %c0_214, %c0_215] : memref<16x16x64xbf16, #tpu.memory_space<vmem>>, vector<1x16x64xbf16>
    %861 = vector.shape_cast %860 : vector<1x16x64xbf16> to vector<16x64xbf16>
    %862 = vector.shape_cast %858 : vector<16x64xbf16> to vector<1x16x64xbf16>
    tpu.vector_store %arg10[%859, %c0_214, %c0_215], %862 {strides = array<i32>} : memref<16x16x64xbf16, #tpu.memory_space<vmem>>, vector<1x16x64xbf16>,
    %c10_i32_216 = arith.constant 10 : i32
    %863 = arith.index_cast %c10_i32_216 : i32 to index
    %c0_217 = arith.constant 0 : index
    %c0_218 = arith.constant 0 : index
    %864 = vector.load %arg9[%863, %c0_217, %c0_218] : memref<16x16x256xbf16, #tpu.memory_space<vmem>>, vector<1x16x256xbf16>
    %865 = vector.shape_cast %864 : vector<1x16x256xbf16> to vector<16x256xbf16>
    %866 = arith.extf %865 : vector<16x256xbf16> to vector<16x256xf32>
    %cst_219 = arith.constant dense<0.000000e+00> : vector<16x256xf32>
    %867 = tpu.matmul %858, %590, %cst_219 {dimension_numbers = #tpu.dot_dimension_numbers<[1], [0], [0], [1], [0, 0, 1, 1], [], []>} : vector<16x64xbf16>, vector<64x256xbf16>, vector<16x256xf32> -> vector<16x256xf32>
    %868 = arith.addf %866, %867 : vector<16x256xf32>
    %869 = vector.extract_strided_slice %868 {offsets = [0, 0], sizes = [16, 192], strides = [1, 1]} : vector<16x256xf32> to vector<16x192xf32>
    %870 = arith.negf %869 : vector<16x192xf32>
    %871 = math.exp %870 : vector<16x192xf32>
    %cst_220 = arith.constant 1.000000e+00 : f32
    %872 = vector.broadcast %cst_220 : f32 to vector<16x192xf32>
    %873 = arith.addf %872, %871 : vector<16x192xf32>
    %874 = arith.divf %872, %873 : vector<16x192xf32>
    %875 = vector.extract_strided_slice %868 {offsets = [0, 192], sizes = [16, 64], strides = [1, 1]} : vector<16x256xf32> to vector<16x64xf32>
    %876 = math.tanh %875 : vector<16x64xf32>
    %877 = vector.extract_strided_slice %874 {offsets = [0, 64], sizes = [16, 64], strides = [1, 1]} : vector<16x192xf32> to vector<16x64xf32>
    %878 = arith.mulf %877, %854 : vector<16x64xf32>
    %879 = vector.extract_strided_slice %874 {offsets = [0, 0], sizes = [16, 64], strides = [1, 1]} : vector<16x192xf32> to vector<16x64xf32>
    %880 = arith.mulf %879, %876 : vector<16x64xf32>
    %881 = arith.addf %878, %880 : vector<16x64xf32>
    %882 = vector.extract_strided_slice %874 {offsets = [0, 128], sizes = [16, 64], strides = [1, 1]} : vector<16x192xf32> to vector<16x64xf32>
    %883 = math.tanh %881 : vector<16x64xf32>
    %884 = arith.mulf %882, %883 : vector<16x64xf32>
    %885 = arith.truncf %884 : vector<16x64xf32> to vector<16x64xbf16>
    %886 = arith.index_cast %c10_i32_216 : i32 to index
    %c0_221 = arith.constant 0 : index
    %c0_222 = arith.constant 0 : index
    %887 = vector.load %arg10[%886, %c0_221, %c0_222] : memref<16x16x64xbf16, #tpu.memory_space<vmem>>, vector<1x16x64xbf16>
    %888 = vector.shape_cast %887 : vector<1x16x64xbf16> to vector<16x64xbf16>
    %889 = vector.shape_cast %885 : vector<16x64xbf16> to vector<1x16x64xbf16>
    tpu.vector_store %arg10[%886, %c0_221, %c0_222], %889 {strides = array<i32>} : memref<16x16x64xbf16, #tpu.memory_space<vmem>>, vector<1x16x64xbf16>,
    %c11_i32_223 = arith.constant 11 : i32
    %890 = arith.index_cast %c11_i32_223 : i32 to index
    %c0_224 = arith.constant 0 : index
    %c0_225 = arith.constant 0 : index
    %891 = vector.load %arg9[%890, %c0_224, %c0_225] : memref<16x16x256xbf16, #tpu.memory_space<vmem>>, vector<1x16x256xbf16>
    %892 = vector.shape_cast %891 : vector<1x16x256xbf16> to vector<16x256xbf16>
    %893 = arith.extf %892 : vector<16x256xbf16> to vector<16x256xf32>
    %cst_226 = arith.constant dense<0.000000e+00> : vector<16x256xf32>
    %894 = tpu.matmul %885, %590, %cst_226 {dimension_numbers = #tpu.dot_dimension_numbers<[1], [0], [0], [1], [0, 0, 1, 1], [], []>} : vector<16x64xbf16>, vector<64x256xbf16>, vector<16x256xf32> -> vector<16x256xf32>
    %895 = arith.addf %893, %894 : vector<16x256xf32>
    %896 = vector.extract_strided_slice %895 {offsets = [0, 0], sizes = [16, 192], strides = [1, 1]} : vector<16x256xf32> to vector<16x192xf32>
    %897 = arith.negf %896 : vector<16x192xf32>
    %898 = math.exp %897 : vector<16x192xf32>
    %cst_227 = arith.constant 1.000000e+00 : f32
    %899 = vector.broadcast %cst_227 : f32 to vector<16x192xf32>
    %900 = arith.addf %899, %898 : vector<16x192xf32>
    %901 = arith.divf %899, %900 : vector<16x192xf32>
    %902 = vector.extract_strided_slice %895 {offsets = [0, 192], sizes = [16, 64], strides = [1, 1]} : vector<16x256xf32> to vector<16x64xf32>
    %903 = math.tanh %902 : vector<16x64xf32>
    %904 = vector.extract_strided_slice %901 {offsets = [0, 64], sizes = [16, 64], strides = [1, 1]} : vector<16x192xf32> to vector<16x64xf32>
    %905 = arith.mulf %904, %881 : vector<16x64xf32>
    %906 = vector.extract_strided_slice %901 {offsets = [0, 0], sizes = [16, 64], strides = [1, 1]} : vector<16x192xf32> to vector<16x64xf32>
    %907 = arith.mulf %906, %903 : vector<16x64xf32>
    %908 = arith.addf %905, %907 : vector<16x64xf32>
    %909 = vector.extract_strided_slice %901 {offsets = [0, 128], sizes = [16, 64], strides = [1, 1]} : vector<16x192xf32> to vector<16x64xf32>
    %910 = math.tanh %908 : vector<16x64xf32>
    %911 = arith.mulf %909, %910 : vector<16x64xf32>
    %912 = arith.truncf %911 : vector<16x64xf32> to vector<16x64xbf16>
    %913 = arith.index_cast %c11_i32_223 : i32 to index
    %c0_228 = arith.constant 0 : index
    %c0_229 = arith.constant 0 : index
    %914 = vector.load %arg10[%913, %c0_228, %c0_229] : memref<16x16x64xbf16, #tpu.memory_space<vmem>>, vector<1x16x64xbf16>
    %915 = vector.shape_cast %914 : vector<1x16x64xbf16> to vector<16x64xbf16>
    %916 = vector.shape_cast %912 : vector<16x64xbf16> to vector<1x16x64xbf16>
    tpu.vector_store %arg10[%913, %c0_228, %c0_229], %916 {strides = array<i32>} : memref<16x16x64xbf16, #tpu.memory_space<vmem>>, vector<1x16x64xbf16>,
    %c12_i32_230 = arith.constant 12 : i32
    %917 = arith.index_cast %c12_i32_230 : i32 to index
    %c0_231 = arith.constant 0 : index
    %c0_232 = arith.constant 0 : index
    %918 = vector.load %arg9[%917, %c0_231, %c0_232] : memref<16x16x256xbf16, #tpu.memory_space<vmem>>, vector<1x16x256xbf16>
    %919 = vector.shape_cast %918 : vector<1x16x256xbf16> to vector<16x256xbf16>
    %920 = arith.extf %919 : vector<16x256xbf16> to vector<16x256xf32>
    %cst_233 = arith.constant dense<0.000000e+00> : vector<16x256xf32>
    %921 = tpu.matmul %912, %590, %cst_233 {dimension_numbers = #tpu.dot_dimension_numbers<[1], [0], [0], [1], [0, 0, 1, 1], [], []>} : vector<16x64xbf16>, vector<64x256xbf16>, vector<16x256xf32> -> vector<16x256xf32>
    %922 = arith.addf %920, %921 : vector<16x256xf32>
    %923 = vector.extract_strided_slice %922 {offsets = [0, 0], sizes = [16, 192], strides = [1, 1]} : vector<16x256xf32> to vector<16x192xf32>
    %924 = arith.negf %923 : vector<16x192xf32>
    %925 = math.exp %924 : vector<16x192xf32>
    %cst_234 = arith.constant 1.000000e+00 : f32
    %926 = vector.broadcast %cst_234 : f32 to vector<16x192xf32>
    %927 = arith.addf %926, %925 : vector<16x192xf32>
    %928 = arith.divf %926, %927 : vector<16x192xf32>
    %929 = vector.extract_strided_slice %922 {offsets = [0, 192], sizes = [16, 64], strides = [1, 1]} : vector<16x256xf32> to vector<16x64xf32>
    %930 = math.tanh %929 : vector<16x64xf32>
    %931 = vector.extract_strided_slice %928 {offsets = [0, 64], sizes = [16, 64], strides = [1, 1]} : vector<16x192xf32> to vector<16x64xf32>
    %932 = arith.mulf %931, %908 : vector<16x64xf32>
    %933 = vector.extract_strided_slice %928 {offsets = [0, 0], sizes = [16, 64], strides = [1, 1]} : vector<16x192xf32> to vector<16x64xf32>
    %934 = arith.mulf %933, %930 : vector<16x64xf32>
    %935 = arith.addf %932, %934 : vector<16x64xf32>
    %936 = vector.extract_strided_slice %928 {offsets = [0, 128], sizes = [16, 64], strides = [1, 1]} : vector<16x192xf32> to vector<16x64xf32>
    %937 = math.tanh %935 : vector<16x64xf32>
    %938 = arith.mulf %936, %937 : vector<16x64xf32>
    %939 = arith.truncf %938 : vector<16x64xf32> to vector<16x64xbf16>
    %940 = arith.index_cast %c12_i32_230 : i32 to index
    %c0_235 = arith.constant 0 : index
    %c0_236 = arith.constant 0 : index
    %941 = vector.load %arg10[%940, %c0_235, %c0_236] : memref<16x16x64xbf16, #tpu.memory_space<vmem>>, vector<1x16x64xbf16>
    %942 = vector.shape_cast %941 : vector<1x16x64xbf16> to vector<16x64xbf16>
    %943 = vector.shape_cast %939 : vector<16x64xbf16> to vector<1x16x64xbf16>
    tpu.vector_store %arg10[%940, %c0_235, %c0_236], %943 {strides = array<i32>} : memref<16x16x64xbf16, #tpu.memory_space<vmem>>, vector<1x16x64xbf16>,
    %c13_i32_237 = arith.constant 13 : i32
    %944 = arith.index_cast %c13_i32_237 : i32 to index
    %c0_238 = arith.constant 0 : index
    %c0_239 = arith.constant 0 : index
    %945 = vector.load %arg9[%944, %c0_238, %c0_239] : memref<16x16x256xbf16, #tpu.memory_space<vmem>>, vector<1x16x256xbf16>
    %946 = vector.shape_cast %945 : vector<1x16x256xbf16> to vector<16x256xbf16>
    %947 = arith.extf %946 : vector<16x256xbf16> to vector<16x256xf32>
    %cst_240 = arith.constant dense<0.000000e+00> : vector<16x256xf32>
    %948 = tpu.matmul %939, %590, %cst_240 {dimension_numbers = #tpu.dot_dimension_numbers<[1], [0], [0], [1], [0, 0, 1, 1], [], []>} : vector<16x64xbf16>, vector<64x256xbf16>, vector<16x256xf32> -> vector<16x256xf32>
    %949 = arith.addf %947, %948 : vector<16x256xf32>
    %950 = vector.extract_strided_slice %949 {offsets = [0, 0], sizes = [16, 192], strides = [1, 1]} : vector<16x256xf32> to vector<16x192xf32>
    %951 = arith.negf %950 : vector<16x192xf32>
    %952 = math.exp %951 : vector<16x192xf32>
    %cst_241 = arith.constant 1.000000e+00 : f32
    %953 = vector.broadcast %cst_241 : f32 to vector<16x192xf32>
    %954 = arith.addf %953, %952 : vector<16x192xf32>
    %955 = arith.divf %953, %954 : vector<16x192xf32>
    %956 = vector.extract_strided_slice %949 {offsets = [0, 192], sizes = [16, 64], strides = [1, 1]} : vector<16x256xf32> to vector<16x64xf32>
    %957 = math.tanh %956 : vector<16x64xf32>
    %958 = vector.extract_strided_slice %955 {offsets = [0, 64], sizes = [16, 64], strides = [1, 1]} : vector<16x192xf32> to vector<16x64xf32>
    %959 = arith.mulf %958, %935 : vector<16x64xf32>
    %960 = vector.extract_strided_slice %955 {offsets = [0, 0], sizes = [16, 64], strides = [1, 1]} : vector<16x192xf32> to vector<16x64xf32>
    %961 = arith.mulf %960, %957 : vector<16x64xf32>
    %962 = arith.addf %959, %961 : vector<16x64xf32>
    %963 = vector.extract_strided_slice %955 {offsets = [0, 128], sizes = [16, 64], strides = [1, 1]} : vector<16x192xf32> to vector<16x64xf32>
    %964 = math.tanh %962 : vector<16x64xf32>
    %965 = arith.mulf %963, %964 : vector<16x64xf32>
    %966 = arith.truncf %965 : vector<16x64xf32> to vector<16x64xbf16>
    %967 = arith.index_cast %c13_i32_237 : i32 to index
    %c0_242 = arith.constant 0 : index
    %c0_243 = arith.constant 0 : index
    %968 = vector.load %arg10[%967, %c0_242, %c0_243] : memref<16x16x64xbf16, #tpu.memory_space<vmem>>, vector<1x16x64xbf16>
    %969 = vector.shape_cast %968 : vector<1x16x64xbf16> to vector<16x64xbf16>
    %970 = vector.shape_cast %966 : vector<16x64xbf16> to vector<1x16x64xbf16>
    tpu.vector_store %arg10[%967, %c0_242, %c0_243], %970 {strides = array<i32>} : memref<16x16x64xbf16, #tpu.memory_space<vmem>>, vector<1x16x64xbf16>,
    %c14_i32_244 = arith.constant 14 : i32
    %971 = arith.index_cast %c14_i32_244 : i32 to index
    %c0_245 = arith.constant 0 : index
    %c0_246 = arith.constant 0 : index
    %972 = vector.load %arg9[%971, %c0_245, %c0_246] : memref<16x16x256xbf16, #tpu.memory_space<vmem>>, vector<1x16x256xbf16>
    %973 = vector.shape_cast %972 : vector<1x16x256xbf16> to vector<16x256xbf16>
    %974 = arith.extf %973 : vector<16x256xbf16> to vector<16x256xf32>
    %cst_247 = arith.constant dense<0.000000e+00> : vector<16x256xf32>
    %975 = tpu.matmul %966, %590, %cst_247 {dimension_numbers = #tpu.dot_dimension_numbers<[1], [0], [0], [1], [0, 0, 1, 1], [], []>} : vector<16x64xbf16>, vector<64x256xbf16>, vector<16x256xf32> -> vector<16x256xf32>
    %976 = arith.addf %974, %975 : vector<16x256xf32>
    %977 = vector.extract_strided_slice %976 {offsets = [0, 0], sizes = [16, 192], strides = [1, 1]} : vector<16x256xf32> to vector<16x192xf32>
    %978 = arith.negf %977 : vector<16x192xf32>
    %979 = math.exp %978 : vector<16x192xf32>
    %cst_248 = arith.constant 1.000000e+00 : f32
    %980 = vector.broadcast %cst_248 : f32 to vector<16x192xf32>
    %981 = arith.addf %980, %979 : vector<16x192xf32>
    %982 = arith.divf %980, %981 : vector<16x192xf32>
    %983 = vector.extract_strided_slice %976 {offsets = [0, 192], sizes = [16, 64], strides = [1, 1]} : vector<16x256xf32> to vector<16x64xf32>
    %984 = math.tanh %983 : vector<16x64xf32>
    %985 = vector.extract_strided_slice %982 {offsets = [0, 64], sizes = [16, 64], strides = [1, 1]} : vector<16x192xf32> to vector<16x64xf32>
    %986 = arith.mulf %985, %962 : vector<16x64xf32>
    %987 = vector.extract_strided_slice %982 {offsets = [0, 0], sizes = [16, 64], strides = [1, 1]} : vector<16x192xf32> to vector<16x64xf32>
    %988 = arith.mulf %987, %984 : vector<16x64xf32>
    %989 = arith.addf %986, %988 : vector<16x64xf32>
    %990 = vector.extract_strided_slice %982 {offsets = [0, 128], sizes = [16, 64], strides = [1, 1]} : vector<16x192xf32> to vector<16x64xf32>
    %991 = math.tanh %989 : vector<16x64xf32>
    %992 = arith.mulf %990, %991 : vector<16x64xf32>
    %993 = arith.truncf %992 : vector<16x64xf32> to vector<16x64xbf16>
    %994 = arith.index_cast %c14_i32_244 : i32 to index
    %c0_249 = arith.constant 0 : index
    %c0_250 = arith.constant 0 : index
    %995 = vector.load %arg10[%994, %c0_249, %c0_250] : memref<16x16x64xbf16, #tpu.memory_space<vmem>>, vector<1x16x64xbf16>
    %996 = vector.shape_cast %995 : vector<1x16x64xbf16> to vector<16x64xbf16>
    %997 = vector.shape_cast %993 : vector<16x64xbf16> to vector<1x16x64xbf16>
    tpu.vector_store %arg10[%994, %c0_249, %c0_250], %997 {strides = array<i32>} : memref<16x16x64xbf16, #tpu.memory_space<vmem>>, vector<1x16x64xbf16>,
    %c15_i32_251 = arith.constant 15 : i32
    %998 = arith.index_cast %c15_i32_251 : i32 to index
    %c0_252 = arith.constant 0 : index
    %c0_253 = arith.constant 0 : index
    %999 = vector.load %arg9[%998, %c0_252, %c0_253] : memref<16x16x256xbf16, #tpu.memory_space<vmem>>, vector<1x16x256xbf16>
    %1000 = vector.shape_cast %999 : vector<1x16x256xbf16> to vector<16x256xbf16>
    %1001 = arith.extf %1000 : vector<16x256xbf16> to vector<16x256xf32>
    %cst_254 = arith.constant dense<0.000000e+00> : vector<16x256xf32>
    %1002 = tpu.matmul %993, %590, %cst_254 {dimension_numbers = #tpu.dot_dimension_numbers<[1], [0], [0], [1], [0, 0, 1, 1], [], []>} : vector<16x64xbf16>, vector<64x256xbf16>, vector<16x256xf32> -> vector<16x256xf32>
    %1003 = arith.addf %1001, %1002 : vector<16x256xf32>
    %1004 = vector.extract_strided_slice %1003 {offsets = [0, 0], sizes = [16, 192], strides = [1, 1]} : vector<16x256xf32> to vector<16x192xf32>
    %1005 = arith.negf %1004 : vector<16x192xf32>
    %1006 = math.exp %1005 : vector<16x192xf32>
    %cst_255 = arith.constant 1.000000e+00 : f32
    %1007 = vector.broadcast %cst_255 : f32 to vector<16x192xf32>
    %1008 = arith.addf %1007, %1006 : vector<16x192xf32>
    %1009 = arith.divf %1007, %1008 : vector<16x192xf32>
    %1010 = vector.extract_strided_slice %1003 {offsets = [0, 192], sizes = [16, 64], strides = [1, 1]} : vector<16x256xf32> to vector<16x64xf32>
    %1011 = math.tanh %1010 : vector<16x64xf32>
    %1012 = vector.extract_strided_slice %1009 {offsets = [0, 64], sizes = [16, 64], strides = [1, 1]} : vector<16x192xf32> to vector<16x64xf32>
    %1013 = arith.mulf %1012, %989 : vector<16x64xf32>
    %1014 = vector.extract_strided_slice %1009 {offsets = [0, 0], sizes = [16, 64], strides = [1, 1]} : vector<16x192xf32> to vector<16x64xf32>
    %1015 = arith.mulf %1014, %1011 : vector<16x64xf32>
    %1016 = arith.addf %1013, %1015 : vector<16x64xf32>
    %1017 = vector.extract_strided_slice %1009 {offsets = [0, 128], sizes = [16, 64], strides = [1, 1]} : vector<16x192xf32> to vector<16x64xf32>
    %1018 = math.tanh %1016 : vector<16x64xf32>
    %1019 = arith.mulf %1017, %1018 : vector<16x64xf32>
    %1020 = arith.truncf %1019 : vector<16x64xf32> to vector<16x64xbf16>
    %1021 = arith.index_cast %c15_i32_251 : i32 to index
    %c0_256 = arith.constant 0 : index
    %c0_257 = arith.constant 0 : index
    %1022 = vector.load %arg10[%1021, %c0_256, %c0_257] : memref<16x16x64xbf16, #tpu.memory_space<vmem>>, vector<1x16x64xbf16>
    %1023 = vector.shape_cast %1022 : vector<1x16x64xbf16> to vector<16x64xbf16>
    %1024 = vector.shape_cast %1020 : vector<16x64xbf16> to vector<1x16x64xbf16>
    tpu.vector_store %arg10[%1021, %c0_256, %c0_257], %1024 {strides = array<i32>} : memref<16x16x64xbf16, #tpu.memory_space<vmem>>, vector<1x16x64xbf16>,
    %c16_i32_258 = arith.constant 16 : i32
    %c0_259 = arith.constant 0 : index
    %c0_260 = arith.constant 0 : index
    %c0_261 = arith.constant 0 : index
    %1025 = vector.load %arg10[%c0_259, %c0_260, %c0_261] : memref<16x16x64xbf16, #tpu.memory_space<vmem>>, vector<1x16x32xbf16>
    %1026 = vector.shape_cast %1025 : vector<1x16x32xbf16> to vector<16x32xbf16>
    %c0_262 = arith.constant 0 : index
    %c0_263 = arith.constant 0 : index
    %c0_264 = arith.constant 0 : index
    %1027 = vector.load %arg7[%c0_262, %c0_263, %c0_264] : memref<16x16x64xbf16, #tpu.memory_space<vmem>>, vector<1x16x32xbf16>
    %1028 = vector.shape_cast %1027 : vector<1x16x32xbf16> to vector<16x32xbf16>
    %1029 = vector.shape_cast %1026 : vector<16x32xbf16> to vector<1x16x32xbf16>
    tpu.vector_store %arg7[%c0_262, %c0_263, %c0_264], %1029 {strides = array<i32>} : memref<16x16x64xbf16, #tpu.memory_space<vmem>>, vector<1x16x32xbf16>,
    %c15_265 = arith.constant 15 : index
    %c0_266 = arith.constant 0 : index
    %c32 = arith.constant 32 : index
    %1030 = vector.load %arg10[%c15_265, %c0_266, %c32] : memref<16x16x64xbf16, #tpu.memory_space<vmem>>, vector<1x16x32xbf16>
    %1031 = vector.shape_cast %1030 : vector<1x16x32xbf16> to vector<16x32xbf16>
    %c0_267 = arith.constant 0 : index
    %c0_268 = arith.constant 0 : index
    %c32_269 = arith.constant 32 : index
    %1032 = vector.load %arg7[%c0_267, %c0_268, %c32_269] : memref<16x16x64xbf16, #tpu.memory_space<vmem>>, vector<1x16x32xbf16>
    %1033 = vector.shape_cast %1032 : vector<1x16x32xbf16> to vector<16x32xbf16>
    %1034 = vector.shape_cast %1031 : vector<16x32xbf16> to vector<1x16x32xbf16>
    tpu.vector_store %arg7[%c0_267, %c0_268, %c32_269], %1034 {strides = array<i32>} : memref<16x16x64xbf16, #tpu.memory_space<vmem>>, vector<1x16x32xbf16>,
    %c1_270 = arith.constant 1 : index
    %c0_271 = arith.constant 0 : index
    %c0_272 = arith.constant 0 : index
    %1035 = vector.load %arg10[%c1_270, %c0_271, %c0_272] : memref<16x16x64xbf16, #tpu.memory_space<vmem>>, vector<1x16x32xbf16>
    %1036 = vector.shape_cast %1035 : vector<1x16x32xbf16> to vector<16x32xbf16>
    %c1_273 = arith.constant 1 : index
    %c0_274 = arith.constant 0 : index
    %c0_275 = arith.constant 0 : index
    %1037 = vector.load %arg7[%c1_273, %c0_274, %c0_275] : memref<16x16x64xbf16, #tpu.memory_space<vmem>>, vector<1x16x32xbf16>
    %1038 = vector.shape_cast %1037 : vector<1x16x32xbf16> to vector<16x32xbf16>
    %1039 = vector.shape_cast %1036 : vector<16x32xbf16> to vector<1x16x32xbf16>
    tpu.vector_store %arg7[%c1_273, %c0_274, %c0_275], %1039 {strides = array<i32>} : memref<16x16x64xbf16, #tpu.memory_space<vmem>>, vector<1x16x32xbf16>,
    %c14_276 = arith.constant 14 : index
    %c0_277 = arith.constant 0 : index
    %c32_278 = arith.constant 32 : index
    %1040 = vector.load %arg10[%c14_276, %c0_277, %c32_278] : memref<16x16x64xbf16, #tpu.memory_space<vmem>>, vector<1x16x32xbf16>
    %1041 = vector.shape_cast %1040 : vector<1x16x32xbf16> to vector<16x32xbf16>
    %c1_279 = arith.constant 1 : index
    %c0_280 = arith.constant 0 : index
    %c32_281 = arith.constant 32 : index
    %1042 = vector.load %arg7[%c1_279, %c0_280, %c32_281] : memref<16x16x64xbf16, #tpu.memory_space<vmem>>, vector<1x16x32xbf16>
    %1043 = vector.shape_cast %1042 : vector<1x16x32xbf16> to vector<16x32xbf16>
    %1044 = vector.shape_cast %1041 : vector<16x32xbf16> to vector<1x16x32xbf16>
    tpu.vector_store %arg7[%c1_279, %c0_280, %c32_281], %1044 {strides = array<i32>} : memref<16x16x64xbf16, #tpu.memory_space<vmem>>, vector<1x16x32xbf16>,
    %c2_282 = arith.constant 2 : index
    %c0_283 = arith.constant 0 : index
    %c0_284 = arith.constant 0 : index
    %1045 = vector.load %arg10[%c2_282, %c0_283, %c0_284] : memref<16x16x64xbf16, #tpu.memory_space<vmem>>, vector<1x16x32xbf16>
    %1046 = vector.shape_cast %1045 : vector<1x16x32xbf16> to vector<16x32xbf16>
    %c2_285 = arith.constant 2 : index
    %c0_286 = arith.constant 0 : index
    %c0_287 = arith.constant 0 : index
    %1047 = vector.load %arg7[%c2_285, %c0_286, %c0_287] : memref<16x16x64xbf16, #tpu.memory_space<vmem>>, vector<1x16x32xbf16>
    %1048 = vector.shape_cast %1047 : vector<1x16x32xbf16> to vector<16x32xbf16>
    %1049 = vector.shape_cast %1046 : vector<16x32xbf16> to vector<1x16x32xbf16>
    tpu.vector_store %arg7[%c2_285, %c0_286, %c0_287], %1049 {strides = array<i32>} : memref<16x16x64xbf16, #tpu.memory_space<vmem>>, vector<1x16x32xbf16>,
    %c13_288 = arith.constant 13 : index
    %c0_289 = arith.constant 0 : index
    %c32_290 = arith.constant 32 : index
    %1050 = vector.load %arg10[%c13_288, %c0_289, %c32_290] : memref<16x16x64xbf16, #tpu.memory_space<vmem>>, vector<1x16x32xbf16>
    %1051 = vector.shape_cast %1050 : vector<1x16x32xbf16> to vector<16x32xbf16>
    %c2_291 = arith.constant 2 : index
    %c0_292 = arith.constant 0 : index
    %c32_293 = arith.constant 32 : index
    %1052 = vector.load %arg7[%c2_291, %c0_292, %c32_293] : memref<16x16x64xbf16, #tpu.memory_space<vmem>>, vector<1x16x32xbf16>
    %1053 = vector.shape_cast %1052 : vector<1x16x32xbf16> to vector<16x32xbf16>
    %1054 = vector.shape_cast %1051 : vector<16x32xbf16> to vector<1x16x32xbf16>
    tpu.vector_store %arg7[%c2_291, %c0_292, %c32_293], %1054 {strides = array<i32>} : memref<16x16x64xbf16, #tpu.memory_space<vmem>>, vector<1x16x32xbf16>,
    %c3_294 = arith.constant 3 : index
    %c0_295 = arith.constant 0 : index
    %c0_296 = arith.constant 0 : index
    %1055 = vector.load %arg10[%c3_294, %c0_295, %c0_296] : memref<16x16x64xbf16, #tpu.memory_space<vmem>>, vector<1x16x32xbf16>
    %1056 = vector.shape_cast %1055 : vector<1x16x32xbf16> to vector<16x32xbf16>
    %c3_297 = arith.constant 3 : index
    %c0_298 = arith.constant 0 : index
    %c0_299 = arith.constant 0 : index
    %1057 = vector.load %arg7[%c3_297, %c0_298, %c0_299] : memref<16x16x64xbf16, #tpu.memory_space<vmem>>, vector<1x16x32xbf16>
    %1058 = vector.shape_cast %1057 : vector<1x16x32xbf16> to vector<16x32xbf16>
    %1059 = vector.shape_cast %1056 : vector<16x32xbf16> to vector<1x16x32xbf16>
    tpu.vector_store %arg7[%c3_297, %c0_298, %c0_299], %1059 {strides = array<i32>} : memref<16x16x64xbf16, #tpu.memory_space<vmem>>, vector<1x16x32xbf16>,
    %c12_300 = arith.constant 12 : index
    %c0_301 = arith.constant 0 : index
    %c32_302 = arith.constant 32 : index
    %1060 = vector.load %arg10[%c12_300, %c0_301, %c32_302] : memref<16x16x64xbf16, #tpu.memory_space<vmem>>, vector<1x16x32xbf16>
    %1061 = vector.shape_cast %1060 : vector<1x16x32xbf16> to vector<16x32xbf16>
    %c3_303 = arith.constant 3 : index
    %c0_304 = arith.constant 0 : index
    %c32_305 = arith.constant 32 : index
    %1062 = vector.load %arg7[%c3_303, %c0_304, %c32_305] : memref<16x16x64xbf16, #tpu.memory_space<vmem>>, vector<1x16x32xbf16>
    %1063 = vector.shape_cast %1062 : vector<1x16x32xbf16> to vector<16x32xbf16>
    %1064 = vector.shape_cast %1061 : vector<16x32xbf16> to vector<1x16x32xbf16>
    tpu.vector_store %arg7[%c3_303, %c0_304, %c32_305], %1064 {strides = array<i32>} : memref<16x16x64xbf16, #tpu.memory_space<vmem>>, vector<1x16x32xbf16>,
    %c4_306 = arith.constant 4 : index
    %c0_307 = arith.constant 0 : index
    %c0_308 = arith.constant 0 : index
    %1065 = vector.load %arg10[%c4_306, %c0_307, %c0_308] : memref<16x16x64xbf16, #tpu.memory_space<vmem>>, vector<1x16x32xbf16>
    %1066 = vector.shape_cast %1065 : vector<1x16x32xbf16> to vector<16x32xbf16>
    %c4_309 = arith.constant 4 : index
    %c0_310 = arith.constant 0 : index
    %c0_311 = arith.constant 0 : index
    %1067 = vector.load %arg7[%c4_309, %c0_310, %c0_311] : memref<16x16x64xbf16, #tpu.memory_space<vmem>>, vector<1x16x32xbf16>
    %1068 = vector.shape_cast %1067 : vector<1x16x32xbf16> to vector<16x32xbf16>
    %1069 = vector.shape_cast %1066 : vector<16x32xbf16> to vector<1x16x32xbf16>
    tpu.vector_store %arg7[%c4_309, %c0_310, %c0_311], %1069 {strides = array<i32>} : memref<16x16x64xbf16, #tpu.memory_space<vmem>>, vector<1x16x32xbf16>,
    %c11_312 = arith.constant 11 : index
    %c0_313 = arith.constant 0 : index
    %c32_314 = arith.constant 32 : index
    %1070 = vector.load %arg10[%c11_312, %c0_313, %c32_314] : memref<16x16x64xbf16, #tpu.memory_space<vmem>>, vector<1x16x32xbf16>
    %1071 = vector.shape_cast %1070 : vector<1x16x32xbf16> to vector<16x32xbf16>
    %c4_315 = arith.constant 4 : index
    %c0_316 = arith.constant 0 : index
    %c32_317 = arith.constant 32 : index
    %1072 = vector.load %arg7[%c4_315, %c0_316, %c32_317] : memref<16x16x64xbf16, #tpu.memory_space<vmem>>, vector<1x16x32xbf16>
    %1073 = vector.shape_cast %1072 : vector<1x16x32xbf16> to vector<16x32xbf16>
    %1074 = vector.shape_cast %1071 : vector<16x32xbf16> to vector<1x16x32xbf16>
    tpu.vector_store %arg7[%c4_315, %c0_316, %c32_317], %1074 {strides = array<i32>} : memref<16x16x64xbf16, #tpu.memory_space<vmem>>, vector<1x16x32xbf16>,
    %c5_318 = arith.constant 5 : index
    %c0_319 = arith.constant 0 : index
    %c0_320 = arith.constant 0 : index
    %1075 = vector.load %arg10[%c5_318, %c0_319, %c0_320] : memref<16x16x64xbf16, #tpu.memory_space<vmem>>, vector<1x16x32xbf16>
    %1076 = vector.shape_cast %1075 : vector<1x16x32xbf16> to vector<16x32xbf16>
    %c5_321 = arith.constant 5 : index
    %c0_322 = arith.constant 0 : index
    %c0_323 = arith.constant 0 : index
    %1077 = vector.load %arg7[%c5_321, %c0_322, %c0_323] : memref<16x16x64xbf16, #tpu.memory_space<vmem>>, vector<1x16x32xbf16>
    %1078 = vector.shape_cast %1077 : vector<1x16x32xbf16> to vector<16x32xbf16>
    %1079 = vector.shape_cast %1076 : vector<16x32xbf16> to vector<1x16x32xbf16>
    tpu.vector_store %arg7[%c5_321, %c0_322, %c0_323], %1079 {strides = array<i32>} : memref<16x16x64xbf16, #tpu.memory_space<vmem>>, vector<1x16x32xbf16>,
    %c10_324 = arith.constant 10 : index
    %c0_325 = arith.constant 0 : index
    %c32_326 = arith.constant 32 : index
    %1080 = vector.load %arg10[%c10_324, %c0_325, %c32_326] : memref<16x16x64xbf16, #tpu.memory_space<vmem>>, vector<1x16x32xbf16>
    %1081 = vector.shape_cast %1080 : vector<1x16x32xbf16> to vector<16x32xbf16>
    %c5_327 = arith.constant 5 : index
    %c0_328 = arith.constant 0 : index
    %c32_329 = arith.constant 32 : index
    %1082 = vector.load %arg7[%c5_327, %c0_328, %c32_329] : memref<16x16x64xbf16, #tpu.memory_space<vmem>>, vector<1x16x32xbf16>
    %1083 = vector.shape_cast %1082 : vector<1x16x32xbf16> to vector<16x32xbf16>
    %1084 = vector.shape_cast %1081 : vector<16x32xbf16> to vector<1x16x32xbf16>
    tpu.vector_store %arg7[%c5_327, %c0_328, %c32_329], %1084 {strides = array<i32>} : memref<16x16x64xbf16, #tpu.memory_space<vmem>>, vector<1x16x32xbf16>,
    %c6_330 = arith.constant 6 : index
    %c0_331 = arith.constant 0 : index
    %c0_332 = arith.constant 0 : index
    %1085 = vector.load %arg10[%c6_330, %c0_331, %c0_332] : memref<16x16x64xbf16, #tpu.memory_space<vmem>>, vector<1x16x32xbf16>
    %1086 = vector.shape_cast %1085 : vector<1x16x32xbf16> to vector<16x32xbf16>
    %c6_333 = arith.constant 6 : index
    %c0_334 = arith.constant 0 : index
    %c0_335 = arith.constant 0 : index
    %1087 = vector.load %arg7[%c6_333, %c0_334, %c0_335] : memref<16x16x64xbf16, #tpu.memory_space<vmem>>, vector<1x16x32xbf16>
    %1088 = vector.shape_cast %1087 : vector<1x16x32xbf16> to vector<16x32xbf16>
    %1089 = vector.shape_cast %1086 : vector<16x32xbf16> to vector<1x16x32xbf16>
    tpu.vector_store %arg7[%c6_333, %c0_334, %c0_335], %1089 {strides = array<i32>} : memref<16x16x64xbf16, #tpu.memory_space<vmem>>, vector<1x16x32xbf16>,
    %c9_336 = arith.constant 9 : index
    %c0_337 = arith.constant 0 : index
    %c32_338 = arith.constant 32 : index
    %1090 = vector.load %arg10[%c9_336, %c0_337, %c32_338] : memref<16x16x64xbf16, #tpu.memory_space<vmem>>, vector<1x16x32xbf16>
    %1091 = vector.shape_cast %1090 : vector<1x16x32xbf16> to vector<16x32xbf16>
    %c6_339 = arith.constant 6 : index
    %c0_340 = arith.constant 0 : index
    %c32_341 = arith.constant 32 : index
    %1092 = vector.load %arg7[%c6_339, %c0_340, %c32_341] : memref<16x16x64xbf16, #tpu.memory_space<vmem>>, vector<1x16x32xbf16>
    %1093 = vector.shape_cast %1092 : vector<1x16x32xbf16> to vector<16x32xbf16>
    %1094 = vector.shape_cast %1091 : vector<16x32xbf16> to vector<1x16x32xbf16>
    tpu.vector_store %arg7[%c6_339, %c0_340, %c32_341], %1094 {strides = array<i32>} : memref<16x16x64xbf16, #tpu.memory_space<vmem>>, vector<1x16x32xbf16>,
    %c7_342 = arith.constant 7 : index
    %c0_343 = arith.constant 0 : index
    %c0_344 = arith.constant 0 : index
    %1095 = vector.load %arg10[%c7_342, %c0_343, %c0_344] : memref<16x16x64xbf16, #tpu.memory_space<vmem>>, vector<1x16x32xbf16>
    %1096 = vector.shape_cast %1095 : vector<1x16x32xbf16> to vector<16x32xbf16>
    %c7_345 = arith.constant 7 : index
    %c0_346 = arith.constant 0 : index
    %c0_347 = arith.constant 0 : index
    %1097 = vector.load %arg7[%c7_345, %c0_346, %c0_347] : memref<16x16x64xbf16, #tpu.memory_space<vmem>>, vector<1x16x32xbf16>
    %1098 = vector.shape_cast %1097 : vector<1x16x32xbf16> to vector<16x32xbf16>
    %1099 = vector.shape_cast %1096 : vector<16x32xbf16> to vector<1x16x32xbf16>
    tpu.vector_store %arg7[%c7_345, %c0_346, %c0_347], %1099 {strides = array<i32>} : memref<16x16x64xbf16, #tpu.memory_space<vmem>>, vector<1x16x32xbf16>,
    %c8_348 = arith.constant 8 : index
    %c0_349 = arith.constant 0 : index
    %c32_350 = arith.constant 32 : index
    %1100 = vector.load %arg10[%c8_348, %c0_349, %c32_350] : memref<16x16x64xbf16, #tpu.memory_space<vmem>>, vector<1x16x32xbf16>
    %1101 = vector.shape_cast %1100 : vector<1x16x32xbf16> to vector<16x32xbf16>
    %c7_351 = arith.constant 7 : index
    %c0_352 = arith.constant 0 : index
    %c32_353 = arith.constant 32 : index
    %1102 = vector.load %arg7[%c7_351, %c0_352, %c32_353] : memref<16x16x64xbf16, #tpu.memory_space<vmem>>, vector<1x16x32xbf16>
    %1103 = vector.shape_cast %1102 : vector<1x16x32xbf16> to vector<16x32xbf16>
    %1104 = vector.shape_cast %1101 : vector<16x32xbf16> to vector<1x16x32xbf16>
    tpu.vector_store %arg7[%c7_351, %c0_352, %c32_353], %1104 {strides = array<i32>} : memref<16x16x64xbf16, #tpu.memory_space<vmem>>, vector<1x16x32xbf16>,
    %c8_354 = arith.constant 8 : index
    %c0_355 = arith.constant 0 : index
    %c0_356 = arith.constant 0 : index
    %1105 = vector.load %arg10[%c8_354, %c0_355, %c0_356] : memref<16x16x64xbf16, #tpu.memory_space<vmem>>, vector<1x16x32xbf16>
    %1106 = vector.shape_cast %1105 : vector<1x16x32xbf16> to vector<16x32xbf16>
    %c8_357 = arith.constant 8 : index
    %c0_358 = arith.constant 0 : index
    %c0_359 = arith.constant 0 : index
    %1107 = vector.load %arg7[%c8_357, %c0_358, %c0_359] : memref<16x16x64xbf16, #tpu.memory_space<vmem>>, vector<1x16x32xbf16>
    %1108 = vector.shape_cast %1107 : vector<1x16x32xbf16> to vector<16x32xbf16>
    %1109 = vector.shape_cast %1106 : vector<16x32xbf16> to vector<1x16x32xbf16>
    tpu.vector_store %arg7[%c8_357, %c0_358, %c0_359], %1109 {strides = array<i32>} : memref<16x16x64xbf16, #tpu.memory_space<vmem>>, vector<1x16x32xbf16>,
    %c7_360 = arith.constant 7 : index
    %c0_361 = arith.constant 0 : index
    %c32_362 = arith.constant 32 : index
    %1110 = vector.load %arg10[%c7_360, %c0_361, %c32_362] : memref<16x16x64xbf16, #tpu.memory_space<vmem>>, vector<1x16x32xbf16>
    %1111 = vector.shape_cast %1110 : vector<1x16x32xbf16> to vector<16x32xbf16>
    %c8_363 = arith.constant 8 : index
    %c0_364 = arith.constant 0 : index
    %c32_365 = arith.constant 32 : index
    %1112 = vector.load %arg7[%c8_363, %c0_364, %c32_365] : memref<16x16x64xbf16, #tpu.memory_space<vmem>>, vector<1x16x32xbf16>
    %1113 = vector.shape_cast %1112 : vector<1x16x32xbf16> to vector<16x32xbf16>
    %1114 = vector.shape_cast %1111 : vector<16x32xbf16> to vector<1x16x32xbf16>
    tpu.vector_store %arg7[%c8_363, %c0_364, %c32_365], %1114 {strides = array<i32>} : memref<16x16x64xbf16, #tpu.memory_space<vmem>>, vector<1x16x32xbf16>,
    %c9_366 = arith.constant 9 : index
    %c0_367 = arith.constant 0 : index
    %c0_368 = arith.constant 0 : index
    %1115 = vector.load %arg10[%c9_366, %c0_367, %c0_368] : memref<16x16x64xbf16, #tpu.memory_space<vmem>>, vector<1x16x32xbf16>
    %1116 = vector.shape_cast %1115 : vector<1x16x32xbf16> to vector<16x32xbf16>
    %c9_369 = arith.constant 9 : index
    %c0_370 = arith.constant 0 : index
    %c0_371 = arith.constant 0 : index
    %1117 = vector.load %arg7[%c9_369, %c0_370, %c0_371] : memref<16x16x64xbf16, #tpu.memory_space<vmem>>, vector<1x16x32xbf16>
    %1118 = vector.shape_cast %1117 : vector<1x16x32xbf16> to vector<16x32xbf16>
    %1119 = vector.shape_cast %1116 : vector<16x32xbf16> to vector<1x16x32xbf16>
    tpu.vector_store %arg7[%c9_369, %c0_370, %c0_371], %1119 {strides = array<i32>} : memref<16x16x64xbf16, #tpu.memory_space<vmem>>, vector<1x16x32xbf16>,
    %c6_372 = arith.constant 6 : index
    %c0_373 = arith.constant 0 : index
    %c32_374 = arith.constant 32 : index
    %1120 = vector.load %arg10[%c6_372, %c0_373, %c32_374] : memref<16x16x64xbf16, #tpu.memory_space<vmem>>, vector<1x16x32xbf16>
    %1121 = vector.shape_cast %1120 : vector<1x16x32xbf16> to vector<16x32xbf16>
    %c9_375 = arith.constant 9 : index
    %c0_376 = arith.constant 0 : index
    %c32_377 = arith.constant 32 : index
    %1122 = vector.load %arg7[%c9_375, %c0_376, %c32_377] : memref<16x16x64xbf16, #tpu.memory_space<vmem>>, vector<1x16x32xbf16>
    %1123 = vector.shape_cast %1122 : vector<1x16x32xbf16> to vector<16x32xbf16>
    %1124 = vector.shape_cast %1121 : vector<16x32xbf16> to vector<1x16x32xbf16>
    tpu.vector_store %arg7[%c9_375, %c0_376, %c32_377], %1124 {strides = array<i32>} : memref<16x16x64xbf16, #tpu.memory_space<vmem>>, vector<1x16x32xbf16>,
    %c10_378 = arith.constant 10 : index
    %c0_379 = arith.constant 0 : index
    %c0_380 = arith.constant 0 : index
    %1125 = vector.load %arg10[%c10_378, %c0_379, %c0_380] : memref<16x16x64xbf16, #tpu.memory_space<vmem>>, vector<1x16x32xbf16>
    %1126 = vector.shape_cast %1125 : vector<1x16x32xbf16> to vector<16x32xbf16>
    %c10_381 = arith.constant 10 : index
    %c0_382 = arith.constant 0 : index
    %c0_383 = arith.constant 0 : index
    %1127 = vector.load %arg7[%c10_381, %c0_382, %c0_383] : memref<16x16x64xbf16, #tpu.memory_space<vmem>>, vector<1x16x32xbf16>
    %1128 = vector.shape_cast %1127 : vector<1x16x32xbf16> to vector<16x32xbf16>
    %1129 = vector.shape_cast %1126 : vector<16x32xbf16> to vector<1x16x32xbf16>
    tpu.vector_store %arg7[%c10_381, %c0_382, %c0_383], %1129 {strides = array<i32>} : memref<16x16x64xbf16, #tpu.memory_space<vmem>>, vector<1x16x32xbf16>,
    %c5_384 = arith.constant 5 : index
    %c0_385 = arith.constant 0 : index
    %c32_386 = arith.constant 32 : index
    %1130 = vector.load %arg10[%c5_384, %c0_385, %c32_386] : memref<16x16x64xbf16, #tpu.memory_space<vmem>>, vector<1x16x32xbf16>
    %1131 = vector.shape_cast %1130 : vector<1x16x32xbf16> to vector<16x32xbf16>
    %c10_387 = arith.constant 10 : index
    %c0_388 = arith.constant 0 : index
    %c32_389 = arith.constant 32 : index
    %1132 = vector.load %arg7[%c10_387, %c0_388, %c32_389] : memref<16x16x64xbf16, #tpu.memory_space<vmem>>, vector<1x16x32xbf16>
    %1133 = vector.shape_cast %1132 : vector<1x16x32xbf16> to vector<16x32xbf16>
    %1134 = vector.shape_cast %1131 : vector<16x32xbf16> to vector<1x16x32xbf16>
    tpu.vector_store %arg7[%c10_387, %c0_388, %c32_389], %1134 {strides = array<i32>} : memref<16x16x64xbf16, #tpu.memory_space<vmem>>, vector<1x16x32xbf16>,
    %c11_390 = arith.constant 11 : index
    %c0_391 = arith.constant 0 : index
    %c0_392 = arith.constant 0 : index
    %1135 = vector.load %arg10[%c11_390, %c0_391, %c0_392] : memref<16x16x64xbf16, #tpu.memory_space<vmem>>, vector<1x16x32xbf16>
    %1136 = vector.shape_cast %1135 : vector<1x16x32xbf16> to vector<16x32xbf16>
    %c11_393 = arith.constant 11 : index
    %c0_394 = arith.constant 0 : index
    %c0_395 = arith.constant 0 : index
    %1137 = vector.load %arg7[%c11_393, %c0_394, %c0_395] : memref<16x16x64xbf16, #tpu.memory_space<vmem>>, vector<1x16x32xbf16>
    %1138 = vector.shape_cast %1137 : vector<1x16x32xbf16> to vector<16x32xbf16>
    %1139 = vector.shape_cast %1136 : vector<16x32xbf16> to vector<1x16x32xbf16>
    tpu.vector_store %arg7[%c11_393, %c0_394, %c0_395], %1139 {strides = array<i32>} : memref<16x16x64xbf16, #tpu.memory_space<vmem>>, vector<1x16x32xbf16>,
    %c4_396 = arith.constant 4 : index
    %c0_397 = arith.constant 0 : index
    %c32_398 = arith.constant 32 : index
    %1140 = vector.load %arg10[%c4_396, %c0_397, %c32_398] : memref<16x16x64xbf16, #tpu.memory_space<vmem>>, vector<1x16x32xbf16>
    %1141 = vector.shape_cast %1140 : vector<1x16x32xbf16> to vector<16x32xbf16>
    %c11_399 = arith.constant 11 : index
    %c0_400 = arith.constant 0 : index
    %c32_401 = arith.constant 32 : index
    %1142 = vector.load %arg7[%c11_399, %c0_400, %c32_401] : memref<16x16x64xbf16, #tpu.memory_space<vmem>>, vector<1x16x32xbf16>
    %1143 = vector.shape_cast %1142 : vector<1x16x32xbf16> to vector<16x32xbf16>
    %1144 = vector.shape_cast %1141 : vector<16x32xbf16> to vector<1x16x32xbf16>
    tpu.vector_store %arg7[%c11_399, %c0_400, %c32_401], %1144 {strides = array<i32>} : memref<16x16x64xbf16, #tpu.memory_space<vmem>>, vector<1x16x32xbf16>,
    %c12_402 = arith.constant 12 : index
    %c0_403 = arith.constant 0 : index
    %c0_404 = arith.constant 0 : index
    %1145 = vector.load %arg10[%c12_402, %c0_403, %c0_404] : memref<16x16x64xbf16, #tpu.memory_space<vmem>>, vector<1x16x32xbf16>
    %1146 = vector.shape_cast %1145 : vector<1x16x32xbf16> to vector<16x32xbf16>
    %c12_405 = arith.constant 12 : index
    %c0_406 = arith.constant 0 : index
    %c0_407 = arith.constant 0 : index
    %1147 = vector.load %arg7[%c12_405, %c0_406, %c0_407] : memref<16x16x64xbf16, #tpu.memory_space<vmem>>, vector<1x16x32xbf16>
    %1148 = vector.shape_cast %1147 : vector<1x16x32xbf16> to vector<16x32xbf16>
    %1149 = vector.shape_cast %1146 : vector<16x32xbf16> to vector<1x16x32xbf16>
    tpu.vector_store %arg7[%c12_405, %c0_406, %c0_407], %1149 {strides = array<i32>} : memref<16x16x64xbf16, #tpu.memory_space<vmem>>, vector<1x16x32xbf16>,
    %c3_408 = arith.constant 3 : index
    %c0_409 = arith.constant 0 : index
    %c32_410 = arith.constant 32 : index
    %1150 = vector.load %arg10[%c3_408, %c0_409, %c32_410] : memref<16x16x64xbf16, #tpu.memory_space<vmem>>, vector<1x16x32xbf16>
    %1151 = vector.shape_cast %1150 : vector<1x16x32xbf16> to vector<16x32xbf16>
    %c12_411 = arith.constant 12 : index
    %c0_412 = arith.constant 0 : index
    %c32_413 = arith.constant 32 : index
    %1152 = vector.load %arg7[%c12_411, %c0_412, %c32_413] : memref<16x16x64xbf16, #tpu.memory_space<vmem>>, vector<1x16x32xbf16>
    %1153 = vector.shape_cast %1152 : vector<1x16x32xbf16> to vector<16x32xbf16>
    %1154 = vector.shape_cast %1151 : vector<16x32xbf16> to vector<1x16x32xbf16>
    tpu.vector_store %arg7[%c12_411, %c0_412, %c32_413], %1154 {strides = array<i32>} : memref<16x16x64xbf16, #tpu.memory_space<vmem>>, vector<1x16x32xbf16>,
    %c13_414 = arith.constant 13 : index
    %c0_415 = arith.constant 0 : index
    %c0_416 = arith.constant 0 : index
    %1155 = vector.load %arg10[%c13_414, %c0_415, %c0_416] : memref<16x16x64xbf16, #tpu.memory_space<vmem>>, vector<1x16x32xbf16>
    %1156 = vector.shape_cast %1155 : vector<1x16x32xbf16> to vector<16x32xbf16>
    %c13_417 = arith.constant 13 : index
    %c0_418 = arith.constant 0 : index
    %c0_419 = arith.constant 0 : index
    %1157 = vector.load %arg7[%c13_417, %c0_418, %c0_419] : memref<16x16x64xbf16, #tpu.memory_space<vmem>>, vector<1x16x32xbf16>
    %1158 = vector.shape_cast %1157 : vector<1x16x32xbf16> to vector<16x32xbf16>
    %1159 = vector.shape_cast %1156 : vector<16x32xbf16> to vector<1x16x32xbf16>
    tpu.vector_store %arg7[%c13_417, %c0_418, %c0_419], %1159 {strides = array<i32>} : memref<16x16x64xbf16, #tpu.memory_space<vmem>>, vector<1x16x32xbf16>,
    %c2_420 = arith.constant 2 : index
    %c0_421 = arith.constant 0 : index
    %c32_422 = arith.constant 32 : index
    %1160 = vector.load %arg10[%c2_420, %c0_421, %c32_422] : memref<16x16x64xbf16, #tpu.memory_space<vmem>>, vector<1x16x32xbf16>
    %1161 = vector.shape_cast %1160 : vector<1x16x32xbf16> to vector<16x32xbf16>
    %c13_423 = arith.constant 13 : index
    %c0_424 = arith.constant 0 : index
    %c32_425 = arith.constant 32 : index
    %1162 = vector.load %arg7[%c13_423, %c0_424, %c32_425] : memref<16x16x64xbf16, #tpu.memory_space<vmem>>, vector<1x16x32xbf16>
    %1163 = vector.shape_cast %1162 : vector<1x16x32xbf16> to vector<16x32xbf16>
    %1164 = vector.shape_cast %1161 : vector<16x32xbf16> to vector<1x16x32xbf16>
    tpu.vector_store %arg7[%c13_423, %c0_424, %c32_425], %1164 {strides = array<i32>} : memref<16x16x64xbf16, #tpu.memory_space<vmem>>, vector<1x16x32xbf16>,
    %c14_426 = arith.constant 14 : index
    %c0_427 = arith.constant 0 : index
    %c0_428 = arith.constant 0 : index
    %1165 = vector.load %arg10[%c14_426, %c0_427, %c0_428] : memref<16x16x64xbf16, #tpu.memory_space<vmem>>, vector<1x16x32xbf16>
    %1166 = vector.shape_cast %1165 : vector<1x16x32xbf16> to vector<16x32xbf16>
    %c14_429 = arith.constant 14 : index
    %c0_430 = arith.constant 0 : index
    %c0_431 = arith.constant 0 : index
    %1167 = vector.load %arg7[%c14_429, %c0_430, %c0_431] : memref<16x16x64xbf16, #tpu.memory_space<vmem>>, vector<1x16x32xbf16>
    %1168 = vector.shape_cast %1167 : vector<1x16x32xbf16> to vector<16x32xbf16>
    %1169 = vector.shape_cast %1166 : vector<16x32xbf16> to vector<1x16x32xbf16>
    tpu.vector_store %arg7[%c14_429, %c0_430, %c0_431], %1169 {strides = array<i32>} : memref<16x16x64xbf16, #tpu.memory_space<vmem>>, vector<1x16x32xbf16>,
    %c1_432 = arith.constant 1 : index
    %c0_433 = arith.constant 0 : index
    %c32_434 = arith.constant 32 : index
    %1170 = vector.load %arg10[%c1_432, %c0_433, %c32_434] : memref<16x16x64xbf16, #tpu.memory_space<vmem>>, vector<1x16x32xbf16>
    %1171 = vector.shape_cast %1170 : vector<1x16x32xbf16> to vector<16x32xbf16>
    %c14_435 = arith.constant 14 : index
    %c0_436 = arith.constant 0 : index
    %c32_437 = arith.constant 32 : index
    %1172 = vector.load %arg7[%c14_435, %c0_436, %c32_437] : memref<16x16x64xbf16, #tpu.memory_space<vmem>>, vector<1x16x32xbf16>
    %1173 = vector.shape_cast %1172 : vector<1x16x32xbf16> to vector<16x32xbf16>
    %1174 = vector.shape_cast %1171 : vector<16x32xbf16> to vector<1x16x32xbf16>
    tpu.vector_store %arg7[%c14_435, %c0_436, %c32_437], %1174 {strides = array<i32>} : memref<16x16x64xbf16, #tpu.memory_space<vmem>>, vector<1x16x32xbf16>,
    %c15_438 = arith.constant 15 : index
    %c0_439 = arith.constant 0 : index
    %c0_440 = arith.constant 0 : index
    %1175 = vector.load %arg10[%c15_438, %c0_439, %c0_440] : memref<16x16x64xbf16, #tpu.memory_space<vmem>>, vector<1x16x32xbf16>
    %1176 = vector.shape_cast %1175 : vector<1x16x32xbf16> to vector<16x32xbf16>
    %c15_441 = arith.constant 15 : index
    %c0_442 = arith.constant 0 : index
    %c0_443 = arith.constant 0 : index
    %1177 = vector.load %arg7[%c15_441, %c0_442, %c0_443] : memref<16x16x64xbf16, #tpu.memory_space<vmem>>, vector<1x16x32xbf16>
    %1178 = vector.shape_cast %1177 : vector<1x16x32xbf16> to vector<16x32xbf16>
    %1179 = vector.shape_cast %1176 : vector<16x32xbf16> to vector<1x16x32xbf16>
    tpu.vector_store %arg7[%c15_441, %c0_442, %c0_443], %1179 {strides = array<i32>} : memref<16x16x64xbf16, #tpu.memory_space<vmem>>, vector<1x16x32xbf16>,
    %c0_444 = arith.constant 0 : index
    %c0_445 = arith.constant 0 : index
    %c32_446 = arith.constant 32 : index
    %1180 = vector.load %arg10[%c0_444, %c0_445, %c32_446] : memref<16x16x64xbf16, #tpu.memory_space<vmem>>, vector<1x16x32xbf16>
    %1181 = vector.shape_cast %1180 : vector<1x16x32xbf16> to vector<16x32xbf16>
    %c15_447 = arith.constant 15 : index
    %c0_448 = arith.constant 0 : index
    %c32_449 = arith.constant 32 : index
    %1182 = vector.load %arg7[%c15_447, %c0_448, %c32_449] : memref<16x16x64xbf16, #tpu.memory_space<vmem>>, vector<1x16x32xbf16>
    %1183 = vector.shape_cast %1182 : vector<1x16x32xbf16> to vector<16x32xbf16>
    %1184 = vector.shape_cast %1181 : vector<16x32xbf16> to vector<1x16x32xbf16>
    tpu.vector_store %arg7[%c15_447, %c0_448, %c32_449], %1184 {strides = array<i32>} : memref<16x16x64xbf16, #tpu.memory_space<vmem>>, vector<1x16x32xbf16>,
    return
  }
  func.func @transform_0(%arg0: i32) -> (i32, i32, i32) {
    %c0_i32 = arith.constant 0 : i32
    %c0_i32_0 = arith.constant 0 : i32
    %c0_i32_1 = arith.constant 0 : i32
    return %c0_i32, %arg0, %c0_i32_0 : i32, i32, i32
  }
  func.func @transform_1(%arg0: i32) -> (i32, i32) {
    %c0_i32 = arith.constant 0 : i32
    %c0_i32_0 = arith.constant 0 : i32
    %c0_i32_1 = arith.constant 0 : i32
    return %c0_i32, %c0_i32_0 : i32, i32
  }
  func.func @transform_2(%arg0: i32) -> (i32, i32) {
    %c0_i32 = arith.constant 0 : i32
    %c0_i32_0 = arith.constant 0 : i32
    %c0_i32_1 = arith.constant 0 : i32
    return %c0_i32, %c0_i32_0 : i32, i32
  }
  func.func @transform_3(%arg0: i32) -> (i32, i32) {
    %c0_i32 = arith.constant 0 : i32
    %c0_i32_0 = arith.constant 0 : i32
    %c0_i32_1 = arith.constant 0 : i32
    return %c0_i32, %c0_i32_0 : i32, i32
  }
  func.func @transform_4(%arg0: i32) -> (i32, i32) {
    %c0_i32 = arith.constant 0 : i32
    %c0_i32_0 = arith.constant 0 : i32
    %c0_i32_1 = arith.constant 0 : i32
    return %c0_i32, %c0_i32_0 : i32, i32
  }
  func.func @transform_5(%arg0: i32) -> (i32, i32) {
    %c0_i32 = arith.constant 0 : i32
    %c0_i32_0 = arith.constant 0 : i32
    %c0_i32_1 = arith.constant 0 : i32
    return %c0_i32, %c0_i32_0 : i32, i32
  }
  func.func @transform_6(%arg0: i32) -> (i32, i32, i32) {
    %c0_i32 = arith.constant 0 : i32
    %c0_i32_0 = arith.constant 0 : i32
    %c0_i32_1 = arith.constant 0 : i32
    return %c0_i32, %arg0, %c0_i32_0 : i32, i32, i32
  }
}

</mosaic_0001>

<llo_original>
// kernel: tpu_custom_call.1
$region0: #{tpu_custom_call.1}
  #allocation0 [shape = 'u32[]', space=smem, size = 0x4, offset = 0x4, fixed_abs, tag = 'smem constant byte address 0x4 - core index']
  #allocation1 [shape = 'u32[72,128]{1,0:T(1,128)}', space=vmem, size = 0x9000, scoped, tag = 'internal scratch']
  #allocation2 [shape = 'bf16[16,16,64]{2,1,0:T(8,128)(2,1)}', space=vmem, size = 0x10000, scoped, tag = 'scratch operand']
  #allocation3 [shape = 'bf16[16,16,256]{2,1,0:T(8,128)(2,1)}', space=vmem, size = 0x20000, scoped, tag = 'scratch operand']
  #allocation4 [shape = 'bf16[16,16,64]{2,1,0:T(8,128)(2,1)}', space=vmem, size = 0x10000, scoped, tag = 'scratch operand']
  #allocation15 [shape = 's32[]', space=sflag, size = 0x4, offset = 0, fixed_abs, tag = 'sflag constant byte address 0x0 - dummy sync flag']
  #allocation17 [shape = 's32[]', space=sflag, size = 0x4, offset = 0, fixed_abs, tag = 'sflag constant byte address 0x0 - dummy sync flag']
  %s0 = inlined_call_operand.hbm [shape: bf16[16,32,256], index: 0, kind: input, shape index: {}]
  %s1 = inlined_call_operand.hbm [shape: bf16[64,256], index: 1, kind: input, shape index: {}]
  %s2 = inlined_call_operand.hbm [shape: bf16[64,256], index: 2, kind: input, shape index: {}]
  %s3 = inlined_call_operand.hbm [shape: bf16[64,256], index: 3, kind: input, shape index: {}]
  %s4 = inlined_call_operand.vmem [shape: f32[1,256], index: 4, kind: input, shape index: {}]
  %s5 = inlined_call_operand.hbm [shape: bf16[64,256], index: 5, kind: input, shape index: {}]
  %s6 = inlined_call_operand.hbm [shape: bf16[16,32,64], index: 6, kind: output, shape index: {}]
  %s7 = sld [smem:[#allocation0]]
  $region77: #{tpu_custom_call.1} parent=0
    _
  %s9 = ssub.s32 1, %s7
  %s10 = scalar_select 0, %s9, %s7
  $region1: #{tpu_custom_call.1} parent=0
    #allocation5 [shape = 'u8[262144]{0}', space=vmem, size = 0x40000, scoped, tag = 'input window, operand 0']
    #allocation6 [shape = 's32[2]{0}', space=sflag, size = 0x8, scoped, tag = 'scoped memory for tpu_custom_call.1']
    #allocation7 [shape = 's32[2]{0}', space=sflag, size = 0x8, scoped, tag = 'scoped memory for tpu_custom_call.1']
    #allocation8 [shape = 'u8[32768]{0}', space=vmem, size = 0x8000, scoped, tag = 'input window, operand 1, single buffered']
    #allocation9 [shape = 's32[1]{0}', space=sflag, size = 0x4, scoped, tag = 'scoped memory for tpu_custom_call.1']
    #allocation10 [shape = 'u8[32768]{0}', space=vmem, size = 0x8000, scoped, tag = 'input window, operand 2, single buffered']
    #allocation11 [shape = 'u8[32768]{0}', space=vmem, size = 0x8000, scoped, tag = 'input window, operand 3, single buffered']
    #allocation12 [shape = 's32[1]{0}', space=sflag, size = 0x4, scoped, tag = 'scoped memory for tpu_custom_call.1']
    #allocation13 [shape = 'u8[32768]{0}', space=vmem, size = 0x8000, scoped, tag = 'input window, operand 5, single buffered']
    #allocation14 [shape = 'u8[131072]{0}', space=vmem, size = 0x20000, scoped, tag = 'output window, operand 0']
    %11 = vsyncpa [#allocation6], 0
    %s12 = scalar_lea.sflag [#allocation6], 1
    %13 = vsyncpa %s12, 0
    %14 = vsyncpa [#allocation9], 0
    %15 = vsyncpa [#allocation12], 0
    %16 = vsyncpa [#allocation7], 0
    %s17 = scalar_lea.sflag [#allocation7], 1
    %18 = vsyncpa %s17, 0
    loop: start=0, step=1, limit=4
    $region2: #{tpu_custom_call.1} parent=1 // loop_pre_header
      _
    $region3: #{tpu_custom_call.1} parent=1 // loop_header
      %s20 = sphi 0, %s24
      %p21 = scmp.ge.s32.totalorder %s20, 4
      %s30 = sphi 0, %s32
      %s33 = sphi 0, %s30
      %s34 = sphi 0, %s33
      %s50 = sphi 0, %s34
      %s54 = sphi 0, %s54
      %s56 = sphi 0, %s54
      %s57 = sphi 0, %s56
      %s71 = sphi 0, %s57
      %s75 = sphi 0, %s75
      %s77 = sphi 0, %s75
      %s78 = sphi 0, %s77
      %s92 = sphi 0, %s78
      %s96 = sphi 0, %s96
      %s98 = sphi 0, %s96
      %s99 = sphi 0, %s98
      %s113 = sphi 0, %s99
      %s117 = sphi 0, %s117
      %s119 = sphi 0, %s117
      %s120 = sphi 0, %s119
      %s134 = sphi 0, %s120
      %s138 = sphi 0, %s138
      %s140 = sphi 0, %s138
      %s141 = sphi 0, %s140
      %s155 = sphi 0, %s141
      %s161 = sphi 0, %s163
      %s164 = sphi 0, %s161
      %s165 = sphi 0, %s164
      %s181 = sphi 0, %s165
    $region4: #{tpu_custom_call.1} parent=1 // loop_header_branch
      %23 = sbr.rel (%p21) target = $region8
    $region5: #{tpu_custom_call.1} parent=1 // loop_body
      %s25 = ssub.s32 %s20, 1
      %s26 = ssub.s32 %s20, 2
      %s27 = sadd.s32 %s20, 1
      %s28 = ssub.s32 %s20, %s27
      %p29 = scmp.eq.s32.totalorder %s28, 0
      %s31 = sadd.s32 %s30, 1
      %s32 = scalar_select %p29, %s30, %s31
      %p35 = pneg %p29
      %p36 = scmp.eq.s32.totalorder %s20, 1
      %p37 = por %p35, %p36
      %p38 = scmp.ne.s32.totalorder %s30, %s33
      %p39 = scmp.eq.s32.totalorder %s20, 0
      %p40 = por %p38, %p39
      %p41 = scmp.ne.s32.totalorder %s30, %s33
      %p42 = scmp.eq.s32.totalorder %s25, 1
      %p43 = por %p41, %p42
      %p44 = scmp.ne.s32.totalorder %s33, %s34
      %p45 = scmp.eq.s32.totalorder %s25, 0
      %p46 = por %p44, %p45
      %p47 = scmp.ne.s32.totalorder %s33, %s34
      %p48 = scmp.eq.s32.totalorder %s26, 1
      %p49 = por %p47, %p48
      %p51 = scmp.ne.s32.totalorder %s34, %s50
      %p52 = scmp.eq.s32.totalorder %s26, 0
      %p53 = por %p51, %p52
      %s55 = sadd.s32 %s54, 1
      %p58 = scmp.eq.s32.totalorder %s20, 1
      %p59 = scmp.ne.s32.totalorder %s54, %s56
      %p60 = scmp.eq.s32.totalorder %s20, 0
      %p61 = por %p59, %p60
      %p62 = scmp.ne.s32.totalorder %s54, %s56
      %p63 = scmp.eq.s32.totalorder %s25, 1
      %p64 = por %p62, %p63
      %p65 = scmp.ne.s32.totalorder %s56, %s57
      %p66 = scmp.eq.s32.totalorder %s25, 0
      %p67 = por %p65, %p66
      %p68 = scmp.ne.s32.totalorder %s56, %s57
      %p69 = scmp.eq.s32.totalorder %s26, 1
      %p70 = por %p68, %p69
      %p72 = scmp.ne.s32.totalorder %s57, %s71
      %p73 = scmp.eq.s32.totalorder %s26, 0
      %p74 = por %p72, %p73
      %s76 = sadd.s32 %s75, 1
      %p79 = scmp.eq.s32.totalorder %s20, 1
      %p80 = scmp.ne.s32.totalorder %s75, %s77
      %p81 = scmp.eq.s32.totalorder %s20, 0
      %p82 = por %p80, %p81
      %p83 = scmp.ne.s32.totalorder %s75, %s77
      %p84 = scmp.eq.s32.totalorder %s25, 1
      %p85 = por %p83, %p84
      %p86 = scmp.ne.s32.totalorder %s77, %s78
      %p87 = scmp.eq.s32.totalorder %s25, 0
      %p88 = por %p86, %p87
      %p89 = scmp.ne.s32.totalorder %s77, %s78
      %p90 = scmp.eq.s32.totalorder %s26, 1
      %p91 = por %p89, %p90
      %p93 = scmp.ne.s32.totalorder %s78, %s92
      %p94 = scmp.eq.s32.totalorder %s26, 0
      %p95 = por %p93, %p94
      %s97 = sadd.s32 %s96, 1
      %p100 = scmp.eq.s32.totalorder %s20, 1
      %p101 = scmp.ne.s32.totalorder %s96, %s98
      %p102 = scmp.eq.s32.totalorder %s20, 0
      %p103 = por %p101, %p102
      %p104 = scmp.ne.s32.totalorder %s96, %s98
      %p105 = scmp.eq.s32.totalorder %s25, 1
      %p106 = por %p104, %p105
      %p107 = scmp.ne.s32.totalorder %s98, %s99
      %p108 = scmp.eq.s32.totalorder %s25, 0
      %p109 = por %p107, %p108
      %p110 = scmp.ne.s32.totalorder %s98, %s99
      %p111 = scmp.eq.s32.totalorder %s26, 1
      %p112 = por %p110, %p111
      %p114 = scmp.ne.s32.totalorder %s99, %s113
      %p115 = scmp.eq.s32.totalorder %s26, 0
      %p116 = por %p114, %p115
      %s118 = sadd.s32 %s117, 1
      %p121 = scmp.eq.s32.totalorder %s20, 1
      %p122 = scmp.ne.s32.totalorder %s117, %s119
      %p123 = scmp.eq.s32.totalorder %s20, 0
      %p124 = por %p122, %p123
      %p125 = scmp.ne.s32.totalorder %s117, %s119
      %p126 = scmp.eq.s32.totalorder %s25, 1
      %p127 = por %p125, %p126
      %p128 = scmp.ne.s32.totalorder %s119, %s120
      %p129 = scmp.eq.s32.totalorder %s25, 0
      %p130 = por %p128, %p129
      %p131 = scmp.ne.s32.totalorder %s119, %s120
      %p132 = scmp.eq.s32.totalorder %s26, 1
      %p133 = por %p131, %p132
      %p135 = scmp.ne.s32.totalorder %s120, %s134
      %p136 = scmp.eq.s32.totalorder %s26, 0
      %p137 = por %p135, %p136
      %s139 = sadd.s32 %s138, 1
      %p142 = scmp.eq.s32.totalorder %s20, 1
      %p143 = scmp.ne.s32.totalorder %s138, %s140
      %p144 = scmp.eq.s32.totalorder %s20, 0
      %p145 = por %p143, %p144
      %p146 = scmp.ne.s32.totalorder %s138, %s140
      %p147 = scmp.eq.s32.totalorder %s25, 1
      %p148 = por %p146, %p147
      %p149 = scmp.ne.s32.totalorder %s140, %s141
      %p150 = scmp.eq.s32.totalorder %s25, 0
      %p151 = por %p149, %p150
      %p152 = scmp.ne.s32.totalorder %s140, %s141
      %p153 = scmp.eq.s32.totalorder %s26, 1
      %p154 = por %p152, %p153
      %p156 = scmp.ne.s32.totalorder %s141, %s155
      %p157 = scmp.eq.s32.totalorder %s26, 0
      %p158 = por %p156, %p157
      %s159 = ssub.s32 %s20, %s27
      %p160 = scmp.eq.s32.totalorder %s159, 0
      %s162 = sadd.s32 %s161, 1
      %s163 = scalar_select %p160, %s161, %s162
      %p166 = pneg %p160
      %p167 = scmp.eq.s32.totalorder %s20, 1
      %p168 = por %p166, %p167
      %p169 = scmp.ne.s32.totalorder %s161, %s164
      %p170 = scmp.eq.s32.totalorder %s20, 0
      %p171 = por %p169, %p170
      %p172 = scmp.ne.s32.totalorder %s161, %s164
      %p173 = scmp.eq.s32.totalorder %s25, 1
      %p174 = por %p172, %p173
      %p175 = scmp.ne.s32.totalorder %s164, %s165
      %p176 = scmp.eq.s32.totalorder %s25, 0
      %p177 = por %p175, %p176
      %p178 = scmp.ne.s32.totalorder %s164, %s165
      %p179 = scmp.eq.s32.totalorder %s26, 1
      %p180 = por %p178, %p179
      %p182 = scmp.ne.s32.totalorder %s165, %s181
      %p183 = scmp.eq.s32.totalorder %s26, 0
      %p184 = por %p182, %p183
      %p185 = scmp.le.s32.totalorder 1, %s20
      %p186 = scmp.lt.s32.totalorder %s20, 3
      %p187 = pnand %p185, %p186
      %p188 = pneg %p187
      // Predicated region
      $region9: #{tpu_custom_call.1} parent=5 // pred_check
        _
      $region10: #{tpu_custom_call.1} parent=5 // pred_check_branch
        %190 = sbr.rel (%p187) target = $region12
      $region11: #{tpu_custom_call.1} parent=5 // pred_region
        %s191 = ssub.s32 %s20, 1
        // Predicated region
        $region13: #{tpu_custom_call.1} parent=11 // pred_check
          %p192 = pneg %p67
        $region14: #{tpu_custom_call.1} parent=11 // pred_check_branch
          %194 = sbr.rel (%p192) target = $region16
        $region15: #{tpu_custom_call.1} parent=11 // pred_region
          %196 = vsyncadd [#allocation9], 0
          %s197 = sshll.u32 %s1, 4
          %s198 = int_to_ptr.hbm [resolvable:$true] %s197
          %s199 = sshll.u32 [#allocation8], 4
          %s200 = int_to_ptr.vmem [resolvable:$true] %s199
          %205 = dma.hbm_to_vmem [thread:$0]  %s198, 1024, %s200, [#allocation9], 128, 128, 8
        $region16: #{tpu_custom_call.1} parent=11 // pred_fallthru
          _
        // Predicated region
        $region17: #{tpu_custom_call.1} parent=11 // pred_check
          %p206 = pneg %p88
        $region18: #{tpu_custom_call.1} parent=11 // pred_check_branch
          %208 = sbr.rel (%p206) target = $region20
        $region19: #{tpu_custom_call.1} parent=11 // pred_region
          %210 = vsyncadd [#allocation9], 0
          %s211 = sshll.u32 %s2, 4
          %s212 = int_to_ptr.hbm [resolvable:$true] %s211
          %s213 = sshll.u32 [#allocation10], 4
          %s214 = int_to_ptr.vmem [resolvable:$true] %s213
          %219 = dma.hbm_to_vmem [thread:$0]  %s212, 1024, %s214, [#allocation9], 128, 128, 8
        $region20: #{tpu_custom_call.1} parent=11 // pred_fallthru
          _
        // Predicated region
        $region21: #{tpu_custom_call.1} parent=11 // pred_check
          %p220 = pneg %p109
        $region22: #{tpu_custom_call.1} parent=11 // pred_check_branch
          %222 = sbr.rel (%p220) target = $region24
        $region23: #{tpu_custom_call.1} parent=11 // pred_region
          %224 = vsyncadd [#allocation12], 0
          %s225 = sshll.u32 %s3, 4
          %s226 = int_to_ptr.hbm [resolvable:$true] %s225
          %s227 = sshll.u32 [#allocation11], 4
          %s228 = int_to_ptr.vmem [resolvable:$true] %s227
          %233 = dma.hbm_to_vmem [thread:$0]  %s226, 1024, %s228, [#allocation12], 128, 128, 8
        $region24: #{tpu_custom_call.1} parent=11 // pred_fallthru
          _
        // Predicated region
        $region25: #{tpu_custom_call.1} parent=11 // pred_check
          %p234 = pneg %p130
        $region26: #{tpu_custom_call.1} parent=11 // pred_check_branch
          %236 = sbr.rel (%p234) target = $region28
        $region27: #{tpu_custom_call.1} parent=11 // pred_region
          _
        $region28: #{tpu_custom_call.1} parent=11 // pred_fallthru
          _
        // Predicated region
        $region29: #{tpu_custom_call.1} parent=11 // pred_check
          %p237 = pneg %p151
        $region30: #{tpu_custom_call.1} parent=11 // pred_check_branch
          %239 = sbr.rel (%p237) target = $region32
        $region31: #{tpu_custom_call.1} parent=11 // pred_region
          %241 = vsyncadd [#allocation12], 0
          %s242 = sshll.u32 %s5, 4
          %s243 = int_to_ptr.hbm [resolvable:$true] %s242
          %s244 = sshll.u32 [#allocation13], 4
          %s245 = int_to_ptr.vmem [resolvable:$true] %s244
          %250 = dma.hbm_to_vmem [thread:$0]  %s243, 1024, %s245, [#allocation12], 128, 128, 8
        $region32: #{tpu_custom_call.1} parent=11 // pred_fallthru
          _
      $region12: #{tpu_custom_call.1} parent=5 // pred_fallthru
        _
      %p251 = scmp.lt.s32.totalorder %s20, 2
      // Predicated region
      $region33: #{tpu_custom_call.1} parent=5 // pred_check
        %p252 = pneg %p251
      $region34: #{tpu_custom_call.1} parent=5 // pred_check_branch
        %254 = sbr.rel (%p252) target = $region36
      $region35: #{tpu_custom_call.1} parent=5 // pred_region
        // Predicated region
        $region37: #{tpu_custom_call.1} parent=35 // pred_check
          %p255 = pneg %p40
        $region38: #{tpu_custom_call.1} parent=35 // pred_check_branch
          %257 = sbr.rel (%p255) target = $region40
        $region39: #{tpu_custom_call.1} parent=35 // pred_region
          #allocation16 [shape = 'u32[6]{0}', space=smem, size = 0x18, scoped, tag = 'DMA stride descriptor']
          %s258 = sand.u32 %s30, 1
          %s259 = scalar_lea.sflag [#allocation6], %s258
          %s260 = sand.u32 %s30, 1
          %s261 = smul.addr %s260, 256
          %s262 = scalar_lea.vmem [#allocation5], %s261
          %s263 = smul.u32 2, %s20
          %265 = vsyncadd %s259, 0
          %s266 = smul.addr %s263, 2
          %s267 = smul.addr %s266, 4
          %s268 = scalar_lea.hbm %s0, %s267
          %s270 = sshll.u32 1, 14
          %s271 = sxor.u32 4294967295, %s270
          %s273 = sld [smem:[#allocation0]]
          %s274 = sadd.s32 2, %s273
          %s276 = sshll.u32 7, 26
          %s277 = sxor.u32 4294967295, %s276
          %s278 = sand.u32 0, %s277
          %s279 = sshll.u32 %s274, 26
          %s280 = sor.u32 %s278, %s279
          %s281 = sshll.u32 %s268, 4
          %s282 = int_to_ptr.hbm [resolvable:$true] %s281
          %s283 = sshll.u32 %s262, 4
          %s284 = int_to_ptr.vmem [resolvable:$true] %s283
          %290 = sst [smem:[#allocation16]] 512
          %s291 = scalar_lea.smem [#allocation16], 1
          %292 = sst [smem:[%s291]] 256
          %s293 = scalar_lea.smem [#allocation16], 2
          %294 = sst [smem:[%s293]] 2
          %s295 = scalar_lea.smem [#allocation16], 3
          %296 = sst [smem:[%s295]] 128
          %s297 = scalar_lea.smem [#allocation16], 4
          %298 = sst [smem:[%s297]] 128
          %s299 = scalar_lea.smem [#allocation16], 5
          %300 = sst [smem:[%s299]] 8
          %302 = dma.general %s282, 4096, %s284, %s259, [#allocation15], [#allocation16], %s280, 0
        $region40: #{tpu_custom_call.1} parent=35 // pred_fallthru
          _
      $region36: #{tpu_custom_call.1} parent=5 // pred_fallthru
        _
      %p303 = scmp.le.s32.totalorder 1, %s20
      %p304 = scmp.lt.s32.totalorder %s20, 3
      %p305 = pnand %p303, %p304
      %p306 = pneg %p305
      // Predicated region
      $region41: #{tpu_custom_call.1} parent=5 // pred_check
        _
      $region42: #{tpu_custom_call.1} parent=5 // pred_check_branch
        %308 = sbr.rel (%p305) target = $region44
      $region43: #{tpu_custom_call.1} parent=5 // pred_region
        %s309 = ssub.s32 %s20, 1
        %s310 = sand.u32 %s33, 1
        %s311 = scalar_lea.sflag [#allocation6], %s310
        %s312 = sand.u32 %s33, 1
        %s313 = smul.addr %s312, 256
        %s314 = scalar_lea.vmem [#allocation5], %s313
        // Predicated region
        $region45: #{tpu_custom_call.1} parent=43 // pred_check
          %p315 = pneg %p46
        $region46: #{tpu_custom_call.1} parent=43 // pred_check_branch
          %317 = sbr.rel (%p315) target = $region48
        $region47: #{tpu_custom_call.1} parent=43 // pred_region
          %319 = dma.done %s311, 4096
        $region48: #{tpu_custom_call.1} parent=43 // pred_fallthru
          _
        // Predicated region
        $region49: #{tpu_custom_call.1} parent=43 // pred_check
          %p320 = pneg %p67
        $region50: #{tpu_custom_call.1} parent=43 // pred_check_branch
          %322 = sbr.rel (%p320) target = $region52
        $region51: #{tpu_custom_call.1} parent=43 // pred_region
          %324 = dma.done [#allocation9], 1024
        $region52: #{tpu_custom_call.1} parent=43 // pred_fallthru
          _
        // Predicated region
        $region53: #{tpu_custom_call.1} parent=43 // pred_check
          %p325 = pneg %p88
        $region54: #{tpu_custom_call.1} parent=43 // pred_check_branch
          %327 = sbr.rel (%p325) target = $region56
        $region55: #{tpu_custom_call.1} parent=43 // pred_region
          %329 = dma.done [#allocation9], 1024
        $region56: #{tpu_custom_call.1} parent=43 // pred_fallthru
          _
        // Predicated region
        $region57: #{tpu_custom_call.1} parent=43 // pred_check
          %p330 = pneg %p109
        $region58: #{tpu_custom_call.1} parent=43 // pred_check_branch
          %332 = sbr.rel (%p330) target = $region60
        $region59: #{tpu_custom_call.1} parent=43 // pred_region
          %334 = dma.done [#allocation12], 1024
        $region60: #{tpu_custom_call.1} parent=43 // pred_fallthru
          _
        // Predicated region
        $region61: #{tpu_custom_call.1} parent=43 // pred_check
          %p335 = pneg %p151
        $region62: #{tpu_custom_call.1} parent=43 // pred_check_branch
          %337 = sbr.rel (%p335) target = $region64
        $region63: #{tpu_custom_call.1} parent=43 // pred_region
          %339 = dma.done [#allocation12], 1024
        $region64: #{tpu_custom_call.1} parent=43 // pred_fallthru
          _
        %s340 = sand.u32 %s33, 1
        %s341 = scalar_lea.sflag [#allocation6], %s340
        %s342 = sand.u32 %s33, 1
        %s343 = smul.addr %s342, 256
        %s344 = scalar_lea.vmem [#allocation5], %s343
        %p345 = pneg %p46
        %p346 = pneg %p43
        %p347 = pneg %p67
        %p348 = pneg %p64
        %p349 = pneg %p88
        %p350 = pneg %p85
        %p351 = pneg %p109
        %p352 = pneg %p106
        %p353 = pneg %p130
        %p354 = pneg %p127
        %p355 = pneg %p151
        %p356 = pneg %p148
        %p357 = pneg %p177
        %p358 = pneg %p174
        %s359 = sand.u32 %s164, 1
        %s360 = scalar_lea.sflag [#allocation7], %s359
        %s361 = sand.u32 %s164, 1
        %s362 = smul.addr %s361, 128
        %s363 = scalar_lea.vmem [#allocation14], %s362
        %s364 = smul.u32 2, %s25
        %s365 = smul.u32 2, %s25
        %v367 = vld [vmem:[#allocation8] sm:$0xff]
        %v368 = vld [vmem:[#allocation8 + $0x8] sm:$0xff]
        %v369 = vld [vmem:[#allocation8 + $0x10] sm:$0xff]
        %v370 = vld [vmem:[#allocation8 + $0x18] sm:$0xff]
        %v371 = vld [vmem:[#allocation8 + $0x20] sm:$0xff]
        %v372 = vld [vmem:[#allocation8 + $0x28] sm:$0xff]
        %v373 = vld [vmem:[#allocation8 + $0x30] sm:$0xff]
        %v374 = vld [vmem:[#allocation8 + $0x38] sm:$0xff]
        %v375 = vld [vmem:[%s314] sm:$0xff]
        %v376 = vld [vmem:[%s314 + $0x8] sm:$0xff]
        %v377 = vunpack.c.l.bf16 %v375
        %v378 = vunpack.c.h.bf16 %v375
        %v379 = vunpack.c.l.bf16 %v376
        %v380 = vunpack.c.h.bf16 %v376
        %v389 = vunpack.c.l.b16 %v367
        %v390 = vunpack.c.h.b16 %v367
        %v391 = vunpack.c.l.b16 %v368
        %v392 = vunpack.c.h.b16 %v368
        %v393 = vunpack.c.l.b16 %v369
        %v394 = vunpack.c.h.b16 %v369
        %v395 = vunpack.c.l.b16 %v370
        %v396 = vunpack.c.h.b16 %v370
        %v397 = vunpack.c.l.b16 %v371
        %v398 = vunpack.c.h.b16 %v371
        %v399 = vunpack.c.l.b16 %v372
        %v400 = vunpack.c.h.b16 %v372
        %v401 = vunpack.c.l.b16 %v373
        %v402 = vunpack.c.h.b16 %v373
        %v403 = vunpack.c.l.b16 %v374
        %v404 = vunpack.c.h.b16 %v374
        %v405 = vpack.c.b16 %v391, %v389
        %v406 = vpack.c.b16 %v392, %v390
        %v407 = vpack.c.b16 %v395, %v393
        %v408 = vpack.c.b16 %v396, %v394
        %v409 = vpack.c.b16 %v399, %v397
        %v410 = vpack.c.b16 %v400, %v398
        %v411 = vpack.c.b16 %v403, %v401
        %v412 = vpack.c.b16 %v404, %v402
        %vm421 = vcmask 523264
        %v423 = vsel %vm421, 0, 0
        %425 = vmatpush.bf16.msra.mxu0 0
        %426 = vmatpush.bf16.msra.mxu0 0
        %427 = vmatpush.bf16.msra.mxu0 0
        %428 = vmatpush.bf16.msra.mxu0 0
        %429 = vmatpush.bf16.msra.mxu0 %v411
        %430 = vmatpush.bf16.msra.mxu0 %v409
        %431 = vmatpush.bf16.msra.mxu0 %v407
        %432 = vmatpush.bf16.msra.mxu0 %v405
        %433 = vmatmul.bf16.gmra.mxu0 %v423
        %v434 = vpop.f32.mrf.mxu0
        %v435 = vadd.f32 0.0, %v434
        %v436 = vpop.f32.mrf.mxu0
        %v437 = vadd.f32 0.0, %v436
        %438 = vdwg.mxu0
        %439 = vmatpush.bf16.msra.mxu0 0
        %440 = vmatpush.bf16.msra.mxu0 0
        %441 = vmatpush.bf16.msra.mxu0 0
        %442 = vmatpush.bf16.msra.mxu0 0
        %443 = vmatpush.bf16.msra.mxu0 %v412
        %444 = vmatpush.bf16.msra.mxu0 %v410
        %445 = vmatpush.bf16.msra.mxu0 %v408
        %446 = vmatpush.bf16.msra.mxu0 %v406
        %447 = vmatmul.bf16.gmra.mxu0 %v423
        %v448 = vpop.f32.mrf.mxu0
        %v449 = vadd.f32 0.0, %v448
        %v450 = vpop.f32.mrf.mxu0
        %v451 = vadd.f32 0.0, %v450
        %452 = vdwg.mxu0
        %v453 = vadd.f32 %v377, %v435
        %v454 = vadd.f32 %v378, %v449
        %v455 = vadd.f32 %v379, %v437
        %v456 = vadd.f32 %v380, %v451
        %v457 = vxor.u32 %v453, 2147483648
        %v458 = vxor.u32 %v454, 2147483648
        %v459 = vxor.u32 %v455, 2147483648
        %v460 = vxor.u32 %v456, 2147483648
        %v461 = vmul.f32 %v457, 1.442695
        %v462 = vpow.pop %v461
        %v463 = vmul.f32 %v458, 1.442695
        %v464 = vpow.pop %v463
        %v465 = vmul.f32 %v459, 1.442695
        %v466 = vpow.pop %v465
        %v467 = vmul.f32 %v460, 1.442695
        %v468 = vpow.pop %v467
        %v469 = vadd.f32 %v462, 1.0
        %v470 = vadd.f32 %v464, 1.0
        %v471 = vadd.f32 %v466, 1.0
        %v472 = vadd.f32 %v468, 1.0
        %v473 = vrcp.pop %v469
        %v474 = vmul.f32 %v469, %v473
        %v475 = vsub.f32 1.0, %v474
        %v476 = vmul.f32 %v473, %v475
        %v477 = vadd.f32 %v473, %v476
        %vm478 = vweird.f32 %v469
        %vm479 = vweird.f32 %v473
        %vm480 = vmor %vm478, %vm479
        %v481 = vsel %vm480, %v473, %v477
        %v482 = vand.u32 2147483647, %v469
        %vm483 = vcmp.eq.f32.partialorder %v482, 8.507059e+37
        %v484 = vand.u32 %v469, 2147483648
        %v485 = vor.u32 1.1754944e-38, %v484
        %v486 = vsel %vm483, %v485, %v481
        %v487 = vmul.f32 1.0, %v486
        %v488 = vrcp.pop %v470
        %v489 = vmul.f32 %v470, %v488
        %v490 = vsub.f32 1.0, %v489
        %v491 = vmul.f32 %v488, %v490
        %v492 = vadd.f32 %v488, %v491
        %vm493 = vweird.f32 %v470
        %vm494 = vweird.f32 %v488
        %vm495 = vmor %vm493, %vm494
        %v496 = vsel %vm495, %v488, %v492
        %v497 = vand.u32 2147483647, %v470
        %vm498 = vcmp.eq.f32.partialorder %v497, 8.507059e+37
        %v499 = vand.u32 %v470, 2147483648
        %v500 = vor.u32 1.1754944e-38, %v499
        %v501 = vsel %vm498, %v500, %v496
        %v502 = vmul.f32 1.0, %v501
        %v503 = vrcp.pop %v471
        %v504 = vmul.f32 %v471, %v503
        %v505 = vsub.f32 1.0, %v504
        %v506 = vmul.f32 %v503, %v505
        %v507 = vadd.f32 %v503, %v506
        %vm508 = vweird.f32 %v471
        %vm509 = vweird.f32 %v503
        %vm510 = vmor %vm508, %vm509
        %v511 = vsel %vm510, %v503, %v507
        %v512 = vand.u32 2147483647, %v471
        %vm513 = vcmp.eq.f32.partialorder %v512, 8.507059e+37
        %v514 = vand.u32 %v471, 2147483648
        %v515 = vor.u32 1.1754944e-38, %v514
        %v516 = vsel %vm513, %v515, %v511
        %v517 = vmul.f32 1.0, %v516
        %v518 = vrcp.pop %v472
        %v519 = vmul.f32 %v472, %v518
        %v520 = vsub.f32 1.0, %v519
        %v521 = vmul.f32 %v518, %v520
        %v522 = vadd.f32 %v518, %v521
        %vm523 = vweird.f32 %v472
        %vm524 = vweird.f32 %v518
        %vm525 = vmor %vm523, %vm524
        %v526 = vsel %vm525, %v518, %v522
        %v527 = vand.u32 2147483647, %v472
        %vm528 = vcmp.eq.f32.partialorder %v527, 8.507059e+37
        %v529 = vand.u32 %v472, 2147483648
        %v530 = vor.u32 1.1754944e-38, %v529
        %v531 = vsel %vm528, %v530, %v526
        %v532 = vmul.f32 1.0, %v531
        %v533 = vtanh.pop %v454
        %v534 = vtanh.pop %v456
        %v535 = vmul.f32 %v487, 0.0
        %v536 = vmul.f32 %v517, 0.0
        %539 = vrot.lane.b32.xlu0 %v533, 64
        %v540 = vpop.permute.xlu0 %539
        %541 = vrot.lane.b32.xlu0 %v534, 64
        %v542 = vpop.permute.xlu0 %541
        %v545 = vmul.f32 %v487, %v540
        %v546 = vmul.f32 %v517, %v542
        %549 = vrot.lane.b32.xlu0 %v545, 64
        %v550 = vpop.permute.xlu0 %549
        %551 = vrot.lane.b32.xlu0 %v546, 64
        %v552 = vpop.permute.xlu0 %551
        %v555 = vadd.f32 %v535, %v550
        %v556 = vadd.f32 %v536, %v552
        %v557 = vtanh.pop %v555
        %v558 = vtanh.pop %v556
        %561 = vrot.lane.b32.xlu0 %v557, 64
        %v562 = vpop.permute.xlu0 %561
        %563 = vrot.lane.b32.xlu0 %v558, 64
        %v564 = vpop.permute.xlu0 %563
        %v567 = vmul.f32 %v502, %v562
        %v568 = vmul.f32 %v532, %v564
        %v569 = vpack.c.bf16 %v567, %v567
        %v570 = vpack.c.bf16 %v568, %v568
        %vm571 = vcmask 519168
        %572 = vst.msk [vmem:[#allocation2] sm:$0xf] %vm571, %v569
        %573 = vst.msk [vmem:[#allocation2 + $0x4] sm:$0xf] %vm571, %v570
        %s574 = scalar_lea.vmem %s314, 16 [#allocation5]
        %v575 = vld [vmem:[%s574] sm:$0xff]
        %v576 = vld [vmem:[%s574 + $0x8] sm:$0xff]
        %v577 = vunpack.c.l.bf16 %v575
        %v578 = vunpack.c.h.bf16 %v575
        %v579 = vunpack.c.l.bf16 %v576
        %v580 = vunpack.c.h.bf16 %v576
        %v583 = vunpack.c.l.b16 %v569
        %v584 = vunpack.c.l.b16 %v570
        %v585 = vpack.c.b16 %v584, %v583
        %v587 = vsel %vm421, %v585, 0
        %589 = vmatpush.bf16.msra.mxu0 0
        %590 = vmatpush.bf16.msra.mxu0 0
        %591 = vmatpush.bf16.msra.mxu0 0
        %592 = vmatpush.bf16.msra.mxu0 0
        %593 = vmatpush.bf16.msra.mxu0 %v411
        %594 = vmatpush.bf16.msra.mxu0 %v409
        %595 = vmatpush.bf16.msra.mxu0 %v407
        %596 = vmatpush.bf16.msra.mxu0 %v405
        %597 = vmatmul.bf16.gmra.mxu0 %v587
        %v598 = vpop.f32.mrf.mxu0
        %v599 = vadd.f32 0.0, %v598
        %v600 = vpop.f32.mrf.mxu0
        %v601 = vadd.f32 0.0, %v600
        %602 = vdwg.mxu0
        %603 = vmatpush.bf16.msra.mxu0 0
        %604 = vmatpush.bf16.msra.mxu0 0
        %605 = vmatpush.bf16.msra.mxu0 0
        %606 = vmatpush.bf16.msra.mxu0 0
        %607 = vmatpush.bf16.msra.mxu0 %v412
        %608 = vmatpush.bf16.msra.mxu0 %v410
        %609 = vmatpush.bf16.msra.mxu0 %v408
        %610 = vmatpush.bf16.msra.mxu0 %v406
        %611 = vmatmul.bf16.gmra.mxu0 %v587
        %v612 = vpop.f32.mrf.mxu0
        %v613 = vadd.f32 0.0, %v612
        %v614 = vpop.f32.mrf.mxu0
        %v615 = vadd.f32 0.0, %v614
        %616 = vdwg.mxu0
        %v617 = vadd.f32 %v577, %v599
        %v618 = vadd.f32 %v578, %v613
        %v619 = vadd.f32 %v579, %v601
        %v620 = vadd.f32 %v580, %v615
        %v621 = vxor.u32 %v617, 2147483648
        %v622 = vxor.u32 %v618, 2147483648
        %v623 = vxor.u32 %v619, 2147483648
        %v624 = vxor.u32 %v620, 2147483648
        %v625 = vmul.f32 %v621, 1.442695
        %v626 = vpow.pop %v625
        %v627 = vmul.f32 %v622, 1.442695
        %v628 = vpow.pop %v627
        %v629 = vmul.f32 %v623, 1.442695
        %v630 = vpow.pop %v629
        %v631 = vmul.f32 %v624, 1.442695
        %v632 = vpow.pop %v631
        %v633 = vadd.f32 %v626, 1.0
        %v634 = vadd.f32 %v628, 1.0
        %v635 = vadd.f32 %v630, 1.0
        %v636 = vadd.f32 %v632, 1.0
        %v637 = vrcp.pop %v633
        %v638 = vmul.f32 %v633, %v637
        %v639 = vsub.f32 1.0, %v638
        %v640 = vmul.f32 %v637, %v639
        %v641 = vadd.f32 %v637, %v640
        %vm642 = vweird.f32 %v633
        %vm643 = vweird.f32 %v637
        %vm644 = vmor %vm642, %vm643
        %v645 = vsel %vm644, %v637, %v641
        %v646 = vand.u32 2147483647, %v633
        %vm647 = vcmp.eq.f32.partialorder %v646, 8.507059e+37
        %v648 = vand.u32 %v633, 2147483648
        %v649 = vor.u32 1.1754944e-38, %v648
        %v650 = vsel %vm647, %v649, %v645
        %v651 = vmul.f32 1.0, %v650
        %v652 = vrcp.pop %v634
        %v653 = vmul.f32 %v634, %v652
        %v654 = vsub.f32 1.0, %v653
        %v655 = vmul.f32 %v652, %v654
        %v656 = vadd.f32 %v652, %v655
        %vm657 = vweird.f32 %v634
        %vm658 = vweird.f32 %v652
        %vm659 = vmor %vm657, %vm658
        %v660 = vsel %vm659, %v652, %v656
        %v661 = vand.u32 2147483647, %v634
        %vm662 = vcmp.eq.f32.partialorder %v661, 8.507059e+37
        %v663 = vand.u32 %v634, 2147483648
        %v664 = vor.u32 1.1754944e-38, %v663
        %v665 = vsel %vm662, %v664, %v660
        %v666 = vmul.f32 1.0, %v665
        %v667 = vrcp.pop %v635
        %v668 = vmul.f32 %v635, %v667
        %v669 = vsub.f32 1.0, %v668
        %v670 = vmul.f32 %v667, %v669
        %v671 = vadd.f32 %v667, %v670
        %vm672 = vweird.f32 %v635
        %vm673 = vweird.f32 %v667
        %vm674 = vmor %vm672, %vm673
        %v675 = vsel %vm674, %v667, %v671
        %v676 = vand.u32 2147483647, %v635
        %vm677 = vcmp.eq.f32.partialorder %v676, 8.507059e+37
        %v678 = vand.u32 %v635, 2147483648
        %v679 = vor.u32 1.1754944e-38, %v678
        %v680 = vsel %vm677, %v679, %v675
        %v681 = vmul.f32 1.0, %v680
        %v682 = vrcp.pop %v636
        %v683 = vmul.f32 %v636, %v682
        %v684 = vsub.f32 1.0, %v683
        %v685 = vmul.f32 %v682, %v684
        %v686 = vadd.f32 %v682, %v685
        %vm687 = vweird.f32 %v636
        %vm688 = vweird.f32 %v682
        %vm689 = vmor %vm687, %vm688
        %v690 = vsel %vm689, %v682, %v686
        %v691 = vand.u32 2147483647, %v636
        %vm692 = vcmp.eq.f32.partialorder %v691, 8.507059e+37
        %v693 = vand.u32 %v636, 2147483648
        %v694 = vor.u32 1.1754944e-38, %v693
        %v695 = vsel %vm692, %v694, %v690
        %v696 = vmul.f32 1.0, %v695
        %v697 = vtanh.pop %v618
        %v698 = vtanh.pop %v620
        %v699 = vmul.f32 %v651, %v555
        %v700 = vmul.f32 %v681, %v556
        %703 = vrot.lane.b32.xlu0 %v697, 64
        %v704 = vpop.permute.xlu0 %703
        %705 = vrot.lane.b32.xlu0 %v698, 64
        %v706 = vpop.permute.xlu0 %705
        %v709 = vmul.f32 %v651, %v704
        %v710 = vmul.f32 %v681, %v706
        %713 = vrot.lane.b32.xlu0 %v709, 64
        %v714 = vpop.permute.xlu0 %713
        %715 = vrot.lane.b32.xlu0 %v710, 64
        %v716 = vpop.permute.xlu0 %715
        %v719 = vadd.f32 %v699, %v714
        %v720 = vadd.f32 %v700, %v716
        %v721 = vtanh.pop %v719
        %v722 = vtanh.pop %v720
        %725 = vrot.lane.b32.xlu0 %v721, 64
        %v726 = vpop.permute.xlu0 %725
        %727 = vrot.lane.b32.xlu0 %v722, 64
        %v728 = vpop.permute.xlu0 %727
        %v731 = vmul.f32 %v666, %v726
        %v732 = vmul.f32 %v696, %v728
        %v733 = vpack.c.bf16 %v731, %v731
        %v734 = vpack.c.bf16 %v732, %v732
        %s735 = scalar_lea.vmem [#allocation2], 8
        %736 = vst.msk [vmem:[%s735] sm:$0xf] %vm571, %v733
        %737 = vst.msk [vmem:[%s735 + $0x4] sm:$0xf] %vm571, %v734
        %s738 = scalar_lea.vmem %s314, 32 [#allocation5]
        %v739 = vld [vmem:[%s738] sm:$0xff]
        %v740 = vld [vmem:[%s738 + $0x8] sm:$0xff]
        %v741 = vunpack.c.l.bf16 %v739
        %v742 = vunpack.c.h.bf16 %v739
        %v743 = vunpack.c.l.bf16 %v740
        %v744 = vunpack.c.h.bf16 %v740
        %v747 = vunpack.c.l.b16 %v733
        %v748 = vunpack.c.l.b16 %v734
        %v749 = vpack.c.b16 %v748, %v747
        %v751 = vsel %vm421, %v749, 0
        %753 = vmatpush.bf16.msra.mxu0 0
        %754 = vmatpush.bf16.msra.mxu0 0
        %755 = vmatpush.bf16.msra.mxu0 0
        %756 = vmatpush.bf16.msra.mxu0 0
        %757 = vmatpush.bf16.msra.mxu0 %v411
        %758 = vmatpush.bf16.msra.mxu0 %v409
        %759 = vmatpush.bf16.msra.mxu0 %v407
        %760 = vmatpush.bf16.msra.mxu0 %v405
        %761 = vmatmul.bf16.gmra.mxu0 %v751
        %v762 = vpop.f32.mrf.mxu0
        %v763 = vadd.f32 0.0, %v762
        %v764 = vpop.f32.mrf.mxu0
        %v765 = vadd.f32 0.0, %v764
        %766 = vdwg.mxu0
        %767 = vmatpush.bf16.msra.mxu0 0
        %768 = vmatpush.bf16.msra.mxu0 0
        %769 = vmatpush.bf16.msra.mxu0 0
        %770 = vmatpush.bf16.msra.mxu0 0
        %771 = vmatpush.bf16.msra.mxu0 %v412
        %772 = vmatpush.bf16.msra.mxu0 %v410
        %773 = vmatpush.bf16.msra.mxu0 %v408
        %774 = vmatpush.bf16.msra.mxu0 %v406
        %775 = vmatmul.bf16.gmra.mxu0 %v751
        %v776 = vpop.f32.mrf.mxu0
        %v777 = vadd.f32 0.0, %v776
        %v778 = vpop.f32.mrf.mxu0
        %v779 = vadd.f32 0.0, %v778
        %780 = vdwg.mxu0
        %v781 = vadd.f32 %v741, %v763
        %v782 = vadd.f32 %v742, %v777
        %v783 = vadd.f32 %v743, %v765
        %v784 = vadd.f32 %v744, %v779
        %v785 = vxor.u32 %v781, 2147483648
        %v786 = vxor.u32 %v782, 2147483648
        %v787 = vxor.u32 %v783, 2147483648
        %v788 = vxor.u32 %v784, 2147483648
        %v789 = vmul.f32 %v785, 1.442695
        %v790 = vpow.pop %v789
        %v791 = vmul.f32 %v786, 1.442695
        %v792 = vpow.pop %v791
        %v793 = vmul.f32 %v787, 1.442695
        %v794 = vpow.pop %v793
        %v795 = vmul.f32 %v788, 1.442695
        %v796 = vpow.pop %v795
        %v797 = vadd.f32 %v790, 1.0
        %v798 = vadd.f32 %v792, 1.0
        %v799 = vadd.f32 %v794, 1.0
        %v800 = vadd.f32 %v796, 1.0
        %v801 = vrcp.pop %v797
        %v802 = vmul.f32 %v797, %v801
        %v803 = vsub.f32 1.0, %v802
        %v804 = vmul.f32 %v801, %v803
        %v805 = vadd.f32 %v801, %v804
        %vm806 = vweird.f32 %v797
        %vm807 = vweird.f32 %v801
        %vm808 = vmor %vm806, %vm807
        %v809 = vsel %vm808, %v801, %v805
        %v810 = vand.u32 2147483647, %v797
        %vm811 = vcmp.eq.f32.partialorder %v810, 8.507059e+37
        %v812 = vand.u32 %v797, 2147483648
        %v813 = vor.u32 1.1754944e-38, %v812
        %v814 = vsel %vm811, %v813, %v809
        %v815 = vmul.f32 1.0, %v814
        %v816 = vrcp.pop %v798
        %v817 = vmul.f32 %v798, %v816
        %v818 = vsub.f32 1.0, %v817
        %v819 = vmul.f32 %v816, %v818
        %v820 = vadd.f32 %v816, %v819
        %vm821 = vweird.f32 %v798
        %vm822 = vweird.f32 %v816
        %vm823 = vmor %vm821, %vm822
        %v824 = vsel %vm823, %v816, %v820
        %v825 = vand.u32 2147483647, %v798
        %vm826 = vcmp.eq.f32.partialorder %v825, 8.507059e+37
        %v827 = vand.u32 %v798, 2147483648
        %v828 = vor.u32 1.1754944e-38, %v827
        %v829 = vsel %vm826, %v828, %v824
        %v830 = vmul.f32 1.0, %v829
        %v831 = vrcp.pop %v799
        %v832 = vmul.f32 %v799, %v831
        %v833 = vsub.f32 1.0, %v832
        %v834 = vmul.f32 %v831, %v833
        %v835 = vadd.f32 %v831, %v834
        %vm836 = vweird.f32 %v799
        %vm837 = vweird.f32 %v831
        %vm838 = vmor %vm836, %vm837
        %v839 = vsel %vm838, %v831, %v835
        %v840 = vand.u32 2147483647, %v799
        %vm841 = vcmp.eq.f32.partialorder %v840, 8.507059e+37
        %v842 = vand.u32 %v799, 2147483648
        %v843 = vor.u32 1.1754944e-38, %v842
        %v844 = vsel %vm841, %v843, %v839
        %v845 = vmul.f32 1.0, %v844
        %v846 = vrcp.pop %v800
        %v847 = vmul.f32 %v800, %v846
        %v848 = vsub.f32 1.0, %v847
        %v849 = vmul.f32 %v846, %v848
        %v850 = vadd.f32 %v846, %v849
        %vm851 = vweird.f32 %v800
        %vm852 = vweird.f32 %v846
        %vm853 = vmor %vm851, %vm852
        %v854 = vsel %vm853, %v846, %v850
        %v855 = vand.u32 2147483647, %v800
        %vm856 = vcmp.eq.f32.partialorder %v855, 8.507059e+37
        %v857 = vand.u32 %v800, 2147483648
        %v858 = vor.u32 1.1754944e-38, %v857
        %v859 = vsel %vm856, %v858, %v854
        %v860 = vmul.f32 1.0, %v859
        %v861 = vtanh.pop %v782
        %v862 = vtanh.pop %v784
        %v863 = vmul.f32 %v815, %v719
        %v864 = vmul.f32 %v845, %v720
        %867 = vrot.lane.b32.xlu0 %v861, 64
        %v868 = vpop.permute.xlu0 %867
        %869 = vrot.lane.b32.xlu0 %v862, 64
        %v870 = vpop.permute.xlu0 %869
        %v873 = vmul.f32 %v815, %v868
        %v874 = vmul.f32 %v845, %v870
        %877 = vrot.lane.b32.xlu0 %v873, 64
        %v878 = vpop.permute.xlu0 %877
        %879 = vrot.lane.b32.xlu0 %v874, 64
        %v880 = vpop.permute.xlu0 %879
        %v883 = vadd.f32 %v863, %v878
        %v884 = vadd.f32 %v864, %v880
        %v885 = vtanh.pop %v883
        %v886 = vtanh.pop %v884
        %889 = vrot.lane.b32.xlu0 %v885, 64
        %v890 = vpop.permute.xlu0 %889
        %891 = vrot.lane.b32.xlu0 %v886, 64
        %v892 = vpop.permute.xlu0 %891
        %v895 = vmul.f32 %v830, %v890
        %v896 = vmul.f32 %v860, %v892
        %v897 = vpack.c.bf16 %v895, %v895
        %v898 = vpack.c.bf16 %v896, %v896
        %s899 = scalar_lea.vmem [#allocation2], 16
        %900 = vst.msk [vmem:[%s899] sm:$0xf] %vm571, %v897
        %901 = vst.msk [vmem:[%s899 + $0x4] sm:$0xf] %vm571, %v898
        %s902 = scalar_lea.vmem %s314, 48 [#allocation5]
        %v903 = vld [vmem:[%s902] sm:$0xff]
        %v904 = vld [vmem:[%s902 + $0x8] sm:$0xff]
        %v905 = vunpack.c.l.bf16 %v903
        %v906 = vunpack.c.h.bf16 %v903
        %v907 = vunpack.c.l.bf16 %v904
        %v908 = vunpack.c.h.bf16 %v904
        %v911 = vunpack.c.l.b16 %v897
        %v912 = vunpack.c.l.b16 %v898
        %v913 = vpack.c.b16 %v912, %v911
        %v915 = vsel %vm421, %v913, 0
        %917 = vmatpush.bf16.msra.mxu0 0
        %918 = vmatpush.bf16.msra.mxu0 0
        %919 = vmatpush.bf16.msra.mxu0 0
        %920 = vmatpush.bf16.msra.mxu0 0
        %921 = vmatpush.bf16.msra.mxu0 %v411
        %922 = vmatpush.bf16.msra.mxu0 %v409
        %923 = vmatpush.bf16.msra.mxu0 %v407
        %924 = vmatpush.bf16.msra.mxu0 %v405
        %925 = vmatmul.bf16.gmra.mxu0 %v915
        %v926 = vpop.f32.mrf.mxu0
        %v927 = vadd.f32 0.0, %v926
        %v928 = vpop.f32.mrf.mxu0
        %v929 = vadd.f32 0.0, %v928
        %930 = vdwg.mxu0
        %931 = vmatpush.bf16.msra.mxu0 0
        %932 = vmatpush.bf16.msra.mxu0 0
        %933 = vmatpush.bf16.msra.mxu0 0
        %934 = vmatpush.bf16.msra.mxu0 0
        %935 = vmatpush.bf16.msra.mxu0 %v412
        %936 = vmatpush.bf16.msra.mxu0 %v410
        %937 = vmatpush.bf16.msra.mxu0 %v408
        %938 = vmatpush.bf16.msra.mxu0 %v406
        %939 = vmatmul.bf16.gmra.mxu0 %v915
        %v940 = vpop.f32.mrf.mxu0
        %v941 = vadd.f32 0.0, %v940
        %v942 = vpop.f32.mrf.mxu0
        %v943 = vadd.f32 0.0, %v942
        %944 = vdwg.mxu0
        %v945 = vadd.f32 %v905, %v927
        %v946 = vadd.f32 %v906, %v941
        %v947 = vadd.f32 %v907, %v929
        %v948 = vadd.f32 %v908, %v943
        %v949 = vxor.u32 %v945, 2147483648
        %v950 = vxor.u32 %v946, 2147483648
        %v951 = vxor.u32 %v947, 2147483648
        %v952 = vxor.u32 %v948, 2147483648
        %v953 = vmul.f32 %v949, 1.442695
        %v954 = vpow.pop %v953
        %v955 = vmul.f32 %v950, 1.442695
        %v956 = vpow.pop %v955
        %v957 = vmul.f32 %v951, 1.442695
        %v958 = vpow.pop %v957
        %v959 = vmul.f32 %v952, 1.442695
        %v960 = vpow.pop %v959
        %v961 = vadd.f32 %v954, 1.0
        %v962 = vadd.f32 %v956, 1.0
        %v963 = vadd.f32 %v958, 1.0
        %v964 = vadd.f32 %v960, 1.0
        %v965 = vrcp.pop %v961
        %v966 = vmul.f32 %v961, %v965
        %v967 = vsub.f32 1.0, %v966
        %v968 = vmul.f32 %v965, %v967
        %v969 = vadd.f32 %v965, %v968
        %vm970 = vweird.f32 %v961
        %vm971 = vweird.f32 %v965
        %vm972 = vmor %vm970, %vm971
        %v973 = vsel %vm972, %v965, %v969
        %v974 = vand.u32 2147483647, %v961
        %vm975 = vcmp.eq.f32.partialorder %v974, 8.507059e+37
        %v976 = vand.u32 %v961, 2147483648
        %v977 = vor.u32 1.1754944e-38, %v976
        %v978 = vsel %vm975, %v977, %v973
        %v979 = vmul.f32 1.0, %v978
        %v980 = vrcp.pop %v962
        %v981 = vmul.f32 %v962, %v980
        %v982 = vsub.f32 1.0, %v981
        %v983 = vmul.f32 %v980, %v982
        %v984 = vadd.f32 %v980, %v983
        %vm985 = vweird.f32 %v962
        %vm986 = vweird.f32 %v980
        %vm987 = vmor %vm985, %vm986
        %v988 = vsel %vm987, %v980, %v984
        %v989 = vand.u32 2147483647, %v962
        %vm990 = vcmp.eq.f32.partialorder %v989, 8.507059e+37
        %v991 = vand.u32 %v962, 2147483648
        %v992 = vor.u32 1.1754944e-38, %v991
        %v993 = vsel %vm990, %v992, %v988
        %v994 = vmul.f32 1.0, %v993
        %v995 = vrcp.pop %v963
        %v996 = vmul.f32 %v963, %v995
        %v997 = vsub.f32 1.0, %v996
        %v998 = vmul.f32 %v995, %v997
        %v999 = vadd.f32 %v995, %v998
        %vm1000 = vweird.f32 %v963
        %vm1001 = vweird.f32 %v995
        %vm1002 = vmor %vm1000, %vm1001
        %v1003 = vsel %vm1002, %v995, %v999
        %v1004 = vand.u32 2147483647, %v963
        %vm1005 = vcmp.eq.f32.partialorder %v1004, 8.507059e+37
        %v1006 = vand.u32 %v963, 2147483648
        %v1007 = vor.u32 1.1754944e-38, %v1006
        %v1008 = vsel %vm1005, %v1007, %v1003
        %v1009 = vmul.f32 1.0, %v1008
        %v1010 = vrcp.pop %v964
        %v1011 = vmul.f32 %v964, %v1010
        %v1012 = vsub.f32 1.0, %v1011
        %v1013 = vmul.f32 %v1010, %v1012
        %v1014 = vadd.f32 %v1010, %v1013
        %vm1015 = vweird.f32 %v964
        %vm1016 = vweird.f32 %v1010
        %vm1017 = vmor %vm1015, %vm1016
        %v1018 = vsel %vm1017, %v1010, %v1014
        %v1019 = vand.u32 2147483647, %v964
        %vm1020 = vcmp.eq.f32.partialorder %v1019, 8.507059e+37
        %v1021 = vand.u32 %v964, 2147483648
        %v1022 = vor.u32 1.1754944e-38, %v1021
        %v1023 = vsel %vm1020, %v1022, %v1018
        %v1024 = vmul.f32 1.0, %v1023
        %v1025 = vtanh.pop %v946
        %v1026 = vtanh.pop %v948
        %v1027 = vmul.f32 %v979, %v883
        %v1028 = vmul.f32 %v1009, %v884
        %1031 = vrot.lane.b32.xlu0 %v1025, 64
        %v1032 = vpop.permute.xlu0 %1031
        %1033 = vrot.lane.b32.xlu0 %v1026, 64
        %v1034 = vpop.permute.xlu0 %1033
        %v1037 = vmul.f32 %v979, %v1032
        %v1038 = vmul.f32 %v1009, %v1034
        %1041 = vrot.lane.b32.xlu0 %v1037, 64
        %v1042 = vpop.permute.xlu0 %1041
        %1043 = vrot.lane.b32.xlu0 %v1038, 64
        %v1044 = vpop.permute.xlu0 %1043
        %v1047 = vadd.f32 %v1027, %v1042
        %v1048 = vadd.f32 %v1028, %v1044
        %v1049 = vtanh.pop %v1047
        %v1050 = vtanh.pop %v1048
        %1053 = vrot.lane.b32.xlu0 %v1049, 64
        %v1054 = vpop.permute.xlu0 %1053
        %1055 = vrot.lane.b32.xlu0 %v1050, 64
        %v1056 = vpop.permute.xlu0 %1055
        %v1059 = vmul.f32 %v994, %v1054
        %v1060 = vmul.f32 %v1024, %v1056
        %v1061 = vpack.c.bf16 %v1059, %v1059
        %v1062 = vpack.c.bf16 %v1060, %v1060
        %s1063 = scalar_lea.vmem [#allocation2], 24
        %1064 = vst.msk [vmem:[%s1063] sm:$0xf] %vm571, %v1061
        %1065 = vst.msk [vmem:[%s1063 + $0x4] sm:$0xf] %vm571, %v1062
        %s1066 = scalar_lea.vmem %s314, 64 [#allocation5]
        %v1067 = vld [vmem:[%s1066] sm:$0xff]
        %v1068 = vld [vmem:[%s1066 + $0x8] sm:$0xff]
        %v1069 = vunpack.c.l.bf16 %v1067
        %v1070 = vunpack.c.h.bf16 %v1067
        %v1071 = vunpack.c.l.bf16 %v1068
        %v1072 = vunpack.c.h.bf16 %v1068
        %v1075 = vunpack.c.l.b16 %v1061
        %v1076 = vunpack.c.l.b16 %v1062
        %v1077 = vpack.c.b16 %v1076, %v1075
        %v1079 = vsel %vm421, %v1077, 0
        %1081 = vmatpush.bf16.msra.mxu0 0
        %1082 = vmatpush.bf16.msra.mxu0 0
        %1083 = vmatpush.bf16.msra.mxu0 0
        %1084 = vmatpush.bf16.msra.mxu0 0
        %1085 = vmatpush.bf16.msra.mxu0 %v411
        %1086 = vmatpush.bf16.msra.mxu0 %v409
        %1087 = vmatpush.bf16.msra.mxu0 %v407
        %1088 = vmatpush.bf16.msra.mxu0 %v405
        %1089 = vmatmul.bf16.gmra.mxu0 %v1079
        %v1090 = vpop.f32.mrf.mxu0
        %v1091 = vadd.f32 0.0, %v1090
        %v1092 = vpop.f32.mrf.mxu0
        %v1093 = vadd.f32 0.0, %v1092
        %1094 = vdwg.mxu0
        %1095 = vmatpush.bf16.msra.mxu0 0
        %1096 = vmatpush.bf16.msra.mxu0 0
        %1097 = vmatpush.bf16.msra.mxu0 0
        %1098 = vmatpush.bf16.msra.mxu0 0
        %1099 = vmatpush.bf16.msra.mxu0 %v412
        %1100 = vmatpush.bf16.msra.mxu0 %v410
        %1101 = vmatpush.bf16.msra.mxu0 %v408
        %1102 = vmatpush.bf16.msra.mxu0 %v406
        %1103 = vmatmul.bf16.gmra.mxu0 %v1079
        %v1104 = vpop.f32.mrf.mxu0
        %v1105 = vadd.f32 0.0, %v1104
        %v1106 = vpop.f32.mrf.mxu0
        %v1107 = vadd.f32 0.0, %v1106
        %1108 = vdwg.mxu0
        %v1109 = vadd.f32 %v1069, %v1091
        %v1110 = vadd.f32 %v1070, %v1105
        %v1111 = vadd.f32 %v1071, %v1093
        %v1112 = vadd.f32 %v1072, %v1107
        %v1113 = vxor.u32 %v1109, 2147483648
        %v1114 = vxor.u32 %v1110, 2147483648
        %v1115 = vxor.u32 %v1111, 2147483648
        %v1116 = vxor.u32 %v1112, 2147483648
        %v1117 = vmul.f32 %v1113, 1.442695
        %v1118 = vpow.pop %v1117
        %v1119 = vmul.f32 %v1114, 1.442695
        %v1120 = vpow.pop %v1119
        %v1121 = vmul.f32 %v1115, 1.442695
        %v1122 = vpow.pop %v1121
        %v1123 = vmul.f32 %v1116, 1.442695
        %v1124 = vpow.pop %v1123
        %v1125 = vadd.f32 %v1118, 1.0
        %v1126 = vadd.f32 %v1120, 1.0
        %v1127 = vadd.f32 %v1122, 1.0
        %v1128 = vadd.f32 %v1124, 1.0
        %v1129 = vrcp.pop %v1125
        %v1130 = vmul.f32 %v1125, %v1129
        %v1131 = vsub.f32 1.0, %v1130
        %v1132 = vmul.f32 %v1129, %v1131
        %v1133 = vadd.f32 %v1129, %v1132
        %vm1134 = vweird.f32 %v1125
        %vm1135 = vweird.f32 %v1129
        %vm1136 = vmor %vm1134, %vm1135
        %v1137 = vsel %vm1136, %v1129, %v1133
        %v1138 = vand.u32 2147483647, %v1125
        %vm1139 = vcmp.eq.f32.partialorder %v1138, 8.507059e+37
        %v1140 = vand.u32 %v1125, 2147483648
        %v1141 = vor.u32 1.1754944e-38, %v1140
        %v1142 = vsel %vm1139, %v1141, %v1137
        %v1143 = vmul.f32 1.0, %v1142
        %v1144 = vrcp.pop %v1126
        %v1145 = vmul.f32 %v1126, %v1144
        %v1146 = vsub.f32 1.0, %v1145
        %v1147 = vmul.f32 %v1144, %v1146
        %v1148 = vadd.f32 %v1144, %v1147
        %vm1149 = vweird.f32 %v1126
        %vm1150 = vweird.f32 %v1144
        %vm1151 = vmor %vm1149, %vm1150
        %v1152 = vsel %vm1151, %v1144, %v1148
        %v1153 = vand.u32 2147483647, %v1126
        %vm1154 = vcmp.eq.f32.partialorder %v1153, 8.507059e+37
        %v1155 = vand.u32 %v1126, 2147483648
        %v1156 = vor.u32 1.1754944e-38, %v1155
        %v1157 = vsel %vm1154, %v1156, %v1152
        %v1158 = vmul.f32 1.0, %v1157
        %v1159 = vrcp.pop %v1127
        %v1160 = vmul.f32 %v1127, %v1159
        %v1161 = vsub.f32 1.0, %v1160
        %v1162 = vmul.f32 %v1159, %v1161
        %v1163 = vadd.f32 %v1159, %v1162
        %vm1164 = vweird.f32 %v1127
        %vm1165 = vweird.f32 %v1159
        %vm1166 = vmor %vm1164, %vm1165
        %v1167 = vsel %vm1166, %v1159, %v1163
        %v1168 = vand.u32 2147483647, %v1127
        %vm1169 = vcmp.eq.f32.partialorder %v1168, 8.507059e+37
        %v1170 = vand.u32 %v1127, 2147483648
        %v1171 = vor.u32 1.1754944e-38, %v1170
        %v1172 = vsel %vm1169, %v1171, %v1167
        %v1173 = vmul.f32 1.0, %v1172
        %v1174 = vrcp.pop %v1128
        %v1175 = vmul.f32 %v1128, %v1174
        %v1176 = vsub.f32 1.0, %v1175
        %v1177 = vmul.f32 %v1174, %v1176
        %v1178 = vadd.f32 %v1174, %v1177
        %vm1179 = vweird.f32 %v1128
        %vm1180 = vweird.f32 %v1174
        %vm1181 = vmor %vm1179, %vm1180
        %v1182 = vsel %vm1181, %v1174, %v1178
        %v1183 = vand.u32 2147483647, %v1128
        %vm1184 = vcmp.eq.f32.partialorder %v1183, 8.507059e+37
        %v1185 = vand.u32 %v1128, 2147483648
        %v1186 = vor.u32 1.1754944e-38, %v1185
        %v1187 = vsel %vm1184, %v1186, %v1182
        %v1188 = vmul.f32 1.0, %v1187
        %v1189 = vtanh.pop %v1110
        %v1190 = vtanh.pop %v1112
        %v1191 = vmul.f32 %v1143, %v1047
        %v1192 = vmul.f32 %v1173, %v1048
        %1195 = vrot.lane.b32.xlu0 %v1189, 64
        %v1196 = vpop.permute.xlu0 %1195
        %1197 = vrot.lane.b32.xlu0 %v1190, 64
        %v1198 = vpop.permute.xlu0 %1197
        %v1201 = vmul.f32 %v1143, %v1196
        %v1202 = vmul.f32 %v1173, %v1198
        %1205 = vrot.lane.b32.xlu0 %v1201, 64
        %v1206 = vpop.permute.xlu0 %1205
        %1207 = vrot.lane.b32.xlu0 %v1202, 64
        %v1208 = vpop.permute.xlu0 %1207
        %v1211 = vadd.f32 %v1191, %v1206
        %v1212 = vadd.f32 %v1192, %v1208
        %v1213 = vtanh.pop %v1211
        %v1214 = vtanh.pop %v1212
        %1217 = vrot.lane.b32.xlu0 %v1213, 64
        %v1218 = vpop.permute.xlu0 %1217
        %1219 = vrot.lane.b32.xlu0 %v1214, 64
        %v1220 = vpop.permute.xlu0 %1219
        %v1223 = vmul.f32 %v1158, %v1218
        %v1224 = vmul.f32 %v1188, %v1220
        %v1225 = vpack.c.bf16 %v1223, %v1223
        %v1226 = vpack.c.bf16 %v1224, %v1224
        %s1227 = scalar_lea.vmem [#allocation2], 32
        %1228 = vst.msk [vmem:[%s1227] sm:$0xf] %vm571, %v1225
        %1229 = vst.msk [vmem:[%s1227 + $0x4] sm:$0xf] %vm571, %v1226
        %s1230 = scalar_lea.vmem %s314, 80 [#allocation5]
        %v1231 = vld [vmem:[%s1230] sm:$0xff]
        %v1232 = vld [vmem:[%s1230 + $0x8] sm:$0xff]
        %v1233 = vunpack.c.l.bf16 %v1231
        %v1234 = vunpack.c.h.bf16 %v1231
        %v1235 = vunpack.c.l.bf16 %v1232
        %v1236 = vunpack.c.h.bf16 %v1232
        %v1239 = vunpack.c.l.b16 %v1225
        %v1240 = vunpack.c.l.b16 %v1226
        %v1241 = vpack.c.b16 %v1240, %v1239
        %v1243 = vsel %vm421, %v1241, 0
        %1245 = vmatpush.bf16.msra.mxu0 0
        %1246 = vmatpush.bf16.msra.mxu0 0
        %1247 = vmatpush.bf16.msra.mxu0 0
        %1248 = vmatpush.bf16.msra.mxu0 0
        %1249 = vmatpush.bf16.msra.mxu0 %v411
        %1250 = vmatpush.bf16.msra.mxu0 %v409
        %1251 = vmatpush.bf16.msra.mxu0 %v407
        %1252 = vmatpush.bf16.msra.mxu0 %v405
        %1253 = vmatmul.bf16.gmra.mxu0 %v1243
        %v1254 = vpop.f32.mrf.mxu0
        %v1255 = vadd.f32 0.0, %v1254
        %v1256 = vpop.f32.mrf.mxu0
        %v1257 = vadd.f32 0.0, %v1256
        %1258 = vdwg.mxu0
        %1259 = vmatpush.bf16.msra.mxu0 0
        %1260 = vmatpush.bf16.msra.mxu0 0
        %1261 = vmatpush.bf16.msra.mxu0 0
        %1262 = vmatpush.bf16.msra.mxu0 0
        %1263 = vmatpush.bf16.msra.mxu0 %v412
        %1264 = vmatpush.bf16.msra.mxu0 %v410
        %1265 = vmatpush.bf16.msra.mxu0 %v408
        %1266 = vmatpush.bf16.msra.mxu0 %v406
        %1267 = vmatmul.bf16.gmra.mxu0 %v1243
        %v1268 = vpop.f32.mrf.mxu0
        %v1269 = vadd.f32 0.0, %v1268
        %v1270 = vpop.f32.mrf.mxu0
        %v1271 = vadd.f32 0.0, %v1270
        %1272 = vdwg.mxu0
        %v1273 = vadd.f32 %v1233, %v1255
        %v1274 = vadd.f32 %v1234, %v1269
        %v1275 = vadd.f32 %v1235, %v1257
        %v1276 = vadd.f32 %v1236, %v1271
        %v1277 = vxor.u32 %v1273, 2147483648
        %v1278 = vxor.u32 %v1274, 2147483648
        %v1279 = vxor.u32 %v1275, 2147483648
        %v1280 = vxor.u32 %v1276, 2147483648
        %v1281 = vmul.f32 %v1277, 1.442695
        %v1282 = vpow.pop %v1281
        %v1283 = vmul.f32 %v1278, 1.442695
        %v1284 = vpow.pop %v1283
        %v1285 = vmul.f32 %v1279, 1.442695
        %v1286 = vpow.pop %v1285
        %v1287 = vmul.f32 %v1280, 1.442695
        %v1288 = vpow.pop %v1287
        %v1289 = vadd.f32 %v1282, 1.0
        %v1290 = vadd.f32 %v1284, 1.0
        %v1291 = vadd.f32 %v1286, 1.0
        %v1292 = vadd.f32 %v1288, 1.0
        %v1293 = vrcp.pop %v1289
        %v1294 = vmul.f32 %v1289, %v1293
        %v1295 = vsub.f32 1.0, %v1294
        %v1296 = vmul.f32 %v1293, %v1295
        %v1297 = vadd.f32 %v1293, %v1296
        %vm1298 = vweird.f32 %v1289
        %vm1299 = vweird.f32 %v1293
        %vm1300 = vmor %vm1298, %vm1299
        %v1301 = vsel %vm1300, %v1293, %v1297
        %v1302 = vand.u32 2147483647, %v1289
        %vm1303 = vcmp.eq.f32.partialorder %v1302, 8.507059e+37
        %v1304 = vand.u32 %v1289, 2147483648
        %v1305 = vor.u32 1.1754944e-38, %v1304
        %v1306 = vsel %vm1303, %v1305, %v1301
        %v1307 = vmul.f32 1.0, %v1306
        %v1308 = vrcp.pop %v1290
        %v1309 = vmul.f32 %v1290, %v1308
        %v1310 = vsub.f32 1.0, %v1309
        %v1311 = vmul.f32 %v1308, %v1310
        %v1312 = vadd.f32 %v1308, %v1311
        %vm1313 = vweird.f32 %v1290
        %vm1314 = vweird.f32 %v1308
        %vm1315 = vmor %vm1313, %vm1314
        %v1316 = vsel %vm1315, %v1308, %v1312
        %v1317 = vand.u32 2147483647, %v1290
        %vm1318 = vcmp.eq.f32.partialorder %v1317, 8.507059e+37
        %v1319 = vand.u32 %v1290, 2147483648
        %v1320 = vor.u32 1.1754944e-38, %v1319
        %v1321 = vsel %vm1318, %v1320, %v1316
        %v1322 = vmul.f32 1.0, %v1321
        %v1323 = vrcp.pop %v1291
        %v1324 = vmul.f32 %v1291, %v1323
        %v1325 = vsub.f32 1.0, %v1324
        %v1326 = vmul.f32 %v1323, %v1325
        %v1327 = vadd.f32 %v1323, %v1326
        %vm1328 = vweird.f32 %v1291
        %vm1329 = vweird.f32 %v1323
        %vm1330 = vmor %vm1328, %vm1329
        %v1331 = vsel %vm1330, %v1323, %v1327
        %v1332 = vand.u32 2147483647, %v1291
        %vm1333 = vcmp.eq.f32.partialorder %v1332, 8.507059e+37
        %v1334 = vand.u32 %v1291, 2147483648
        %v1335 = vor.u32 1.1754944e-38, %v1334
        %v1336 = vsel %vm1333, %v1335, %v1331
        %v1337 = vmul.f32 1.0, %v1336
        %v1338 = vrcp.pop %v1292
        %v1339 = vmul.f32 %v1292, %v1338
        %v1340 = vsub.f32 1.0, %v1339
        %v1341 = vmul.f32 %v1338, %v1340
        %v1342 = vadd.f32 %v1338, %v1341
        %vm1343 = vweird.f32 %v1292
        %vm1344 = vweird.f32 %v1338
        %vm1345 = vmor %vm1343, %vm1344
        %v1346 = vsel %vm1345, %v1338, %v1342
        %v1347 = vand.u32 2147483647, %v1292
        %vm1348 = vcmp.eq.f32.partialorder %v1347, 8.507059e+37
        %v1349 = vand.u32 %v1292, 2147483648
        %v1350 = vor.u32 1.1754944e-38, %v1349
        %v1351 = vsel %vm1348, %v1350, %v1346
        %v1352 = vmul.f32 1.0, %v1351
        %v1353 = vtanh.pop %v1274
        %v1354 = vtanh.pop %v1276
        %v1355 = vmul.f32 %v1307, %v1211
        %v1356 = vmul.f32 %v1337, %v1212
        %1359 = vrot.lane.b32.xlu0 %v1353, 64
        %v1360 = vpop.permute.xlu0 %1359
        %1361 = vrot.lane.b32.xlu0 %v1354, 64
        %v1362 = vpop.permute.xlu0 %1361
        %v1365 = vmul.f32 %v1307, %v1360
        %v1366 = vmul.f32 %v1337, %v1362
        %1369 = vrot.lane.b32.xlu0 %v1365, 64
        %v1370 = vpop.permute.xlu0 %1369
        %1371 = vrot.lane.b32.xlu0 %v1366, 64
        %v1372 = vpop.permute.xlu0 %1371
        %v1375 = vadd.f32 %v1355, %v1370
        %v1376 = vadd.f32 %v1356, %v1372
        %v1377 = vtanh.pop %v1375
        %v1378 = vtanh.pop %v1376
        %1381 = vrot.lane.b32.xlu0 %v1377, 64
        %v1382 = vpop.permute.xlu0 %1381
        %1383 = vrot.lane.b32.xlu0 %v1378, 64
        %v1384 = vpop.permute.xlu0 %1383
        %v1387 = vmul.f32 %v1322, %v1382
        %v1388 = vmul.f32 %v1352, %v1384
        %v1389 = vpack.c.bf16 %v1387, %v1387
        %v1390 = vpack.c.bf16 %v1388, %v1388
        %s1391 = scalar_lea.vmem [#allocation2], 40
        %1392 = vst.msk [vmem:[%s1391] sm:$0xf] %vm571, %v1389
        %1393 = vst.msk [vmem:[%s1391 + $0x4] sm:$0xf] %vm571, %v1390
        %s1394 = scalar_lea.vmem %s314, 96 [#allocation5]
        %v1395 = vld [vmem:[%s1394] sm:$0xff]
        %v1396 = vld [vmem:[%s1394 + $0x8] sm:$0xff]
        %v1397 = vunpack.c.l.bf16 %v1395
        %v1398 = vunpack.c.h.bf16 %v1395
        %v1399 = vunpack.c.l.bf16 %v1396
        %v1400 = vunpack.c.h.bf16 %v1396
        %v1403 = vunpack.c.l.b16 %v1389
        %v1404 = vunpack.c.l.b16 %v1390
        %v1405 = vpack.c.b16 %v1404, %v1403
        %v1407 = vsel %vm421, %v1405, 0
        %1409 = vmatpush.bf16.msra.mxu0 0
        %1410 = vmatpush.bf16.msra.mxu0 0
        %1411 = vmatpush.bf16.msra.mxu0 0
        %1412 = vmatpush.bf16.msra.mxu0 0
        %1413 = vmatpush.bf16.msra.mxu0 %v411
        %1414 = vmatpush.bf16.msra.mxu0 %v409
        %1415 = vmatpush.bf16.msra.mxu0 %v407
        %1416 = vmatpush.bf16.msra.mxu0 %v405
        %1417 = vmatmul.bf16.gmra.mxu0 %v1407
        %v1418 = vpop.f32.mrf.mxu0
        %v1419 = vadd.f32 0.0, %v1418
        %v1420 = vpop.f32.mrf.mxu0
        %v1421 = vadd.f32 0.0, %v1420
        %1422 = vdwg.mxu0
        %1423 = vmatpush.bf16.msra.mxu0 0
        %1424 = vmatpush.bf16.msra.mxu0 0
        %1425 = vmatpush.bf16.msra.mxu0 0
        %1426 = vmatpush.bf16.msra.mxu0 0
        %1427 = vmatpush.bf16.msra.mxu0 %v412
        %1428 = vmatpush.bf16.msra.mxu0 %v410
        %1429 = vmatpush.bf16.msra.mxu0 %v408
        %1430 = vmatpush.bf16.msra.mxu0 %v406
        %1431 = vmatmul.bf16.gmra.mxu0 %v1407
        %v1432 = vpop.f32.mrf.mxu0
        %v1433 = vadd.f32 0.0, %v1432
        %v1434 = vpop.f32.mrf.mxu0
        %v1435 = vadd.f32 0.0, %v1434
        %1436 = vdwg.mxu0
        %v1437 = vadd.f32 %v1397, %v1419
        %v1438 = vadd.f32 %v1398, %v1433
        %v1439 = vadd.f32 %v1399, %v1421
        %v1440 = vadd.f32 %v1400, %v1435
        %v1441 = vxor.u32 %v1437, 2147483648
        %v1442 = vxor.u32 %v1438, 2147483648
        %v1443 = vxor.u32 %v1439, 2147483648
        %v1444 = vxor.u32 %v1440, 2147483648
        %v1445 = vmul.f32 %v1441, 1.442695
        %v1446 = vpow.pop %v1445
        %v1447 = vmul.f32 %v1442, 1.442695
        %v1448 = vpow.pop %v1447
        %v1449 = vmul.f32 %v1443, 1.442695
        %v1450 = vpow.pop %v1449
        %v1451 = vmul.f32 %v1444, 1.442695
        %v1452 = vpow.pop %v1451
        %v1453 = vadd.f32 %v1446, 1.0
        %v1454 = vadd.f32 %v1448, 1.0
        %v1455 = vadd.f32 %v1450, 1.0
        %v1456 = vadd.f32 %v1452, 1.0
        %v1457 = vrcp.pop %v1453
        %v1458 = vmul.f32 %v1453, %v1457
        %v1459 = vsub.f32 1.0, %v1458
        %v1460 = vmul.f32 %v1457, %v1459
        %v1461 = vadd.f32 %v1457, %v1460
        %vm1462 = vweird.f32 %v1453
        %vm1463 = vweird.f32 %v1457
        %vm1464 = vmor %vm1462, %vm1463
        %v1465 = vsel %vm1464, %v1457, %v1461
        %v1466 = vand.u32 2147483647, %v1453
        %vm1467 = vcmp.eq.f32.partialorder %v1466, 8.507059e+37
        %v1468 = vand.u32 %v1453, 2147483648
        %v1469 = vor.u32 1.1754944e-38, %v1468
        %v1470 = vsel %vm1467, %v1469, %v1465
        %v1471 = vmul.f32 1.0, %v1470
        %v1472 = vrcp.pop %v1454
        %v1473 = vmul.f32 %v1454, %v1472
        %v1474 = vsub.f32 1.0, %v1473
        %v1475 = vmul.f32 %v1472, %v1474
        %v1476 = vadd.f32 %v1472, %v1475
        %vm1477 = vweird.f32 %v1454
        %vm1478 = vweird.f32 %v1472
        %vm1479 = vmor %vm1477, %vm1478
        %v1480 = vsel %vm1479, %v1472, %v1476
        %v1481 = vand.u32 2147483647, %v1454
        %vm1482 = vcmp.eq.f32.partialorder %v1481, 8.507059e+37
        %v1483 = vand.u32 %v1454, 2147483648
        %v1484 = vor.u32 1.1754944e-38, %v1483
        %v1485 = vsel %vm1482, %v1484, %v1480
        %v1486 = vmul.f32 1.0, %v1485
        %v1487 = vrcp.pop %v1455
        %v1488 = vmul.f32 %v1455, %v1487
        %v1489 = vsub.f32 1.0, %v1488
        %v1490 = vmul.f32 %v1487, %v1489
        %v1491 = vadd.f32 %v1487, %v1490
        %vm1492 = vweird.f32 %v1455
        %vm1493 = vweird.f32 %v1487
        %vm1494 = vmor %vm1492, %vm1493
        %v1495 = vsel %vm1494, %v1487, %v1491
        %v1496 = vand.u32 2147483647, %v1455
        %vm1497 = vcmp.eq.f32.partialorder %v1496, 8.507059e+37
        %v1498 = vand.u32 %v1455, 2147483648
        %v1499 = vor.u32 1.1754944e-38, %v1498
        %v1500 = vsel %vm1497, %v1499, %v1495
        %v1501 = vmul.f32 1.0, %v1500
        %v1502 = vrcp.pop %v1456
        %v1503 = vmul.f32 %v1456, %v1502
        %v1504 = vsub.f32 1.0, %v1503
        %v1505 = vmul.f32 %v1502, %v1504
        %v1506 = vadd.f32 %v1502, %v1505
        %vm1507 = vweird.f32 %v1456
        %vm1508 = vweird.f32 %v1502
        %vm1509 = vmor %vm1507, %vm1508
        %v1510 = vsel %vm1509, %v1502, %v1506
        %v1511 = vand.u32 2147483647, %v1456
        %vm1512 = vcmp.eq.f32.partialorder %v1511, 8.507059e+37
        %v1513 = vand.u32 %v1456, 2147483648
        %v1514 = vor.u32 1.1754944e-38, %v1513
        %v1515 = vsel %vm1512, %v1514, %v1510
        %v1516 = vmul.f32 1.0, %v1515
        %v1517 = vtanh.pop %v1438
        %v1518 = vtanh.pop %v1440
        %v1519 = vmul.f32 %v1471, %v1375
        %v1520 = vmul.f32 %v1501, %v1376
        %1523 = vrot.lane.b32.xlu0 %v1517, 64
        %v1524 = vpop.permute.xlu0 %1523
        %1525 = vrot.lane.b32.xlu0 %v1518, 64
        %v1526 = vpop.permute.xlu0 %1525
        %v1529 = vmul.f32 %v1471, %v1524
        %v1530 = vmul.f32 %v1501, %v1526
        %1533 = vrot.lane.b32.xlu0 %v1529, 64
        %v1534 = vpop.permute.xlu0 %1533
        %1535 = vrot.lane.b32.xlu0 %v1530, 64
        %v1536 = vpop.permute.xlu0 %1535
        %v1539 = vadd.f32 %v1519, %v1534
        %v1540 = vadd.f32 %v1520, %v1536
        %v1541 = vtanh.pop %v1539
        %v1542 = vtanh.pop %v1540
        %1545 = vrot.lane.b32.xlu0 %v1541, 64
        %v1546 = vpop.permute.xlu0 %1545
        %1547 = vrot.lane.b32.xlu0 %v1542, 64
        %v1548 = vpop.permute.xlu0 %1547
        %v1551 = vmul.f32 %v1486, %v1546
        %v1552 = vmul.f32 %v1516, %v1548
        %v1553 = vpack.c.bf16 %v1551, %v1551
        %v1554 = vpack.c.bf16 %v1552, %v1552
        %s1555 = scalar_lea.vmem [#allocation2], 48
        %1556 = vst.msk [vmem:[%s1555] sm:$0xf] %vm571, %v1553
        %1557 = vst.msk [vmem:[%s1555 + $0x4] sm:$0xf] %vm571, %v1554
        %s1558 = scalar_lea.vmem %s314, 112 [#allocation5]
        %v1559 = vld [vmem:[%s1558] sm:$0xff]
        %v1560 = vld [vmem:[%s1558 + $0x8] sm:$0xff]
        %v1561 = vunpack.c.l.bf16 %v1559
        %v1562 = vunpack.c.h.bf16 %v1559
        %v1563 = vunpack.c.l.bf16 %v1560
        %v1564 = vunpack.c.h.bf16 %v1560
        %v1567 = vunpack.c.l.b16 %v1553
        %v1568 = vunpack.c.l.b16 %v1554
        %v1569 = vpack.c.b16 %v1568, %v1567
        %v1571 = vsel %vm421, %v1569, 0
        %1573 = vmatpush.bf16.msra.mxu0 0
        %1574 = vmatpush.bf16.msra.mxu0 0
        %1575 = vmatpush.bf16.msra.mxu0 0
        %1576 = vmatpush.bf16.msra.mxu0 0
        %1577 = vmatpush.bf16.msra.mxu0 %v411
        %1578 = vmatpush.bf16.msra.mxu0 %v409
        %1579 = vmatpush.bf16.msra.mxu0 %v407
        %1580 = vmatpush.bf16.msra.mxu0 %v405
        %1581 = vmatmul.bf16.gmra.mxu0 %v1571
        %v1582 = vpop.f32.mrf.mxu0
        %v1583 = vadd.f32 0.0, %v1582
        %v1584 = vpop.f32.mrf.mxu0
        %v1585 = vadd.f32 0.0, %v1584
        %1586 = vdwg.mxu0
        %1587 = vmatpush.bf16.msra.mxu0 0
        %1588 = vmatpush.bf16.msra.mxu0 0
        %1589 = vmatpush.bf16.msra.mxu0 0
        %1590 = vmatpush.bf16.msra.mxu0 0
        %1591 = vmatpush.bf16.msra.mxu0 %v412
        %1592 = vmatpush.bf16.msra.mxu0 %v410
        %1593 = vmatpush.bf16.msra.mxu0 %v408
        %1594 = vmatpush.bf16.msra.mxu0 %v406
        %1595 = vmatmul.bf16.gmra.mxu0 %v1571
        %v1596 = vpop.f32.mrf.mxu0
        %v1597 = vadd.f32 0.0, %v1596
        %v1598 = vpop.f32.mrf.mxu0
        %v1599 = vadd.f32 0.0, %v1598
        %1600 = vdwg.mxu0
        %v1601 = vadd.f32 %v1561, %v1583
        %v1602 = vadd.f32 %v1562, %v1597
        %v1603 = vadd.f32 %v1563, %v1585
        %v1604 = vadd.f32 %v1564, %v1599
        %v1605 = vxor.u32 %v1601, 2147483648
        %v1606 = vxor.u32 %v1602, 2147483648
        %v1607 = vxor.u32 %v1603, 2147483648
        %v1608 = vxor.u32 %v1604, 2147483648
        %v1609 = vmul.f32 %v1605, 1.442695
        %v1610 = vpow.pop %v1609
        %v1611 = vmul.f32 %v1606, 1.442695
        %v1612 = vpow.pop %v1611
        %v1613 = vmul.f32 %v1607, 1.442695
        %v1614 = vpow.pop %v1613
        %v1615 = vmul.f32 %v1608, 1.442695
        %v1616 = vpow.pop %v1615
        %v1617 = vadd.f32 %v1610, 1.0
        %v1618 = vadd.f32 %v1612, 1.0
        %v1619 = vadd.f32 %v1614, 1.0
        %v1620 = vadd.f32 %v1616, 1.0
        %v1621 = vrcp.pop %v1617
        %v1622 = vmul.f32 %v1617, %v1621
        %v1623 = vsub.f32 1.0, %v1622
        %v1624 = vmul.f32 %v1621, %v1623
        %v1625 = vadd.f32 %v1621, %v1624
        %vm1626 = vweird.f32 %v1617
        %vm1627 = vweird.f32 %v1621
        %vm1628 = vmor %vm1626, %vm1627
        %v1629 = vsel %vm1628, %v1621, %v1625
        %v1630 = vand.u32 2147483647, %v1617
        %vm1631 = vcmp.eq.f32.partialorder %v1630, 8.507059e+37
        %v1632 = vand.u32 %v1617, 2147483648
        %v1633 = vor.u32 1.1754944e-38, %v1632
        %v1634 = vsel %vm1631, %v1633, %v1629
        %v1635 = vmul.f32 1.0, %v1634
        %v1636 = vrcp.pop %v1618
        %v1637 = vmul.f32 %v1618, %v1636
        %v1638 = vsub.f32 1.0, %v1637
        %v1639 = vmul.f32 %v1636, %v1638
        %v1640 = vadd.f32 %v1636, %v1639
        %vm1641 = vweird.f32 %v1618
        %vm1642 = vweird.f32 %v1636
        %vm1643 = vmor %vm1641, %vm1642
        %v1644 = vsel %vm1643, %v1636, %v1640
        %v1645 = vand.u32 2147483647, %v1618
        %vm1646 = vcmp.eq.f32.partialorder %v1645, 8.507059e+37
        %v1647 = vand.u32 %v1618, 2147483648
        %v1648 = vor.u32 1.1754944e-38, %v1647
        %v1649 = vsel %vm1646, %v1648, %v1644
        %v1650 = vmul.f32 1.0, %v1649
        %v1651 = vrcp.pop %v1619
        %v1652 = vmul.f32 %v1619, %v1651
        %v1653 = vsub.f32 1.0, %v1652
        %v1654 = vmul.f32 %v1651, %v1653
        %v1655 = vadd.f32 %v1651, %v1654
        %vm1656 = vweird.f32 %v1619
        %vm1657 = vweird.f32 %v1651
        %vm1658 = vmor %vm1656, %vm1657
        %v1659 = vsel %vm1658, %v1651, %v1655
        %v1660 = vand.u32 2147483647, %v1619
        %vm1661 = vcmp.eq.f32.partialorder %v1660, 8.507059e+37
        %v1662 = vand.u32 %v1619, 2147483648
        %v1663 = vor.u32 1.1754944e-38, %v1662
        %v1664 = vsel %vm1661, %v1663, %v1659
        %v1665 = vmul.f32 1.0, %v1664
        %v1666 = vrcp.pop %v1620
        %v1667 = vmul.f32 %v1620, %v1666
        %v1668 = vsub.f32 1.0, %v1667
        %v1669 = vmul.f32 %v1666, %v1668
        %v1670 = vadd.f32 %v1666, %v1669
        %vm1671 = vweird.f32 %v1620
        %vm1672 = vweird.f32 %v1666
        %vm1673 = vmor %vm1671, %vm1672
        %v1674 = vsel %vm1673, %v1666, %v1670
        %v1675 = vand.u32 2147483647, %v1620
        %vm1676 = vcmp.eq.f32.partialorder %v1675, 8.507059e+37
        %v1677 = vand.u32 %v1620, 2147483648
        %v1678 = vor.u32 1.1754944e-38, %v1677
        %v1679 = vsel %vm1676, %v1678, %v1674
        %v1680 = vmul.f32 1.0, %v1679
        %v1681 = vtanh.pop %v1602
        %v1682 = vtanh.pop %v1604
        %v1683 = vmul.f32 %v1635, %v1539
        %v1684 = vmul.f32 %v1665, %v1540
        %1687 = vrot.lane.b32.xlu0 %v1681, 64
        %v1688 = vpop.permute.xlu0 %1687
        %1689 = vrot.lane.b32.xlu0 %v1682, 64
        %v1690 = vpop.permute.xlu0 %1689
        %v1693 = vmul.f32 %v1635, %v1688
        %v1694 = vmul.f32 %v1665, %v1690
        %1697 = vrot.lane.b32.xlu0 %v1693, 64
        %v1698 = vpop.permute.xlu0 %1697
        %1699 = vrot.lane.b32.xlu0 %v1694, 64
        %v1700 = vpop.permute.xlu0 %1699
        %v1703 = vadd.f32 %v1683, %v1698
        %v1704 = vadd.f32 %v1684, %v1700
        %v1705 = vtanh.pop %v1703
        %v1706 = vtanh.pop %v1704
        %1709 = vrot.lane.b32.xlu0 %v1705, 64
        %v1710 = vpop.permute.xlu0 %1709
        %1711 = vrot.lane.b32.xlu0 %v1706, 64
        %v1712 = vpop.permute.xlu0 %1711
        %v1715 = vmul.f32 %v1650, %v1710
        %v1716 = vmul.f32 %v1680, %v1712
        %v1717 = vpack.c.bf16 %v1715, %v1715
        %v1718 = vpack.c.bf16 %v1716, %v1716
        %s1719 = scalar_lea.vmem [#allocation2], 56
        %1720 = vst.msk [vmem:[%s1719] sm:$0xf] %vm571, %v1717
        %1721 = vst.msk [vmem:[%s1719 + $0x4] sm:$0xf] %vm571, %v1718
        %s1722 = scalar_lea.vmem %s314, 128 [#allocation5]
        %v1723 = vld [vmem:[%s1722] sm:$0xff]
        %v1724 = vld [vmem:[%s1722 + $0x8] sm:$0xff]
        %v1725 = vunpack.c.l.bf16 %v1723
        %v1726 = vunpack.c.h.bf16 %v1723
        %v1727 = vunpack.c.l.bf16 %v1724
        %v1728 = vunpack.c.h.bf16 %v1724
        %v1731 = vunpack.c.l.b16 %v1717
        %v1732 = vunpack.c.l.b16 %v1718
        %v1733 = vpack.c.b16 %v1732, %v1731
        %v1735 = vsel %vm421, %v1733, 0
        %1737 = vmatpush.bf16.msra.mxu0 0
        %1738 = vmatpush.bf16.msra.mxu0 0
        %1739 = vmatpush.bf16.msra.mxu0 0
        %1740 = vmatpush.bf16.msra.mxu0 0
        %1741 = vmatpush.bf16.msra.mxu0 %v411
        %1742 = vmatpush.bf16.msra.mxu0 %v409
        %1743 = vmatpush.bf16.msra.mxu0 %v407
        %1744 = vmatpush.bf16.msra.mxu0 %v405
        %1745 = vmatmul.bf16.gmra.mxu0 %v1735
        %v1746 = vpop.f32.mrf.mxu0
        %v1747 = vadd.f32 0.0, %v1746
        %v1748 = vpop.f32.mrf.mxu0
        %v1749 = vadd.f32 0.0, %v1748
        %1750 = vdwg.mxu0
        %1751 = vmatpush.bf16.msra.mxu0 0
        %1752 = vmatpush.bf16.msra.mxu0 0
        %1753 = vmatpush.bf16.msra.mxu0 0
        %1754 = vmatpush.bf16.msra.mxu0 0
        %1755 = vmatpush.bf16.msra.mxu0 %v412
        %1756 = vmatpush.bf16.msra.mxu0 %v410
        %1757 = vmatpush.bf16.msra.mxu0 %v408
        %1758 = vmatpush.bf16.msra.mxu0 %v406
        %1759 = vmatmul.bf16.gmra.mxu0 %v1735
        %v1760 = vpop.f32.mrf.mxu0
        %v1761 = vadd.f32 0.0, %v1760
        %v1762 = vpop.f32.mrf.mxu0
        %v1763 = vadd.f32 0.0, %v1762
        %1764 = vdwg.mxu0
        %v1765 = vadd.f32 %v1725, %v1747
        %v1766 = vadd.f32 %v1726, %v1761
        %v1767 = vadd.f32 %v1727, %v1749
        %v1768 = vadd.f32 %v1728, %v1763
        %v1769 = vxor.u32 %v1765, 2147483648
        %v1770 = vxor.u32 %v1766, 2147483648
        %v1771 = vxor.u32 %v1767, 2147483648
        %v1772 = vxor.u32 %v1768, 2147483648
        %v1773 = vmul.f32 %v1769, 1.442695
        %v1774 = vpow.pop %v1773
        %v1775 = vmul.f32 %v1770, 1.442695
        %v1776 = vpow.pop %v1775
        %v1777 = vmul.f32 %v1771, 1.442695
        %v1778 = vpow.pop %v1777
        %v1779 = vmul.f32 %v1772, 1.442695
        %v1780 = vpow.pop %v1779
        %v1781 = vadd.f32 %v1774, 1.0
        %v1782 = vadd.f32 %v1776, 1.0
        %v1783 = vadd.f32 %v1778, 1.0
        %v1784 = vadd.f32 %v1780, 1.0
        %v1785 = vrcp.pop %v1781
        %v1786 = vmul.f32 %v1781, %v1785
        %v1787 = vsub.f32 1.0, %v1786
        %v1788 = vmul.f32 %v1785, %v1787
        %v1789 = vadd.f32 %v1785, %v1788
        %vm1790 = vweird.f32 %v1781
        %vm1791 = vweird.f32 %v1785
        %vm1792 = vmor %vm1790, %vm1791
        %v1793 = vsel %vm1792, %v1785, %v1789
        %v1794 = vand.u32 2147483647, %v1781
        %vm1795 = vcmp.eq.f32.partialorder %v1794, 8.507059e+37
        %v1796 = vand.u32 %v1781, 2147483648
        %v1797 = vor.u32 1.1754944e-38, %v1796
        %v1798 = vsel %vm1795, %v1797, %v1793
        %v1799 = vmul.f32 1.0, %v1798
        %v1800 = vrcp.pop %v1782
        %v1801 = vmul.f32 %v1782, %v1800
        %v1802 = vsub.f32 1.0, %v1801
        %v1803 = vmul.f32 %v1800, %v1802
        %v1804 = vadd.f32 %v1800, %v1803
        %vm1805 = vweird.f32 %v1782
        %vm1806 = vweird.f32 %v1800
        %vm1807 = vmor %vm1805, %vm1806
        %v1808 = vsel %vm1807, %v1800, %v1804
        %v1809 = vand.u32 2147483647, %v1782
        %vm1810 = vcmp.eq.f32.partialorder %v1809, 8.507059e+37
        %v1811 = vand.u32 %v1782, 2147483648
        %v1812 = vor.u32 1.1754944e-38, %v1811
        %v1813 = vsel %vm1810, %v1812, %v1808
        %v1814 = vmul.f32 1.0, %v1813
        %v1815 = vrcp.pop %v1783
        %v1816 = vmul.f32 %v1783, %v1815
        %v1817 = vsub.f32 1.0, %v1816
        %v1818 = vmul.f32 %v1815, %v1817
        %v1819 = vadd.f32 %v1815, %v1818
        %vm1820 = vweird.f32 %v1783
        %vm1821 = vweird.f32 %v1815
        %vm1822 = vmor %vm1820, %vm1821
        %v1823 = vsel %vm1822, %v1815, %v1819
        %v1824 = vand.u32 2147483647, %v1783
        %vm1825 = vcmp.eq.f32.partialorder %v1824, 8.507059e+37
        %v1826 = vand.u32 %v1783, 2147483648
        %v1827 = vor.u32 1.1754944e-38, %v1826
        %v1828 = vsel %vm1825, %v1827, %v1823
        %v1829 = vmul.f32 1.0, %v1828
        %v1830 = vrcp.pop %v1784
        %v1831 = vmul.f32 %v1784, %v1830
        %v1832 = vsub.f32 1.0, %v1831
        %v1833 = vmul.f32 %v1830, %v1832
        %v1834 = vadd.f32 %v1830, %v1833
        %vm1835 = vweird.f32 %v1784
        %vm1836 = vweird.f32 %v1830
        %vm1837 = vmor %vm1835, %vm1836
        %v1838 = vsel %vm1837, %v1830, %v1834
        %v1839 = vand.u32 2147483647, %v1784
        %vm1840 = vcmp.eq.f32.partialorder %v1839, 8.507059e+37
        %v1841 = vand.u32 %v1784, 2147483648
        %v1842 = vor.u32 1.1754944e-38, %v1841
        %v1843 = vsel %vm1840, %v1842, %v1838
        %v1844 = vmul.f32 1.0, %v1843
        %v1845 = vtanh.pop %v1766
        %v1846 = vtanh.pop %v1768
        %v1847 = vmul.f32 %v1799, %v1703
        %v1848 = vmul.f32 %v1829, %v1704
        %1851 = vrot.lane.b32.xlu0 %v1845, 64
        %v1852 = vpop.permute.xlu0 %1851
        %1853 = vrot.lane.b32.xlu0 %v1846, 64
        %v1854 = vpop.permute.xlu0 %1853
        %v1857 = vmul.f32 %v1799, %v1852
        %v1858 = vmul.f32 %v1829, %v1854
        %1861 = vrot.lane.b32.xlu0 %v1857, 64
        %v1862 = vpop.permute.xlu0 %1861
        %1863 = vrot.lane.b32.xlu0 %v1858, 64
        %v1864 = vpop.permute.xlu0 %1863
        %v1867 = vadd.f32 %v1847, %v1862
        %v1868 = vadd.f32 %v1848, %v1864
        %v1869 = vtanh.pop %v1867
        %v1870 = vtanh.pop %v1868
        %1873 = vrot.lane.b32.xlu0 %v1869, 64
        %v1874 = vpop.permute.xlu0 %1873
        %1875 = vrot.lane.b32.xlu0 %v1870, 64
        %v1876 = vpop.permute.xlu0 %1875
        %v1879 = vmul.f32 %v1814, %v1874
        %v1880 = vmul.f32 %v1844, %v1876
        %v1881 = vpack.c.bf16 %v1879, %v1879
        %v1882 = vpack.c.bf16 %v1880, %v1880
        %s1883 = scalar_lea.vmem [#allocation2], 64
        %1884 = vst.msk [vmem:[%s1883] sm:$0xf] %vm571, %v1881
        %1885 = vst.msk [vmem:[%s1883 + $0x4] sm:$0xf] %vm571, %v1882
        %s1886 = scalar_lea.vmem %s314, 144 [#allocation5]
        %v1887 = vld [vmem:[%s1886] sm:$0xff]
        %v1888 = vld [vmem:[%s1886 + $0x8] sm:$0xff]
        %v1889 = vunpack.c.l.bf16 %v1887
        %v1890 = vunpack.c.h.bf16 %v1887
        %v1891 = vunpack.c.l.bf16 %v1888
        %v1892 = vunpack.c.h.bf16 %v1888
        %v1895 = vunpack.c.l.b16 %v1881
        %v1896 = vunpack.c.l.b16 %v1882
        %v1897 = vpack.c.b16 %v1896, %v1895
        %v1899 = vsel %vm421, %v1897, 0
        %1901 = vmatpush.bf16.msra.mxu0 0
        %1902 = vmatpush.bf16.msra.mxu0 0
        %1903 = vmatpush.bf16.msra.mxu0 0
        %1904 = vmatpush.bf16.msra.mxu0 0
        %1905 = vmatpush.bf16.msra.mxu0 %v411
        %1906 = vmatpush.bf16.msra.mxu0 %v409
        %1907 = vmatpush.bf16.msra.mxu0 %v407
        %1908 = vmatpush.bf16.msra.mxu0 %v405
        %1909 = vmatmul.bf16.gmra.mxu0 %v1899
        %v1910 = vpop.f32.mrf.mxu0
        %v1911 = vadd.f32 0.0, %v1910
        %v1912 = vpop.f32.mrf.mxu0
        %v1913 = vadd.f32 0.0, %v1912
        %1914 = vdwg.mxu0
        %1915 = vmatpush.bf16.msra.mxu0 0
        %1916 = vmatpush.bf16.msra.mxu0 0
        %1917 = vmatpush.bf16.msra.mxu0 0
        %1918 = vmatpush.bf16.msra.mxu0 0
        %1919 = vmatpush.bf16.msra.mxu0 %v412
        %1920 = vmatpush.bf16.msra.mxu0 %v410
        %1921 = vmatpush.bf16.msra.mxu0 %v408
        %1922 = vmatpush.bf16.msra.mxu0 %v406
        %1923 = vmatmul.bf16.gmra.mxu0 %v1899
        %v1924 = vpop.f32.mrf.mxu0
        %v1925 = vadd.f32 0.0, %v1924
        %v1926 = vpop.f32.mrf.mxu0
        %v1927 = vadd.f32 0.0, %v1926
        %1928 = vdwg.mxu0
        %v1929 = vadd.f32 %v1889, %v1911
        %v1930 = vadd.f32 %v1890, %v1925
        %v1931 = vadd.f32 %v1891, %v1913
        %v1932 = vadd.f32 %v1892, %v1927
        %v1933 = vxor.u32 %v1929, 2147483648
        %v1934 = vxor.u32 %v1930, 2147483648
        %v1935 = vxor.u32 %v1931, 2147483648
        %v1936 = vxor.u32 %v1932, 2147483648
        %v1937 = vmul.f32 %v1933, 1.442695
        %v1938 = vpow.pop %v1937
        %v1939 = vmul.f32 %v1934, 1.442695
        %v1940 = vpow.pop %v1939
        %v1941 = vmul.f32 %v1935, 1.442695
        %v1942 = vpow.pop %v1941
        %v1943 = vmul.f32 %v1936, 1.442695
        %v1944 = vpow.pop %v1943
        %v1945 = vadd.f32 %v1938, 1.0
        %v1946 = vadd.f32 %v1940, 1.0
        %v1947 = vadd.f32 %v1942, 1.0
        %v1948 = vadd.f32 %v1944, 1.0
        %v1949 = vrcp.pop %v1945
        %v1950 = vmul.f32 %v1945, %v1949
        %v1951 = vsub.f32 1.0, %v1950
        %v1952 = vmul.f32 %v1949, %v1951
        %v1953 = vadd.f32 %v1949, %v1952
        %vm1954 = vweird.f32 %v1945
        %vm1955 = vweird.f32 %v1949
        %vm1956 = vmor %vm1954, %vm1955
        %v1957 = vsel %vm1956, %v1949, %v1953
        %v1958 = vand.u32 2147483647, %v1945
        %vm1959 = vcmp.eq.f32.partialorder %v1958, 8.507059e+37
        %v1960 = vand.u32 %v1945, 2147483648
        %v1961 = vor.u32 1.1754944e-38, %v1960
        %v1962 = vsel %vm1959, %v1961, %v1957
        %v1963 = vmul.f32 1.0, %v1962
        %v1964 = vrcp.pop %v1946
        %v1965 = vmul.f32 %v1946, %v1964
        %v1966 = vsub.f32 1.0, %v1965
        %v1967 = vmul.f32 %v1964, %v1966
        %v1968 = vadd.f32 %v1964, %v1967
        %vm1969 = vweird.f32 %v1946
        %vm1970 = vweird.f32 %v1964
        %vm1971 = vmor %vm1969, %vm1970
        %v1972 = vsel %vm1971, %v1964, %v1968
        %v1973 = vand.u32 2147483647, %v1946
        %vm1974 = vcmp.eq.f32.partialorder %v1973, 8.507059e+37
        %v1975 = vand.u32 %v1946, 2147483648
        %v1976 = vor.u32 1.1754944e-38, %v1975
        %v1977 = vsel %vm1974, %v1976, %v1972
        %v1978 = vmul.f32 1.0, %v1977
        %v1979 = vrcp.pop %v1947
        %v1980 = vmul.f32 %v1947, %v1979
        %v1981 = vsub.f32 1.0, %v1980
        %v1982 = vmul.f32 %v1979, %v1981
        %v1983 = vadd.f32 %v1979, %v1982
        %vm1984 = vweird.f32 %v1947
        %vm1985 = vweird.f32 %v1979
        %vm1986 = vmor %vm1984, %vm1985
        %v1987 = vsel %vm1986, %v1979, %v1983
        %v1988 = vand.u32 2147483647, %v1947
        %vm1989 = vcmp.eq.f32.partialorder %v1988, 8.507059e+37
        %v1990 = vand.u32 %v1947, 2147483648
        %v1991 = vor.u32 1.1754944e-38, %v1990
        %v1992 = vsel %vm1989, %v1991, %v1987
        %v1993 = vmul.f32 1.0, %v1992
        %v1994 = vrcp.pop %v1948
        %v1995 = vmul.f32 %v1948, %v1994
        %v1996 = vsub.f32 1.0, %v1995
        %v1997 = vmul.f32 %v1994, %v1996
        %v1998 = vadd.f32 %v1994, %v1997
        %vm1999 = vweird.f32 %v1948
        %vm2000 = vweird.f32 %v1994
        %vm2001 = vmor %vm1999, %vm2000
        %v2002 = vsel %vm2001, %v1994, %v1998
        %v2003 = vand.u32 2147483647, %v1948
        %vm2004 = vcmp.eq.f32.partialorder %v2003, 8.507059e+37
        %v2005 = vand.u32 %v1948, 2147483648
        %v2006 = vor.u32 1.1754944e-38, %v2005
        %v2007 = vsel %vm2004, %v2006, %v2002
        %v2008 = vmul.f32 1.0, %v2007
        %v2009 = vtanh.pop %v1930
        %v2010 = vtanh.pop %v1932
        %v2011 = vmul.f32 %v1963, %v1867
        %v2012 = vmul.f32 %v1993, %v1868
        %2015 = vrot.lane.b32.xlu0 %v2009, 64
        %v2016 = vpop.permute.xlu0 %2015
        %2017 = vrot.lane.b32.xlu0 %v2010, 64
        %v2018 = vpop.permute.xlu0 %2017
        %v2021 = vmul.f32 %v1963, %v2016
        %v2022 = vmul.f32 %v1993, %v2018
        %2025 = vrot.lane.b32.xlu0 %v2021, 64
        %v2026 = vpop.permute.xlu0 %2025
        %2027 = vrot.lane.b32.xlu0 %v2022, 64
        %v2028 = vpop.permute.xlu0 %2027
        %v2031 = vadd.f32 %v2011, %v2026
        %v2032 = vadd.f32 %v2012, %v2028
        %v2033 = vtanh.pop %v2031
        %v2034 = vtanh.pop %v2032
        %2037 = vrot.lane.b32.xlu0 %v2033, 64
        %v2038 = vpop.permute.xlu0 %2037
        %2039 = vrot.lane.b32.xlu0 %v2034, 64
        %v2040 = vpop.permute.xlu0 %2039
        %v2043 = vmul.f32 %v1978, %v2038
        %v2044 = vmul.f32 %v2008, %v2040
        %v2045 = vpack.c.bf16 %v2043, %v2043
        %v2046 = vpack.c.bf16 %v2044, %v2044
        %s2047 = scalar_lea.vmem [#allocation2], 72
        %2048 = vst.msk [vmem:[%s2047] sm:$0xf] %vm571, %v2045
        %2049 = vst.msk [vmem:[%s2047 + $0x4] sm:$0xf] %vm571, %v2046
        %s2050 = scalar_lea.vmem %s314, 160 [#allocation5]
        %v2051 = vld [vmem:[%s2050] sm:$0xff]
        %v2052 = vld [vmem:[%s2050 + $0x8] sm:$0xff]
        %v2053 = vunpack.c.l.bf16 %v2051
        %v2054 = vunpack.c.h.bf16 %v2051
        %v2055 = vunpack.c.l.bf16 %v2052
        %v2056 = vunpack.c.h.bf16 %v2052
        %v2059 = vunpack.c.l.b16 %v2045
        %v2060 = vunpack.c.l.b16 %v2046
        %v2061 = vpack.c.b16 %v2060, %v2059
        %v2063 = vsel %vm421, %v2061, 0
        %2065 = vmatpush.bf16.msra.mxu0 0
        %2066 = vmatpush.bf16.msra.mxu0 0
        %2067 = vmatpush.bf16.msra.mxu0 0
        %2068 = vmatpush.bf16.msra.mxu0 0
        %2069 = vmatpush.bf16.msra.mxu0 %v411
        %2070 = vmatpush.bf16.msra.mxu0 %v409
        %2071 = vmatpush.bf16.msra.mxu0 %v407
        %2072 = vmatpush.bf16.msra.mxu0 %v405
        %2073 = vmatmul.bf16.gmra.mxu0 %v2063
        %v2074 = vpop.f32.mrf.mxu0
        %v2075 = vadd.f32 0.0, %v2074
        %v2076 = vpop.f32.mrf.mxu0
        %v2077 = vadd.f32 0.0, %v2076
        %2078 = vdwg.mxu0
        %2079 = vmatpush.bf16.msra.mxu0 0
        %2080 = vmatpush.bf16.msra.mxu0 0
        %2081 = vmatpush.bf16.msra.mxu0 0
        %2082 = vmatpush.bf16.msra.mxu0 0
        %2083 = vmatpush.bf16.msra.mxu0 %v412
        %2084 = vmatpush.bf16.msra.mxu0 %v410
        %2085 = vmatpush.bf16.msra.mxu0 %v408
        %2086 = vmatpush.bf16.msra.mxu0 %v406
        %2087 = vmatmul.bf16.gmra.mxu0 %v2063
        %v2088 = vpop.f32.mrf.mxu0
        %v2089 = vadd.f32 0.0, %v2088
        %v2090 = vpop.f32.mrf.mxu0
        %v2091 = vadd.f32 0.0, %v2090
        %2092 = vdwg.mxu0
        %v2093 = vadd.f32 %v2053, %v2075
        %v2094 = vadd.f32 %v2054, %v2089
        %v2095 = vadd.f32 %v2055, %v2077
        %v2096 = vadd.f32 %v2056, %v2091
        %v2097 = vxor.u32 %v2093, 2147483648
        %v2098 = vxor.u32 %v2094, 2147483648
        %v2099 = vxor.u32 %v2095, 2147483648
        %v2100 = vxor.u32 %v2096, 2147483648
        %v2101 = vmul.f32 %v2097, 1.442695
        %v2102 = vpow.pop %v2101
        %v2103 = vmul.f32 %v2098, 1.442695
        %v2104 = vpow.pop %v2103
        %v2105 = vmul.f32 %v2099, 1.442695
        %v2106 = vpow.pop %v2105
        %v2107 = vmul.f32 %v2100, 1.442695
        %v2108 = vpow.pop %v2107
        %v2109 = vadd.f32 %v2102, 1.0
        %v2110 = vadd.f32 %v2104, 1.0
        %v2111 = vadd.f32 %v2106, 1.0
        %v2112 = vadd.f32 %v2108, 1.0
        %v2113 = vrcp.pop %v2109
        %v2114 = vmul.f32 %v2109, %v2113
        %v2115 = vsub.f32 1.0, %v2114
        %v2116 = vmul.f32 %v2113, %v2115
        %v2117 = vadd.f32 %v2113, %v2116
        %vm2118 = vweird.f32 %v2109
        %vm2119 = vweird.f32 %v2113
        %vm2120 = vmor %vm2118, %vm2119
        %v2121 = vsel %vm2120, %v2113, %v2117
        %v2122 = vand.u32 2147483647, %v2109
        %vm2123 = vcmp.eq.f32.partialorder %v2122, 8.507059e+37
        %v2124 = vand.u32 %v2109, 2147483648
        %v2125 = vor.u32 1.1754944e-38, %v2124
        %v2126 = vsel %vm2123, %v2125, %v2121
        %v2127 = vmul.f32 1.0, %v2126
        %v2128 = vrcp.pop %v2110
        %v2129 = vmul.f32 %v2110, %v2128
        %v2130 = vsub.f32 1.0, %v2129
        %v2131 = vmul.f32 %v2128, %v2130
        %v2132 = vadd.f32 %v2128, %v2131
        %vm2133 = vweird.f32 %v2110
        %vm2134 = vweird.f32 %v2128
        %vm2135 = vmor %vm2133, %vm2134
        %v2136 = vsel %vm2135, %v2128, %v2132
        %v2137 = vand.u32 2147483647, %v2110
        %vm2138 = vcmp.eq.f32.partialorder %v2137, 8.507059e+37
        %v2139 = vand.u32 %v2110, 2147483648
        %v2140 = vor.u32 1.1754944e-38, %v2139
        %v2141 = vsel %vm2138, %v2140, %v2136
        %v2142 = vmul.f32 1.0, %v2141
        %v2143 = vrcp.pop %v2111
        %v2144 = vmul.f32 %v2111, %v2143
        %v2145 = vsub.f32 1.0, %v2144
        %v2146 = vmul.f32 %v2143, %v2145
        %v2147 = vadd.f32 %v2143, %v2146
        %vm2148 = vweird.f32 %v2111
        %vm2149 = vweird.f32 %v2143
        %vm2150 = vmor %vm2148, %vm2149
        %v2151 = vsel %vm2150, %v2143, %v2147
        %v2152 = vand.u32 2147483647, %v2111
        %vm2153 = vcmp.eq.f32.partialorder %v2152, 8.507059e+37
        %v2154 = vand.u32 %v2111, 2147483648
        %v2155 = vor.u32 1.1754944e-38, %v2154
        %v2156 = vsel %vm2153, %v2155, %v2151
        %v2157 = vmul.f32 1.0, %v2156
        %v2158 = vrcp.pop %v2112
        %v2159 = vmul.f32 %v2112, %v2158
        %v2160 = vsub.f32 1.0, %v2159
        %v2161 = vmul.f32 %v2158, %v2160
        %v2162 = vadd.f32 %v2158, %v2161
        %vm2163 = vweird.f32 %v2112
        %vm2164 = vweird.f32 %v2158
        %vm2165 = vmor %vm2163, %vm2164
        %v2166 = vsel %vm2165, %v2158, %v2162
        %v2167 = vand.u32 2147483647, %v2112
        %vm2168 = vcmp.eq.f32.partialorder %v2167, 8.507059e+37
        %v2169 = vand.u32 %v2112, 2147483648
        %v2170 = vor.u32 1.1754944e-38, %v2169
        %v2171 = vsel %vm2168, %v2170, %v2166
        %v2172 = vmul.f32 1.0, %v2171
        %v2173 = vtanh.pop %v2094
        %v2174 = vtanh.pop %v2096
        %v2175 = vmul.f32 %v2127, %v2031
        %v2176 = vmul.f32 %v2157, %v2032
        %2179 = vrot.lane.b32.xlu0 %v2173, 64
        %v2180 = vpop.permute.xlu0 %2179
        %2181 = vrot.lane.b32.xlu0 %v2174, 64
        %v2182 = vpop.permute.xlu0 %2181
        %v2185 = vmul.f32 %v2127, %v2180
        %v2186 = vmul.f32 %v2157, %v2182
        %2189 = vrot.lane.b32.xlu0 %v2185, 64
        %v2190 = vpop.permute.xlu0 %2189
        %2191 = vrot.lane.b32.xlu0 %v2186, 64
        %v2192 = vpop.permute.xlu0 %2191
        %v2195 = vadd.f32 %v2175, %v2190
        %v2196 = vadd.f32 %v2176, %v2192
        %v2197 = vtanh.pop %v2195
        %v2198 = vtanh.pop %v2196
        %2201 = vrot.lane.b32.xlu0 %v2197, 64
        %v2202 = vpop.permute.xlu0 %2201
        %2203 = vrot.lane.b32.xlu0 %v2198, 64
        %v2204 = vpop.permute.xlu0 %2203
        %v2207 = vmul.f32 %v2142, %v2202
        %v2208 = vmul.f32 %v2172, %v2204
        %v2209 = vpack.c.bf16 %v2207, %v2207
        %v2210 = vpack.c.bf16 %v2208, %v2208
        %s2211 = scalar_lea.vmem [#allocation2], 80
        %2212 = vst.msk [vmem:[%s2211] sm:$0xf] %vm571, %v2209
        %2213 = vst.msk [vmem:[%s2211 + $0x4] sm:$0xf] %vm571, %v2210
        %s2214 = scalar_lea.vmem %s314, 176 [#allocation5]
        %v2215 = vld [vmem:[%s2214] sm:$0xff]
        %v2216 = vld [vmem:[%s2214 + $0x8] sm:$0xff]
        %v2217 = vunpack.c.l.bf16 %v2215
        %v2218 = vunpack.c.h.bf16 %v2215
        %v2219 = vunpack.c.l.bf16 %v2216
        %v2220 = vunpack.c.h.bf16 %v2216
        %v2223 = vunpack.c.l.b16 %v2209
        %v2224 = vunpack.c.l.b16 %v2210
        %v2225 = vpack.c.b16 %v2224, %v2223
        %v2227 = vsel %vm421, %v2225, 0
        %2229 = vmatpush.bf16.msra.mxu0 0
        %2230 = vmatpush.bf16.msra.mxu0 0
        %2231 = vmatpush.bf16.msra.mxu0 0
        %2232 = vmatpush.bf16.msra.mxu0 0
        %2233 = vmatpush.bf16.msra.mxu0 %v411
        %2234 = vmatpush.bf16.msra.mxu0 %v409
        %2235 = vmatpush.bf16.msra.mxu0 %v407
        %2236 = vmatpush.bf16.msra.mxu0 %v405
        %2237 = vmatmul.bf16.gmra.mxu0 %v2227
        %v2238 = vpop.f32.mrf.mxu0
        %v2239 = vadd.f32 0.0, %v2238
        %v2240 = vpop.f32.mrf.mxu0
        %v2241 = vadd.f32 0.0, %v2240
        %2242 = vdwg.mxu0
        %2243 = vmatpush.bf16.msra.mxu0 0
        %2244 = vmatpush.bf16.msra.mxu0 0
        %2245 = vmatpush.bf16.msra.mxu0 0
        %2246 = vmatpush.bf16.msra.mxu0 0
        %2247 = vmatpush.bf16.msra.mxu0 %v412
        %2248 = vmatpush.bf16.msra.mxu0 %v410
        %2249 = vmatpush.bf16.msra.mxu0 %v408
        %2250 = vmatpush.bf16.msra.mxu0 %v406
        %2251 = vmatmul.bf16.gmra.mxu0 %v2227
        %v2252 = vpop.f32.mrf.mxu0
        %v2253 = vadd.f32 0.0, %v2252
        %v2254 = vpop.f32.mrf.mxu0
        %v2255 = vadd.f32 0.0, %v2254
        %2256 = vdwg.mxu0
        %v2257 = vadd.f32 %v2217, %v2239
        %v2258 = vadd.f32 %v2218, %v2253
        %v2259 = vadd.f32 %v2219, %v2241
        %v2260 = vadd.f32 %v2220, %v2255
        %v2261 = vxor.u32 %v2257, 2147483648
        %v2262 = vxor.u32 %v2258, 2147483648
        %v2263 = vxor.u32 %v2259, 2147483648
        %v2264 = vxor.u32 %v2260, 2147483648
        %v2265 = vmul.f32 %v2261, 1.442695
        %v2266 = vpow.pop %v2265
        %v2267 = vmul.f32 %v2262, 1.442695
        %v2268 = vpow.pop %v2267
        %v2269 = vmul.f32 %v2263, 1.442695
        %v2270 = vpow.pop %v2269
        %v2271 = vmul.f32 %v2264, 1.442695
        %v2272 = vpow.pop %v2271
        %v2273 = vadd.f32 %v2266, 1.0
        %v2274 = vadd.f32 %v2268, 1.0
        %v2275 = vadd.f32 %v2270, 1.0
        %v2276 = vadd.f32 %v2272, 1.0
        %v2277 = vrcp.pop %v2273
        %v2278 = vmul.f32 %v2273, %v2277
        %v2279 = vsub.f32 1.0, %v2278
        %v2280 = vmul.f32 %v2277, %v2279
        %v2281 = vadd.f32 %v2277, %v2280
        %vm2282 = vweird.f32 %v2273
        %vm2283 = vweird.f32 %v2277
        %vm2284 = vmor %vm2282, %vm2283
        %v2285 = vsel %vm2284, %v2277, %v2281
        %v2286 = vand.u32 2147483647, %v2273
        %vm2287 = vcmp.eq.f32.partialorder %v2286, 8.507059e+37
        %v2288 = vand.u32 %v2273, 2147483648
        %v2289 = vor.u32 1.1754944e-38, %v2288
        %v2290 = vsel %vm2287, %v2289, %v2285
        %v2291 = vmul.f32 1.0, %v2290
        %v2292 = vrcp.pop %v2274
        %v2293 = vmul.f32 %v2274, %v2292
        %v2294 = vsub.f32 1.0, %v2293
        %v2295 = vmul.f32 %v2292, %v2294
        %v2296 = vadd.f32 %v2292, %v2295
        %vm2297 = vweird.f32 %v2274
        %vm2298 = vweird.f32 %v2292
        %vm2299 = vmor %vm2297, %vm2298
        %v2300 = vsel %vm2299, %v2292, %v2296
        %v2301 = vand.u32 2147483647, %v2274
        %vm2302 = vcmp.eq.f32.partialorder %v2301, 8.507059e+37
        %v2303 = vand.u32 %v2274, 2147483648
        %v2304 = vor.u32 1.1754944e-38, %v2303
        %v2305 = vsel %vm2302, %v2304, %v2300
        %v2306 = vmul.f32 1.0, %v2305
        %v2307 = vrcp.pop %v2275
        %v2308 = vmul.f32 %v2275, %v2307
        %v2309 = vsub.f32 1.0, %v2308
        %v2310 = vmul.f32 %v2307, %v2309
        %v2311 = vadd.f32 %v2307, %v2310
        %vm2312 = vweird.f32 %v2275
        %vm2313 = vweird.f32 %v2307
        %vm2314 = vmor %vm2312, %vm2313
        %v2315 = vsel %vm2314, %v2307, %v2311
        %v2316 = vand.u32 2147483647, %v2275
        %vm2317 = vcmp.eq.f32.partialorder %v2316, 8.507059e+37
        %v2318 = vand.u32 %v2275, 2147483648
        %v2319 = vor.u32 1.1754944e-38, %v2318
        %v2320 = vsel %vm2317, %v2319, %v2315
        %v2321 = vmul.f32 1.0, %v2320
        %v2322 = vrcp.pop %v2276
        %v2323 = vmul.f32 %v2276, %v2322
        %v2324 = vsub.f32 1.0, %v2323
        %v2325 = vmul.f32 %v2322, %v2324
        %v2326 = vadd.f32 %v2322, %v2325
        %vm2327 = vweird.f32 %v2276
        %vm2328 = vweird.f32 %v2322
        %vm2329 = vmor %vm2327, %vm2328
        %v2330 = vsel %vm2329, %v2322, %v2326
        %v2331 = vand.u32 2147483647, %v2276
        %vm2332 = vcmp.eq.f32.partialorder %v2331, 8.507059e+37
        %v2333 = vand.u32 %v2276, 2147483648
        %v2334 = vor.u32 1.1754944e-38, %v2333
        %v2335 = vsel %vm2332, %v2334, %v2330
        %v2336 = vmul.f32 1.0, %v2335
        %v2337 = vtanh.pop %v2258
        %v2338 = vtanh.pop %v2260
        %v2339 = vmul.f32 %v2291, %v2195
        %v2340 = vmul.f32 %v2321, %v2196
        %2343 = vrot.lane.b32.xlu0 %v2337, 64
        %v2344 = vpop.permute.xlu0 %2343
        %2345 = vrot.lane.b32.xlu0 %v2338, 64
        %v2346 = vpop.permute.xlu0 %2345
        %v2349 = vmul.f32 %v2291, %v2344
        %v2350 = vmul.f32 %v2321, %v2346
        %2353 = vrot.lane.b32.xlu0 %v2349, 64
        %v2354 = vpop.permute.xlu0 %2353
        %2355 = vrot.lane.b32.xlu0 %v2350, 64
        %v2356 = vpop.permute.xlu0 %2355
        %v2359 = vadd.f32 %v2339, %v2354
        %v2360 = vadd.f32 %v2340, %v2356
        %v2361 = vtanh.pop %v2359
        %v2362 = vtanh.pop %v2360
        %2365 = vrot.lane.b32.xlu0 %v2361, 64
        %v2366 = vpop.permute.xlu0 %2365
        %2367 = vrot.lane.b32.xlu0 %v2362, 64
        %v2368 = vpop.permute.xlu0 %2367
        %v2371 = vmul.f32 %v2306, %v2366
        %v2372 = vmul.f32 %v2336, %v2368
        %v2373 = vpack.c.bf16 %v2371, %v2371
        %v2374 = vpack.c.bf16 %v2372, %v2372
        %s2375 = scalar_lea.vmem [#allocation2], 88
        %2376 = vst.msk [vmem:[%s2375] sm:$0xf] %vm571, %v2373
        %2377 = vst.msk [vmem:[%s2375 + $0x4] sm:$0xf] %vm571, %v2374
        %s2378 = scalar_lea.vmem %s314, 192 [#allocation5]
        %v2379 = vld [vmem:[%s2378] sm:$0xff]
        %v2380 = vld [vmem:[%s2378 + $0x8] sm:$0xff]
        %v2381 = vunpack.c.l.bf16 %v2379
        %v2382 = vunpack.c.h.bf16 %v2379
        %v2383 = vunpack.c.l.bf16 %v2380
        %v2384 = vunpack.c.h.bf16 %v2380
        %v2387 = vunpack.c.l.b16 %v2373
        %v2388 = vunpack.c.l.b16 %v2374
        %v2389 = vpack.c.b16 %v2388, %v2387
        %v2391 = vsel %vm421, %v2389, 0
        %2393 = vmatpush.bf16.msra.mxu0 0
        %2394 = vmatpush.bf16.msra.mxu0 0
        %2395 = vmatpush.bf16.msra.mxu0 0
        %2396 = vmatpush.bf16.msra.mxu0 0
        %2397 = vmatpush.bf16.msra.mxu0 %v411
        %2398 = vmatpush.bf16.msra.mxu0 %v409
        %2399 = vmatpush.bf16.msra.mxu0 %v407
        %2400 = vmatpush.bf16.msra.mxu0 %v405
        %2401 = vmatmul.bf16.gmra.mxu0 %v2391
        %v2402 = vpop.f32.mrf.mxu0
        %v2403 = vadd.f32 0.0, %v2402
        %v2404 = vpop.f32.mrf.mxu0
        %v2405 = vadd.f32 0.0, %v2404
        %2406 = vdwg.mxu0
        %2407 = vmatpush.bf16.msra.mxu0 0
        %2408 = vmatpush.bf16.msra.mxu0 0
        %2409 = vmatpush.bf16.msra.mxu0 0
        %2410 = vmatpush.bf16.msra.mxu0 0
        %2411 = vmatpush.bf16.msra.mxu0 %v412
        %2412 = vmatpush.bf16.msra.mxu0 %v410
        %2413 = vmatpush.bf16.msra.mxu0 %v408
        %2414 = vmatpush.bf16.msra.mxu0 %v406
        %2415 = vmatmul.bf16.gmra.mxu0 %v2391
        %v2416 = vpop.f32.mrf.mxu0
        %v2417 = vadd.f32 0.0, %v2416
        %v2418 = vpop.f32.mrf.mxu0
        %v2419 = vadd.f32 0.0, %v2418
        %2420 = vdwg.mxu0
        %v2421 = vadd.f32 %v2381, %v2403
        %v2422 = vadd.f32 %v2382, %v2417
        %v2423 = vadd.f32 %v2383, %v2405
        %v2424 = vadd.f32 %v2384, %v2419
        %v2425 = vxor.u32 %v2421, 2147483648
        %v2426 = vxor.u32 %v2422, 2147483648
        %v2427 = vxor.u32 %v2423, 2147483648
        %v2428 = vxor.u32 %v2424, 2147483648
        %v2429 = vmul.f32 %v2425, 1.442695
        %v2430 = vpow.pop %v2429
        %v2431 = vmul.f32 %v2426, 1.442695
        %v2432 = vpow.pop %v2431
        %v2433 = vmul.f32 %v2427, 1.442695
        %v2434 = vpow.pop %v2433
        %v2435 = vmul.f32 %v2428, 1.442695
        %v2436 = vpow.pop %v2435
        %v2437 = vadd.f32 %v2430, 1.0
        %v2438 = vadd.f32 %v2432, 1.0
        %v2439 = vadd.f32 %v2434, 1.0
        %v2440 = vadd.f32 %v2436, 1.0
        %v2441 = vrcp.pop %v2437
        %v2442 = vmul.f32 %v2437, %v2441
        %v2443 = vsub.f32 1.0, %v2442
        %v2444 = vmul.f32 %v2441, %v2443
        %v2445 = vadd.f32 %v2441, %v2444
        %vm2446 = vweird.f32 %v2437
        %vm2447 = vweird.f32 %v2441
        %vm2448 = vmor %vm2446, %vm2447
        %v2449 = vsel %vm2448, %v2441, %v2445
        %v2450 = vand.u32 2147483647, %v2437
        %vm2451 = vcmp.eq.f32.partialorder %v2450, 8.507059e+37
        %v2452 = vand.u32 %v2437, 2147483648
        %v2453 = vor.u32 1.1754944e-38, %v2452
        %v2454 = vsel %vm2451, %v2453, %v2449
        %v2455 = vmul.f32 1.0, %v2454
        %v2456 = vrcp.pop %v2438
        %v2457 = vmul.f32 %v2438, %v2456
        %v2458 = vsub.f32 1.0, %v2457
        %v2459 = vmul.f32 %v2456, %v2458
        %v2460 = vadd.f32 %v2456, %v2459
        %vm2461 = vweird.f32 %v2438
        %vm2462 = vweird.f32 %v2456
        %vm2463 = vmor %vm2461, %vm2462
        %v2464 = vsel %vm2463, %v2456, %v2460
        %v2465 = vand.u32 2147483647, %v2438
        %vm2466 = vcmp.eq.f32.partialorder %v2465, 8.507059e+37
        %v2467 = vand.u32 %v2438, 2147483648
        %v2468 = vor.u32 1.1754944e-38, %v2467
        %v2469 = vsel %vm2466, %v2468, %v2464
        %v2470 = vmul.f32 1.0, %v2469
        %v2471 = vrcp.pop %v2439
        %v2472 = vmul.f32 %v2439, %v2471
        %v2473 = vsub.f32 1.0, %v2472
        %v2474 = vmul.f32 %v2471, %v2473
        %v2475 = vadd.f32 %v2471, %v2474
        %vm2476 = vweird.f32 %v2439
        %vm2477 = vweird.f32 %v2471
        %vm2478 = vmor %vm2476, %vm2477
        %v2479 = vsel %vm2478, %v2471, %v2475
        %v2480 = vand.u32 2147483647, %v2439
        %vm2481 = vcmp.eq.f32.partialorder %v2480, 8.507059e+37
        %v2482 = vand.u32 %v2439, 2147483648
        %v2483 = vor.u32 1.1754944e-38, %v2482
        %v2484 = vsel %vm2481, %v2483, %v2479
        %v2485 = vmul.f32 1.0, %v2484
        %v2486 = vrcp.pop %v2440
        %v2487 = vmul.f32 %v2440, %v2486
        %v2488 = vsub.f32 1.0, %v2487
        %v2489 = vmul.f32 %v2486, %v2488
        %v2490 = vadd.f32 %v2486, %v2489
        %vm2491 = vweird.f32 %v2440
        %vm2492 = vweird.f32 %v2486
        %vm2493 = vmor %vm2491, %vm2492
        %v2494 = vsel %vm2493, %v2486, %v2490
        %v2495 = vand.u32 2147483647, %v2440
        %vm2496 = vcmp.eq.f32.partialorder %v2495, 8.507059e+37
        %v2497 = vand.u32 %v2440, 2147483648
        %v2498 = vor.u32 1.1754944e-38, %v2497
        %v2499 = vsel %vm2496, %v2498, %v2494
        %v2500 = vmul.f32 1.0, %v2499
        %v2501 = vtanh.pop %v2422
        %v2502 = vtanh.pop %v2424
        %v2503 = vmul.f32 %v2455, %v2359
        %v2504 = vmul.f32 %v2485, %v2360
        %2507 = vrot.lane.b32.xlu0 %v2501, 64
        %v2508 = vpop.permute.xlu0 %2507
        %2509 = vrot.lane.b32.xlu0 %v2502, 64
        %v2510 = vpop.permute.xlu0 %2509
        %v2513 = vmul.f32 %v2455, %v2508
        %v2514 = vmul.f32 %v2485, %v2510
        %2517 = vrot.lane.b32.xlu0 %v2513, 64
        %v2518 = vpop.permute.xlu0 %2517
        %2519 = vrot.lane.b32.xlu0 %v2514, 64
        %v2520 = vpop.permute.xlu0 %2519
        %v2523 = vadd.f32 %v2503, %v2518
        %v2524 = vadd.f32 %v2504, %v2520
        %v2525 = vtanh.pop %v2523
        %v2526 = vtanh.pop %v2524
        %2529 = vrot.lane.b32.xlu0 %v2525, 64
        %v2530 = vpop.permute.xlu0 %2529
        %2531 = vrot.lane.b32.xlu0 %v2526, 64
        %v2532 = vpop.permute.xlu0 %2531
        %v2535 = vmul.f32 %v2470, %v2530
        %v2536 = vmul.f32 %v2500, %v2532
        %v2537 = vpack.c.bf16 %v2535, %v2535
        %v2538 = vpack.c.bf16 %v2536, %v2536
        %s2539 = scalar_lea.vmem [#allocation2], 96
        %2540 = vst.msk [vmem:[%s2539] sm:$0xf] %vm571, %v2537
        %2541 = vst.msk [vmem:[%s2539 + $0x4] sm:$0xf] %vm571, %v2538
        %s2542 = scalar_lea.vmem %s314, 208 [#allocation5]
        %v2543 = vld [vmem:[%s2542] sm:$0xff]
        %v2544 = vld [vmem:[%s2542 + $0x8] sm:$0xff]
        %v2545 = vunpack.c.l.bf16 %v2543
        %v2546 = vunpack.c.h.bf16 %v2543
        %v2547 = vunpack.c.l.bf16 %v2544
        %v2548 = vunpack.c.h.bf16 %v2544
        %v2551 = vunpack.c.l.b16 %v2537
        %v2552 = vunpack.c.l.b16 %v2538
        %v2553 = vpack.c.b16 %v2552, %v2551
        %v2555 = vsel %vm421, %v2553, 0
        %2557 = vmatpush.bf16.msra.mxu0 0
        %2558 = vmatpush.bf16.msra.mxu0 0
        %2559 = vmatpush.bf16.msra.mxu0 0
        %2560 = vmatpush.bf16.msra.mxu0 0
        %2561 = vmatpush.bf16.msra.mxu0 %v411
        %2562 = vmatpush.bf16.msra.mxu0 %v409
        %2563 = vmatpush.bf16.msra.mxu0 %v407
        %2564 = vmatpush.bf16.msra.mxu0 %v405
        %2565 = vmatmul.bf16.gmra.mxu0 %v2555
        %v2566 = vpop.f32.mrf.mxu0
        %v2567 = vadd.f32 0.0, %v2566
        %v2568 = vpop.f32.mrf.mxu0
        %v2569 = vadd.f32 0.0, %v2568
        %2570 = vdwg.mxu0
        %2571 = vmatpush.bf16.msra.mxu0 0
        %2572 = vmatpush.bf16.msra.mxu0 0
        %2573 = vmatpush.bf16.msra.mxu0 0
        %2574 = vmatpush.bf16.msra.mxu0 0
        %2575 = vmatpush.bf16.msra.mxu0 %v412
        %2576 = vmatpush.bf16.msra.mxu0 %v410
        %2577 = vmatpush.bf16.msra.mxu0 %v408
        %2578 = vmatpush.bf16.msra.mxu0 %v406
        %2579 = vmatmul.bf16.gmra.mxu0 %v2555
        %v2580 = vpop.f32.mrf.mxu0
        %v2581 = vadd.f32 0.0, %v2580
        %v2582 = vpop.f32.mrf.mxu0
        %v2583 = vadd.f32 0.0, %v2582
        %2584 = vdwg.mxu0
        %v2585 = vadd.f32 %v2545, %v2567
        %v2586 = vadd.f32 %v2546, %v2581
        %v2587 = vadd.f32 %v2547, %v2569
        %v2588 = vadd.f32 %v2548, %v2583
        %v2589 = vxor.u32 %v2585, 2147483648
        %v2590 = vxor.u32 %v2586, 2147483648
        %v2591 = vxor.u32 %v2587, 2147483648
        %v2592 = vxor.u32 %v2588, 2147483648
        %v2593 = vmul.f32 %v2589, 1.442695
        %v2594 = vpow.pop %v2593
        %v2595 = vmul.f32 %v2590, 1.442695
        %v2596 = vpow.pop %v2595
        %v2597 = vmul.f32 %v2591, 1.442695
        %v2598 = vpow.pop %v2597
        %v2599 = vmul.f32 %v2592, 1.442695
        %v2600 = vpow.pop %v2599
        %v2601 = vadd.f32 %v2594, 1.0
        %v2602 = vadd.f32 %v2596, 1.0
        %v2603 = vadd.f32 %v2598, 1.0
        %v2604 = vadd.f32 %v2600, 1.0
        %v2605 = vrcp.pop %v2601
        %v2606 = vmul.f32 %v2601, %v2605
        %v2607 = vsub.f32 1.0, %v2606
        %v2608 = vmul.f32 %v2605, %v2607
        %v2609 = vadd.f32 %v2605, %v2608
        %vm2610 = vweird.f32 %v2601
        %vm2611 = vweird.f32 %v2605
        %vm2612 = vmor %vm2610, %vm2611
        %v2613 = vsel %vm2612, %v2605, %v2609
        %v2614 = vand.u32 2147483647, %v2601
        %vm2615 = vcmp.eq.f32.partialorder %v2614, 8.507059e+37
        %v2616 = vand.u32 %v2601, 2147483648
        %v2617 = vor.u32 1.1754944e-38, %v2616
        %v2618 = vsel %vm2615, %v2617, %v2613
        %v2619 = vmul.f32 1.0, %v2618
        %v2620 = vrcp.pop %v2602
        %v2621 = vmul.f32 %v2602, %v2620
        %v2622 = vsub.f32 1.0, %v2621
        %v2623 = vmul.f32 %v2620, %v2622
        %v2624 = vadd.f32 %v2620, %v2623
        %vm2625 = vweird.f32 %v2602
        %vm2626 = vweird.f32 %v2620
        %vm2627 = vmor %vm2625, %vm2626
        %v2628 = vsel %vm2627, %v2620, %v2624
        %v2629 = vand.u32 2147483647, %v2602
        %vm2630 = vcmp.eq.f32.partialorder %v2629, 8.507059e+37
        %v2631 = vand.u32 %v2602, 2147483648
        %v2632 = vor.u32 1.1754944e-38, %v2631
        %v2633 = vsel %vm2630, %v2632, %v2628
        %v2634 = vmul.f32 1.0, %v2633
        %v2635 = vrcp.pop %v2603
        %v2636 = vmul.f32 %v2603, %v2635
        %v2637 = vsub.f32 1.0, %v2636
        %v2638 = vmul.f32 %v2635, %v2637
        %v2639 = vadd.f32 %v2635, %v2638
        %vm2640 = vweird.f32 %v2603
        %vm2641 = vweird.f32 %v2635
        %vm2642 = vmor %vm2640, %vm2641
        %v2643 = vsel %vm2642, %v2635, %v2639
        %v2644 = vand.u32 2147483647, %v2603
        %vm2645 = vcmp.eq.f32.partialorder %v2644, 8.507059e+37
        %v2646 = vand.u32 %v2603, 2147483648
        %v2647 = vor.u32 1.1754944e-38, %v2646
        %v2648 = vsel %vm2645, %v2647, %v2643
        %v2649 = vmul.f32 1.0, %v2648
        %v2650 = vrcp.pop %v2604
        %v2651 = vmul.f32 %v2604, %v2650
        %v2652 = vsub.f32 1.0, %v2651
        %v2653 = vmul.f32 %v2650, %v2652
        %v2654 = vadd.f32 %v2650, %v2653
        %vm2655 = vweird.f32 %v2604
        %vm2656 = vweird.f32 %v2650
        %vm2657 = vmor %vm2655, %vm2656
        %v2658 = vsel %vm2657, %v2650, %v2654
        %v2659 = vand.u32 2147483647, %v2604
        %vm2660 = vcmp.eq.f32.partialorder %v2659, 8.507059e+37
        %v2661 = vand.u32 %v2604, 2147483648
        %v2662 = vor.u32 1.1754944e-38, %v2661
        %v2663 = vsel %vm2660, %v2662, %v2658
        %v2664 = vmul.f32 1.0, %v2663
        %v2665 = vtanh.pop %v2586
        %v2666 = vtanh.pop %v2588
        %v2667 = vmul.f32 %v2619, %v2523
        %v2668 = vmul.f32 %v2649, %v2524
        %2671 = vrot.lane.b32.xlu0 %v2665, 64
        %v2672 = vpop.permute.xlu0 %2671
        %2673 = vrot.lane.b32.xlu0 %v2666, 64
        %v2674 = vpop.permute.xlu0 %2673
        %v2677 = vmul.f32 %v2619, %v2672
        %v2678 = vmul.f32 %v2649, %v2674
        %2681 = vrot.lane.b32.xlu0 %v2677, 64
        %v2682 = vpop.permute.xlu0 %2681
        %2683 = vrot.lane.b32.xlu0 %v2678, 64
        %v2684 = vpop.permute.xlu0 %2683
        %v2687 = vadd.f32 %v2667, %v2682
        %v2688 = vadd.f32 %v2668, %v2684
        %v2689 = vtanh.pop %v2687
        %v2690 = vtanh.pop %v2688
        %2693 = vrot.lane.b32.xlu0 %v2689, 64
        %v2694 = vpop.permute.xlu0 %2693
        %2695 = vrot.lane.b32.xlu0 %v2690, 64
        %v2696 = vpop.permute.xlu0 %2695
        %v2699 = vmul.f32 %v2634, %v2694
        %v2700 = vmul.f32 %v2664, %v2696
        %v2701 = vpack.c.bf16 %v2699, %v2699
        %v2702 = vpack.c.bf16 %v2700, %v2700
        %s2703 = scalar_lea.vmem [#allocation2], 104
        %2704 = vst.msk [vmem:[%s2703] sm:$0xf] %vm571, %v2701
        %2705 = vst.msk [vmem:[%s2703 + $0x4] sm:$0xf] %vm571, %v2702
        %s2706 = scalar_lea.vmem %s314, 224 [#allocation5]
        %v2707 = vld [vmem:[%s2706] sm:$0xff]
        %v2708 = vld [vmem:[%s2706 + $0x8] sm:$0xff]
        %v2709 = vunpack.c.l.bf16 %v2707
        %v2710 = vunpack.c.h.bf16 %v2707
        %v2711 = vunpack.c.l.bf16 %v2708
        %v2712 = vunpack.c.h.bf16 %v2708
        %v2715 = vunpack.c.l.b16 %v2701
        %v2716 = vunpack.c.l.b16 %v2702
        %v2717 = vpack.c.b16 %v2716, %v2715
        %v2719 = vsel %vm421, %v2717, 0
        %2721 = vmatpush.bf16.msra.mxu0 0
        %2722 = vmatpush.bf16.msra.mxu0 0
        %2723 = vmatpush.bf16.msra.mxu0 0
        %2724 = vmatpush.bf16.msra.mxu0 0
        %2725 = vmatpush.bf16.msra.mxu0 %v411
        %2726 = vmatpush.bf16.msra.mxu0 %v409
        %2727 = vmatpush.bf16.msra.mxu0 %v407
        %2728 = vmatpush.bf16.msra.mxu0 %v405
        %2729 = vmatmul.bf16.gmra.mxu0 %v2719
        %v2730 = vpop.f32.mrf.mxu0
        %v2731 = vadd.f32 0.0, %v2730
        %v2732 = vpop.f32.mrf.mxu0
        %v2733 = vadd.f32 0.0, %v2732
        %2734 = vdwg.mxu0
        %2735 = vmatpush.bf16.msra.mxu0 0
        %2736 = vmatpush.bf16.msra.mxu0 0
        %2737 = vmatpush.bf16.msra.mxu0 0
        %2738 = vmatpush.bf16.msra.mxu0 0
        %2739 = vmatpush.bf16.msra.mxu0 %v412
        %2740 = vmatpush.bf16.msra.mxu0 %v410
        %2741 = vmatpush.bf16.msra.mxu0 %v408
        %2742 = vmatpush.bf16.msra.mxu0 %v406
        %2743 = vmatmul.bf16.gmra.mxu0 %v2719
        %v2744 = vpop.f32.mrf.mxu0
        %v2745 = vadd.f32 0.0, %v2744
        %v2746 = vpop.f32.mrf.mxu0
        %v2747 = vadd.f32 0.0, %v2746
        %2748 = vdwg.mxu0
        %v2749 = vadd.f32 %v2709, %v2731
        %v2750 = vadd.f32 %v2710, %v2745
        %v2751 = vadd.f32 %v2711, %v2733
        %v2752 = vadd.f32 %v2712, %v2747
        %v2753 = vxor.u32 %v2749, 2147483648
        %v2754 = vxor.u32 %v2750, 2147483648
        %v2755 = vxor.u32 %v2751, 2147483648
        %v2756 = vxor.u32 %v2752, 2147483648
        %v2757 = vmul.f32 %v2753, 1.442695
        %v2758 = vpow.pop %v2757
        %v2759 = vmul.f32 %v2754, 1.442695
        %v2760 = vpow.pop %v2759
        %v2761 = vmul.f32 %v2755, 1.442695
        %v2762 = vpow.pop %v2761
        %v2763 = vmul.f32 %v2756, 1.442695
        %v2764 = vpow.pop %v2763
        %v2765 = vadd.f32 %v2758, 1.0
        %v2766 = vadd.f32 %v2760, 1.0
        %v2767 = vadd.f32 %v2762, 1.0
        %v2768 = vadd.f32 %v2764, 1.0
        %v2769 = vrcp.pop %v2765
        %v2770 = vmul.f32 %v2765, %v2769
        %v2771 = vsub.f32 1.0, %v2770
        %v2772 = vmul.f32 %v2769, %v2771
        %v2773 = vadd.f32 %v2769, %v2772
        %vm2774 = vweird.f32 %v2765
        %vm2775 = vweird.f32 %v2769
        %vm2776 = vmor %vm2774, %vm2775
        %v2777 = vsel %vm2776, %v2769, %v2773
        %v2778 = vand.u32 2147483647, %v2765
        %vm2779 = vcmp.eq.f32.partialorder %v2778, 8.507059e+37
        %v2780 = vand.u32 %v2765, 2147483648
        %v2781 = vor.u32 1.1754944e-38, %v2780
        %v2782 = vsel %vm2779, %v2781, %v2777
        %v2783 = vmul.f32 1.0, %v2782
        %v2784 = vrcp.pop %v2766
        %v2785 = vmul.f32 %v2766, %v2784
        %v2786 = vsub.f32 1.0, %v2785
        %v2787 = vmul.f32 %v2784, %v2786
        %v2788 = vadd.f32 %v2784, %v2787
        %vm2789 = vweird.f32 %v2766
        %vm2790 = vweird.f32 %v2784
        %vm2791 = vmor %vm2789, %vm2790
        %v2792 = vsel %vm2791, %v2784, %v2788
        %v2793 = vand.u32 2147483647, %v2766
        %vm2794 = vcmp.eq.f32.partialorder %v2793, 8.507059e+37
        %v2795 = vand.u32 %v2766, 2147483648
        %v2796 = vor.u32 1.1754944e-38, %v2795
        %v2797 = vsel %vm2794, %v2796, %v2792
        %v2798 = vmul.f32 1.0, %v2797
        %v2799 = vrcp.pop %v2767
        %v2800 = vmul.f32 %v2767, %v2799
        %v2801 = vsub.f32 1.0, %v2800
        %v2802 = vmul.f32 %v2799, %v2801
        %v2803 = vadd.f32 %v2799, %v2802
        %vm2804 = vweird.f32 %v2767
        %vm2805 = vweird.f32 %v2799
        %vm2806 = vmor %vm2804, %vm2805
        %v2807 = vsel %vm2806, %v2799, %v2803
        %v2808 = vand.u32 2147483647, %v2767
        %vm2809 = vcmp.eq.f32.partialorder %v2808, 8.507059e+37
        %v2810 = vand.u32 %v2767, 2147483648
        %v2811 = vor.u32 1.1754944e-38, %v2810
        %v2812 = vsel %vm2809, %v2811, %v2807
        %v2813 = vmul.f32 1.0, %v2812
        %v2814 = vrcp.pop %v2768
        %v2815 = vmul.f32 %v2768, %v2814
        %v2816 = vsub.f32 1.0, %v2815
        %v2817 = vmul.f32 %v2814, %v2816
        %v2818 = vadd.f32 %v2814, %v2817
        %vm2819 = vweird.f32 %v2768
        %vm2820 = vweird.f32 %v2814
        %vm2821 = vmor %vm2819, %vm2820
        %v2822 = vsel %vm2821, %v2814, %v2818
        %v2823 = vand.u32 2147483647, %v2768
        %vm2824 = vcmp.eq.f32.partialorder %v2823, 8.507059e+37
        %v2825 = vand.u32 %v2768, 2147483648
        %v2826 = vor.u32 1.1754944e-38, %v2825
        %v2827 = vsel %vm2824, %v2826, %v2822
        %v2828 = vmul.f32 1.0, %v2827
        %v2829 = vtanh.pop %v2750
        %v2830 = vtanh.pop %v2752
        %v2831 = vmul.f32 %v2783, %v2687
        %v2832 = vmul.f32 %v2813, %v2688
        %2835 = vrot.lane.b32.xlu0 %v2829, 64
        %v2836 = vpop.permute.xlu0 %2835
        %2837 = vrot.lane.b32.xlu0 %v2830, 64
        %v2838 = vpop.permute.xlu0 %2837
        %v2841 = vmul.f32 %v2783, %v2836
        %v2842 = vmul.f32 %v2813, %v2838
        %2845 = vrot.lane.b32.xlu0 %v2841, 64
        %v2846 = vpop.permute.xlu0 %2845
        %2847 = vrot.lane.b32.xlu0 %v2842, 64
        %v2848 = vpop.permute.xlu0 %2847
        %v2851 = vadd.f32 %v2831, %v2846
        %v2852 = vadd.f32 %v2832, %v2848
        %v2853 = vtanh.pop %v2851
        %v2854 = vtanh.pop %v2852
        %2857 = vrot.lane.b32.xlu0 %v2853, 64
        %v2858 = vpop.permute.xlu0 %2857
        %2859 = vrot.lane.b32.xlu0 %v2854, 64
        %v2860 = vpop.permute.xlu0 %2859
        %v2863 = vmul.f32 %v2798, %v2858
        %v2864 = vmul.f32 %v2828, %v2860
        %v2865 = vpack.c.bf16 %v2863, %v2863
        %v2866 = vpack.c.bf16 %v2864, %v2864
        %s2867 = scalar_lea.vmem [#allocation2], 112
        %2868 = vst.msk [vmem:[%s2867] sm:$0xf] %vm571, %v2865
        %2869 = vst.msk [vmem:[%s2867 + $0x4] sm:$0xf] %vm571, %v2866
        %s2870 = scalar_lea.vmem %s314, 240 [#allocation5]
        %v2871 = vld [vmem:[%s2870] sm:$0xff]
        %v2872 = vld [vmem:[%s2870 + $0x8] sm:$0xff]
        %v2873 = vunpack.c.l.bf16 %v2871
        %v2874 = vunpack.c.h.bf16 %v2871
        %v2875 = vunpack.c.l.bf16 %v2872
        %v2876 = vunpack.c.h.bf16 %v2872
        %v2879 = vunpack.c.l.b16 %v2865
        %v2880 = vunpack.c.l.b16 %v2866
        %v2881 = vpack.c.b16 %v2880, %v2879
        %v2883 = vsel %vm421, %v2881, 0
        %2885 = vmatpush.bf16.msra.mxu0 0
        %2886 = vmatpush.bf16.msra.mxu0 0
        %2887 = vmatpush.bf16.msra.mxu0 0
        %2888 = vmatpush.bf16.msra.mxu0 0
        %2889 = vmatpush.bf16.msra.mxu0 %v411
        %2890 = vmatpush.bf16.msra.mxu0 %v409
        %2891 = vmatpush.bf16.msra.mxu0 %v407
        %2892 = vmatpush.bf16.msra.mxu0 %v405
        %2893 = vmatmul.bf16.gmra.mxu0 %v2883
        %v2894 = vpop.f32.mrf.mxu0
        %v2895 = vadd.f32 0.0, %v2894
        %v2896 = vpop.f32.mrf.mxu0
        %v2897 = vadd.f32 0.0, %v2896
        %2898 = vdwg.mxu0
        %2899 = vmatpush.bf16.msra.mxu0 0
        %2900 = vmatpush.bf16.msra.mxu0 0
        %2901 = vmatpush.bf16.msra.mxu0 0
        %2902 = vmatpush.bf16.msra.mxu0 0
        %2903 = vmatpush.bf16.msra.mxu0 %v412
        %2904 = vmatpush.bf16.msra.mxu0 %v410
        %2905 = vmatpush.bf16.msra.mxu0 %v408
        %2906 = vmatpush.bf16.msra.mxu0 %v406
        %2907 = vmatmul.bf16.gmra.mxu0 %v2883
        %v2908 = vpop.f32.mrf.mxu0
        %v2909 = vadd.f32 0.0, %v2908
        %v2910 = vpop.f32.mrf.mxu0
        %v2911 = vadd.f32 0.0, %v2910
        %2912 = vdwg.mxu0
        %v2913 = vadd.f32 %v2873, %v2895
        %v2914 = vadd.f32 %v2874, %v2909
        %v2915 = vadd.f32 %v2875, %v2897
        %v2916 = vadd.f32 %v2876, %v2911
        %v2917 = vxor.u32 %v2913, 2147483648
        %v2918 = vxor.u32 %v2914, 2147483648
        %v2919 = vxor.u32 %v2915, 2147483648
        %v2920 = vxor.u32 %v2916, 2147483648
        %v2921 = vmul.f32 %v2917, 1.442695
        %v2922 = vpow.pop %v2921
        %v2923 = vmul.f32 %v2918, 1.442695
        %v2924 = vpow.pop %v2923
        %v2925 = vmul.f32 %v2919, 1.442695
        %v2926 = vpow.pop %v2925
        %v2927 = vmul.f32 %v2920, 1.442695
        %v2928 = vpow.pop %v2927
        %v2929 = vadd.f32 %v2922, 1.0
        %v2930 = vadd.f32 %v2924, 1.0
        %v2931 = vadd.f32 %v2926, 1.0
        %v2932 = vadd.f32 %v2928, 1.0
        %v2933 = vrcp.pop %v2929
        %v2934 = vmul.f32 %v2929, %v2933
        %v2935 = vsub.f32 1.0, %v2934
        %v2936 = vmul.f32 %v2933, %v2935
        %v2937 = vadd.f32 %v2933, %v2936
        %vm2938 = vweird.f32 %v2929
        %vm2939 = vweird.f32 %v2933
        %vm2940 = vmor %vm2938, %vm2939
        %v2941 = vsel %vm2940, %v2933, %v2937
        %v2942 = vand.u32 2147483647, %v2929
        %vm2943 = vcmp.eq.f32.partialorder %v2942, 8.507059e+37
        %v2944 = vand.u32 %v2929, 2147483648
        %v2945 = vor.u32 1.1754944e-38, %v2944
        %v2946 = vsel %vm2943, %v2945, %v2941
        %v2947 = vmul.f32 1.0, %v2946
        %v2948 = vrcp.pop %v2930
        %v2949 = vmul.f32 %v2930, %v2948
        %v2950 = vsub.f32 1.0, %v2949
        %v2951 = vmul.f32 %v2948, %v2950
        %v2952 = vadd.f32 %v2948, %v2951
        %vm2953 = vweird.f32 %v2930
        %vm2954 = vweird.f32 %v2948
        %vm2955 = vmor %vm2953, %vm2954
        %v2956 = vsel %vm2955, %v2948, %v2952
        %v2957 = vand.u32 2147483647, %v2930
        %vm2958 = vcmp.eq.f32.partialorder %v2957, 8.507059e+37
        %v2959 = vand.u32 %v2930, 2147483648
        %v2960 = vor.u32 1.1754944e-38, %v2959
        %v2961 = vsel %vm2958, %v2960, %v2956
        %v2962 = vmul.f32 1.0, %v2961
        %v2963 = vrcp.pop %v2931
        %v2964 = vmul.f32 %v2931, %v2963
        %v2965 = vsub.f32 1.0, %v2964
        %v2966 = vmul.f32 %v2963, %v2965
        %v2967 = vadd.f32 %v2963, %v2966
        %vm2968 = vweird.f32 %v2931
        %vm2969 = vweird.f32 %v2963
        %vm2970 = vmor %vm2968, %vm2969
        %v2971 = vsel %vm2970, %v2963, %v2967
        %v2972 = vand.u32 2147483647, %v2931
        %vm2973 = vcmp.eq.f32.partialorder %v2972, 8.507059e+37
        %v2974 = vand.u32 %v2931, 2147483648
        %v2975 = vor.u32 1.1754944e-38, %v2974
        %v2976 = vsel %vm2973, %v2975, %v2971
        %v2977 = vmul.f32 1.0, %v2976
        %v2978 = vrcp.pop %v2932
        %v2979 = vmul.f32 %v2932, %v2978
        %v2980 = vsub.f32 1.0, %v2979
        %v2981 = vmul.f32 %v2978, %v2980
        %v2982 = vadd.f32 %v2978, %v2981
        %vm2983 = vweird.f32 %v2932
        %vm2984 = vweird.f32 %v2978
        %vm2985 = vmor %vm2983, %vm2984
        %v2986 = vsel %vm2985, %v2978, %v2982
        %v2987 = vand.u32 2147483647, %v2932
        %vm2988 = vcmp.eq.f32.partialorder %v2987, 8.507059e+37
        %v2989 = vand.u32 %v2932, 2147483648
        %v2990 = vor.u32 1.1754944e-38, %v2989
        %v2991 = vsel %vm2988, %v2990, %v2986
        %v2992 = vmul.f32 1.0, %v2991
        %v2993 = vtanh.pop %v2914
        %v2994 = vtanh.pop %v2916
        %v2995 = vmul.f32 %v2947, %v2851
        %v2996 = vmul.f32 %v2977, %v2852
        %2999 = vrot.lane.b32.xlu0 %v2993, 64
        %v3000 = vpop.permute.xlu0 %2999
        %3001 = vrot.lane.b32.xlu0 %v2994, 64
        %v3002 = vpop.permute.xlu0 %3001
        %v3005 = vmul.f32 %v2947, %v3000
        %v3006 = vmul.f32 %v2977, %v3002
        %3009 = vrot.lane.b32.xlu0 %v3005, 64
        %v3010 = vpop.permute.xlu0 %3009
        %3011 = vrot.lane.b32.xlu0 %v3006, 64
        %v3012 = vpop.permute.xlu0 %3011
        %v3015 = vadd.f32 %v2995, %v3010
        %v3016 = vadd.f32 %v2996, %v3012
        %v3017 = vtanh.pop %v3015
        %v3018 = vtanh.pop %v3016
        %3021 = vrot.lane.b32.xlu0 %v3017, 64
        %v3022 = vpop.permute.xlu0 %3021
        %3023 = vrot.lane.b32.xlu0 %v3018, 64
        %v3024 = vpop.permute.xlu0 %3023
        %v3027 = vmul.f32 %v2962, %v3022
        %v3028 = vmul.f32 %v2992, %v3024
        %v3029 = vpack.c.bf16 %v3027, %v3027
        %v3030 = vpack.c.bf16 %v3028, %v3028
        %s3031 = scalar_lea.vmem [#allocation2], 120
        %3032 = vst.msk [vmem:[%s3031] sm:$0xf] %vm571, %v3029
        %3033 = vst.msk [vmem:[%s3031 + $0x4] sm:$0xf] %vm571, %v3030
        %v3034 = vld [vmem:[#allocation2] sm:$0xf]
        %v3035 = vld [vmem:[#allocation2 + $0x4] sm:$0xf]
        %v3036 = vld [vmem:[#allocation2 + $0x8] sm:$0xf]
        %v3037 = vld [vmem:[#allocation2 + $0xc] sm:$0xf]
        %v3038 = vld [vmem:[#allocation2 + $0x10] sm:$0xf]
        %v3039 = vld [vmem:[#allocation2 + $0x14] sm:$0xf]
        %v3040 = vld [vmem:[#allocation2 + $0x18] sm:$0xf]
        %v3041 = vld [vmem:[#allocation2 + $0x1c] sm:$0xf]
        %v3042 = vld [vmem:[#allocation2 + $0x20] sm:$0xf]
        %v3043 = vld [vmem:[#allocation2 + $0x24] sm:$0xf]
        %v3044 = vld [vmem:[#allocation2 + $0x28] sm:$0xf]
        %v3045 = vld [vmem:[#allocation2 + $0x2c] sm:$0xf]
        %v3046 = vld [vmem:[#allocation2 + $0x30] sm:$0xf]
        %v3047 = vld [vmem:[#allocation2 + $0x34] sm:$0xf]
        %v3048 = vld [vmem:[#allocation2 + $0x38] sm:$0xf]
        %v3049 = vld [vmem:[#allocation2 + $0x3c] sm:$0xf]
        %v3050 = vld [vmem:[#allocation2 + $0x40] sm:$0xf]
        %v3051 = vld [vmem:[#allocation2 + $0x44] sm:$0xf]
        %v3052 = vld [vmem:[#allocation2 + $0x48] sm:$0xf]
        %v3053 = vld [vmem:[#allocation2 + $0x4c] sm:$0xf]
        %v3054 = vld [vmem:[#allocation2 + $0x50] sm:$0xf]
        %v3055 = vld [vmem:[#allocation2 + $0x54] sm:$0xf]
        %v3056 = vld [vmem:[#allocation2 + $0x58] sm:$0xf]
        %v3057 = vld [vmem:[#allocation2 + $0x5c] sm:$0xf]
        %v3058 = vld [vmem:[#allocation2 + $0x60] sm:$0xf]
        %v3059 = vld [vmem:[#allocation2 + $0x64] sm:$0xf]
        %v3060 = vld [vmem:[#allocation2 + $0x68] sm:$0xf]
        %v3061 = vld [vmem:[#allocation2 + $0x6c] sm:$0xf]
        %v3062 = vld [vmem:[#allocation2 + $0x70] sm:$0xf]
        %v3063 = vld [vmem:[#allocation2 + $0x74] sm:$0xf]
        %v3064 = vld [vmem:[#allocation2 + $0x78] sm:$0xf]
        %v3065 = vld [vmem:[#allocation2 + $0x7c] sm:$0xf]
        %v3066 = vld [vmem:[#allocation10] sm:$0xff]
        %v3067 = vld [vmem:[#allocation10 + $0x8] sm:$0xff]
        %v3068 = vld [vmem:[#allocation10 + $0x10] sm:$0xff]
        %v3069 = vld [vmem:[#allocation10 + $0x18] sm:$0xff]
        %v3070 = vld [vmem:[#allocation10 + $0x20] sm:$0xff]
        %v3071 = vld [vmem:[#allocation10 + $0x28] sm:$0xff]
        %v3072 = vld [vmem:[#allocation10 + $0x30] sm:$0xff]
        %v3073 = vld [vmem:[#allocation10 + $0x38] sm:$0xff]
        %v3074 = vld [vmem:[%s4] sm:$0x3]
        %v3076 = vperm.slane %v3074, 0
        %v3077 = vperm.slane %v3074, 1
        %v3112 = vunpack.c.l.b16 %v3034
        %v3113 = vunpack.c.l.b16 %v3035
        %v3114 = vunpack.c.l.b16 %v3036
        %v3115 = vunpack.c.l.b16 %v3037
        %v3116 = vunpack.c.l.b16 %v3038
        %v3117 = vunpack.c.l.b16 %v3039
        %v3118 = vunpack.c.l.b16 %v3040
        %v3119 = vunpack.c.l.b16 %v3041
        %v3120 = vunpack.c.l.b16 %v3042
        %v3121 = vunpack.c.l.b16 %v3043
        %v3122 = vunpack.c.l.b16 %v3044
        %v3123 = vunpack.c.l.b16 %v3045
        %v3124 = vunpack.c.l.b16 %v3046
        %v3125 = vunpack.c.l.b16 %v3047
        %v3126 = vunpack.c.l.b16 %v3048
        %v3127 = vunpack.c.l.b16 %v3049
        %v3128 = vunpack.c.l.b16 %v3050
        %v3129 = vunpack.c.l.b16 %v3051
        %v3130 = vunpack.c.l.b16 %v3052
        %v3131 = vunpack.c.l.b16 %v3053
        %v3132 = vunpack.c.l.b16 %v3054
        %v3133 = vunpack.c.l.b16 %v3055
        %v3134 = vunpack.c.l.b16 %v3056
        %v3135 = vunpack.c.l.b16 %v3057
        %v3136 = vunpack.c.l.b16 %v3058
        %v3137 = vunpack.c.l.b16 %v3059
        %v3138 = vunpack.c.l.b16 %v3060
        %v3139 = vunpack.c.l.b16 %v3061
        %v3140 = vunpack.c.l.b16 %v3062
        %v3141 = vunpack.c.l.b16 %v3063
        %v3142 = vunpack.c.l.b16 %v3064
        %v3143 = vunpack.c.l.b16 %v3065
        %v3144 = vpack.c.b16 %v3113, %v3112
        %v3145 = vpack.c.b16 %v3115, %v3114
        %v3146 = vpack.c.b16 %v3117, %v3116
        %v3147 = vpack.c.b16 %v3119, %v3118
        %v3148 = vpack.c.b16 %v3121, %v3120
        %v3149 = vpack.c.b16 %v3123, %v3122
        %v3150 = vpack.c.b16 %v3125, %v3124
        %v3151 = vpack.c.b16 %v3127, %v3126
        %v3152 = vpack.c.b16 %v3129, %v3128
        %v3153 = vpack.c.b16 %v3131, %v3130
        %v3154 = vpack.c.b16 %v3133, %v3132
        %v3155 = vpack.c.b16 %v3135, %v3134
        %v3156 = vpack.c.b16 %v3137, %v3136
        %v3157 = vpack.c.b16 %v3139, %v3138
        %v3158 = vpack.c.b16 %v3141, %v3140
        %v3159 = vpack.c.b16 %v3143, %v3142
        %v3168 = vunpack.c.l.b16 %v3066
        %v3169 = vunpack.c.h.b16 %v3066
        %v3170 = vunpack.c.l.b16 %v3067
        %v3171 = vunpack.c.h.b16 %v3067
        %v3172 = vunpack.c.l.b16 %v3068
        %v3173 = vunpack.c.h.b16 %v3068
        %v3174 = vunpack.c.l.b16 %v3069
        %v3175 = vunpack.c.h.b16 %v3069
        %v3176 = vunpack.c.l.b16 %v3070
        %v3177 = vunpack.c.h.b16 %v3070
        %v3178 = vunpack.c.l.b16 %v3071
        %v3179 = vunpack.c.h.b16 %v3071
        %v3180 = vunpack.c.l.b16 %v3072
        %v3181 = vunpack.c.h.b16 %v3072
        %v3182 = vunpack.c.l.b16 %v3073
        %v3183 = vunpack.c.h.b16 %v3073
        %v3184 = vpack.c.b16 %v3170, %v3168
        %v3185 = vpack.c.b16 %v3171, %v3169
        %v3186 = vpack.c.b16 %v3174, %v3172
        %v3187 = vpack.c.b16 %v3175, %v3173
        %v3188 = vpack.c.b16 %v3178, %v3176
        %v3189 = vpack.c.b16 %v3179, %v3177
        %v3190 = vpack.c.b16 %v3182, %v3180
        %v3191 = vpack.c.b16 %v3183, %v3181
        %v3201 = vsel %vm421, %v3144, 0
        %v3204 = vsel %vm421, %v3145, 0
        %v3207 = vsel %vm421, %v3146, 0
        %v3210 = vsel %vm421, %v3147, 0
        %v3213 = vsel %vm421, %v3148, 0
        %v3216 = vsel %vm421, %v3149, 0
        %v3219 = vsel %vm421, %v3150, 0
        %v3222 = vsel %vm421, %v3151, 0
        %v3225 = vsel %vm421, %v3152, 0
        %v3228 = vsel %vm421, %v3153, 0
        %v3231 = vsel %vm421, %v3154, 0
        %v3234 = vsel %vm421, %v3155, 0
        %v3237 = vsel %vm421, %v3156, 0
        %v3240 = vsel %vm421, %v3157, 0
        %v3243 = vsel %vm421, %v3158, 0
        %v3246 = vsel %vm421, %v3159, 0
        %3248 = vmatpush.bf16.msra.mxu0 0
        %3249 = vmatpush.bf16.msra.mxu0 0
        %3250 = vmatpush.bf16.msra.mxu0 0
        %3251 = vmatpush.bf16.msra.mxu0 0
        %3252 = vmatpush.bf16.msra.mxu0 %v3190
        %3253 = vmatpush.bf16.msra.mxu0 %v3188
        %3254 = vmatpush.bf16.msra.mxu0 %v3186
        %3255 = vmatpush.bf16.msra.mxu0 %v3184
        %3256 = vmatmul.bf16.gmra.mxu0 %v3201
        %v3257 = vpop.f32.mrf.mxu0
        %v3258 = vadd.f32 %v3076, %v3257
        %v3259 = vpop.f32.mrf.mxu0
        %v3260 = vadd.f32 %v3076, %v3259
        %3261 = vmatmul.bf16.gmra.mxu0 %v3204
        %v3262 = vpop.f32.mrf.mxu0
        %v3263 = vadd.f32 %v3076, %v3262
        %v3264 = vpop.f32.mrf.mxu0
        %v3265 = vadd.f32 %v3076, %v3264
        %3266 = vmatmul.bf16.gmra.mxu0 %v3207
        %v3267 = vpop.f32.mrf.mxu0
        %v3268 = vadd.f32 %v3076, %v3267
        %v3269 = vpop.f32.mrf.mxu0
        %v3270 = vadd.f32 %v3076, %v3269
        %3271 = vmatmul.bf16.gmra.mxu0 %v3210
        %v3272 = vpop.f32.mrf.mxu0
        %v3273 = vadd.f32 %v3076, %v3272
        %v3274 = vpop.f32.mrf.mxu0
        %v3275 = vadd.f32 %v3076, %v3274
        %3276 = vmatmul.bf16.gmra.mxu0 %v3213
        %v3277 = vpop.f32.mrf.mxu0
        %v3278 = vadd.f32 %v3076, %v3277
        %v3279 = vpop.f32.mrf.mxu0
        %v3280 = vadd.f32 %v3076, %v3279
        %3281 = vmatmul.bf16.gmra.mxu0 %v3216
        %v3282 = vpop.f32.mrf.mxu0
        %v3283 = vadd.f32 %v3076, %v3282
        %v3284 = vpop.f32.mrf.mxu0
        %v3285 = vadd.f32 %v3076, %v3284
        %3286 = vmatmul.bf16.gmra.mxu0 %v3219
        %v3287 = vpop.f32.mrf.mxu0
        %v3288 = vadd.f32 %v3076, %v3287
        %v3289 = vpop.f32.mrf.mxu0
        %v3290 = vadd.f32 %v3076, %v3289
        %3291 = vmatmul.bf16.gmra.mxu0 %v3222
        %v3292 = vpop.f32.mrf.mxu0
        %v3293 = vadd.f32 %v3076, %v3292
        %v3294 = vpop.f32.mrf.mxu0
        %v3295 = vadd.f32 %v3076, %v3294
        %3296 = vmatmul.bf16.gmra.mxu0 %v3225
        %v3297 = vpop.f32.mrf.mxu0
        %v3298 = vadd.f32 %v3076, %v3297
        %v3299 = vpop.f32.mrf.mxu0
        %v3300 = vadd.f32 %v3076, %v3299
        %3301 = vmatmul.bf16.gmra.mxu0 %v3228
        %v3302 = vpop.f32.mrf.mxu0
        %v3303 = vadd.f32 %v3076, %v3302
        %v3304 = vpop.f32.mrf.mxu0
        %v3305 = vadd.f32 %v3076, %v3304
        %3306 = vmatmul.bf16.gmra.mxu0 %v3231
        %v3307 = vpop.f32.mrf.mxu0
        %v3308 = vadd.f32 %v3076, %v3307
        %v3309 = vpop.f32.mrf.mxu0
        %v3310 = vadd.f32 %v3076, %v3309
        %3311 = vmatmul.bf16.gmra.mxu0 %v3234
        %v3312 = vpop.f32.mrf.mxu0
        %v3313 = vadd.f32 %v3076, %v3312
        %v3314 = vpop.f32.mrf.mxu0
        %v3315 = vadd.f32 %v3076, %v3314
        %3316 = vmatmul.bf16.gmra.mxu0 %v3237
        %v3317 = vpop.f32.mrf.mxu0
        %v3318 = vadd.f32 %v3076, %v3317
        %v3319 = vpop.f32.mrf.mxu0
        %v3320 = vadd.f32 %v3076, %v3319
        %3321 = vmatmul.bf16.gmra.mxu0 %v3240
        %v3322 = vpop.f32.mrf.mxu0
        %v3323 = vadd.f32 %v3076, %v3322
        %v3324 = vpop.f32.mrf.mxu0
        %v3325 = vadd.f32 %v3076, %v3324
        %3326 = vmatmul.bf16.gmra.mxu0 %v3243
        %v3327 = vpop.f32.mrf.mxu0
        %v3328 = vadd.f32 %v3076, %v3327
        %v3329 = vpop.f32.mrf.mxu0
        %v3330 = vadd.f32 %v3076, %v3329
        %3331 = vmatmul.bf16.gmra.mxu0 %v3246
        %v3332 = vpop.f32.mrf.mxu0
        %v3333 = vadd.f32 %v3076, %v3332
        %v3334 = vpop.f32.mrf.mxu0
        %v3335 = vadd.f32 %v3076, %v3334
        %3336 = vdwg.mxu0
        %3337 = vmatpush.bf16.msra.mxu0 0
        %3338 = vmatpush.bf16.msra.mxu0 0
        %3339 = vmatpush.bf16.msra.mxu0 0
        %3340 = vmatpush.bf16.msra.mxu0 0
        %3341 = vmatpush.bf16.msra.mxu0 %v3191
        %3342 = vmatpush.bf16.msra.mxu0 %v3189
        %3343 = vmatpush.bf16.msra.mxu0 %v3187
        %3344 = vmatpush.bf16.msra.mxu0 %v3185
        %3345 = vmatmul.bf16.gmra.mxu0 %v3201
        %v3346 = vpop.f32.mrf.mxu0
        %v3347 = vadd.f32 %v3077, %v3346
        %v3348 = vpop.f32.mrf.mxu0
        %v3349 = vadd.f32 %v3077, %v3348
        %3350 = vmatmul.bf16.gmra.mxu0 %v3204
        %v3351 = vpop.f32.mrf.mxu0
        %v3352 = vadd.f32 %v3077, %v3351
        %v3353 = vpop.f32.mrf.mxu0
        %v3354 = vadd.f32 %v3077, %v3353
        %3355 = vmatmul.bf16.gmra.mxu0 %v3207
        %v3356 = vpop.f32.mrf.mxu0
        %v3357 = vadd.f32 %v3077, %v3356
        %v3358 = vpop.f32.mrf.mxu0
        %v3359 = vadd.f32 %v3077, %v3358
        %3360 = vmatmul.bf16.gmra.mxu0 %v3210
        %v3361 = vpop.f32.mrf.mxu0
        %v3362 = vadd.f32 %v3077, %v3361
        %v3363 = vpop.f32.mrf.mxu0
        %v3364 = vadd.f32 %v3077, %v3363
        %3365 = vmatmul.bf16.gmra.mxu0 %v3213
        %v3366 = vpop.f32.mrf.mxu0
        %v3367 = vadd.f32 %v3077, %v3366
        %v3368 = vpop.f32.mrf.mxu0
        %v3369 = vadd.f32 %v3077, %v3368
        %3370 = vmatmul.bf16.gmra.mxu0 %v3216
        %v3371 = vpop.f32.mrf.mxu0
        %v3372 = vadd.f32 %v3077, %v3371
        %v3373 = vpop.f32.mrf.mxu0
        %v3374 = vadd.f32 %v3077, %v3373
        %3375 = vmatmul.bf16.gmra.mxu0 %v3219
        %v3376 = vpop.f32.mrf.mxu0
        %v3377 = vadd.f32 %v3077, %v3376
        %v3378 = vpop.f32.mrf.mxu0
        %v3379 = vadd.f32 %v3077, %v3378
        %3380 = vmatmul.bf16.gmra.mxu0 %v3222
        %v3381 = vpop.f32.mrf.mxu0
        %v3382 = vadd.f32 %v3077, %v3381
        %v3383 = vpop.f32.mrf.mxu0
        %v3384 = vadd.f32 %v3077, %v3383
        %3385 = vmatmul.bf16.gmra.mxu0 %v3225
        %v3386 = vpop.f32.mrf.mxu0
        %v3387 = vadd.f32 %v3077, %v3386
        %v3388 = vpop.f32.mrf.mxu0
        %v3389 = vadd.f32 %v3077, %v3388
        %3390 = vmatmul.bf16.gmra.mxu0 %v3228
        %v3391 = vpop.f32.mrf.mxu0
        %v3392 = vadd.f32 %v3077, %v3391
        %v3393 = vpop.f32.mrf.mxu0
        %v3394 = vadd.f32 %v3077, %v3393
        %3395 = vmatmul.bf16.gmra.mxu0 %v3231
        %v3396 = vpop.f32.mrf.mxu0
        %v3397 = vadd.f32 %v3077, %v3396
        %v3398 = vpop.f32.mrf.mxu0
        %v3399 = vadd.f32 %v3077, %v3398
        %3400 = vmatmul.bf16.gmra.mxu0 %v3234
        %v3401 = vpop.f32.mrf.mxu0
        %v3402 = vadd.f32 %v3077, %v3401
        %v3403 = vpop.f32.mrf.mxu0
        %v3404 = vadd.f32 %v3077, %v3403
        %3405 = vmatmul.bf16.gmra.mxu0 %v3237
        %v3406 = vpop.f32.mrf.mxu0
        %v3407 = vadd.f32 %v3077, %v3406
        %v3408 = vpop.f32.mrf.mxu0
        %v3409 = vadd.f32 %v3077, %v3408
        %3410 = vmatmul.bf16.gmra.mxu0 %v3240
        %v3411 = vpop.f32.mrf.mxu0
        %v3412 = vadd.f32 %v3077, %v3411
        %v3413 = vpop.f32.mrf.mxu0
        %v3414 = vadd.f32 %v3077, %v3413
        %3415 = vmatmul.bf16.gmra.mxu0 %v3243
        %v3416 = vpop.f32.mrf.mxu0
        %v3417 = vadd.f32 %v3077, %v3416
        %v3418 = vpop.f32.mrf.mxu0
        %v3419 = vadd.f32 %v3077, %v3418
        %3420 = vmatmul.bf16.gmra.mxu0 %v3246
        %v3421 = vpop.f32.mrf.mxu0
        %v3422 = vadd.f32 %v3077, %v3421
        %v3423 = vpop.f32.mrf.mxu0
        %v3424 = vadd.f32 %v3077, %v3423
        %3425 = vdwg.mxu0
        %v3426 = vld [vmem:[#allocation11] sm:$0xff]
        %v3427 = vld [vmem:[#allocation11 + $0x8] sm:$0xff]
        %v3428 = vld [vmem:[#allocation11 + $0x10] sm:$0xff]
        %v3429 = vld [vmem:[#allocation11 + $0x18] sm:$0xff]
        %v3430 = vld [vmem:[#allocation11 + $0x20] sm:$0xff]
        %v3431 = vld [vmem:[#allocation11 + $0x28] sm:$0xff]
        %v3432 = vld [vmem:[#allocation11 + $0x30] sm:$0xff]
        %v3433 = vld [vmem:[#allocation11 + $0x38] sm:$0xff]
        %v3442 = vunpack.c.l.b16 %v3426
        %v3443 = vunpack.c.h.b16 %v3426
        %v3444 = vunpack.c.l.b16 %v3427
        %v3445 = vunpack.c.h.b16 %v3427
        %v3446 = vunpack.c.l.b16 %v3428
        %v3447 = vunpack.c.h.b16 %v3428
        %v3448 = vunpack.c.l.b16 %v3429
        %v3449 = vunpack.c.h.b16 %v3429
        %v3450 = vunpack.c.l.b16 %v3430
        %v3451 = vunpack.c.h.b16 %v3430
        %v3452 = vunpack.c.l.b16 %v3431
        %v3453 = vunpack.c.h.b16 %v3431
        %v3454 = vunpack.c.l.b16 %v3432
        %v3455 = vunpack.c.h.b16 %v3432
        %v3456 = vunpack.c.l.b16 %v3433
        %v3457 = vunpack.c.h.b16 %v3433
        %v3458 = vpack.c.b16 %v3444, %v3442
        %v3459 = vpack.c.b16 %v3445, %v3443
        %v3460 = vpack.c.b16 %v3448, %v3446
        %v3461 = vpack.c.b16 %v3449, %v3447
        %v3462 = vpack.c.b16 %v3452, %v3450
        %v3463 = vpack.c.b16 %v3453, %v3451
        %v3464 = vpack.c.b16 %v3456, %v3454
        %v3465 = vpack.c.b16 %v3457, %v3455
        %3474 = vmatpush.bf16.msra.mxu0 0
        %3475 = vmatpush.bf16.msra.mxu0 0
        %3476 = vmatpush.bf16.msra.mxu0 0
        %3477 = vmatpush.bf16.msra.mxu0 0
        %3478 = vmatpush.bf16.msra.mxu0 %v3464
        %3479 = vmatpush.bf16.msra.mxu0 %v3462
        %3480 = vmatpush.bf16.msra.mxu0 %v3460
        %3481 = vmatpush.bf16.msra.mxu0 %v3458
        %3482 = vmatmul.bf16.gmra.mxu0 %v3201
        %v3483 = vpop.f32.mrf.mxu0
        %v3484 = vadd.f32 0.0, %v3483
        %v3485 = vpop.f32.mrf.mxu0
        %v3486 = vadd.f32 0.0, %v3485
        %3487 = vmatmul.bf16.gmra.mxu0 %v3204
        %v3488 = vpop.f32.mrf.mxu0
        %v3489 = vadd.f32 0.0, %v3488
        %v3490 = vpop.f32.mrf.mxu0
        %v3491 = vadd.f32 0.0, %v3490
        %3492 = vmatmul.bf16.gmra.mxu0 %v3207
        %v3493 = vpop.f32.mrf.mxu0
        %v3494 = vadd.f32 0.0, %v3493
        %v3495 = vpop.f32.mrf.mxu0
        %v3496 = vadd.f32 0.0, %v3495
        %3497 = vmatmul.bf16.gmra.mxu0 %v3210
        %v3498 = vpop.f32.mrf.mxu0
        %v3499 = vadd.f32 0.0, %v3498
        %v3500 = vpop.f32.mrf.mxu0
        %v3501 = vadd.f32 0.0, %v3500
        %3502 = vmatmul.bf16.gmra.mxu0 %v3213
        %v3503 = vpop.f32.mrf.mxu0
        %v3504 = vadd.f32 0.0, %v3503
        %v3505 = vpop.f32.mrf.mxu0
        %v3506 = vadd.f32 0.0, %v3505
        %3507 = vmatmul.bf16.gmra.mxu0 %v3216
        %v3508 = vpop.f32.mrf.mxu0
        %v3509 = vadd.f32 0.0, %v3508
        %v3510 = vpop.f32.mrf.mxu0
        %v3511 = vadd.f32 0.0, %v3510
        %3512 = vmatmul.bf16.gmra.mxu0 %v3219
        %v3513 = vpop.f32.mrf.mxu0
        %v3514 = vadd.f32 0.0, %v3513
        %v3515 = vpop.f32.mrf.mxu0
        %v3516 = vadd.f32 0.0, %v3515
        %3517 = vmatmul.bf16.gmra.mxu0 %v3222
        %v3518 = vpop.f32.mrf.mxu0
        %v3519 = vadd.f32 0.0, %v3518
        %v3520 = vpop.f32.mrf.mxu0
        %v3521 = vadd.f32 0.0, %v3520
        %3522 = vmatmul.bf16.gmra.mxu0 %v3225
        %v3523 = vpop.f32.mrf.mxu0
        %v3524 = vadd.f32 0.0, %v3523
        %v3525 = vpop.f32.mrf.mxu0
        %v3526 = vadd.f32 0.0, %v3525
        %3527 = vmatmul.bf16.gmra.mxu0 %v3228
        %v3528 = vpop.f32.mrf.mxu0
        %v3529 = vadd.f32 0.0, %v3528
        %v3530 = vpop.f32.mrf.mxu0
        %v3531 = vadd.f32 0.0, %v3530
        %3532 = vmatmul.bf16.gmra.mxu0 %v3231
        %v3533 = vpop.f32.mrf.mxu0
        %v3534 = vadd.f32 0.0, %v3533
        %v3535 = vpop.f32.mrf.mxu0
        %v3536 = vadd.f32 0.0, %v3535
        %3537 = vmatmul.bf16.gmra.mxu0 %v3234
        %v3538 = vpop.f32.mrf.mxu0
        %v3539 = vadd.f32 0.0, %v3538
        %v3540 = vpop.f32.mrf.mxu0
        %v3541 = vadd.f32 0.0, %v3540
        %3542 = vmatmul.bf16.gmra.mxu0 %v3237
        %v3543 = vpop.f32.mrf.mxu0
        %v3544 = vadd.f32 0.0, %v3543
        %v3545 = vpop.f32.mrf.mxu0
        %v3546 = vadd.f32 0.0, %v3545
        %3547 = vmatmul.bf16.gmra.mxu0 %v3240
        %v3548 = vpop.f32.mrf.mxu0
        %v3549 = vadd.f32 0.0, %v3548
        %v3550 = vpop.f32.mrf.mxu0
        %v3551 = vadd.f32 0.0, %v3550
        %3552 = vmatmul.bf16.gmra.mxu0 %v3243
        %v3553 = vpop.f32.mrf.mxu0
        %v3554 = vadd.f32 0.0, %v3553
        %v3555 = vpop.f32.mrf.mxu0
        %v3556 = vadd.f32 0.0, %v3555
        %3557 = vmatmul.bf16.gmra.mxu0 %v3246
        %v3558 = vpop.f32.mrf.mxu0
        %v3559 = vadd.f32 0.0, %v3558
        %v3560 = vpop.f32.mrf.mxu0
        %v3561 = vadd.f32 0.0, %v3560
        %3562 = vdwg.mxu0
        %3563 = vmatpush.bf16.msra.mxu0 0
        %3564 = vmatpush.bf16.msra.mxu0 0
        %3565 = vmatpush.bf16.msra.mxu0 0
        %3566 = vmatpush.bf16.msra.mxu0 0
        %3567 = vmatpush.bf16.msra.mxu0 %v3465
        %3568 = vmatpush.bf16.msra.mxu0 %v3463
        %3569 = vmatpush.bf16.msra.mxu0 %v3461
        %3570 = vmatpush.bf16.msra.mxu0 %v3459
        %3571 = vmatmul.bf16.gmra.mxu0 %v3201
        %v3572 = vpop.f32.mrf.mxu0
        %v3573 = vadd.f32 0.0, %v3572
        %v3574 = vpop.f32.mrf.mxu0
        %v3575 = vadd.f32 0.0, %v3574
        %3576 = vmatmul.bf16.gmra.mxu0 %v3204
        %v3577 = vpop.f32.mrf.mxu0
        %v3578 = vadd.f32 0.0, %v3577
        %v3579 = vpop.f32.mrf.mxu0
        %v3580 = vadd.f32 0.0, %v3579
        %3581 = vmatmul.bf16.gmra.mxu0 %v3207
        %v3582 = vpop.f32.mrf.mxu0
        %v3583 = vadd.f32 0.0, %v3582
        %v3584 = vpop.f32.mrf.mxu0
        %v3585 = vadd.f32 0.0, %v3584
        %3586 = vmatmul.bf16.gmra.mxu0 %v3210
        %v3587 = vpop.f32.mrf.mxu0
        %v3588 = vadd.f32 0.0, %v3587
        %v3589 = vpop.f32.mrf.mxu0
        %v3590 = vadd.f32 0.0, %v3589
        %3591 = vmatmul.bf16.gmra.mxu0 %v3213
        %v3592 = vpop.f32.mrf.mxu0
        %v3593 = vadd.f32 0.0, %v3592
        %v3594 = vpop.f32.mrf.mxu0
        %v3595 = vadd.f32 0.0, %v3594
        %3596 = vmatmul.bf16.gmra.mxu0 %v3216
        %v3597 = vpop.f32.mrf.mxu0
        %v3598 = vadd.f32 0.0, %v3597
        %v3599 = vpop.f32.mrf.mxu0
        %v3600 = vadd.f32 0.0, %v3599
        %3601 = vmatmul.bf16.gmra.mxu0 %v3219
        %v3602 = vpop.f32.mrf.mxu0
        %v3603 = vadd.f32 0.0, %v3602
        %v3604 = vpop.f32.mrf.mxu0
        %v3605 = vadd.f32 0.0, %v3604
        %3606 = vmatmul.bf16.gmra.mxu0 %v3222
        %v3607 = vpop.f32.mrf.mxu0
        %v3608 = vadd.f32 0.0, %v3607
        %v3609 = vpop.f32.mrf.mxu0
        %v3610 = vadd.f32 0.0, %v3609
        %3611 = vmatmul.bf16.gmra.mxu0 %v3225
        %v3612 = vpop.f32.mrf.mxu0
        %v3613 = vadd.f32 0.0, %v3612
        %v3614 = vpop.f32.mrf.mxu0
        %v3615 = vadd.f32 0.0, %v3614
        %3616 = vmatmul.bf16.gmra.mxu0 %v3228
        %v3617 = vpop.f32.mrf.mxu0
        %v3618 = vadd.f32 0.0, %v3617
        %v3619 = vpop.f32.mrf.mxu0
        %v3620 = vadd.f32 0.0, %v3619
        %3621 = vmatmul.bf16.gmra.mxu0 %v3231
        %v3622 = vpop.f32.mrf.mxu0
        %v3623 = vadd.f32 0.0, %v3622
        %v3624 = vpop.f32.mrf.mxu0
        %v3625 = vadd.f32 0.0, %v3624
        %3626 = vmatmul.bf16.gmra.mxu0 %v3234
        %v3627 = vpop.f32.mrf.mxu0
        %v3628 = vadd.f32 0.0, %v3627
        %v3629 = vpop.f32.mrf.mxu0
        %v3630 = vadd.f32 0.0, %v3629
        %3631 = vmatmul.bf16.gmra.mxu0 %v3237
        %v3632 = vpop.f32.mrf.mxu0
        %v3633 = vadd.f32 0.0, %v3632
        %v3634 = vpop.f32.mrf.mxu0
        %v3635 = vadd.f32 0.0, %v3634
        %3636 = vmatmul.bf16.gmra.mxu0 %v3240
        %v3637 = vpop.f32.mrf.mxu0
        %v3638 = vadd.f32 0.0, %v3637
        %v3639 = vpop.f32.mrf.mxu0
        %v3640 = vadd.f32 0.0, %v3639
        %3641 = vmatmul.bf16.gmra.mxu0 %v3243
        %v3642 = vpop.f32.mrf.mxu0
        %v3643 = vadd.f32 0.0, %v3642
        %v3644 = vpop.f32.mrf.mxu0
        %v3645 = vadd.f32 0.0, %v3644
        %3646 = vmatmul.bf16.gmra.mxu0 %v3246
        %v3647 = vpop.f32.mrf.mxu0
        %v3648 = vadd.f32 0.0, %v3647
        %v3649 = vpop.f32.mrf.mxu0
        %v3650 = vadd.f32 0.0, %v3649
        %3651 = vdwg.mxu0
        %v3652 = vadd.f32 %v3258, %v3559
        %v3653 = vadd.f32 %v3347, %v3648
        %v3654 = vadd.f32 %v3260, %v3561
        %v3655 = vadd.f32 %v3349, %v3650
        %v3656 = vpack.c.bf16 %v3653, %v3652
        %v3657 = vpack.c.bf16 %v3655, %v3654
        %3658 = vst [vmem:[#allocation3] sm:$0xff] %v3656
        %3659 = vst [vmem:[#allocation3 + $0x8] sm:$0xff] %v3657
        %v3660 = vadd.f32 %v3263, %v3554
        %v3661 = vadd.f32 %v3352, %v3643
        %v3662 = vadd.f32 %v3265, %v3556
        %v3663 = vadd.f32 %v3354, %v3645
        %v3664 = vpack.c.bf16 %v3661, %v3660
        %v3665 = vpack.c.bf16 %v3663, %v3662
        %s3666 = scalar_lea.vmem [#allocation3], 16
        %3667 = vst [vmem:[%s3666] sm:$0xff] %v3664
        %3668 = vst [vmem:[%s3666 + $0x8] sm:$0xff] %v3665
        %v3669 = vadd.f32 %v3268, %v3549
        %v3670 = vadd.f32 %v3357, %v3638
        %v3671 = vadd.f32 %v3270, %v3551
        %v3672 = vadd.f32 %v3359, %v3640
        %v3673 = vpack.c.bf16 %v3670, %v3669
        %v3674 = vpack.c.bf16 %v3672, %v3671
        %s3675 = scalar_lea.vmem [#allocation3], 32
        %3676 = vst [vmem:[%s3675] sm:$0xff] %v3673
        %3677 = vst [vmem:[%s3675 + $0x8] sm:$0xff] %v3674
        %v3678 = vadd.f32 %v3273, %v3544
        %v3679 = vadd.f32 %v3362, %v3633
        %v3680 = vadd.f32 %v3275, %v3546
        %v3681 = vadd.f32 %v3364, %v3635
        %v3682 = vpack.c.bf16 %v3679, %v3678
        %v3683 = vpack.c.bf16 %v3681, %v3680
        %s3684 = scalar_lea.vmem [#allocation3], 48
        %3685 = vst [vmem:[%s3684] sm:$0xff] %v3682
        %3686 = vst [vmem:[%s3684 + $0x8] sm:$0xff] %v3683
        %v3687 = vadd.f32 %v3278, %v3539
        %v3688 = vadd.f32 %v3367, %v3628
        %v3689 = vadd.f32 %v3280, %v3541
        %v3690 = vadd.f32 %v3369, %v3630
        %v3691 = vpack.c.bf16 %v3688, %v3687
        %v3692 = vpack.c.bf16 %v3690, %v3689
        %s3693 = scalar_lea.vmem [#allocation3], 64
        %3694 = vst [vmem:[%s3693] sm:$0xff] %v3691
        %3695 = vst [vmem:[%s3693 + $0x8] sm:$0xff] %v3692
        %v3696 = vadd.f32 %v3283, %v3534
        %v3697 = vadd.f32 %v3372, %v3623
        %v3698 = vadd.f32 %v3285, %v3536
        %v3699 = vadd.f32 %v3374, %v3625
        %v3700 = vpack.c.bf16 %v3697, %v3696
        %v3701 = vpack.c.bf16 %v3699, %v3698
        %s3702 = scalar_lea.vmem [#allocation3], 80
        %3703 = vst [vmem:[%s3702] sm:$0xff] %v3700
        %3704 = vst [vmem:[%s3702 + $0x8] sm:$0xff] %v3701
        %v3705 = vadd.f32 %v3288, %v3529
        %v3706 = vadd.f32 %v3377, %v3618
        %v3707 = vadd.f32 %v3290, %v3531
        %v3708 = vadd.f32 %v3379, %v3620
        %v3709 = vpack.c.bf16 %v3706, %v3705
        %v3710 = vpack.c.bf16 %v3708, %v3707
        %s3711 = scalar_lea.vmem [#allocation3], 96
        %3712 = vst [vmem:[%s3711] sm:$0xff] %v3709
        %3713 = vst [vmem:[%s3711 + $0x8] sm:$0xff] %v3710
        %v3714 = vadd.f32 %v3293, %v3524
        %v3715 = vadd.f32 %v3382, %v3613
        %v3716 = vadd.f32 %v3295, %v3526
        %v3717 = vadd.f32 %v3384, %v3615
        %v3718 = vpack.c.bf16 %v3715, %v3714
        %v3719 = vpack.c.bf16 %v3717, %v3716
        %s3720 = scalar_lea.vmem [#allocation3], 112
        %3721 = vst [vmem:[%s3720] sm:$0xff] %v3718
        %3722 = vst [vmem:[%s3720 + $0x8] sm:$0xff] %v3719
        %v3723 = vadd.f32 %v3298, %v3519
        %v3724 = vadd.f32 %v3387, %v3608
        %v3725 = vadd.f32 %v3300, %v3521
        %v3726 = vadd.f32 %v3389, %v3610
        %v3727 = vpack.c.bf16 %v3724, %v3723
        %v3728 = vpack.c.bf16 %v3726, %v3725
        %s3729 = scalar_lea.vmem [#allocation3], 128
        %3730 = vst [vmem:[%s3729] sm:$0xff] %v3727
        %3731 = vst [vmem:[%s3729 + $0x8] sm:$0xff] %v3728
        %v3732 = vadd.f32 %v3303, %v3514
        %v3733 = vadd.f32 %v3392, %v3603
        %v3734 = vadd.f32 %v3305, %v3516
        %v3735 = vadd.f32 %v3394, %v3605
        %v3736 = vpack.c.bf16 %v3733, %v3732
        %v3737 = vpack.c.bf16 %v3735, %v3734
        %s3738 = scalar_lea.vmem [#allocation3], 144
        %3739 = vst [vmem:[%s3738] sm:$0xff] %v3736
        %3740 = vst [vmem:[%s3738 + $0x8] sm:$0xff] %v3737
        %v3741 = vadd.f32 %v3308, %v3509
        %v3742 = vadd.f32 %v3397, %v3598
        %v3743 = vadd.f32 %v3310, %v3511
        %v3744 = vadd.f32 %v3399, %v3600
        %v3745 = vpack.c.bf16 %v3742, %v3741
        %v3746 = vpack.c.bf16 %v3744, %v3743
        %s3747 = scalar_lea.vmem [#allocation3], 160
        %3748 = vst [vmem:[%s3747] sm:$0xff] %v3745
        %3749 = vst [vmem:[%s3747 + $0x8] sm:$0xff] %v3746
        %v3750 = vadd.f32 %v3313, %v3504
        %v3751 = vadd.f32 %v3402, %v3593
        %v3752 = vadd.f32 %v3315, %v3506
        %v3753 = vadd.f32 %v3404, %v3595
        %v3754 = vpack.c.bf16 %v3751, %v3750
        %v3755 = vpack.c.bf16 %v3753, %v3752
        %s3756 = scalar_lea.vmem [#allocation3], 176
        %3757 = vst [vmem:[%s3756] sm:$0xff] %v3754
        %3758 = vst [vmem:[%s3756 + $0x8] sm:$0xff] %v3755
        %v3759 = vadd.f32 %v3318, %v3499
        %v3760 = vadd.f32 %v3407, %v3588
        %v3761 = vadd.f32 %v3320, %v3501
        %v3762 = vadd.f32 %v3409, %v3590
        %v3763 = vpack.c.bf16 %v3760, %v3759
        %v3764 = vpack.c.bf16 %v3762, %v3761
        %s3765 = scalar_lea.vmem [#allocation3], 192
        %3766 = vst [vmem:[%s3765] sm:$0xff] %v3763
        %3767 = vst [vmem:[%s3765 + $0x8] sm:$0xff] %v3764
        %v3768 = vadd.f32 %v3323, %v3494
        %v3769 = vadd.f32 %v3412, %v3583
        %v3770 = vadd.f32 %v3325, %v3496
        %v3771 = vadd.f32 %v3414, %v3585
        %v3772 = vpack.c.bf16 %v3769, %v3768
        %v3773 = vpack.c.bf16 %v3771, %v3770
        %s3774 = scalar_lea.vmem [#allocation3], 208
        %3775 = vst [vmem:[%s3774] sm:$0xff] %v3772
        %3776 = vst [vmem:[%s3774 + $0x8] sm:$0xff] %v3773
        %v3777 = vadd.f32 %v3328, %v3489
        %v3778 = vadd.f32 %v3417, %v3578
        %v3779 = vadd.f32 %v3330, %v3491
        %v3780 = vadd.f32 %v3419, %v3580
        %v3781 = vpack.c.bf16 %v3778, %v3777
        %v3782 = vpack.c.bf16 %v3780, %v3779
        %s3783 = scalar_lea.vmem [#allocation3], 224
        %3784 = vst [vmem:[%s3783] sm:$0xff] %v3781
        %3785 = vst [vmem:[%s3783 + $0x8] sm:$0xff] %v3782
        %v3786 = vadd.f32 %v3333, %v3484
        %v3787 = vadd.f32 %v3422, %v3573
        %v3788 = vadd.f32 %v3335, %v3486
        %v3789 = vadd.f32 %v3424, %v3575
        %v3790 = vpack.c.bf16 %v3787, %v3786
        %v3791 = vpack.c.bf16 %v3789, %v3788
        %s3792 = scalar_lea.vmem [#allocation3], 240
        %3793 = vst [vmem:[%s3792] sm:$0xff] %v3790
        %3794 = vst [vmem:[%s3792 + $0x8] sm:$0xff] %v3791
        %v3795 = vld [vmem:[#allocation13] sm:$0xff]
        %v3796 = vld [vmem:[#allocation13 + $0x8] sm:$0xff]
        %v3797 = vld [vmem:[#allocation13 + $0x10] sm:$0xff]
        %v3798 = vld [vmem:[#allocation13 + $0x18] sm:$0xff]
        %v3799 = vld [vmem:[#allocation13 + $0x20] sm:$0xff]
        %v3800 = vld [vmem:[#allocation13 + $0x28] sm:$0xff]
        %v3801 = vld [vmem:[#allocation13 + $0x30] sm:$0xff]
        %v3802 = vld [vmem:[#allocation13 + $0x38] sm:$0xff]
        %v3803 = vld [vmem:[#allocation3] sm:$0xff]
        %v3804 = vld [vmem:[#allocation3 + $0x8] sm:$0xff]
        %v3805 = vunpack.c.l.bf16 %v3803
        %v3806 = vunpack.c.h.bf16 %v3803
        %v3807 = vunpack.c.l.bf16 %v3804
        %v3808 = vunpack.c.h.bf16 %v3804
        %v3817 = vunpack.c.l.b16 %v3795
        %v3818 = vunpack.c.h.b16 %v3795
        %v3819 = vunpack.c.l.b16 %v3796
        %v3820 = vunpack.c.h.b16 %v3796
        %v3821 = vunpack.c.l.b16 %v3797
        %v3822 = vunpack.c.h.b16 %v3797
        %v3823 = vunpack.c.l.b16 %v3798
        %v3824 = vunpack.c.h.b16 %v3798
        %v3825 = vunpack.c.l.b16 %v3799
        %v3826 = vunpack.c.h.b16 %v3799
        %v3827 = vunpack.c.l.b16 %v3800
        %v3828 = vunpack.c.h.b16 %v3800
        %v3829 = vunpack.c.l.b16 %v3801
        %v3830 = vunpack.c.h.b16 %v3801
        %v3831 = vunpack.c.l.b16 %v3802
        %v3832 = vunpack.c.h.b16 %v3802
        %v3833 = vpack.c.b16 %v3819, %v3817
        %v3834 = vpack.c.b16 %v3820, %v3818
        %v3835 = vpack.c.b16 %v3823, %v3821
        %v3836 = vpack.c.b16 %v3824, %v3822
        %v3837 = vpack.c.b16 %v3827, %v3825
        %v3838 = vpack.c.b16 %v3828, %v3826
        %v3839 = vpack.c.b16 %v3831, %v3829
        %v3840 = vpack.c.b16 %v3832, %v3830
        %3849 = vmatpush.bf16.msra.mxu0 0
        %3850 = vmatpush.bf16.msra.mxu0 0
        %3851 = vmatpush.bf16.msra.mxu0 0
        %3852 = vmatpush.bf16.msra.mxu0 0
        %3853 = vmatpush.bf16.msra.mxu0 %v3839
        %3854 = vmatpush.bf16.msra.mxu0 %v3837
        %3855 = vmatpush.bf16.msra.mxu0 %v3835
        %3856 = vmatpush.bf16.msra.mxu0 %v3833
        %3857 = vmatmul.bf16.gmra.mxu0 %v423
        %v3858 = vpop.f32.mrf.mxu0
        %v3859 = vadd.f32 0.0, %v3858
        %v3860 = vpop.f32.mrf.mxu0
        %v3861 = vadd.f32 0.0, %v3860
        %3862 = vdwg.mxu0
        %3863 = vmatpush.bf16.msra.mxu0 0
        %3864 = vmatpush.bf16.msra.mxu0 0
        %3865 = vmatpush.bf16.msra.mxu0 0
        %3866 = vmatpush.bf16.msra.mxu0 0
        %3867 = vmatpush.bf16.msra.mxu0 %v3840
        %3868 = vmatpush.bf16.msra.mxu0 %v3838
        %3869 = vmatpush.bf16.msra.mxu0 %v3836
        %3870 = vmatpush.bf16.msra.mxu0 %v3834
        %3871 = vmatmul.bf16.gmra.mxu0 %v423
        %v3872 = vpop.f32.mrf.mxu0
        %v3873 = vadd.f32 0.0, %v3872
        %v3874 = vpop.f32.mrf.mxu0
        %v3875 = vadd.f32 0.0, %v3874
        %3876 = vdwg.mxu0
        %v3877 = vadd.f32 %v3805, %v3859
        %v3878 = vadd.f32 %v3806, %v3873
        %v3879 = vadd.f32 %v3807, %v3861
        %v3880 = vadd.f32 %v3808, %v3875
        %v3881 = vxor.u32 %v3877, 2147483648
        %v3882 = vxor.u32 %v3878, 2147483648
        %v3883 = vxor.u32 %v3879, 2147483648
        %v3884 = vxor.u32 %v3880, 2147483648
        %v3885 = vmul.f32 %v3881, 1.442695
        %v3886 = vpow.pop %v3885
        %v3887 = vmul.f32 %v3882, 1.442695
        %v3888 = vpow.pop %v3887
        %v3889 = vmul.f32 %v3883, 1.442695
        %v3890 = vpow.pop %v3889
        %v3891 = vmul.f32 %v3884, 1.442695
        %v3892 = vpow.pop %v3891
        %v3893 = vadd.f32 %v3886, 1.0
        %v3894 = vadd.f32 %v3888, 1.0
        %v3895 = vadd.f32 %v3890, 1.0
        %v3896 = vadd.f32 %v3892, 1.0
        %v3897 = vrcp.pop %v3893
        %v3898 = vmul.f32 %v3893, %v3897
        %v3899 = vsub.f32 1.0, %v3898
        %v3900 = vmul.f32 %v3897, %v3899
        %v3901 = vadd.f32 %v3897, %v3900
        %vm3902 = vweird.f32 %v3893
        %vm3903 = vweird.f32 %v3897
        %vm3904 = vmor %vm3902, %vm3903
        %v3905 = vsel %vm3904, %v3897, %v3901
        %v3906 = vand.u32 2147483647, %v3893
        %vm3907 = vcmp.eq.f32.partialorder %v3906, 8.507059e+37
        %v3908 = vand.u32 %v3893, 2147483648
        %v3909 = vor.u32 1.1754944e-38, %v3908
        %v3910 = vsel %vm3907, %v3909, %v3905
        %v3911 = vmul.f32 1.0, %v3910
        %v3912 = vrcp.pop %v3894
        %v3913 = vmul.f32 %v3894, %v3912
        %v3914 = vsub.f32 1.0, %v3913
        %v3915 = vmul.f32 %v3912, %v3914
        %v3916 = vadd.f32 %v3912, %v3915
        %vm3917 = vweird.f32 %v3894
        %vm3918 = vweird.f32 %v3912
        %vm3919 = vmor %vm3917, %vm3918
        %v3920 = vsel %vm3919, %v3912, %v3916
        %v3921 = vand.u32 2147483647, %v3894
        %vm3922 = vcmp.eq.f32.partialorder %v3921, 8.507059e+37
        %v3923 = vand.u32 %v3894, 2147483648
        %v3924 = vor.u32 1.1754944e-38, %v3923
        %v3925 = vsel %vm3922, %v3924, %v3920
        %v3926 = vmul.f32 1.0, %v3925
        %v3927 = vrcp.pop %v3895
        %v3928 = vmul.f32 %v3895, %v3927
        %v3929 = vsub.f32 1.0, %v3928
        %v3930 = vmul.f32 %v3927, %v3929
        %v3931 = vadd.f32 %v3927, %v3930
        %vm3932 = vweird.f32 %v3895
        %vm3933 = vweird.f32 %v3927
        %vm3934 = vmor %vm3932, %vm3933
        %v3935 = vsel %vm3934, %v3927, %v3931
        %v3936 = vand.u32 2147483647, %v3895
        %vm3937 = vcmp.eq.f32.partialorder %v3936, 8.507059e+37
        %v3938 = vand.u32 %v3895, 2147483648
        %v3939 = vor.u32 1.1754944e-38, %v3938
        %v3940 = vsel %vm3937, %v3939, %v3935
        %v3941 = vmul.f32 1.0, %v3940
        %v3942 = vrcp.pop %v3896
        %v3943 = vmul.f32 %v3896, %v3942
        %v3944 = vsub.f32 1.0, %v3943
        %v3945 = vmul.f32 %v3942, %v3944
        %v3946 = vadd.f32 %v3942, %v3945
        %vm3947 = vweird.f32 %v3896
        %vm3948 = vweird.f32 %v3942
        %vm3949 = vmor %vm3947, %vm3948
        %v3950 = vsel %vm3949, %v3942, %v3946
        %v3951 = vand.u32 2147483647, %v3896
        %vm3952 = vcmp.eq.f32.partialorder %v3951, 8.507059e+37
        %v3953 = vand.u32 %v3896, 2147483648
        %v3954 = vor.u32 1.1754944e-38, %v3953
        %v3955 = vsel %vm3952, %v3954, %v3950
        %v3956 = vmul.f32 1.0, %v3955
        %v3957 = vtanh.pop %v3878
        %v3958 = vtanh.pop %v3880
        %v3959 = vmul.f32 %v3911, 0.0
        %v3960 = vmul.f32 %v3941, 0.0
        %3963 = vrot.lane.b32.xlu0 %v3957, 64
        %v3964 = vpop.permute.xlu0 %3963
        %3965 = vrot.lane.b32.xlu0 %v3958, 64
        %v3966 = vpop.permute.xlu0 %3965
        %v3969 = vmul.f32 %v3911, %v3964
        %v3970 = vmul.f32 %v3941, %v3966
        %3973 = vrot.lane.b32.xlu0 %v3969, 64
        %v3974 = vpop.permute.xlu0 %3973
        %3975 = vrot.lane.b32.xlu0 %v3970, 64
        %v3976 = vpop.permute.xlu0 %3975
        %v3979 = vadd.f32 %v3959, %v3974
        %v3980 = vadd.f32 %v3960, %v3976
        %v3981 = vtanh.pop %v3979
        %v3982 = vtanh.pop %v3980
        %3985 = vrot.lane.b32.xlu0 %v3981, 64
        %v3986 = vpop.permute.xlu0 %3985
        %3987 = vrot.lane.b32.xlu0 %v3982, 64
        %v3988 = vpop.permute.xlu0 %3987
        %v3991 = vmul.f32 %v3926, %v3986
        %v3992 = vmul.f32 %v3956, %v3988
        %v3993 = vpack.c.bf16 %v3991, %v3991
        %v3994 = vpack.c.bf16 %v3992, %v3992
        %3995 = vst.msk [vmem:[#allocation4] sm:$0xf] %vm571, %v3993
        %3996 = vst.msk [vmem:[#allocation4 + $0x4] sm:$0xf] %vm571, %v3994
        %v3997 = vld [vmem:[%s3666] sm:$0xff]
        %v3998 = vld [vmem:[%s3666 + $0x8] sm:$0xff]
        %v3999 = vunpack.c.l.bf16 %v3997
        %v4000 = vunpack.c.h.bf16 %v3997
        %v4001 = vunpack.c.l.bf16 %v3998
        %v4002 = vunpack.c.h.bf16 %v3998
        %v4005 = vunpack.c.l.b16 %v3993
        %v4006 = vunpack.c.l.b16 %v3994
        %v4007 = vpack.c.b16 %v4006, %v4005
        %v4009 = vsel %vm421, %v4007, 0
        %4011 = vmatpush.bf16.msra.mxu0 0
        %4012 = vmatpush.bf16.msra.mxu0 0
        %4013 = vmatpush.bf16.msra.mxu0 0
        %4014 = vmatpush.bf16.msra.mxu0 0
        %4015 = vmatpush.bf16.msra.mxu0 %v3839
        %4016 = vmatpush.bf16.msra.mxu0 %v3837
        %4017 = vmatpush.bf16.msra.mxu0 %v3835
        %4018 = vmatpush.bf16.msra.mxu0 %v3833
        %4019 = vmatmul.bf16.gmra.mxu0 %v4009
        %v4020 = vpop.f32.mrf.mxu0
        %v4021 = vadd.f32 0.0, %v4020
        %v4022 = vpop.f32.mrf.mxu0
        %v4023 = vadd.f32 0.0, %v4022
        %4024 = vdwg.mxu0
        %4025 = vmatpush.bf16.msra.mxu0 0
        %4026 = vmatpush.bf16.msra.mxu0 0
        %4027 = vmatpush.bf16.msra.mxu0 0
        %4028 = vmatpush.bf16.msra.mxu0 0
        %4029 = vmatpush.bf16.msra.mxu0 %v3840
        %4030 = vmatpush.bf16.msra.mxu0 %v3838
        %4031 = vmatpush.bf16.msra.mxu0 %v3836
        %4032 = vmatpush.bf16.msra.mxu0 %v3834
        %4033 = vmatmul.bf16.gmra.mxu0 %v4009
        %v4034 = vpop.f32.mrf.mxu0
        %v4035 = vadd.f32 0.0, %v4034
        %v4036 = vpop.f32.mrf.mxu0
        %v4037 = vadd.f32 0.0, %v4036
        %4038 = vdwg.mxu0
        %v4039 = vadd.f32 %v3999, %v4021
        %v4040 = vadd.f32 %v4000, %v4035
        %v4041 = vadd.f32 %v4001, %v4023
        %v4042 = vadd.f32 %v4002, %v4037
        %v4043 = vxor.u32 %v4039, 2147483648
        %v4044 = vxor.u32 %v4040, 2147483648
        %v4045 = vxor.u32 %v4041, 2147483648
        %v4046 = vxor.u32 %v4042, 2147483648
        %v4047 = vmul.f32 %v4043, 1.442695
        %v4048 = vpow.pop %v4047
        %v4049 = vmul.f32 %v4044, 1.442695
        %v4050 = vpow.pop %v4049
        %v4051 = vmul.f32 %v4045, 1.442695
        %v4052 = vpow.pop %v4051
        %v4053 = vmul.f32 %v4046, 1.442695
        %v4054 = vpow.pop %v4053
        %v4055 = vadd.f32 %v4048, 1.0
        %v4056 = vadd.f32 %v4050, 1.0
        %v4057 = vadd.f32 %v4052, 1.0
        %v4058 = vadd.f32 %v4054, 1.0
        %v4059 = vrcp.pop %v4055
        %v4060 = vmul.f32 %v4055, %v4059
        %v4061 = vsub.f32 1.0, %v4060
        %v4062 = vmul.f32 %v4059, %v4061
        %v4063 = vadd.f32 %v4059, %v4062
        %vm4064 = vweird.f32 %v4055
        %vm4065 = vweird.f32 %v4059
        %vm4066 = vmor %vm4064, %vm4065
        %v4067 = vsel %vm4066, %v4059, %v4063
        %v4068 = vand.u32 2147483647, %v4055
        %vm4069 = vcmp.eq.f32.partialorder %v4068, 8.507059e+37
        %v4070 = vand.u32 %v4055, 2147483648
        %v4071 = vor.u32 1.1754944e-38, %v4070
        %v4072 = vsel %vm4069, %v4071, %v4067
        %v4073 = vmul.f32 1.0, %v4072
        %v4074 = vrcp.pop %v4056
        %v4075 = vmul.f32 %v4056, %v4074
        %v4076 = vsub.f32 1.0, %v4075
        %v4077 = vmul.f32 %v4074, %v4076
        %v4078 = vadd.f32 %v4074, %v4077
        %vm4079 = vweird.f32 %v4056
        %vm4080 = vweird.f32 %v4074
        %vm4081 = vmor %vm4079, %vm4080
        %v4082 = vsel %vm4081, %v4074, %v4078
        %v4083 = vand.u32 2147483647, %v4056
        %vm4084 = vcmp.eq.f32.partialorder %v4083, 8.507059e+37
        %v4085 = vand.u32 %v4056, 2147483648
        %v4086 = vor.u32 1.1754944e-38, %v4085
        %v4087 = vsel %vm4084, %v4086, %v4082
        %v4088 = vmul.f32 1.0, %v4087
        %v4089 = vrcp.pop %v4057
        %v4090 = vmul.f32 %v4057, %v4089
        %v4091 = vsub.f32 1.0, %v4090
        %v4092 = vmul.f32 %v4089, %v4091
        %v4093 = vadd.f32 %v4089, %v4092
        %vm4094 = vweird.f32 %v4057
        %vm4095 = vweird.f32 %v4089
        %vm4096 = vmor %vm4094, %vm4095
        %v4097 = vsel %vm4096, %v4089, %v4093
        %v4098 = vand.u32 2147483647, %v4057
        %vm4099 = vcmp.eq.f32.partialorder %v4098, 8.507059e+37
        %v4100 = vand.u32 %v4057, 2147483648
        %v4101 = vor.u32 1.1754944e-38, %v4100
        %v4102 = vsel %vm4099, %v4101, %v4097
        %v4103 = vmul.f32 1.0, %v4102
        %v4104 = vrcp.pop %v4058
        %v4105 = vmul.f32 %v4058, %v4104
        %v4106 = vsub.f32 1.0, %v4105
        %v4107 = vmul.f32 %v4104, %v4106
        %v4108 = vadd.f32 %v4104, %v4107
        %vm4109 = vweird.f32 %v4058
        %vm4110 = vweird.f32 %v4104
        %vm4111 = vmor %vm4109, %vm4110
        %v4112 = vsel %vm4111, %v4104, %v4108
        %v4113 = vand.u32 2147483647, %v4058
        %vm4114 = vcmp.eq.f32.partialorder %v4113, 8.507059e+37
        %v4115 = vand.u32 %v4058, 2147483648
        %v4116 = vor.u32 1.1754944e-38, %v4115
        %v4117 = vsel %vm4114, %v4116, %v4112
        %v4118 = vmul.f32 1.0, %v4117
        %v4119 = vtanh.pop %v4040
        %v4120 = vtanh.pop %v4042
        %v4121 = vmul.f32 %v4073, %v3979
        %v4122 = vmul.f32 %v4103, %v3980
        %4125 = vrot.lane.b32.xlu0 %v4119, 64
        %v4126 = vpop.permute.xlu0 %4125
        %4127 = vrot.lane.b32.xlu0 %v4120, 64
        %v4128 = vpop.permute.xlu0 %4127
        %v4131 = vmul.f32 %v4073, %v4126
        %v4132 = vmul.f32 %v4103, %v4128
        %4135 = vrot.lane.b32.xlu0 %v4131, 64
        %v4136 = vpop.permute.xlu0 %4135
        %4137 = vrot.lane.b32.xlu0 %v4132, 64
        %v4138 = vpop.permute.xlu0 %4137
        %v4141 = vadd.f32 %v4121, %v4136
        %v4142 = vadd.f32 %v4122, %v4138
        %v4143 = vtanh.pop %v4141
        %v4144 = vtanh.pop %v4142
        %4147 = vrot.lane.b32.xlu0 %v4143, 64
        %v4148 = vpop.permute.xlu0 %4147
        %4149 = vrot.lane.b32.xlu0 %v4144, 64
        %v4150 = vpop.permute.xlu0 %4149
        %v4153 = vmul.f32 %v4088, %v4148
        %v4154 = vmul.f32 %v4118, %v4150
        %v4155 = vpack.c.bf16 %v4153, %v4153
        %v4156 = vpack.c.bf16 %v4154, %v4154
        %s4157 = scalar_lea.vmem [#allocation4], 8
        %4158 = vst.msk [vmem:[%s4157] sm:$0xf] %vm571, %v4155
        %4159 = vst.msk [vmem:[%s4157 + $0x4] sm:$0xf] %vm571, %v4156
        %v4160 = vld [vmem:[%s3675] sm:$0xff]
        %v4161 = vld [vmem:[%s3675 + $0x8] sm:$0xff]
        %v4162 = vunpack.c.l.bf16 %v4160
        %v4163 = vunpack.c.h.bf16 %v4160
        %v4164 = vunpack.c.l.bf16 %v4161
        %v4165 = vunpack.c.h.bf16 %v4161
        %v4168 = vunpack.c.l.b16 %v4155
        %v4169 = vunpack.c.l.b16 %v4156
        %v4170 = vpack.c.b16 %v4169, %v4168
        %v4172 = vsel %vm421, %v4170, 0
        %4174 = vmatpush.bf16.msra.mxu0 0
        %4175 = vmatpush.bf16.msra.mxu0 0
        %4176 = vmatpush.bf16.msra.mxu0 0
        %4177 = vmatpush.bf16.msra.mxu0 0
        %4178 = vmatpush.bf16.msra.mxu0 %v3839
        %4179 = vmatpush.bf16.msra.mxu0 %v3837
        %4180 = vmatpush.bf16.msra.mxu0 %v3835
        %4181 = vmatpush.bf16.msra.mxu0 %v3833
        %4182 = vmatmul.bf16.gmra.mxu0 %v4172
        %v4183 = vpop.f32.mrf.mxu0
        %v4184 = vadd.f32 0.0, %v4183
        %v4185 = vpop.f32.mrf.mxu0
        %v4186 = vadd.f32 0.0, %v4185
        %4187 = vdwg.mxu0
        %4188 = vmatpush.bf16.msra.mxu0 0
        %4189 = vmatpush.bf16.msra.mxu0 0
        %4190 = vmatpush.bf16.msra.mxu0 0
        %4191 = vmatpush.bf16.msra.mxu0 0
        %4192 = vmatpush.bf16.msra.mxu0 %v3840
        %4193 = vmatpush.bf16.msra.mxu0 %v3838
        %4194 = vmatpush.bf16.msra.mxu0 %v3836
        %4195 = vmatpush.bf16.msra.mxu0 %v3834
        %4196 = vmatmul.bf16.gmra.mxu0 %v4172
        %v4197 = vpop.f32.mrf.mxu0
        %v4198 = vadd.f32 0.0, %v4197
        %v4199 = vpop.f32.mrf.mxu0
        %v4200 = vadd.f32 0.0, %v4199
        %4201 = vdwg.mxu0
        %v4202 = vadd.f32 %v4162, %v4184
        %v4203 = vadd.f32 %v4163, %v4198
        %v4204 = vadd.f32 %v4164, %v4186
        %v4205 = vadd.f32 %v4165, %v4200
        %v4206 = vxor.u32 %v4202, 2147483648
        %v4207 = vxor.u32 %v4203, 2147483648
        %v4208 = vxor.u32 %v4204, 2147483648
        %v4209 = vxor.u32 %v4205, 2147483648
        %v4210 = vmul.f32 %v4206, 1.442695
        %v4211 = vpow.pop %v4210
        %v4212 = vmul.f32 %v4207, 1.442695
        %v4213 = vpow.pop %v4212
        %v4214 = vmul.f32 %v4208, 1.442695
        %v4215 = vpow.pop %v4214
        %v4216 = vmul.f32 %v4209, 1.442695
        %v4217 = vpow.pop %v4216
        %v4218 = vadd.f32 %v4211, 1.0
        %v4219 = vadd.f32 %v4213, 1.0
        %v4220 = vadd.f32 %v4215, 1.0
        %v4221 = vadd.f32 %v4217, 1.0
        %v4222 = vrcp.pop %v4218
        %v4223 = vmul.f32 %v4218, %v4222
        %v4224 = vsub.f32 1.0, %v4223
        %v4225 = vmul.f32 %v4222, %v4224
        %v4226 = vadd.f32 %v4222, %v4225
        %vm4227 = vweird.f32 %v4218
        %vm4228 = vweird.f32 %v4222
        %vm4229 = vmor %vm4227, %vm4228
        %v4230 = vsel %vm4229, %v4222, %v4226
        %v4231 = vand.u32 2147483647, %v4218
        %vm4232 = vcmp.eq.f32.partialorder %v4231, 8.507059e+37
        %v4233 = vand.u32 %v4218, 2147483648
        %v4234 = vor.u32 1.1754944e-38, %v4233
        %v4235 = vsel %vm4232, %v4234, %v4230
        %v4236 = vmul.f32 1.0, %v4235
        %v4237 = vrcp.pop %v4219
        %v4238 = vmul.f32 %v4219, %v4237
        %v4239 = vsub.f32 1.0, %v4238
        %v4240 = vmul.f32 %v4237, %v4239
        %v4241 = vadd.f32 %v4237, %v4240
        %vm4242 = vweird.f32 %v4219
        %vm4243 = vweird.f32 %v4237
        %vm4244 = vmor %vm4242, %vm4243
        %v4245 = vsel %vm4244, %v4237, %v4241
        %v4246 = vand.u32 2147483647, %v4219
        %vm4247 = vcmp.eq.f32.partialorder %v4246, 8.507059e+37
        %v4248 = vand.u32 %v4219, 2147483648
        %v4249 = vor.u32 1.1754944e-38, %v4248
        %v4250 = vsel %vm4247, %v4249, %v4245
        %v4251 = vmul.f32 1.0, %v4250
        %v4252 = vrcp.pop %v4220
        %v4253 = vmul.f32 %v4220, %v4252
        %v4254 = vsub.f32 1.0, %v4253
        %v4255 = vmul.f32 %v4252, %v4254
        %v4256 = vadd.f32 %v4252, %v4255
        %vm4257 = vweird.f32 %v4220
        %vm4258 = vweird.f32 %v4252
        %vm4259 = vmor %vm4257, %vm4258
        %v4260 = vsel %vm4259, %v4252, %v4256
        %v4261 = vand.u32 2147483647, %v4220
        %vm4262 = vcmp.eq.f32.partialorder %v4261, 8.507059e+37
        %v4263 = vand.u32 %v4220, 2147483648
        %v4264 = vor.u32 1.1754944e-38, %v4263
        %v4265 = vsel %vm4262, %v4264, %v4260
        %v4266 = vmul.f32 1.0, %v4265
        %v4267 = vrcp.pop %v4221
        %v4268 = vmul.f32 %v4221, %v4267
        %v4269 = vsub.f32 1.0, %v4268
        %v4270 = vmul.f32 %v4267, %v4269
        %v4271 = vadd.f32 %v4267, %v4270
        %vm4272 = vweird.f32 %v4221
        %vm4273 = vweird.f32 %v4267
        %vm4274 = vmor %vm4272, %vm4273
        %v4275 = vsel %vm4274, %v4267, %v4271
        %v4276 = vand.u32 2147483647, %v4221
        %vm4277 = vcmp.eq.f32.partialorder %v4276, 8.507059e+37
        %v4278 = vand.u32 %v4221, 2147483648
        %v4279 = vor.u32 1.1754944e-38, %v4278
        %v4280 = vsel %vm4277, %v4279, %v4275
        %v4281 = vmul.f32 1.0, %v4280
        %v4282 = vtanh.pop %v4203
        %v4283 = vtanh.pop %v4205
        %v4284 = vmul.f32 %v4236, %v4141
        %v4285 = vmul.f32 %v4266, %v4142
        %4288 = vrot.lane.b32.xlu0 %v4282, 64
        %v4289 = vpop.permute.xlu0 %4288
        %4290 = vrot.lane.b32.xlu0 %v4283, 64
        %v4291 = vpop.permute.xlu0 %4290
        %v4294 = vmul.f32 %v4236, %v4289
        %v4295 = vmul.f32 %v4266, %v4291
        %4298 = vrot.lane.b32.xlu0 %v4294, 64
        %v4299 = vpop.permute.xlu0 %4298
        %4300 = vrot.lane.b32.xlu0 %v4295, 64
        %v4301 = vpop.permute.xlu0 %4300
        %v4304 = vadd.f32 %v4284, %v4299
        %v4305 = vadd.f32 %v4285, %v4301
        %v4306 = vtanh.pop %v4304
        %v4307 = vtanh.pop %v4305
        %4310 = vrot.lane.b32.xlu0 %v4306, 64
        %v4311 = vpop.permute.xlu0 %4310
        %4312 = vrot.lane.b32.xlu0 %v4307, 64
        %v4313 = vpop.permute.xlu0 %4312
        %v4316 = vmul.f32 %v4251, %v4311
        %v4317 = vmul.f32 %v4281, %v4313
        %v4318 = vpack.c.bf16 %v4316, %v4316
        %v4319 = vpack.c.bf16 %v4317, %v4317
        %s4320 = scalar_lea.vmem [#allocation4], 16
        %4321 = vst.msk [vmem:[%s4320] sm:$0xf] %vm571, %v4318
        %4322 = vst.msk [vmem:[%s4320 + $0x4] sm:$0xf] %vm571, %v4319
        %v4323 = vld [vmem:[%s3684] sm:$0xff]
        %v4324 = vld [vmem:[%s3684 + $0x8] sm:$0xff]
        %v4325 = vunpack.c.l.bf16 %v4323
        %v4326 = vunpack.c.h.bf16 %v4323
        %v4327 = vunpack.c.l.bf16 %v4324
        %v4328 = vunpack.c.h.bf16 %v4324
        %v4331 = vunpack.c.l.b16 %v4318
        %v4332 = vunpack.c.l.b16 %v4319
        %v4333 = vpack.c.b16 %v4332, %v4331
        %v4335 = vsel %vm421, %v4333, 0
        %4337 = vmatpush.bf16.msra.mxu0 0
        %4338 = vmatpush.bf16.msra.mxu0 0
        %4339 = vmatpush.bf16.msra.mxu0 0
        %4340 = vmatpush.bf16.msra.mxu0 0
        %4341 = vmatpush.bf16.msra.mxu0 %v3839
        %4342 = vmatpush.bf16.msra.mxu0 %v3837
        %4343 = vmatpush.bf16.msra.mxu0 %v3835
        %4344 = vmatpush.bf16.msra.mxu0 %v3833
        %4345 = vmatmul.bf16.gmra.mxu0 %v4335
        %v4346 = vpop.f32.mrf.mxu0
        %v4347 = vadd.f32 0.0, %v4346
        %v4348 = vpop.f32.mrf.mxu0
        %v4349 = vadd.f32 0.0, %v4348
        %4350 = vdwg.mxu0
        %4351 = vmatpush.bf16.msra.mxu0 0
        %4352 = vmatpush.bf16.msra.mxu0 0
        %4353 = vmatpush.bf16.msra.mxu0 0
        %4354 = vmatpush.bf16.msra.mxu0 0
        %4355 = vmatpush.bf16.msra.mxu0 %v3840
        %4356 = vmatpush.bf16.msra.mxu0 %v3838
        %4357 = vmatpush.bf16.msra.mxu0 %v3836
        %4358 = vmatpush.bf16.msra.mxu0 %v3834
        %4359 = vmatmul.bf16.gmra.mxu0 %v4335
        %v4360 = vpop.f32.mrf.mxu0
        %v4361 = vadd.f32 0.0, %v4360
        %v4362 = vpop.f32.mrf.mxu0
        %v4363 = vadd.f32 0.0, %v4362
        %4364 = vdwg.mxu0
        %v4365 = vadd.f32 %v4325, %v4347
        %v4366 = vadd.f32 %v4326, %v4361
        %v4367 = vadd.f32 %v4327, %v4349
        %v4368 = vadd.f32 %v4328, %v4363
        %v4369 = vxor.u32 %v4365, 2147483648
        %v4370 = vxor.u32 %v4366, 2147483648
        %v4371 = vxor.u32 %v4367, 2147483648
        %v4372 = vxor.u32 %v4368, 2147483648
        %v4373 = vmul.f32 %v4369, 1.442695
        %v4374 = vpow.pop %v4373
        %v4375 = vmul.f32 %v4370, 1.442695
        %v4376 = vpow.pop %v4375
        %v4377 = vmul.f32 %v4371, 1.442695
        %v4378 = vpow.pop %v4377
        %v4379 = vmul.f32 %v4372, 1.442695
        %v4380 = vpow.pop %v4379
        %v4381 = vadd.f32 %v4374, 1.0
        %v4382 = vadd.f32 %v4376, 1.0
        %v4383 = vadd.f32 %v4378, 1.0
        %v4384 = vadd.f32 %v4380, 1.0
        %v4385 = vrcp.pop %v4381
        %v4386 = vmul.f32 %v4381, %v4385
        %v4387 = vsub.f32 1.0, %v4386
        %v4388 = vmul.f32 %v4385, %v4387
        %v4389 = vadd.f32 %v4385, %v4388
        %vm4390 = vweird.f32 %v4381
        %vm4391 = vweird.f32 %v4385
        %vm4392 = vmor %vm4390, %vm4391
        %v4393 = vsel %vm4392, %v4385, %v4389
        %v4394 = vand.u32 2147483647, %v4381
        %vm4395 = vcmp.eq.f32.partialorder %v4394, 8.507059e+37
        %v4396 = vand.u32 %v4381, 2147483648
        %v4397 = vor.u32 1.1754944e-38, %v4396
        %v4398 = vsel %vm4395, %v4397, %v4393
        %v4399 = vmul.f32 1.0, %v4398
        %v4400 = vrcp.pop %v4382
        %v4401 = vmul.f32 %v4382, %v4400
        %v4402 = vsub.f32 1.0, %v4401
        %v4403 = vmul.f32 %v4400, %v4402
        %v4404 = vadd.f32 %v4400, %v4403
        %vm4405 = vweird.f32 %v4382
        %vm4406 = vweird.f32 %v4400
        %vm4407 = vmor %vm4405, %vm4406
        %v4408 = vsel %vm4407, %v4400, %v4404
        %v4409 = vand.u32 2147483647, %v4382
        %vm4410 = vcmp.eq.f32.partialorder %v4409, 8.507059e+37
        %v4411 = vand.u32 %v4382, 2147483648
        %v4412 = vor.u32 1.1754944e-38, %v4411
        %v4413 = vsel %vm4410, %v4412, %v4408
        %v4414 = vmul.f32 1.0, %v4413
        %v4415 = vrcp.pop %v4383
        %v4416 = vmul.f32 %v4383, %v4415
        %v4417 = vsub.f32 1.0, %v4416
        %v4418 = vmul.f32 %v4415, %v4417
        %v4419 = vadd.f32 %v4415, %v4418
        %vm4420 = vweird.f32 %v4383
        %vm4421 = vweird.f32 %v4415
        %vm4422 = vmor %vm4420, %vm4421
        %v4423 = vsel %vm4422, %v4415, %v4419
        %v4424 = vand.u32 2147483647, %v4383
        %vm4425 = vcmp.eq.f32.partialorder %v4424, 8.507059e+37
        %v4426 = vand.u32 %v4383, 2147483648
        %v4427 = vor.u32 1.1754944e-38, %v4426
        %v4428 = vsel %vm4425, %v4427, %v4423
        %v4429 = vmul.f32 1.0, %v4428
        %v4430 = vrcp.pop %v4384
        %v4431 = vmul.f32 %v4384, %v4430
        %v4432 = vsub.f32 1.0, %v4431
        %v4433 = vmul.f32 %v4430, %v4432
        %v4434 = vadd.f32 %v4430, %v4433
        %vm4435 = vweird.f32 %v4384
        %vm4436 = vweird.f32 %v4430
        %vm4437 = vmor %vm4435, %vm4436
        %v4438 = vsel %vm4437, %v4430, %v4434
        %v4439 = vand.u32 2147483647, %v4384
        %vm4440 = vcmp.eq.f32.partialorder %v4439, 8.507059e+37
        %v4441 = vand.u32 %v4384, 2147483648
        %v4442 = vor.u32 1.1754944e-38, %v4441
        %v4443 = vsel %vm4440, %v4442, %v4438
        %v4444 = vmul.f32 1.0, %v4443
        %v4445 = vtanh.pop %v4366
        %v4446 = vtanh.pop %v4368
        %v4447 = vmul.f32 %v4399, %v4304
        %v4448 = vmul.f32 %v4429, %v4305
        %4451 = vrot.lane.b32.xlu0 %v4445, 64
        %v4452 = vpop.permute.xlu0 %4451
        %4453 = vrot.lane.b32.xlu0 %v4446, 64
        %v4454 = vpop.permute.xlu0 %4453
        %v4457 = vmul.f32 %v4399, %v4452
        %v4458 = vmul.f32 %v4429, %v4454
        %4461 = vrot.lane.b32.xlu0 %v4457, 64
        %v4462 = vpop.permute.xlu0 %4461
        %4463 = vrot.lane.b32.xlu0 %v4458, 64
        %v4464 = vpop.permute.xlu0 %4463
        %v4467 = vadd.f32 %v4447, %v4462
        %v4468 = vadd.f32 %v4448, %v4464
        %v4469 = vtanh.pop %v4467
        %v4470 = vtanh.pop %v4468
        %4473 = vrot.lane.b32.xlu0 %v4469, 64
        %v4474 = vpop.permute.xlu0 %4473
        %4475 = vrot.lane.b32.xlu0 %v4470, 64
        %v4476 = vpop.permute.xlu0 %4475
        %v4479 = vmul.f32 %v4414, %v4474
        %v4480 = vmul.f32 %v4444, %v4476
        %v4481 = vpack.c.bf16 %v4479, %v4479
        %v4482 = vpack.c.bf16 %v4480, %v4480
        %s4483 = scalar_lea.vmem [#allocation4], 24
        %4484 = vst.msk [vmem:[%s4483] sm:$0xf] %vm571, %v4481
        %4485 = vst.msk [vmem:[%s4483 + $0x4] sm:$0xf] %vm571, %v4482
        %v4486 = vld [vmem:[%s3693] sm:$0xff]
        %v4487 = vld [vmem:[%s3693 + $0x8] sm:$0xff]
        %v4488 = vunpack.c.l.bf16 %v4486
        %v4489 = vunpack.c.h.bf16 %v4486
        %v4490 = vunpack.c.l.bf16 %v4487
        %v4491 = vunpack.c.h.bf16 %v4487
        %v4494 = vunpack.c.l.b16 %v4481
        %v4495 = vunpack.c.l.b16 %v4482
        %v4496 = vpack.c.b16 %v4495, %v4494
        %v4498 = vsel %vm421, %v4496, 0
        %4500 = vmatpush.bf16.msra.mxu0 0
        %4501 = vmatpush.bf16.msra.mxu0 0
        %4502 = vmatpush.bf16.msra.mxu0 0
        %4503 = vmatpush.bf16.msra.mxu0 0
        %4504 = vmatpush.bf16.msra.mxu0 %v3839
        %4505 = vmatpush.bf16.msra.mxu0 %v3837
        %4506 = vmatpush.bf16.msra.mxu0 %v3835
        %4507 = vmatpush.bf16.msra.mxu0 %v3833
        %4508 = vmatmul.bf16.gmra.mxu0 %v4498
        %v4509 = vpop.f32.mrf.mxu0
        %v4510 = vadd.f32 0.0, %v4509
        %v4511 = vpop.f32.mrf.mxu0
        %v4512 = vadd.f32 0.0, %v4511
        %4513 = vdwg.mxu0
        %4514 = vmatpush.bf16.msra.mxu0 0
        %4515 = vmatpush.bf16.msra.mxu0 0
        %4516 = vmatpush.bf16.msra.mxu0 0
        %4517 = vmatpush.bf16.msra.mxu0 0
        %4518 = vmatpush.bf16.msra.mxu0 %v3840
        %4519 = vmatpush.bf16.msra.mxu0 %v3838
        %4520 = vmatpush.bf16.msra.mxu0 %v3836
        %4521 = vmatpush.bf16.msra.mxu0 %v3834
        %4522 = vmatmul.bf16.gmra.mxu0 %v4498
        %v4523 = vpop.f32.mrf.mxu0
        %v4524 = vadd.f32 0.0, %v4523
        %v4525 = vpop.f32.mrf.mxu0
        %v4526 = vadd.f32 0.0, %v4525
        %4527 = vdwg.mxu0
        %v4528 = vadd.f32 %v4488, %v4510
        %v4529 = vadd.f32 %v4489, %v4524
        %v4530 = vadd.f32 %v4490, %v4512
        %v4531 = vadd.f32 %v4491, %v4526
        %v4532 = vxor.u32 %v4528, 2147483648
        %v4533 = vxor.u32 %v4529, 2147483648
        %v4534 = vxor.u32 %v4530, 2147483648
        %v4535 = vxor.u32 %v4531, 2147483648
        %v4536 = vmul.f32 %v4532, 1.442695
        %v4537 = vpow.pop %v4536
        %v4538 = vmul.f32 %v4533, 1.442695
        %v4539 = vpow.pop %v4538
        %v4540 = vmul.f32 %v4534, 1.442695
        %v4541 = vpow.pop %v4540
        %v4542 = vmul.f32 %v4535, 1.442695
        %v4543 = vpow.pop %v4542
        %v4544 = vadd.f32 %v4537, 1.0
        %v4545 = vadd.f32 %v4539, 1.0
        %v4546 = vadd.f32 %v4541, 1.0
        %v4547 = vadd.f32 %v4543, 1.0
        %v4548 = vrcp.pop %v4544
        %v4549 = vmul.f32 %v4544, %v4548
        %v4550 = vsub.f32 1.0, %v4549
        %v4551 = vmul.f32 %v4548, %v4550
        %v4552 = vadd.f32 %v4548, %v4551
        %vm4553 = vweird.f32 %v4544
        %vm4554 = vweird.f32 %v4548
        %vm4555 = vmor %vm4553, %vm4554
        %v4556 = vsel %vm4555, %v4548, %v4552
        %v4557 = vand.u32 2147483647, %v4544
        %vm4558 = vcmp.eq.f32.partialorder %v4557, 8.507059e+37
        %v4559 = vand.u32 %v4544, 2147483648
        %v4560 = vor.u32 1.1754944e-38, %v4559
        %v4561 = vsel %vm4558, %v4560, %v4556
        %v4562 = vmul.f32 1.0, %v4561
        %v4563 = vrcp.pop %v4545
        %v4564 = vmul.f32 %v4545, %v4563
        %v4565 = vsub.f32 1.0, %v4564
        %v4566 = vmul.f32 %v4563, %v4565
        %v4567 = vadd.f32 %v4563, %v4566
        %vm4568 = vweird.f32 %v4545
        %vm4569 = vweird.f32 %v4563
        %vm4570 = vmor %vm4568, %vm4569
        %v4571 = vsel %vm4570, %v4563, %v4567
        %v4572 = vand.u32 2147483647, %v4545
        %vm4573 = vcmp.eq.f32.partialorder %v4572, 8.507059e+37
        %v4574 = vand.u32 %v4545, 2147483648
        %v4575 = vor.u32 1.1754944e-38, %v4574
        %v4576 = vsel %vm4573, %v4575, %v4571
        %v4577 = vmul.f32 1.0, %v4576
        %v4578 = vrcp.pop %v4546
        %v4579 = vmul.f32 %v4546, %v4578
        %v4580 = vsub.f32 1.0, %v4579
        %v4581 = vmul.f32 %v4578, %v4580
        %v4582 = vadd.f32 %v4578, %v4581
        %vm4583 = vweird.f32 %v4546
        %vm4584 = vweird.f32 %v4578
        %vm4585 = vmor %vm4583, %vm4584
        %v4586 = vsel %vm4585, %v4578, %v4582
        %v4587 = vand.u32 2147483647, %v4546
        %vm4588 = vcmp.eq.f32.partialorder %v4587, 8.507059e+37
        %v4589 = vand.u32 %v4546, 2147483648
        %v4590 = vor.u32 1.1754944e-38, %v4589
        %v4591 = vsel %vm4588, %v4590, %v4586
        %v4592 = vmul.f32 1.0, %v4591
        %v4593 = vrcp.pop %v4547
        %v4594 = vmul.f32 %v4547, %v4593
        %v4595 = vsub.f32 1.0, %v4594
        %v4596 = vmul.f32 %v4593, %v4595
        %v4597 = vadd.f32 %v4593, %v4596
        %vm4598 = vweird.f32 %v4547
        %vm4599 = vweird.f32 %v4593
        %vm4600 = vmor %vm4598, %vm4599
        %v4601 = vsel %vm4600, %v4593, %v4597
        %v4602 = vand.u32 2147483647, %v4547
        %vm4603 = vcmp.eq.f32.partialorder %v4602, 8.507059e+37
        %v4604 = vand.u32 %v4547, 2147483648
        %v4605 = vor.u32 1.1754944e-38, %v4604
        %v4606 = vsel %vm4603, %v4605, %v4601
        %v4607 = vmul.f32 1.0, %v4606
        %v4608 = vtanh.pop %v4529
        %v4609 = vtanh.pop %v4531
        %v4610 = vmul.f32 %v4562, %v4467
        %v4611 = vmul.f32 %v4592, %v4468
        %4614 = vrot.lane.b32.xlu0 %v4608, 64
        %v4615 = vpop.permute.xlu0 %4614
        %4616 = vrot.lane.b32.xlu0 %v4609, 64
        %v4617 = vpop.permute.xlu0 %4616
        %v4620 = vmul.f32 %v4562, %v4615
        %v4621 = vmul.f32 %v4592, %v4617
        %4624 = vrot.lane.b32.xlu0 %v4620, 64
        %v4625 = vpop.permute.xlu0 %4624
        %4626 = vrot.lane.b32.xlu0 %v4621, 64
        %v4627 = vpop.permute.xlu0 %4626
        %v4630 = vadd.f32 %v4610, %v4625
        %v4631 = vadd.f32 %v4611, %v4627
        %v4632 = vtanh.pop %v4630
        %v4633 = vtanh.pop %v4631
        %4636 = vrot.lane.b32.xlu0 %v4632, 64
        %v4637 = vpop.permute.xlu0 %4636
        %4638 = vrot.lane.b32.xlu0 %v4633, 64
        %v4639 = vpop.permute.xlu0 %4638
        %v4642 = vmul.f32 %v4577, %v4637
        %v4643 = vmul.f32 %v4607, %v4639
        %v4644 = vpack.c.bf16 %v4642, %v4642
        %v4645 = vpack.c.bf16 %v4643, %v4643
        %s4646 = scalar_lea.vmem [#allocation4], 32
        %4647 = vst.msk [vmem:[%s4646] sm:$0xf] %vm571, %v4644
        %4648 = vst.msk [vmem:[%s4646 + $0x4] sm:$0xf] %vm571, %v4645
        %v4649 = vld [vmem:[%s3702] sm:$0xff]
        %v4650 = vld [vmem:[%s3702 + $0x8] sm:$0xff]
        %v4651 = vunpack.c.l.bf16 %v4649
        %v4652 = vunpack.c.h.bf16 %v4649
        %v4653 = vunpack.c.l.bf16 %v4650
        %v4654 = vunpack.c.h.bf16 %v4650
        %v4657 = vunpack.c.l.b16 %v4644
        %v4658 = vunpack.c.l.b16 %v4645
        %v4659 = vpack.c.b16 %v4658, %v4657
        %v4661 = vsel %vm421, %v4659, 0
        %4663 = vmatpush.bf16.msra.mxu0 0
        %4664 = vmatpush.bf16.msra.mxu0 0
        %4665 = vmatpush.bf16.msra.mxu0 0
        %4666 = vmatpush.bf16.msra.mxu0 0
        %4667 = vmatpush.bf16.msra.mxu0 %v3839
        %4668 = vmatpush.bf16.msra.mxu0 %v3837
        %4669 = vmatpush.bf16.msra.mxu0 %v3835
        %4670 = vmatpush.bf16.msra.mxu0 %v3833
        %4671 = vmatmul.bf16.gmra.mxu0 %v4661
        %v4672 = vpop.f32.mrf.mxu0
        %v4673 = vadd.f32 0.0, %v4672
        %v4674 = vpop.f32.mrf.mxu0
        %v4675 = vadd.f32 0.0, %v4674
        %4676 = vdwg.mxu0
        %4677 = vmatpush.bf16.msra.mxu0 0
        %4678 = vmatpush.bf16.msra.mxu0 0
        %4679 = vmatpush.bf16.msra.mxu0 0
        %4680 = vmatpush.bf16.msra.mxu0 0
        %4681 = vmatpush.bf16.msra.mxu0 %v3840
        %4682 = vmatpush.bf16.msra.mxu0 %v3838
        %4683 = vmatpush.bf16.msra.mxu0 %v3836
        %4684 = vmatpush.bf16.msra.mxu0 %v3834
        %4685 = vmatmul.bf16.gmra.mxu0 %v4661
        %v4686 = vpop.f32.mrf.mxu0
        %v4687 = vadd.f32 0.0, %v4686
        %v4688 = vpop.f32.mrf.mxu0
        %v4689 = vadd.f32 0.0, %v4688
        %4690 = vdwg.mxu0
        %v4691 = vadd.f32 %v4651, %v4673
        %v4692 = vadd.f32 %v4652, %v4687
        %v4693 = vadd.f32 %v4653, %v4675
        %v4694 = vadd.f32 %v4654, %v4689
        %v4695 = vxor.u32 %v4691, 2147483648
        %v4696 = vxor.u32 %v4692, 2147483648
        %v4697 = vxor.u32 %v4693, 2147483648
        %v4698 = vxor.u32 %v4694, 2147483648
        %v4699 = vmul.f32 %v4695, 1.442695
        %v4700 = vpow.pop %v4699
        %v4701 = vmul.f32 %v4696, 1.442695
        %v4702 = vpow.pop %v4701
        %v4703 = vmul.f32 %v4697, 1.442695
        %v4704 = vpow.pop %v4703
        %v4705 = vmul.f32 %v4698, 1.442695
        %v4706 = vpow.pop %v4705
        %v4707 = vadd.f32 %v4700, 1.0
        %v4708 = vadd.f32 %v4702, 1.0
        %v4709 = vadd.f32 %v4704, 1.0
        %v4710 = vadd.f32 %v4706, 1.0
        %v4711 = vrcp.pop %v4707
        %v4712 = vmul.f32 %v4707, %v4711
        %v4713 = vsub.f32 1.0, %v4712
        %v4714 = vmul.f32 %v4711, %v4713
        %v4715 = vadd.f32 %v4711, %v4714
        %vm4716 = vweird.f32 %v4707
        %vm4717 = vweird.f32 %v4711
        %vm4718 = vmor %vm4716, %vm4717
        %v4719 = vsel %vm4718, %v4711, %v4715
        %v4720 = vand.u32 2147483647, %v4707
        %vm4721 = vcmp.eq.f32.partialorder %v4720, 8.507059e+37
        %v4722 = vand.u32 %v4707, 2147483648
        %v4723 = vor.u32 1.1754944e-38, %v4722
        %v4724 = vsel %vm4721, %v4723, %v4719
        %v4725 = vmul.f32 1.0, %v4724
        %v4726 = vrcp.pop %v4708
        %v4727 = vmul.f32 %v4708, %v4726
        %v4728 = vsub.f32 1.0, %v4727
        %v4729 = vmul.f32 %v4726, %v4728
        %v4730 = vadd.f32 %v4726, %v4729
        %vm4731 = vweird.f32 %v4708
        %vm4732 = vweird.f32 %v4726
        %vm4733 = vmor %vm4731, %vm4732
        %v4734 = vsel %vm4733, %v4726, %v4730
        %v4735 = vand.u32 2147483647, %v4708
        %vm4736 = vcmp.eq.f32.partialorder %v4735, 8.507059e+37
        %v4737 = vand.u32 %v4708, 2147483648
        %v4738 = vor.u32 1.1754944e-38, %v4737
        %v4739 = vsel %vm4736, %v4738, %v4734
        %v4740 = vmul.f32 1.0, %v4739
        %v4741 = vrcp.pop %v4709
        %v4742 = vmul.f32 %v4709, %v4741
        %v4743 = vsub.f32 1.0, %v4742
        %v4744 = vmul.f32 %v4741, %v4743
        %v4745 = vadd.f32 %v4741, %v4744
        %vm4746 = vweird.f32 %v4709
        %vm4747 = vweird.f32 %v4741
        %vm4748 = vmor %vm4746, %vm4747
        %v4749 = vsel %vm4748, %v4741, %v4745
        %v4750 = vand.u32 2147483647, %v4709
        %vm4751 = vcmp.eq.f32.partialorder %v4750, 8.507059e+37
        %v4752 = vand.u32 %v4709, 2147483648
        %v4753 = vor.u32 1.1754944e-38, %v4752
        %v4754 = vsel %vm4751, %v4753, %v4749
        %v4755 = vmul.f32 1.0, %v4754
        %v4756 = vrcp.pop %v4710
        %v4757 = vmul.f32 %v4710, %v4756
        %v4758 = vsub.f32 1.0, %v4757
        %v4759 = vmul.f32 %v4756, %v4758
        %v4760 = vadd.f32 %v4756, %v4759
        %vm4761 = vweird.f32 %v4710
        %vm4762 = vweird.f32 %v4756
        %vm4763 = vmor %vm4761, %vm4762
        %v4764 = vsel %vm4763, %v4756, %v4760
        %v4765 = vand.u32 2147483647, %v4710
        %vm4766 = vcmp.eq.f32.partialorder %v4765, 8.507059e+37
        %v4767 = vand.u32 %v4710, 2147483648
        %v4768 = vor.u32 1.1754944e-38, %v4767
        %v4769 = vsel %vm4766, %v4768, %v4764
        %v4770 = vmul.f32 1.0, %v4769
        %v4771 = vtanh.pop %v4692
        %v4772 = vtanh.pop %v4694
        %v4773 = vmul.f32 %v4725, %v4630
        %v4774 = vmul.f32 %v4755, %v4631
        %4777 = vrot.lane.b32.xlu0 %v4771, 64
        %v4778 = vpop.permute.xlu0 %4777
        %4779 = vrot.lane.b32.xlu0 %v4772, 64
        %v4780 = vpop.permute.xlu0 %4779
        %v4783 = vmul.f32 %v4725, %v4778
        %v4784 = vmul.f32 %v4755, %v4780
        %4787 = vrot.lane.b32.xlu0 %v4783, 64
        %v4788 = vpop.permute.xlu0 %4787
        %4789 = vrot.lane.b32.xlu0 %v4784, 64
        %v4790 = vpop.permute.xlu0 %4789
        %v4793 = vadd.f32 %v4773, %v4788
        %v4794 = vadd.f32 %v4774, %v4790
        %v4795 = vtanh.pop %v4793
        %v4796 = vtanh.pop %v4794
        %4799 = vrot.lane.b32.xlu0 %v4795, 64
        %v4800 = vpop.permute.xlu0 %4799
        %4801 = vrot.lane.b32.xlu0 %v4796, 64
        %v4802 = vpop.permute.xlu0 %4801
        %v4805 = vmul.f32 %v4740, %v4800
        %v4806 = vmul.f32 %v4770, %v4802
        %v4807 = vpack.c.bf16 %v4805, %v4805
        %v4808 = vpack.c.bf16 %v4806, %v4806
        %s4809 = scalar_lea.vmem [#allocation4], 40
        %4810 = vst.msk [vmem:[%s4809] sm:$0xf] %vm571, %v4807
        %4811 = vst.msk [vmem:[%s4809 + $0x4] sm:$0xf] %vm571, %v4808
        %v4812 = vld [vmem:[%s3711] sm:$0xff]
        %v4813 = vld [vmem:[%s3711 + $0x8] sm:$0xff]
        %v4814 = vunpack.c.l.bf16 %v4812
        %v4815 = vunpack.c.h.bf16 %v4812
        %v4816 = vunpack.c.l.bf16 %v4813
        %v4817 = vunpack.c.h.bf16 %v4813
        %v4820 = vunpack.c.l.b16 %v4807
        %v4821 = vunpack.c.l.b16 %v4808
        %v4822 = vpack.c.b16 %v4821, %v4820
        %v4824 = vsel %vm421, %v4822, 0
        %4826 = vmatpush.bf16.msra.mxu0 0
        %4827 = vmatpush.bf16.msra.mxu0 0
        %4828 = vmatpush.bf16.msra.mxu0 0
        %4829 = vmatpush.bf16.msra.mxu0 0
        %4830 = vmatpush.bf16.msra.mxu0 %v3839
        %4831 = vmatpush.bf16.msra.mxu0 %v3837
        %4832 = vmatpush.bf16.msra.mxu0 %v3835
        %4833 = vmatpush.bf16.msra.mxu0 %v3833
        %4834 = vmatmul.bf16.gmra.mxu0 %v4824
        %v4835 = vpop.f32.mrf.mxu0
        %v4836 = vadd.f32 0.0, %v4835
        %v4837 = vpop.f32.mrf.mxu0
        %v4838 = vadd.f32 0.0, %v4837
        %4839 = vdwg.mxu0
        %4840 = vmatpush.bf16.msra.mxu0 0
        %4841 = vmatpush.bf16.msra.mxu0 0
        %4842 = vmatpush.bf16.msra.mxu0 0
        %4843 = vmatpush.bf16.msra.mxu0 0
        %4844 = vmatpush.bf16.msra.mxu0 %v3840
        %4845 = vmatpush.bf16.msra.mxu0 %v3838
        %4846 = vmatpush.bf16.msra.mxu0 %v3836
        %4847 = vmatpush.bf16.msra.mxu0 %v3834
        %4848 = vmatmul.bf16.gmra.mxu0 %v4824
        %v4849 = vpop.f32.mrf.mxu0
        %v4850 = vadd.f32 0.0, %v4849
        %v4851 = vpop.f32.mrf.mxu0
        %v4852 = vadd.f32 0.0, %v4851
        %4853 = vdwg.mxu0
        %v4854 = vadd.f32 %v4814, %v4836
        %v4855 = vadd.f32 %v4815, %v4850
        %v4856 = vadd.f32 %v4816, %v4838
        %v4857 = vadd.f32 %v4817, %v4852
        %v4858 = vxor.u32 %v4854, 2147483648
        %v4859 = vxor.u32 %v4855, 2147483648
        %v4860 = vxor.u32 %v4856, 2147483648
        %v4861 = vxor.u32 %v4857, 2147483648
        %v4862 = vmul.f32 %v4858, 1.442695
        %v4863 = vpow.pop %v4862
        %v4864 = vmul.f32 %v4859, 1.442695
        %v4865 = vpow.pop %v4864
        %v4866 = vmul.f32 %v4860, 1.442695
        %v4867 = vpow.pop %v4866
        %v4868 = vmul.f32 %v4861, 1.442695
        %v4869 = vpow.pop %v4868
        %v4870 = vadd.f32 %v4863, 1.0
        %v4871 = vadd.f32 %v4865, 1.0
        %v4872 = vadd.f32 %v4867, 1.0
        %v4873 = vadd.f32 %v4869, 1.0
        %v4874 = vrcp.pop %v4870
        %v4875 = vmul.f32 %v4870, %v4874
        %v4876 = vsub.f32 1.0, %v4875
        %v4877 = vmul.f32 %v4874, %v4876
        %v4878 = vadd.f32 %v4874, %v4877
        %vm4879 = vweird.f32 %v4870
        %vm4880 = vweird.f32 %v4874
        %vm4881 = vmor %vm4879, %vm4880
        %v4882 = vsel %vm4881, %v4874, %v4878
        %v4883 = vand.u32 2147483647, %v4870
        %vm4884 = vcmp.eq.f32.partialorder %v4883, 8.507059e+37
        %v4885 = vand.u32 %v4870, 2147483648
        %v4886 = vor.u32 1.1754944e-38, %v4885
        %v4887 = vsel %vm4884, %v4886, %v4882
        %v4888 = vmul.f32 1.0, %v4887
        %v4889 = vrcp.pop %v4871
        %v4890 = vmul.f32 %v4871, %v4889
        %v4891 = vsub.f32 1.0, %v4890
        %v4892 = vmul.f32 %v4889, %v4891
        %v4893 = vadd.f32 %v4889, %v4892
        %vm4894 = vweird.f32 %v4871
        %vm4895 = vweird.f32 %v4889
        %vm4896 = vmor %vm4894, %vm4895
        %v4897 = vsel %vm4896, %v4889, %v4893
        %v4898 = vand.u32 2147483647, %v4871
        %vm4899 = vcmp.eq.f32.partialorder %v4898, 8.507059e+37
        %v4900 = vand.u32 %v4871, 2147483648
        %v4901 = vor.u32 1.1754944e-38, %v4900
        %v4902 = vsel %vm4899, %v4901, %v4897
        %v4903 = vmul.f32 1.0, %v4902
        %v4904 = vrcp.pop %v4872
        %v4905 = vmul.f32 %v4872, %v4904
        %v4906 = vsub.f32 1.0, %v4905
        %v4907 = vmul.f32 %v4904, %v4906
        %v4908 = vadd.f32 %v4904, %v4907
        %vm4909 = vweird.f32 %v4872
        %vm4910 = vweird.f32 %v4904
        %vm4911 = vmor %vm4909, %vm4910
        %v4912 = vsel %vm4911, %v4904, %v4908
        %v4913 = vand.u32 2147483647, %v4872
        %vm4914 = vcmp.eq.f32.partialorder %v4913, 8.507059e+37
        %v4915 = vand.u32 %v4872, 2147483648
        %v4916 = vor.u32 1.1754944e-38, %v4915
        %v4917 = vsel %vm4914, %v4916, %v4912
        %v4918 = vmul.f32 1.0, %v4917
        %v4919 = vrcp.pop %v4873
        %v4920 = vmul.f32 %v4873, %v4919
        %v4921 = vsub.f32 1.0, %v4920
        %v4922 = vmul.f32 %v4919, %v4921
        %v4923 = vadd.f32 %v4919, %v4922
        %vm4924 = vweird.f32 %v4873
        %vm4925 = vweird.f32 %v4919
        %vm4926 = vmor %vm4924, %vm4925
        %v4927 = vsel %vm4926, %v4919, %v4923
        %v4928 = vand.u32 2147483647, %v4873
        %vm4929 = vcmp.eq.f32.partialorder %v4928, 8.507059e+37
        %v4930 = vand.u32 %v4873, 2147483648
        %v4931 = vor.u32 1.1754944e-38, %v4930
        %v4932 = vsel %vm4929, %v4931, %v4927
        %v4933 = vmul.f32 1.0, %v4932
        %v4934 = vtanh.pop %v4855
        %v4935 = vtanh.pop %v4857
        %v4936 = vmul.f32 %v4888, %v4793
        %v4937 = vmul.f32 %v4918, %v4794
        %4940 = vrot.lane.b32.xlu0 %v4934, 64
        %v4941 = vpop.permute.xlu0 %4940
        %4942 = vrot.lane.b32.xlu0 %v4935, 64
        %v4943 = vpop.permute.xlu0 %4942
        %v4946 = vmul.f32 %v4888, %v4941
        %v4947 = vmul.f32 %v4918, %v4943
        %4950 = vrot.lane.b32.xlu0 %v4946, 64
        %v4951 = vpop.permute.xlu0 %4950
        %4952 = vrot.lane.b32.xlu0 %v4947, 64
        %v4953 = vpop.permute.xlu0 %4952
        %v4956 = vadd.f32 %v4936, %v4951
        %v4957 = vadd.f32 %v4937, %v4953
        %v4958 = vtanh.pop %v4956
        %v4959 = vtanh.pop %v4957
        %4962 = vrot.lane.b32.xlu0 %v4958, 64
        %v4963 = vpop.permute.xlu0 %4962
        %4964 = vrot.lane.b32.xlu0 %v4959, 64
        %v4965 = vpop.permute.xlu0 %4964
        %v4968 = vmul.f32 %v4903, %v4963
        %v4969 = vmul.f32 %v4933, %v4965
        %v4970 = vpack.c.bf16 %v4968, %v4968
        %v4971 = vpack.c.bf16 %v4969, %v4969
        %s4972 = scalar_lea.vmem [#allocation4], 48
        %4973 = vst.msk [vmem:[%s4972] sm:$0xf] %vm571, %v4970
        %4974 = vst.msk [vmem:[%s4972 + $0x4] sm:$0xf] %vm571, %v4971
        %v4975 = vld [vmem:[%s3720] sm:$0xff]
        %v4976 = vld [vmem:[%s3720 + $0x8] sm:$0xff]
        %v4977 = vunpack.c.l.bf16 %v4975
        %v4978 = vunpack.c.h.bf16 %v4975
        %v4979 = vunpack.c.l.bf16 %v4976
        %v4980 = vunpack.c.h.bf16 %v4976
        %v4983 = vunpack.c.l.b16 %v4970
        %v4984 = vunpack.c.l.b16 %v4971
        %v4985 = vpack.c.b16 %v4984, %v4983
        %v4987 = vsel %vm421, %v4985, 0
        %4989 = vmatpush.bf16.msra.mxu0 0
        %4990 = vmatpush.bf16.msra.mxu0 0
        %4991 = vmatpush.bf16.msra.mxu0 0
        %4992 = vmatpush.bf16.msra.mxu0 0
        %4993 = vmatpush.bf16.msra.mxu0 %v3839
        %4994 = vmatpush.bf16.msra.mxu0 %v3837
        %4995 = vmatpush.bf16.msra.mxu0 %v3835
        %4996 = vmatpush.bf16.msra.mxu0 %v3833
        %4997 = vmatmul.bf16.gmra.mxu0 %v4987
        %v4998 = vpop.f32.mrf.mxu0
        %v4999 = vadd.f32 0.0, %v4998
        %v5000 = vpop.f32.mrf.mxu0
        %v5001 = vadd.f32 0.0, %v5000
        %5002 = vdwg.mxu0
        %5003 = vmatpush.bf16.msra.mxu0 0
        %5004 = vmatpush.bf16.msra.mxu0 0
        %5005 = vmatpush.bf16.msra.mxu0 0
        %5006 = vmatpush.bf16.msra.mxu0 0
        %5007 = vmatpush.bf16.msra.mxu0 %v3840
        %5008 = vmatpush.bf16.msra.mxu0 %v3838
        %5009 = vmatpush.bf16.msra.mxu0 %v3836
        %5010 = vmatpush.bf16.msra.mxu0 %v3834
        %5011 = vmatmul.bf16.gmra.mxu0 %v4987
        %v5012 = vpop.f32.mrf.mxu0
        %v5013 = vadd.f32 0.0, %v5012
        %v5014 = vpop.f32.mrf.mxu0
        %v5015 = vadd.f32 0.0, %v5014
        %5016 = vdwg.mxu0
        %v5017 = vadd.f32 %v4977, %v4999
        %v5018 = vadd.f32 %v4978, %v5013
        %v5019 = vadd.f32 %v4979, %v5001
        %v5020 = vadd.f32 %v4980, %v5015
        %v5021 = vxor.u32 %v5017, 2147483648
        %v5022 = vxor.u32 %v5018, 2147483648
        %v5023 = vxor.u32 %v5019, 2147483648
        %v5024 = vxor.u32 %v5020, 2147483648
        %v5025 = vmul.f32 %v5021, 1.442695
        %v5026 = vpow.pop %v5025
        %v5027 = vmul.f32 %v5022, 1.442695
        %v5028 = vpow.pop %v5027
        %v5029 = vmul.f32 %v5023, 1.442695
        %v5030 = vpow.pop %v5029
        %v5031 = vmul.f32 %v5024, 1.442695
        %v5032 = vpow.pop %v5031
        %v5033 = vadd.f32 %v5026, 1.0
        %v5034 = vadd.f32 %v5028, 1.0
        %v5035 = vadd.f32 %v5030, 1.0
        %v5036 = vadd.f32 %v5032, 1.0
        %v5037 = vrcp.pop %v5033
        %v5038 = vmul.f32 %v5033, %v5037
        %v5039 = vsub.f32 1.0, %v5038
        %v5040 = vmul.f32 %v5037, %v5039
        %v5041 = vadd.f32 %v5037, %v5040
        %vm5042 = vweird.f32 %v5033
        %vm5043 = vweird.f32 %v5037
        %vm5044 = vmor %vm5042, %vm5043
        %v5045 = vsel %vm5044, %v5037, %v5041
        %v5046 = vand.u32 2147483647, %v5033
        %vm5047 = vcmp.eq.f32.partialorder %v5046, 8.507059e+37
        %v5048 = vand.u32 %v5033, 2147483648
        %v5049 = vor.u32 1.1754944e-38, %v5048
        %v5050 = vsel %vm5047, %v5049, %v5045
        %v5051 = vmul.f32 1.0, %v5050
        %v5052 = vrcp.pop %v5034
        %v5053 = vmul.f32 %v5034, %v5052
        %v5054 = vsub.f32 1.0, %v5053
        %v5055 = vmul.f32 %v5052, %v5054
        %v5056 = vadd.f32 %v5052, %v5055
        %vm5057 = vweird.f32 %v5034
        %vm5058 = vweird.f32 %v5052
        %vm5059 = vmor %vm5057, %vm5058
        %v5060 = vsel %vm5059, %v5052, %v5056
        %v5061 = vand.u32 2147483647, %v5034
        %vm5062 = vcmp.eq.f32.partialorder %v5061, 8.507059e+37
        %v5063 = vand.u32 %v5034, 2147483648
        %v5064 = vor.u32 1.1754944e-38, %v5063
        %v5065 = vsel %vm5062, %v5064, %v5060
        %v5066 = vmul.f32 1.0, %v5065
        %v5067 = vrcp.pop %v5035
        %v5068 = vmul.f32 %v5035, %v5067
        %v5069 = vsub.f32 1.0, %v5068
        %v5070 = vmul.f32 %v5067, %v5069
        %v5071 = vadd.f32 %v5067, %v5070
        %vm5072 = vweird.f32 %v5035
        %vm5073 = vweird.f32 %v5067
        %vm5074 = vmor %vm5072, %vm5073
        %v5075 = vsel %vm5074, %v5067, %v5071
        %v5076 = vand.u32 2147483647, %v5035
        %vm5077 = vcmp.eq.f32.partialorder %v5076, 8.507059e+37
        %v5078 = vand.u32 %v5035, 2147483648
        %v5079 = vor.u32 1.1754944e-38, %v5078
        %v5080 = vsel %vm5077, %v5079, %v5075
        %v5081 = vmul.f32 1.0, %v5080
        %v5082 = vrcp.pop %v5036
        %v5083 = vmul.f32 %v5036, %v5082
        %v5084 = vsub.f32 1.0, %v5083
        %v5085 = vmul.f32 %v5082, %v5084
        %v5086 = vadd.f32 %v5082, %v5085
        %vm5087 = vweird.f32 %v5036
        %vm5088 = vweird.f32 %v5082
        %vm5089 = vmor %vm5087, %vm5088
        %v5090 = vsel %vm5089, %v5082, %v5086
        %v5091 = vand.u32 2147483647, %v5036
        %vm5092 = vcmp.eq.f32.partialorder %v5091, 8.507059e+37
        %v5093 = vand.u32 %v5036, 2147483648
        %v5094 = vor.u32 1.1754944e-38, %v5093
        %v5095 = vsel %vm5092, %v5094, %v5090
        %v5096 = vmul.f32 1.0, %v5095
        %v5097 = vtanh.pop %v5018
        %v5098 = vtanh.pop %v5020
        %v5099 = vmul.f32 %v5051, %v4956
        %v5100 = vmul.f32 %v5081, %v4957
        %5103 = vrot.lane.b32.xlu0 %v5097, 64
        %v5104 = vpop.permute.xlu0 %5103
        %5105 = vrot.lane.b32.xlu0 %v5098, 64
        %v5106 = vpop.permute.xlu0 %5105
        %v5109 = vmul.f32 %v5051, %v5104
        %v5110 = vmul.f32 %v5081, %v5106
        %5113 = vrot.lane.b32.xlu0 %v5109, 64
        %v5114 = vpop.permute.xlu0 %5113
        %5115 = vrot.lane.b32.xlu0 %v5110, 64
        %v5116 = vpop.permute.xlu0 %5115
        %v5119 = vadd.f32 %v5099, %v5114
        %v5120 = vadd.f32 %v5100, %v5116
        %v5121 = vtanh.pop %v5119
        %v5122 = vtanh.pop %v5120
        %5125 = vrot.lane.b32.xlu0 %v5121, 64
        %v5126 = vpop.permute.xlu0 %5125
        %5127 = vrot.lane.b32.xlu0 %v5122, 64
        %v5128 = vpop.permute.xlu0 %5127
        %v5131 = vmul.f32 %v5066, %v5126
        %v5132 = vmul.f32 %v5096, %v5128
        %v5133 = vpack.c.bf16 %v5131, %v5131
        %v5134 = vpack.c.bf16 %v5132, %v5132
        %s5135 = scalar_lea.vmem [#allocation4], 56
        %5136 = vst.msk [vmem:[%s5135] sm:$0xf] %vm571, %v5133
        %5137 = vst.msk [vmem:[%s5135 + $0x4] sm:$0xf] %vm571, %v5134
        %v5138 = vld [vmem:[%s3729] sm:$0xff]
        %v5139 = vld [vmem:[%s3729 + $0x8] sm:$0xff]
        %v5140 = vunpack.c.l.bf16 %v5138
        %v5141 = vunpack.c.h.bf16 %v5138
        %v5142 = vunpack.c.l.bf16 %v5139
        %v5143 = vunpack.c.h.bf16 %v5139
        %v5146 = vunpack.c.l.b16 %v5133
        %v5147 = vunpack.c.l.b16 %v5134
        %v5148 = vpack.c.b16 %v5147, %v5146
        %v5150 = vsel %vm421, %v5148, 0
        %5152 = vmatpush.bf16.msra.mxu0 0
        %5153 = vmatpush.bf16.msra.mxu0 0
        %5154 = vmatpush.bf16.msra.mxu0 0
        %5155 = vmatpush.bf16.msra.mxu0 0
        %5156 = vmatpush.bf16.msra.mxu0 %v3839
        %5157 = vmatpush.bf16.msra.mxu0 %v3837
        %5158 = vmatpush.bf16.msra.mxu0 %v3835
        %5159 = vmatpush.bf16.msra.mxu0 %v3833
        %5160 = vmatmul.bf16.gmra.mxu0 %v5150
        %v5161 = vpop.f32.mrf.mxu0
        %v5162 = vadd.f32 0.0, %v5161
        %v5163 = vpop.f32.mrf.mxu0
        %v5164 = vadd.f32 0.0, %v5163
        %5165 = vdwg.mxu0
        %5166 = vmatpush.bf16.msra.mxu0 0
        %5167 = vmatpush.bf16.msra.mxu0 0
        %5168 = vmatpush.bf16.msra.mxu0 0
        %5169 = vmatpush.bf16.msra.mxu0 0
        %5170 = vmatpush.bf16.msra.mxu0 %v3840
        %5171 = vmatpush.bf16.msra.mxu0 %v3838
        %5172 = vmatpush.bf16.msra.mxu0 %v3836
        %5173 = vmatpush.bf16.msra.mxu0 %v3834
        %5174 = vmatmul.bf16.gmra.mxu0 %v5150
        %v5175 = vpop.f32.mrf.mxu0
        %v5176 = vadd.f32 0.0, %v5175
        %v5177 = vpop.f32.mrf.mxu0
        %v5178 = vadd.f32 0.0, %v5177
        %5179 = vdwg.mxu0
        %v5180 = vadd.f32 %v5140, %v5162
        %v5181 = vadd.f32 %v5141, %v5176
        %v5182 = vadd.f32 %v5142, %v5164
        %v5183 = vadd.f32 %v5143, %v5178
        %v5184 = vxor.u32 %v5180, 2147483648
        %v5185 = vxor.u32 %v5181, 2147483648
        %v5186 = vxor.u32 %v5182, 2147483648
        %v5187 = vxor.u32 %v5183, 2147483648
        %v5188 = vmul.f32 %v5184, 1.442695
        %v5189 = vpow.pop %v5188
        %v5190 = vmul.f32 %v5185, 1.442695
        %v5191 = vpow.pop %v5190
        %v5192 = vmul.f32 %v5186, 1.442695
        %v5193 = vpow.pop %v5192
        %v5194 = vmul.f32 %v5187, 1.442695
        %v5195 = vpow.pop %v5194
        %v5196 = vadd.f32 %v5189, 1.0
        %v5197 = vadd.f32 %v5191, 1.0
        %v5198 = vadd.f32 %v5193, 1.0
        %v5199 = vadd.f32 %v5195, 1.0
        %v5200 = vrcp.pop %v5196
        %v5201 = vmul.f32 %v5196, %v5200
        %v5202 = vsub.f32 1.0, %v5201
        %v5203 = vmul.f32 %v5200, %v5202
        %v5204 = vadd.f32 %v5200, %v5203
        %vm5205 = vweird.f32 %v5196
        %vm5206 = vweird.f32 %v5200
        %vm5207 = vmor %vm5205, %vm5206
        %v5208 = vsel %vm5207, %v5200, %v5204
        %v5209 = vand.u32 2147483647, %v5196
        %vm5210 = vcmp.eq.f32.partialorder %v5209, 8.507059e+37
        %v5211 = vand.u32 %v5196, 2147483648
        %v5212 = vor.u32 1.1754944e-38, %v5211
        %v5213 = vsel %vm5210, %v5212, %v5208
        %v5214 = vmul.f32 1.0, %v5213
        %v5215 = vrcp.pop %v5197
        %v5216 = vmul.f32 %v5197, %v5215
        %v5217 = vsub.f32 1.0, %v5216
        %v5218 = vmul.f32 %v5215, %v5217
        %v5219 = vadd.f32 %v5215, %v5218
        %vm5220 = vweird.f32 %v5197
        %vm5221 = vweird.f32 %v5215
        %vm5222 = vmor %vm5220, %vm5221
        %v5223 = vsel %vm5222, %v5215, %v5219
        %v5224 = vand.u32 2147483647, %v5197
        %vm5225 = vcmp.eq.f32.partialorder %v5224, 8.507059e+37
        %v5226 = vand.u32 %v5197, 2147483648
        %v5227 = vor.u32 1.1754944e-38, %v5226
        %v5228 = vsel %vm5225, %v5227, %v5223
        %v5229 = vmul.f32 1.0, %v5228
        %v5230 = vrcp.pop %v5198
        %v5231 = vmul.f32 %v5198, %v5230
        %v5232 = vsub.f32 1.0, %v5231
        %v5233 = vmul.f32 %v5230, %v5232
        %v5234 = vadd.f32 %v5230, %v5233
        %vm5235 = vweird.f32 %v5198
        %vm5236 = vweird.f32 %v5230
        %vm5237 = vmor %vm5235, %vm5236
        %v5238 = vsel %vm5237, %v5230, %v5234
        %v5239 = vand.u32 2147483647, %v5198
        %vm5240 = vcmp.eq.f32.partialorder %v5239, 8.507059e+37
        %v5241 = vand.u32 %v5198, 2147483648
        %v5242 = vor.u32 1.1754944e-38, %v5241
        %v5243 = vsel %vm5240, %v5242, %v5238
        %v5244 = vmul.f32 1.0, %v5243
        %v5245 = vrcp.pop %v5199
        %v5246 = vmul.f32 %v5199, %v5245
        %v5247 = vsub.f32 1.0, %v5246
        %v5248 = vmul.f32 %v5245, %v5247
        %v5249 = vadd.f32 %v5245, %v5248
        %vm5250 = vweird.f32 %v5199
        %vm5251 = vweird.f32 %v5245
        %vm5252 = vmor %vm5250, %vm5251
        %v5253 = vsel %vm5252, %v5245, %v5249
        %v5254 = vand.u32 2147483647, %v5199
        %vm5255 = vcmp.eq.f32.partialorder %v5254, 8.507059e+37
        %v5256 = vand.u32 %v5199, 2147483648
        %v5257 = vor.u32 1.1754944e-38, %v5256
        %v5258 = vsel %vm5255, %v5257, %v5253
        %v5259 = vmul.f32 1.0, %v5258
        %v5260 = vtanh.pop %v5181
        %v5261 = vtanh.pop %v5183
        %v5262 = vmul.f32 %v5214, %v5119
        %v5263 = vmul.f32 %v5244, %v5120
        %5266 = vrot.lane.b32.xlu0 %v5260, 64
        %v5267 = vpop.permute.xlu0 %5266
        %5268 = vrot.lane.b32.xlu0 %v5261, 64
        %v5269 = vpop.permute.xlu0 %5268
        %v5272 = vmul.f32 %v5214, %v5267
        %v5273 = vmul.f32 %v5244, %v5269
        %5276 = vrot.lane.b32.xlu0 %v5272, 64
        %v5277 = vpop.permute.xlu0 %5276
        %5278 = vrot.lane.b32.xlu0 %v5273, 64
        %v5279 = vpop.permute.xlu0 %5278
        %v5282 = vadd.f32 %v5262, %v5277
        %v5283 = vadd.f32 %v5263, %v5279
        %v5284 = vtanh.pop %v5282
        %v5285 = vtanh.pop %v5283
        %5288 = vrot.lane.b32.xlu0 %v5284, 64
        %v5289 = vpop.permute.xlu0 %5288
        %5290 = vrot.lane.b32.xlu0 %v5285, 64
        %v5291 = vpop.permute.xlu0 %5290
        %v5294 = vmul.f32 %v5229, %v5289
        %v5295 = vmul.f32 %v5259, %v5291
        %v5296 = vpack.c.bf16 %v5294, %v5294
        %v5297 = vpack.c.bf16 %v5295, %v5295
        %s5298 = scalar_lea.vmem [#allocation4], 64
        %5299 = vst.msk [vmem:[%s5298] sm:$0xf] %vm571, %v5296
        %5300 = vst.msk [vmem:[%s5298 + $0x4] sm:$0xf] %vm571, %v5297
        %v5301 = vld [vmem:[%s3738] sm:$0xff]
        %v5302 = vld [vmem:[%s3738 + $0x8] sm:$0xff]
        %v5303 = vunpack.c.l.bf16 %v5301
        %v5304 = vunpack.c.h.bf16 %v5301
        %v5305 = vunpack.c.l.bf16 %v5302
        %v5306 = vunpack.c.h.bf16 %v5302
        %v5309 = vunpack.c.l.b16 %v5296
        %v5310 = vunpack.c.l.b16 %v5297
        %v5311 = vpack.c.b16 %v5310, %v5309
        %v5313 = vsel %vm421, %v5311, 0
        %5315 = vmatpush.bf16.msra.mxu0 0
        %5316 = vmatpush.bf16.msra.mxu0 0
        %5317 = vmatpush.bf16.msra.mxu0 0
        %5318 = vmatpush.bf16.msra.mxu0 0
        %5319 = vmatpush.bf16.msra.mxu0 %v3839
        %5320 = vmatpush.bf16.msra.mxu0 %v3837
        %5321 = vmatpush.bf16.msra.mxu0 %v3835
        %5322 = vmatpush.bf16.msra.mxu0 %v3833
        %5323 = vmatmul.bf16.gmra.mxu0 %v5313
        %v5324 = vpop.f32.mrf.mxu0
        %v5325 = vadd.f32 0.0, %v5324
        %v5326 = vpop.f32.mrf.mxu0
        %v5327 = vadd.f32 0.0, %v5326
        %5328 = vdwg.mxu0
        %5329 = vmatpush.bf16.msra.mxu0 0
        %5330 = vmatpush.bf16.msra.mxu0 0
        %5331 = vmatpush.bf16.msra.mxu0 0
        %5332 = vmatpush.bf16.msra.mxu0 0
        %5333 = vmatpush.bf16.msra.mxu0 %v3840
        %5334 = vmatpush.bf16.msra.mxu0 %v3838
        %5335 = vmatpush.bf16.msra.mxu0 %v3836
        %5336 = vmatpush.bf16.msra.mxu0 %v3834
        %5337 = vmatmul.bf16.gmra.mxu0 %v5313
        %v5338 = vpop.f32.mrf.mxu0
        %v5339 = vadd.f32 0.0, %v5338
        %v5340 = vpop.f32.mrf.mxu0
        %v5341 = vadd.f32 0.0, %v5340
        %5342 = vdwg.mxu0
        %v5343 = vadd.f32 %v5303, %v5325
        %v5344 = vadd.f32 %v5304, %v5339
        %v5345 = vadd.f32 %v5305, %v5327
        %v5346 = vadd.f32 %v5306, %v5341
        %v5347 = vxor.u32 %v5343, 2147483648
        %v5348 = vxor.u32 %v5344, 2147483648
        %v5349 = vxor.u32 %v5345, 2147483648
        %v5350 = vxor.u32 %v5346, 2147483648
        %v5351 = vmul.f32 %v5347, 1.442695
        %v5352 = vpow.pop %v5351
        %v5353 = vmul.f32 %v5348, 1.442695
        %v5354 = vpow.pop %v5353
        %v5355 = vmul.f32 %v5349, 1.442695
        %v5356 = vpow.pop %v5355
        %v5357 = vmul.f32 %v5350, 1.442695
        %v5358 = vpow.pop %v5357
        %v5359 = vadd.f32 %v5352, 1.0
        %v5360 = vadd.f32 %v5354, 1.0
        %v5361 = vadd.f32 %v5356, 1.0
        %v5362 = vadd.f32 %v5358, 1.0
        %v5363 = vrcp.pop %v5359
        %v5364 = vmul.f32 %v5359, %v5363
        %v5365 = vsub.f32 1.0, %v5364
        %v5366 = vmul.f32 %v5363, %v5365
        %v5367 = vadd.f32 %v5363, %v5366
        %vm5368 = vweird.f32 %v5359
        %vm5369 = vweird.f32 %v5363
        %vm5370 = vmor %vm5368, %vm5369
        %v5371 = vsel %vm5370, %v5363, %v5367
        %v5372 = vand.u32 2147483647, %v5359
        %vm5373 = vcmp.eq.f32.partialorder %v5372, 8.507059e+37
        %v5374 = vand.u32 %v5359, 2147483648
        %v5375 = vor.u32 1.1754944e-38, %v5374
        %v5376 = vsel %vm5373, %v5375, %v5371
        %v5377 = vmul.f32 1.0, %v5376
        %v5378 = vrcp.pop %v5360
        %v5379 = vmul.f32 %v5360, %v5378
        %v5380 = vsub.f32 1.0, %v5379
        %v5381 = vmul.f32 %v5378, %v5380
        %v5382 = vadd.f32 %v5378, %v5381
        %vm5383 = vweird.f32 %v5360
        %vm5384 = vweird.f32 %v5378
        %vm5385 = vmor %vm5383, %vm5384
        %v5386 = vsel %vm5385, %v5378, %v5382
        %v5387 = vand.u32 2147483647, %v5360
        %vm5388 = vcmp.eq.f32.partialorder %v5387, 8.507059e+37
        %v5389 = vand.u32 %v5360, 2147483648
        %v5390 = vor.u32 1.1754944e-38, %v5389
        %v5391 = vsel %vm5388, %v5390, %v5386
        %v5392 = vmul.f32 1.0, %v5391
        %v5393 = vrcp.pop %v5361
        %v5394 = vmul.f32 %v5361, %v5393
        %v5395 = vsub.f32 1.0, %v5394
        %v5396 = vmul.f32 %v5393, %v5395
        %v5397 = vadd.f32 %v5393, %v5396
        %vm5398 = vweird.f32 %v5361
        %vm5399 = vweird.f32 %v5393
        %vm5400 = vmor %vm5398, %vm5399
        %v5401 = vsel %vm5400, %v5393, %v5397
        %v5402 = vand.u32 2147483647, %v5361
        %vm5403 = vcmp.eq.f32.partialorder %v5402, 8.507059e+37
        %v5404 = vand.u32 %v5361, 2147483648
        %v5405 = vor.u32 1.1754944e-38, %v5404
        %v5406 = vsel %vm5403, %v5405, %v5401
        %v5407 = vmul.f32 1.0, %v5406
        %v5408 = vrcp.pop %v5362
        %v5409 = vmul.f32 %v5362, %v5408
        %v5410 = vsub.f32 1.0, %v5409
        %v5411 = vmul.f32 %v5408, %v5410
        %v5412 = vadd.f32 %v5408, %v5411
        %vm5413 = vweird.f32 %v5362
        %vm5414 = vweird.f32 %v5408
        %vm5415 = vmor %vm5413, %vm5414
        %v5416 = vsel %vm5415, %v5408, %v5412
        %v5417 = vand.u32 2147483647, %v5362
        %vm5418 = vcmp.eq.f32.partialorder %v5417, 8.507059e+37
        %v5419 = vand.u32 %v5362, 2147483648
        %v5420 = vor.u32 1.1754944e-38, %v5419
        %v5421 = vsel %vm5418, %v5420, %v5416
        %v5422 = vmul.f32 1.0, %v5421
        %v5423 = vtanh.pop %v5344
        %v5424 = vtanh.pop %v5346
        %v5425 = vmul.f32 %v5377, %v5282
        %v5426 = vmul.f32 %v5407, %v5283
        %5429 = vrot.lane.b32.xlu0 %v5423, 64
        %v5430 = vpop.permute.xlu0 %5429
        %5431 = vrot.lane.b32.xlu0 %v5424, 64
        %v5432 = vpop.permute.xlu0 %5431
        %v5435 = vmul.f32 %v5377, %v5430
        %v5436 = vmul.f32 %v5407, %v5432
        %5439 = vrot.lane.b32.xlu0 %v5435, 64
        %v5440 = vpop.permute.xlu0 %5439
        %5441 = vrot.lane.b32.xlu0 %v5436, 64
        %v5442 = vpop.permute.xlu0 %5441
        %v5445 = vadd.f32 %v5425, %v5440
        %v5446 = vadd.f32 %v5426, %v5442
        %v5447 = vtanh.pop %v5445
        %v5448 = vtanh.pop %v5446
        %5451 = vrot.lane.b32.xlu0 %v5447, 64
        %v5452 = vpop.permute.xlu0 %5451
        %5453 = vrot.lane.b32.xlu0 %v5448, 64
        %v5454 = vpop.permute.xlu0 %5453
        %v5457 = vmul.f32 %v5392, %v5452
        %v5458 = vmul.f32 %v5422, %v5454
        %v5459 = vpack.c.bf16 %v5457, %v5457
        %v5460 = vpack.c.bf16 %v5458, %v5458
        %s5461 = scalar_lea.vmem [#allocation4], 72
        %5462 = vst.msk [vmem:[%s5461] sm:$0xf] %vm571, %v5459
        %5463 = vst.msk [vmem:[%s5461 + $0x4] sm:$0xf] %vm571, %v5460
        %v5464 = vld [vmem:[%s3747] sm:$0xff]
        %v5465 = vld [vmem:[%s3747 + $0x8] sm:$0xff]
        %v5466 = vunpack.c.l.bf16 %v5464
        %v5467 = vunpack.c.h.bf16 %v5464
        %v5468 = vunpack.c.l.bf16 %v5465
        %v5469 = vunpack.c.h.bf16 %v5465
        %v5472 = vunpack.c.l.b16 %v5459
        %v5473 = vunpack.c.l.b16 %v5460
        %v5474 = vpack.c.b16 %v5473, %v5472
        %v5476 = vsel %vm421, %v5474, 0
        %5478 = vmatpush.bf16.msra.mxu0 0
        %5479 = vmatpush.bf16.msra.mxu0 0
        %5480 = vmatpush.bf16.msra.mxu0 0
        %5481 = vmatpush.bf16.msra.mxu0 0
        %5482 = vmatpush.bf16.msra.mxu0 %v3839
        %5483 = vmatpush.bf16.msra.mxu0 %v3837
        %5484 = vmatpush.bf16.msra.mxu0 %v3835
        %5485 = vmatpush.bf16.msra.mxu0 %v3833
        %5486 = vmatmul.bf16.gmra.mxu0 %v5476
        %v5487 = vpop.f32.mrf.mxu0
        %v5488 = vadd.f32 0.0, %v5487
        %v5489 = vpop.f32.mrf.mxu0
        %v5490 = vadd.f32 0.0, %v5489
        %5491 = vdwg.mxu0
        %5492 = vmatpush.bf16.msra.mxu0 0
        %5493 = vmatpush.bf16.msra.mxu0 0
        %5494 = vmatpush.bf16.msra.mxu0 0
        %5495 = vmatpush.bf16.msra.mxu0 0
        %5496 = vmatpush.bf16.msra.mxu0 %v3840
        %5497 = vmatpush.bf16.msra.mxu0 %v3838
        %5498 = vmatpush.bf16.msra.mxu0 %v3836
        %5499 = vmatpush.bf16.msra.mxu0 %v3834
        %5500 = vmatmul.bf16.gmra.mxu0 %v5476
        %v5501 = vpop.f32.mrf.mxu0
        %v5502 = vadd.f32 0.0, %v5501
        %v5503 = vpop.f32.mrf.mxu0
        %v5504 = vadd.f32 0.0, %v5503
        %5505 = vdwg.mxu0
        %v5506 = vadd.f32 %v5466, %v5488
        %v5507 = vadd.f32 %v5467, %v5502
        %v5508 = vadd.f32 %v5468, %v5490
        %v5509 = vadd.f32 %v5469, %v5504
        %v5510 = vxor.u32 %v5506, 2147483648
        %v5511 = vxor.u32 %v5507, 2147483648
        %v5512 = vxor.u32 %v5508, 2147483648
        %v5513 = vxor.u32 %v5509, 2147483648
        %v5514 = vmul.f32 %v5510, 1.442695
        %v5515 = vpow.pop %v5514
        %v5516 = vmul.f32 %v5511, 1.442695
        %v5517 = vpow.pop %v5516
        %v5518 = vmul.f32 %v5512, 1.442695
        %v5519 = vpow.pop %v5518
        %v5520 = vmul.f32 %v5513, 1.442695
        %v5521 = vpow.pop %v5520
        %v5522 = vadd.f32 %v5515, 1.0
        %v5523 = vadd.f32 %v5517, 1.0
        %v5524 = vadd.f32 %v5519, 1.0
        %v5525 = vadd.f32 %v5521, 1.0
        %v5526 = vrcp.pop %v5522
        %v5527 = vmul.f32 %v5522, %v5526
        %v5528 = vsub.f32 1.0, %v5527
        %v5529 = vmul.f32 %v5526, %v5528
        %v5530 = vadd.f32 %v5526, %v5529
        %vm5531 = vweird.f32 %v5522
        %vm5532 = vweird.f32 %v5526
        %vm5533 = vmor %vm5531, %vm5532
        %v5534 = vsel %vm5533, %v5526, %v5530
        %v5535 = vand.u32 2147483647, %v5522
        %vm5536 = vcmp.eq.f32.partialorder %v5535, 8.507059e+37
        %v5537 = vand.u32 %v5522, 2147483648
        %v5538 = vor.u32 1.1754944e-38, %v5537
        %v5539 = vsel %vm5536, %v5538, %v5534
        %v5540 = vmul.f32 1.0, %v5539
        %v5541 = vrcp.pop %v5523
        %v5542 = vmul.f32 %v5523, %v5541
        %v5543 = vsub.f32 1.0, %v5542
        %v5544 = vmul.f32 %v5541, %v5543
        %v5545 = vadd.f32 %v5541, %v5544
        %vm5546 = vweird.f32 %v5523
        %vm5547 = vweird.f32 %v5541
        %vm5548 = vmor %vm5546, %vm5547
        %v5549 = vsel %vm5548, %v5541, %v5545
        %v5550 = vand.u32 2147483647, %v5523
        %vm5551 = vcmp.eq.f32.partialorder %v5550, 8.507059e+37
        %v5552 = vand.u32 %v5523, 2147483648
        %v5553 = vor.u32 1.1754944e-38, %v5552
        %v5554 = vsel %vm5551, %v5553, %v5549
        %v5555 = vmul.f32 1.0, %v5554
        %v5556 = vrcp.pop %v5524
        %v5557 = vmul.f32 %v5524, %v5556
        %v5558 = vsub.f32 1.0, %v5557
        %v5559 = vmul.f32 %v5556, %v5558
        %v5560 = vadd.f32 %v5556, %v5559
        %vm5561 = vweird.f32 %v5524
        %vm5562 = vweird.f32 %v5556
        %vm5563 = vmor %vm5561, %vm5562
        %v5564 = vsel %vm5563, %v5556, %v5560
        %v5565 = vand.u32 2147483647, %v5524
        %vm5566 = vcmp.eq.f32.partialorder %v5565, 8.507059e+37
        %v5567 = vand.u32 %v5524, 2147483648
        %v5568 = vor.u32 1.1754944e-38, %v5567
        %v5569 = vsel %vm5566, %v5568, %v5564
        %v5570 = vmul.f32 1.0, %v5569
        %v5571 = vrcp.pop %v5525
        %v5572 = vmul.f32 %v5525, %v5571
        %v5573 = vsub.f32 1.0, %v5572
        %v5574 = vmul.f32 %v5571, %v5573
        %v5575 = vadd.f32 %v5571, %v5574
        %vm5576 = vweird.f32 %v5525
        %vm5577 = vweird.f32 %v5571
        %vm5578 = vmor %vm5576, %vm5577
        %v5579 = vsel %vm5578, %v5571, %v5575
        %v5580 = vand.u32 2147483647, %v5525
        %vm5581 = vcmp.eq.f32.partialorder %v5580, 8.507059e+37
        %v5582 = vand.u32 %v5525, 2147483648
        %v5583 = vor.u32 1.1754944e-38, %v5582
        %v5584 = vsel %vm5581, %v5583, %v5579
        %v5585 = vmul.f32 1.0, %v5584
        %v5586 = vtanh.pop %v5507
        %v5587 = vtanh.pop %v5509
        %v5588 = vmul.f32 %v5540, %v5445
        %v5589 = vmul.f32 %v5570, %v5446
        %5592 = vrot.lane.b32.xlu0 %v5586, 64
        %v5593 = vpop.permute.xlu0 %5592
        %5594 = vrot.lane.b32.xlu0 %v5587, 64
        %v5595 = vpop.permute.xlu0 %5594
        %v5598 = vmul.f32 %v5540, %v5593
        %v5599 = vmul.f32 %v5570, %v5595
        %5602 = vrot.lane.b32.xlu0 %v5598, 64
        %v5603 = vpop.permute.xlu0 %5602
        %5604 = vrot.lane.b32.xlu0 %v5599, 64
        %v5605 = vpop.permute.xlu0 %5604
        %v5608 = vadd.f32 %v5588, %v5603
        %v5609 = vadd.f32 %v5589, %v5605
        %v5610 = vtanh.pop %v5608
        %v5611 = vtanh.pop %v5609
        %5614 = vrot.lane.b32.xlu0 %v5610, 64
        %v5615 = vpop.permute.xlu0 %5614
        %5616 = vrot.lane.b32.xlu0 %v5611, 64
        %v5617 = vpop.permute.xlu0 %5616
        %v5620 = vmul.f32 %v5555, %v5615
        %v5621 = vmul.f32 %v5585, %v5617
        %v5622 = vpack.c.bf16 %v5620, %v5620
        %v5623 = vpack.c.bf16 %v5621, %v5621
        %s5624 = scalar_lea.vmem [#allocation4], 80
        %5625 = vst.msk [vmem:[%s5624] sm:$0xf] %vm571, %v5622
        %5626 = vst.msk [vmem:[%s5624 + $0x4] sm:$0xf] %vm571, %v5623
        %v5627 = vld [vmem:[%s3756] sm:$0xff]
        %v5628 = vld [vmem:[%s3756 + $0x8] sm:$0xff]
        %v5629 = vunpack.c.l.bf16 %v5627
        %v5630 = vunpack.c.h.bf16 %v5627
        %v5631 = vunpack.c.l.bf16 %v5628
        %v5632 = vunpack.c.h.bf16 %v5628
        %v5635 = vunpack.c.l.b16 %v5622
        %v5636 = vunpack.c.l.b16 %v5623
        %v5637 = vpack.c.b16 %v5636, %v5635
        %v5639 = vsel %vm421, %v5637, 0
        %5641 = vmatpush.bf16.msra.mxu0 0
        %5642 = vmatpush.bf16.msra.mxu0 0
        %5643 = vmatpush.bf16.msra.mxu0 0
        %5644 = vmatpush.bf16.msra.mxu0 0
        %5645 = vmatpush.bf16.msra.mxu0 %v3839
        %5646 = vmatpush.bf16.msra.mxu0 %v3837
        %5647 = vmatpush.bf16.msra.mxu0 %v3835
        %5648 = vmatpush.bf16.msra.mxu0 %v3833
        %5649 = vmatmul.bf16.gmra.mxu0 %v5639
        %v5650 = vpop.f32.mrf.mxu0
        %v5651 = vadd.f32 0.0, %v5650
        %v5652 = vpop.f32.mrf.mxu0
        %v5653 = vadd.f32 0.0, %v5652
        %5654 = vdwg.mxu0
        %5655 = vmatpush.bf16.msra.mxu0 0
        %5656 = vmatpush.bf16.msra.mxu0 0
        %5657 = vmatpush.bf16.msra.mxu0 0
        %5658 = vmatpush.bf16.msra.mxu0 0
        %5659 = vmatpush.bf16.msra.mxu0 %v3840
        %5660 = vmatpush.bf16.msra.mxu0 %v3838
        %5661 = vmatpush.bf16.msra.mxu0 %v3836
        %5662 = vmatpush.bf16.msra.mxu0 %v3834
        %5663 = vmatmul.bf16.gmra.mxu0 %v5639
        %v5664 = vpop.f32.mrf.mxu0
        %v5665 = vadd.f32 0.0, %v5664
        %v5666 = vpop.f32.mrf.mxu0
        %v5667 = vadd.f32 0.0, %v5666
        %5668 = vdwg.mxu0
        %v5669 = vadd.f32 %v5629, %v5651
        %v5670 = vadd.f32 %v5630, %v5665
        %v5671 = vadd.f32 %v5631, %v5653
        %v5672 = vadd.f32 %v5632, %v5667
        %v5673 = vxor.u32 %v5669, 2147483648
        %v5674 = vxor.u32 %v5670, 2147483648
        %v5675 = vxor.u32 %v5671, 2147483648
        %v5676 = vxor.u32 %v5672, 2147483648
        %v5677 = vmul.f32 %v5673, 1.442695
        %v5678 = vpow.pop %v5677
        %v5679 = vmul.f32 %v5674, 1.442695
        %v5680 = vpow.pop %v5679
        %v5681 = vmul.f32 %v5675, 1.442695
        %v5682 = vpow.pop %v5681
        %v5683 = vmul.f32 %v5676, 1.442695
        %v5684 = vpow.pop %v5683
        %v5685 = vadd.f32 %v5678, 1.0
        %v5686 = vadd.f32 %v5680, 1.0
        %v5687 = vadd.f32 %v5682, 1.0
        %v5688 = vadd.f32 %v5684, 1.0
        %v5689 = vrcp.pop %v5685
        %v5690 = vmul.f32 %v5685, %v5689
        %v5691 = vsub.f32 1.0, %v5690
        %v5692 = vmul.f32 %v5689, %v5691
        %v5693 = vadd.f32 %v5689, %v5692
        %vm5694 = vweird.f32 %v5685
        %vm5695 = vweird.f32 %v5689
        %vm5696 = vmor %vm5694, %vm5695
        %v5697 = vsel %vm5696, %v5689, %v5693
        %v5698 = vand.u32 2147483647, %v5685
        %vm5699 = vcmp.eq.f32.partialorder %v5698, 8.507059e+37
        %v5700 = vand.u32 %v5685, 2147483648
        %v5701 = vor.u32 1.1754944e-38, %v5700
        %v5702 = vsel %vm5699, %v5701, %v5697
        %v5703 = vmul.f32 1.0, %v5702
        %v5704 = vrcp.pop %v5686
        %v5705 = vmul.f32 %v5686, %v5704
        %v5706 = vsub.f32 1.0, %v5705
        %v5707 = vmul.f32 %v5704, %v5706
        %v5708 = vadd.f32 %v5704, %v5707
        %vm5709 = vweird.f32 %v5686
        %vm5710 = vweird.f32 %v5704
        %vm5711 = vmor %vm5709, %vm5710
        %v5712 = vsel %vm5711, %v5704, %v5708
        %v5713 = vand.u32 2147483647, %v5686
        %vm5714 = vcmp.eq.f32.partialorder %v5713, 8.507059e+37
        %v5715 = vand.u32 %v5686, 2147483648
        %v5716 = vor.u32 1.1754944e-38, %v5715
        %v5717 = vsel %vm5714, %v5716, %v5712
        %v5718 = vmul.f32 1.0, %v5717
        %v5719 = vrcp.pop %v5687
        %v5720 = vmul.f32 %v5687, %v5719
        %v5721 = vsub.f32 1.0, %v5720
        %v5722 = vmul.f32 %v5719, %v5721
        %v5723 = vadd.f32 %v5719, %v5722
        %vm5724 = vweird.f32 %v5687
        %vm5725 = vweird.f32 %v5719
        %vm5726 = vmor %vm5724, %vm5725
        %v5727 = vsel %vm5726, %v5719, %v5723
        %v5728 = vand.u32 2147483647, %v5687
        %vm5729 = vcmp.eq.f32.partialorder %v5728, 8.507059e+37
        %v5730 = vand.u32 %v5687, 2147483648
        %v5731 = vor.u32 1.1754944e-38, %v5730
        %v5732 = vsel %vm5729, %v5731, %v5727
        %v5733 = vmul.f32 1.0, %v5732
        %v5734 = vrcp.pop %v5688
        %v5735 = vmul.f32 %v5688, %v5734
        %v5736 = vsub.f32 1.0, %v5735
        %v5737 = vmul.f32 %v5734, %v5736
        %v5738 = vadd.f32 %v5734, %v5737
        %vm5739 = vweird.f32 %v5688
        %vm5740 = vweird.f32 %v5734
        %vm5741 = vmor %vm5739, %vm5740
        %v5742 = vsel %vm5741, %v5734, %v5738
        %v5743 = vand.u32 2147483647, %v5688
        %vm5744 = vcmp.eq.f32.partialorder %v5743, 8.507059e+37
        %v5745 = vand.u32 %v5688, 2147483648
        %v5746 = vor.u32 1.1754944e-38, %v5745
        %v5747 = vsel %vm5744, %v5746, %v5742
        %v5748 = vmul.f32 1.0, %v5747
        %v5749 = vtanh.pop %v5670
        %v5750 = vtanh.pop %v5672
        %v5751 = vmul.f32 %v5703, %v5608
        %v5752 = vmul.f32 %v5733, %v5609
        %5755 = vrot.lane.b32.xlu0 %v5749, 64
        %v5756 = vpop.permute.xlu0 %5755
        %5757 = vrot.lane.b32.xlu0 %v5750, 64
        %v5758 = vpop.permute.xlu0 %5757
        %v5761 = vmul.f32 %v5703, %v5756
        %v5762 = vmul.f32 %v5733, %v5758
        %5765 = vrot.lane.b32.xlu0 %v5761, 64
        %v5766 = vpop.permute.xlu0 %5765
        %5767 = vrot.lane.b32.xlu0 %v5762, 64
        %v5768 = vpop.permute.xlu0 %5767
        %v5771 = vadd.f32 %v5751, %v5766
        %v5772 = vadd.f32 %v5752, %v5768
        %v5773 = vtanh.pop %v5771
        %v5774 = vtanh.pop %v5772
        %5777 = vrot.lane.b32.xlu0 %v5773, 64
        %v5778 = vpop.permute.xlu0 %5777
        %5779 = vrot.lane.b32.xlu0 %v5774, 64
        %v5780 = vpop.permute.xlu0 %5779
        %v5783 = vmul.f32 %v5718, %v5778
        %v5784 = vmul.f32 %v5748, %v5780
        %v5785 = vpack.c.bf16 %v5783, %v5783
        %v5786 = vpack.c.bf16 %v5784, %v5784
        %s5787 = scalar_lea.vmem [#allocation4], 88
        %5788 = vst.msk [vmem:[%s5787] sm:$0xf] %vm571, %v5785
        %5789 = vst.msk [vmem:[%s5787 + $0x4] sm:$0xf] %vm571, %v5786
        %v5790 = vld [vmem:[%s3765] sm:$0xff]
        %v5791 = vld [vmem:[%s3765 + $0x8] sm:$0xff]
        %v5792 = vunpack.c.l.bf16 %v5790
        %v5793 = vunpack.c.h.bf16 %v5790
        %v5794 = vunpack.c.l.bf16 %v5791
        %v5795 = vunpack.c.h.bf16 %v5791
        %v5798 = vunpack.c.l.b16 %v5785
        %v5799 = vunpack.c.l.b16 %v5786
        %v5800 = vpack.c.b16 %v5799, %v5798
        %v5802 = vsel %vm421, %v5800, 0
        %5804 = vmatpush.bf16.msra.mxu0 0
        %5805 = vmatpush.bf16.msra.mxu0 0
        %5806 = vmatpush.bf16.msra.mxu0 0
        %5807 = vmatpush.bf16.msra.mxu0 0
        %5808 = vmatpush.bf16.msra.mxu0 %v3839
        %5809 = vmatpush.bf16.msra.mxu0 %v3837
        %5810 = vmatpush.bf16.msra.mxu0 %v3835
        %5811 = vmatpush.bf16.msra.mxu0 %v3833
        %5812 = vmatmul.bf16.gmra.mxu0 %v5802
        %v5813 = vpop.f32.mrf.mxu0
        %v5814 = vadd.f32 0.0, %v5813
        %v5815 = vpop.f32.mrf.mxu0
        %v5816 = vadd.f32 0.0, %v5815
        %5817 = vdwg.mxu0
        %5818 = vmatpush.bf16.msra.mxu0 0
        %5819 = vmatpush.bf16.msra.mxu0 0
        %5820 = vmatpush.bf16.msra.mxu0 0
        %5821 = vmatpush.bf16.msra.mxu0 0
        %5822 = vmatpush.bf16.msra.mxu0 %v3840
        %5823 = vmatpush.bf16.msra.mxu0 %v3838
        %5824 = vmatpush.bf16.msra.mxu0 %v3836
        %5825 = vmatpush.bf16.msra.mxu0 %v3834
        %5826 = vmatmul.bf16.gmra.mxu0 %v5802
        %v5827 = vpop.f32.mrf.mxu0
        %v5828 = vadd.f32 0.0, %v5827
        %v5829 = vpop.f32.mrf.mxu0
        %v5830 = vadd.f32 0.0, %v5829
        %5831 = vdwg.mxu0
        %v5832 = vadd.f32 %v5792, %v5814
        %v5833 = vadd.f32 %v5793, %v5828
        %v5834 = vadd.f32 %v5794, %v5816
        %v5835 = vadd.f32 %v5795, %v5830
        %v5836 = vxor.u32 %v5832, 2147483648
        %v5837 = vxor.u32 %v5833, 2147483648
        %v5838 = vxor.u32 %v5834, 2147483648
        %v5839 = vxor.u32 %v5835, 2147483648
        %v5840 = vmul.f32 %v5836, 1.442695
        %v5841 = vpow.pop %v5840
        %v5842 = vmul.f32 %v5837, 1.442695
        %v5843 = vpow.pop %v5842
        %v5844 = vmul.f32 %v5838, 1.442695
        %v5845 = vpow.pop %v5844
        %v5846 = vmul.f32 %v5839, 1.442695
        %v5847 = vpow.pop %v5846
        %v5848 = vadd.f32 %v5841, 1.0
        %v5849 = vadd.f32 %v5843, 1.0
        %v5850 = vadd.f32 %v5845, 1.0
        %v5851 = vadd.f32 %v5847, 1.0
        %v5852 = vrcp.pop %v5848
        %v5853 = vmul.f32 %v5848, %v5852
        %v5854 = vsub.f32 1.0, %v5853
        %v5855 = vmul.f32 %v5852, %v5854
        %v5856 = vadd.f32 %v5852, %v5855
        %vm5857 = vweird.f32 %v5848
        %vm5858 = vweird.f32 %v5852
        %vm5859 = vmor %vm5857, %vm5858
        %v5860 = vsel %vm5859, %v5852, %v5856
        %v5861 = vand.u32 2147483647, %v5848
        %vm5862 = vcmp.eq.f32.partialorder %v5861, 8.507059e+37
        %v5863 = vand.u32 %v5848, 2147483648
        %v5864 = vor.u32 1.1754944e-38, %v5863
        %v5865 = vsel %vm5862, %v5864, %v5860
        %v5866 = vmul.f32 1.0, %v5865
        %v5867 = vrcp.pop %v5849
        %v5868 = vmul.f32 %v5849, %v5867
        %v5869 = vsub.f32 1.0, %v5868
        %v5870 = vmul.f32 %v5867, %v5869
        %v5871 = vadd.f32 %v5867, %v5870
        %vm5872 = vweird.f32 %v5849
        %vm5873 = vweird.f32 %v5867
        %vm5874 = vmor %vm5872, %vm5873
        %v5875 = vsel %vm5874, %v5867, %v5871
        %v5876 = vand.u32 2147483647, %v5849
        %vm5877 = vcmp.eq.f32.partialorder %v5876, 8.507059e+37
        %v5878 = vand.u32 %v5849, 2147483648
        %v5879 = vor.u32 1.1754944e-38, %v5878
        %v5880 = vsel %vm5877, %v5879, %v5875
        %v5881 = vmul.f32 1.0, %v5880
        %v5882 = vrcp.pop %v5850
        %v5883 = vmul.f32 %v5850, %v5882
        %v5884 = vsub.f32 1.0, %v5883
        %v5885 = vmul.f32 %v5882, %v5884
        %v5886 = vadd.f32 %v5882, %v5885
        %vm5887 = vweird.f32 %v5850
        %vm5888 = vweird.f32 %v5882
        %vm5889 = vmor %vm5887, %vm5888
        %v5890 = vsel %vm5889, %v5882, %v5886
        %v5891 = vand.u32 2147483647, %v5850
        %vm5892 = vcmp.eq.f32.partialorder %v5891, 8.507059e+37
        %v5893 = vand.u32 %v5850, 2147483648
        %v5894 = vor.u32 1.1754944e-38, %v5893
        %v5895 = vsel %vm5892, %v5894, %v5890
        %v5896 = vmul.f32 1.0, %v5895
        %v5897 = vrcp.pop %v5851
        %v5898 = vmul.f32 %v5851, %v5897
        %v5899 = vsub.f32 1.0, %v5898
        %v5900 = vmul.f32 %v5897, %v5899
        %v5901 = vadd.f32 %v5897, %v5900
        %vm5902 = vweird.f32 %v5851
        %vm5903 = vweird.f32 %v5897
        %vm5904 = vmor %vm5902, %vm5903
        %v5905 = vsel %vm5904, %v5897, %v5901
        %v5906 = vand.u32 2147483647, %v5851
        %vm5907 = vcmp.eq.f32.partialorder %v5906, 8.507059e+37
        %v5908 = vand.u32 %v5851, 2147483648
        %v5909 = vor.u32 1.1754944e-38, %v5908
        %v5910 = vsel %vm5907, %v5909, %v5905
        %v5911 = vmul.f32 1.0, %v5910
        %v5912 = vtanh.pop %v5833
        %v5913 = vtanh.pop %v5835
        %v5914 = vmul.f32 %v5866, %v5771
        %v5915 = vmul.f32 %v5896, %v5772
        %5918 = vrot.lane.b32.xlu0 %v5912, 64
        %v5919 = vpop.permute.xlu0 %5918
        %5920 = vrot.lane.b32.xlu0 %v5913, 64
        %v5921 = vpop.permute.xlu0 %5920
        %v5924 = vmul.f32 %v5866, %v5919
        %v5925 = vmul.f32 %v5896, %v5921
        %5928 = vrot.lane.b32.xlu0 %v5924, 64
        %v5929 = vpop.permute.xlu0 %5928
        %5930 = vrot.lane.b32.xlu0 %v5925, 64
        %v5931 = vpop.permute.xlu0 %5930
        %v5934 = vadd.f32 %v5914, %v5929
        %v5935 = vadd.f32 %v5915, %v5931
        %v5936 = vtanh.pop %v5934
        %v5937 = vtanh.pop %v5935
        %5940 = vrot.lane.b32.xlu0 %v5936, 64
        %v5941 = vpop.permute.xlu0 %5940
        %5942 = vrot.lane.b32.xlu0 %v5937, 64
        %v5943 = vpop.permute.xlu0 %5942
        %v5946 = vmul.f32 %v5881, %v5941
        %v5947 = vmul.f32 %v5911, %v5943
        %v5948 = vpack.c.bf16 %v5946, %v5946
        %v5949 = vpack.c.bf16 %v5947, %v5947
        %s5950 = scalar_lea.vmem [#allocation4], 96
        %5951 = vst.msk [vmem:[%s5950] sm:$0xf] %vm571, %v5948
        %5952 = vst.msk [vmem:[%s5950 + $0x4] sm:$0xf] %vm571, %v5949
        %v5953 = vld [vmem:[%s3774] sm:$0xff]
        %v5954 = vld [vmem:[%s3774 + $0x8] sm:$0xff]
        %v5955 = vunpack.c.l.bf16 %v5953
        %v5956 = vunpack.c.h.bf16 %v5953
        %v5957 = vunpack.c.l.bf16 %v5954
        %v5958 = vunpack.c.h.bf16 %v5954
        %v5961 = vunpack.c.l.b16 %v5948
        %v5962 = vunpack.c.l.b16 %v5949
        %v5963 = vpack.c.b16 %v5962, %v5961
        %v5965 = vsel %vm421, %v5963, 0
        %5967 = vmatpush.bf16.msra.mxu0 0
        %5968 = vmatpush.bf16.msra.mxu0 0
        %5969 = vmatpush.bf16.msra.mxu0 0
        %5970 = vmatpush.bf16.msra.mxu0 0
        %5971 = vmatpush.bf16.msra.mxu0 %v3839
        %5972 = vmatpush.bf16.msra.mxu0 %v3837
        %5973 = vmatpush.bf16.msra.mxu0 %v3835
        %5974 = vmatpush.bf16.msra.mxu0 %v3833
        %5975 = vmatmul.bf16.gmra.mxu0 %v5965
        %v5976 = vpop.f32.mrf.mxu0
        %v5977 = vadd.f32 0.0, %v5976
        %v5978 = vpop.f32.mrf.mxu0
        %v5979 = vadd.f32 0.0, %v5978
        %5980 = vdwg.mxu0
        %5981 = vmatpush.bf16.msra.mxu0 0
        %5982 = vmatpush.bf16.msra.mxu0 0
        %5983 = vmatpush.bf16.msra.mxu0 0
        %5984 = vmatpush.bf16.msra.mxu0 0
        %5985 = vmatpush.bf16.msra.mxu0 %v3840
        %5986 = vmatpush.bf16.msra.mxu0 %v3838
        %5987 = vmatpush.bf16.msra.mxu0 %v3836
        %5988 = vmatpush.bf16.msra.mxu0 %v3834
        %5989 = vmatmul.bf16.gmra.mxu0 %v5965
        %v5990 = vpop.f32.mrf.mxu0
        %v5991 = vadd.f32 0.0, %v5990
        %v5992 = vpop.f32.mrf.mxu0
        %v5993 = vadd.f32 0.0, %v5992
        %5994 = vdwg.mxu0
        %v5995 = vadd.f32 %v5955, %v5977
        %v5996 = vadd.f32 %v5956, %v5991
        %v5997 = vadd.f32 %v5957, %v5979
        %v5998 = vadd.f32 %v5958, %v5993
        %v5999 = vxor.u32 %v5995, 2147483648
        %v6000 = vxor.u32 %v5996, 2147483648
        %v6001 = vxor.u32 %v5997, 2147483648
        %v6002 = vxor.u32 %v5998, 2147483648
        %v6003 = vmul.f32 %v5999, 1.442695
        %v6004 = vpow.pop %v6003
        %v6005 = vmul.f32 %v6000, 1.442695
        %v6006 = vpow.pop %v6005
        %v6007 = vmul.f32 %v6001, 1.442695
        %v6008 = vpow.pop %v6007
        %v6009 = vmul.f32 %v6002, 1.442695
        %v6010 = vpow.pop %v6009
        %v6011 = vadd.f32 %v6004, 1.0
        %v6012 = vadd.f32 %v6006, 1.0
        %v6013 = vadd.f32 %v6008, 1.0
        %v6014 = vadd.f32 %v6010, 1.0
        %v6015 = vrcp.pop %v6011
        %v6016 = vmul.f32 %v6011, %v6015
        %v6017 = vsub.f32 1.0, %v6016
        %v6018 = vmul.f32 %v6015, %v6017
        %v6019 = vadd.f32 %v6015, %v6018
        %vm6020 = vweird.f32 %v6011
        %vm6021 = vweird.f32 %v6015
        %vm6022 = vmor %vm6020, %vm6021
        %v6023 = vsel %vm6022, %v6015, %v6019
        %v6024 = vand.u32 2147483647, %v6011
        %vm6025 = vcmp.eq.f32.partialorder %v6024, 8.507059e+37
        %v6026 = vand.u32 %v6011, 2147483648
        %v6027 = vor.u32 1.1754944e-38, %v6026
        %v6028 = vsel %vm6025, %v6027, %v6023
        %v6029 = vmul.f32 1.0, %v6028
        %v6030 = vrcp.pop %v6012
        %v6031 = vmul.f32 %v6012, %v6030
        %v6032 = vsub.f32 1.0, %v6031
        %v6033 = vmul.f32 %v6030, %v6032
        %v6034 = vadd.f32 %v6030, %v6033
        %vm6035 = vweird.f32 %v6012
        %vm6036 = vweird.f32 %v6030
        %vm6037 = vmor %vm6035, %vm6036
        %v6038 = vsel %vm6037, %v6030, %v6034
        %v6039 = vand.u32 2147483647, %v6012
        %vm6040 = vcmp.eq.f32.partialorder %v6039, 8.507059e+37
        %v6041 = vand.u32 %v6012, 2147483648
        %v6042 = vor.u32 1.1754944e-38, %v6041
        %v6043 = vsel %vm6040, %v6042, %v6038
        %v6044 = vmul.f32 1.0, %v6043
        %v6045 = vrcp.pop %v6013
        %v6046 = vmul.f32 %v6013, %v6045
        %v6047 = vsub.f32 1.0, %v6046
        %v6048 = vmul.f32 %v6045, %v6047
        %v6049 = vadd.f32 %v6045, %v6048
        %vm6050 = vweird.f32 %v6013
        %vm6051 = vweird.f32 %v6045
        %vm6052 = vmor %vm6050, %vm6051
        %v6053 = vsel %vm6052, %v6045, %v6049
        %v6054 = vand.u32 2147483647, %v6013
        %vm6055 = vcmp.eq.f32.partialorder %v6054, 8.507059e+37
        %v6056 = vand.u32 %v6013, 2147483648
        %v6057 = vor.u32 1.1754944e-38, %v6056
        %v6058 = vsel %vm6055, %v6057, %v6053
        %v6059 = vmul.f32 1.0, %v6058
        %v6060 = vrcp.pop %v6014
        %v6061 = vmul.f32 %v6014, %v6060
        %v6062 = vsub.f32 1.0, %v6061
        %v6063 = vmul.f32 %v6060, %v6062
        %v6064 = vadd.f32 %v6060, %v6063
        %vm6065 = vweird.f32 %v6014
        %vm6066 = vweird.f32 %v6060
        %vm6067 = vmor %vm6065, %vm6066
        %v6068 = vsel %vm6067, %v6060, %v6064
        %v6069 = vand.u32 2147483647, %v6014
        %vm6070 = vcmp.eq.f32.partialorder %v6069, 8.507059e+37
        %v6071 = vand.u32 %v6014, 2147483648
        %v6072 = vor.u32 1.1754944e-38, %v6071
        %v6073 = vsel %vm6070, %v6072, %v6068
        %v6074 = vmul.f32 1.0, %v6073
        %v6075 = vtanh.pop %v5996
        %v6076 = vtanh.pop %v5998
        %v6077 = vmul.f32 %v6029, %v5934
        %v6078 = vmul.f32 %v6059, %v5935
        %6081 = vrot.lane.b32.xlu0 %v6075, 64
        %v6082 = vpop.permute.xlu0 %6081
        %6083 = vrot.lane.b32.xlu0 %v6076, 64
        %v6084 = vpop.permute.xlu0 %6083
        %v6087 = vmul.f32 %v6029, %v6082
        %v6088 = vmul.f32 %v6059, %v6084
        %6091 = vrot.lane.b32.xlu0 %v6087, 64
        %v6092 = vpop.permute.xlu0 %6091
        %6093 = vrot.lane.b32.xlu0 %v6088, 64
        %v6094 = vpop.permute.xlu0 %6093
        %v6097 = vadd.f32 %v6077, %v6092
        %v6098 = vadd.f32 %v6078, %v6094
        %v6099 = vtanh.pop %v6097
        %v6100 = vtanh.pop %v6098
        %6103 = vrot.lane.b32.xlu0 %v6099, 64
        %v6104 = vpop.permute.xlu0 %6103
        %6105 = vrot.lane.b32.xlu0 %v6100, 64
        %v6106 = vpop.permute.xlu0 %6105
        %v6109 = vmul.f32 %v6044, %v6104
        %v6110 = vmul.f32 %v6074, %v6106
        %v6111 = vpack.c.bf16 %v6109, %v6109
        %v6112 = vpack.c.bf16 %v6110, %v6110
        %s6113 = scalar_lea.vmem [#allocation4], 104
        %6114 = vst.msk [vmem:[%s6113] sm:$0xf] %vm571, %v6111
        %6115 = vst.msk [vmem:[%s6113 + $0x4] sm:$0xf] %vm571, %v6112
        %v6116 = vld [vmem:[%s3783] sm:$0xff]
        %v6117 = vld [vmem:[%s3783 + $0x8] sm:$0xff]
        %v6118 = vunpack.c.l.bf16 %v6116
        %v6119 = vunpack.c.h.bf16 %v6116
        %v6120 = vunpack.c.l.bf16 %v6117
        %v6121 = vunpack.c.h.bf16 %v6117
        %v6124 = vunpack.c.l.b16 %v6111
        %v6125 = vunpack.c.l.b16 %v6112
        %v6126 = vpack.c.b16 %v6125, %v6124
        %v6128 = vsel %vm421, %v6126, 0
        %6130 = vmatpush.bf16.msra.mxu0 0
        %6131 = vmatpush.bf16.msra.mxu0 0
        %6132 = vmatpush.bf16.msra.mxu0 0
        %6133 = vmatpush.bf16.msra.mxu0 0
        %6134 = vmatpush.bf16.msra.mxu0 %v3839
        %6135 = vmatpush.bf16.msra.mxu0 %v3837
        %6136 = vmatpush.bf16.msra.mxu0 %v3835
        %6137 = vmatpush.bf16.msra.mxu0 %v3833
        %6138 = vmatmul.bf16.gmra.mxu0 %v6128
        %v6139 = vpop.f32.mrf.mxu0
        %v6140 = vadd.f32 0.0, %v6139
        %v6141 = vpop.f32.mrf.mxu0
        %v6142 = vadd.f32 0.0, %v6141
        %6143 = vdwg.mxu0
        %6144 = vmatpush.bf16.msra.mxu0 0
        %6145 = vmatpush.bf16.msra.mxu0 0
        %6146 = vmatpush.bf16.msra.mxu0 0
        %6147 = vmatpush.bf16.msra.mxu0 0
        %6148 = vmatpush.bf16.msra.mxu0 %v3840
        %6149 = vmatpush.bf16.msra.mxu0 %v3838
        %6150 = vmatpush.bf16.msra.mxu0 %v3836
        %6151 = vmatpush.bf16.msra.mxu0 %v3834
        %6152 = vmatmul.bf16.gmra.mxu0 %v6128
        %v6153 = vpop.f32.mrf.mxu0
        %v6154 = vadd.f32 0.0, %v6153
        %v6155 = vpop.f32.mrf.mxu0
        %v6156 = vadd.f32 0.0, %v6155
        %6157 = vdwg.mxu0
        %v6158 = vadd.f32 %v6118, %v6140
        %v6159 = vadd.f32 %v6119, %v6154
        %v6160 = vadd.f32 %v6120, %v6142
        %v6161 = vadd.f32 %v6121, %v6156
        %v6162 = vxor.u32 %v6158, 2147483648
        %v6163 = vxor.u32 %v6159, 2147483648
        %v6164 = vxor.u32 %v6160, 2147483648
        %v6165 = vxor.u32 %v6161, 2147483648
        %v6166 = vmul.f32 %v6162, 1.442695
        %v6167 = vpow.pop %v6166
        %v6168 = vmul.f32 %v6163, 1.442695
        %v6169 = vpow.pop %v6168
        %v6170 = vmul.f32 %v6164, 1.442695
        %v6171 = vpow.pop %v6170
        %v6172 = vmul.f32 %v6165, 1.442695
        %v6173 = vpow.pop %v6172
        %v6174 = vadd.f32 %v6167, 1.0
        %v6175 = vadd.f32 %v6169, 1.0
        %v6176 = vadd.f32 %v6171, 1.0
        %v6177 = vadd.f32 %v6173, 1.0
        %v6178 = vrcp.pop %v6174
        %v6179 = vmul.f32 %v6174, %v6178
        %v6180 = vsub.f32 1.0, %v6179
        %v6181 = vmul.f32 %v6178, %v6180
        %v6182 = vadd.f32 %v6178, %v6181
        %vm6183 = vweird.f32 %v6174
        %vm6184 = vweird.f32 %v6178
        %vm6185 = vmor %vm6183, %vm6184
        %v6186 = vsel %vm6185, %v6178, %v6182
        %v6187 = vand.u32 2147483647, %v6174
        %vm6188 = vcmp.eq.f32.partialorder %v6187, 8.507059e+37
        %v6189 = vand.u32 %v6174, 2147483648
        %v6190 = vor.u32 1.1754944e-38, %v6189
        %v6191 = vsel %vm6188, %v6190, %v6186
        %v6192 = vmul.f32 1.0, %v6191
        %v6193 = vrcp.pop %v6175
        %v6194 = vmul.f32 %v6175, %v6193
        %v6195 = vsub.f32 1.0, %v6194
        %v6196 = vmul.f32 %v6193, %v6195
        %v6197 = vadd.f32 %v6193, %v6196
        %vm6198 = vweird.f32 %v6175
        %vm6199 = vweird.f32 %v6193
        %vm6200 = vmor %vm6198, %vm6199
        %v6201 = vsel %vm6200, %v6193, %v6197
        %v6202 = vand.u32 2147483647, %v6175
        %vm6203 = vcmp.eq.f32.partialorder %v6202, 8.507059e+37
        %v6204 = vand.u32 %v6175, 2147483648
        %v6205 = vor.u32 1.1754944e-38, %v6204
        %v6206 = vsel %vm6203, %v6205, %v6201
        %v6207 = vmul.f32 1.0, %v6206
        %v6208 = vrcp.pop %v6176
        %v6209 = vmul.f32 %v6176, %v6208
        %v6210 = vsub.f32 1.0, %v6209
        %v6211 = vmul.f32 %v6208, %v6210
        %v6212 = vadd.f32 %v6208, %v6211
        %vm6213 = vweird.f32 %v6176
        %vm6214 = vweird.f32 %v6208
        %vm6215 = vmor %vm6213, %vm6214
        %v6216 = vsel %vm6215, %v6208, %v6212
        %v6217 = vand.u32 2147483647, %v6176
        %vm6218 = vcmp.eq.f32.partialorder %v6217, 8.507059e+37
        %v6219 = vand.u32 %v6176, 2147483648
        %v6220 = vor.u32 1.1754944e-38, %v6219
        %v6221 = vsel %vm6218, %v6220, %v6216
        %v6222 = vmul.f32 1.0, %v6221
        %v6223 = vrcp.pop %v6177
        %v6224 = vmul.f32 %v6177, %v6223
        %v6225 = vsub.f32 1.0, %v6224
        %v6226 = vmul.f32 %v6223, %v6225
        %v6227 = vadd.f32 %v6223, %v6226
        %vm6228 = vweird.f32 %v6177
        %vm6229 = vweird.f32 %v6223
        %vm6230 = vmor %vm6228, %vm6229
        %v6231 = vsel %vm6230, %v6223, %v6227
        %v6232 = vand.u32 2147483647, %v6177
        %vm6233 = vcmp.eq.f32.partialorder %v6232, 8.507059e+37
        %v6234 = vand.u32 %v6177, 2147483648
        %v6235 = vor.u32 1.1754944e-38, %v6234
        %v6236 = vsel %vm6233, %v6235, %v6231
        %v6237 = vmul.f32 1.0, %v6236
        %v6238 = vtanh.pop %v6159
        %v6239 = vtanh.pop %v6161
        %v6240 = vmul.f32 %v6192, %v6097
        %v6241 = vmul.f32 %v6222, %v6098
        %6244 = vrot.lane.b32.xlu0 %v6238, 64
        %v6245 = vpop.permute.xlu0 %6244
        %6246 = vrot.lane.b32.xlu0 %v6239, 64
        %v6247 = vpop.permute.xlu0 %6246
        %v6250 = vmul.f32 %v6192, %v6245
        %v6251 = vmul.f32 %v6222, %v6247
        %6254 = vrot.lane.b32.xlu0 %v6250, 64
        %v6255 = vpop.permute.xlu0 %6254
        %6256 = vrot.lane.b32.xlu0 %v6251, 64
        %v6257 = vpop.permute.xlu0 %6256
        %v6260 = vadd.f32 %v6240, %v6255
        %v6261 = vadd.f32 %v6241, %v6257
        %v6262 = vtanh.pop %v6260
        %v6263 = vtanh.pop %v6261
        %6266 = vrot.lane.b32.xlu0 %v6262, 64
        %v6267 = vpop.permute.xlu0 %6266
        %6268 = vrot.lane.b32.xlu0 %v6263, 64
        %v6269 = vpop.permute.xlu0 %6268
        %v6272 = vmul.f32 %v6207, %v6267
        %v6273 = vmul.f32 %v6237, %v6269
        %v6274 = vpack.c.bf16 %v6272, %v6272
        %v6275 = vpack.c.bf16 %v6273, %v6273
        %s6276 = scalar_lea.vmem [#allocation4], 112
        %6277 = vst.msk [vmem:[%s6276] sm:$0xf] %vm571, %v6274
        %6278 = vst.msk [vmem:[%s6276 + $0x4] sm:$0xf] %vm571, %v6275
        %v6279 = vld [vmem:[%s3792] sm:$0xff]
        %v6280 = vld [vmem:[%s3792 + $0x8] sm:$0xff]
        %v6281 = vunpack.c.l.bf16 %v6279
        %v6282 = vunpack.c.h.bf16 %v6279
        %v6283 = vunpack.c.l.bf16 %v6280
        %v6284 = vunpack.c.h.bf16 %v6280
        %v6287 = vunpack.c.l.b16 %v6274
        %v6288 = vunpack.c.l.b16 %v6275
        %v6289 = vpack.c.b16 %v6288, %v6287
        %v6291 = vsel %vm421, %v6289, 0
        %6293 = vmatpush.bf16.msra.mxu0 0
        %6294 = vmatpush.bf16.msra.mxu0 0
        %6295 = vmatpush.bf16.msra.mxu0 0
        %6296 = vmatpush.bf16.msra.mxu0 0
        %6297 = vmatpush.bf16.msra.mxu0 %v3839
        %6298 = vmatpush.bf16.msra.mxu0 %v3837
        %6299 = vmatpush.bf16.msra.mxu0 %v3835
        %6300 = vmatpush.bf16.msra.mxu0 %v3833
        %6301 = vmatmul.bf16.gmra.mxu0 %v6291
        %v6302 = vpop.f32.mrf.mxu0
        %v6303 = vadd.f32 0.0, %v6302
        %v6304 = vpop.f32.mrf.mxu0
        %v6305 = vadd.f32 0.0, %v6304
        %6306 = vdwg.mxu0
        %6307 = vmatpush.bf16.msra.mxu0 0
        %6308 = vmatpush.bf16.msra.mxu0 0
        %6309 = vmatpush.bf16.msra.mxu0 0
        %6310 = vmatpush.bf16.msra.mxu0 0
        %6311 = vmatpush.bf16.msra.mxu0 %v3840
        %6312 = vmatpush.bf16.msra.mxu0 %v3838
        %6313 = vmatpush.bf16.msra.mxu0 %v3836
        %6314 = vmatpush.bf16.msra.mxu0 %v3834
        %6315 = vmatmul.bf16.gmra.mxu0 %v6291
        %v6316 = vpop.f32.mrf.mxu0
        %v6317 = vadd.f32 0.0, %v6316
        %v6318 = vpop.f32.mrf.mxu0
        %v6319 = vadd.f32 0.0, %v6318
        %6320 = vdwg.mxu0
        %v6321 = vadd.f32 %v6281, %v6303
        %v6322 = vadd.f32 %v6282, %v6317
        %v6323 = vadd.f32 %v6283, %v6305
        %v6324 = vadd.f32 %v6284, %v6319
        %v6325 = vxor.u32 %v6321, 2147483648
        %v6326 = vxor.u32 %v6322, 2147483648
        %v6327 = vxor.u32 %v6323, 2147483648
        %v6328 = vxor.u32 %v6324, 2147483648
        %v6329 = vmul.f32 %v6325, 1.442695
        %v6330 = vpow.pop %v6329
        %v6331 = vmul.f32 %v6326, 1.442695
        %v6332 = vpow.pop %v6331
        %v6333 = vmul.f32 %v6327, 1.442695
        %v6334 = vpow.pop %v6333
        %v6335 = vmul.f32 %v6328, 1.442695
        %v6336 = vpow.pop %v6335
        %v6337 = vadd.f32 %v6330, 1.0
        %v6338 = vadd.f32 %v6332, 1.0
        %v6339 = vadd.f32 %v6334, 1.0
        %v6340 = vadd.f32 %v6336, 1.0
        %v6341 = vrcp.pop %v6337
        %v6342 = vmul.f32 %v6337, %v6341
        %v6343 = vsub.f32 1.0, %v6342
        %v6344 = vmul.f32 %v6341, %v6343
        %v6345 = vadd.f32 %v6341, %v6344
        %vm6346 = vweird.f32 %v6337
        %vm6347 = vweird.f32 %v6341
        %vm6348 = vmor %vm6346, %vm6347
        %v6349 = vsel %vm6348, %v6341, %v6345
        %v6350 = vand.u32 2147483647, %v6337
        %vm6351 = vcmp.eq.f32.partialorder %v6350, 8.507059e+37
        %v6352 = vand.u32 %v6337, 2147483648
        %v6353 = vor.u32 1.1754944e-38, %v6352
        %v6354 = vsel %vm6351, %v6353, %v6349
        %v6355 = vmul.f32 1.0, %v6354
        %v6356 = vrcp.pop %v6338
        %v6357 = vmul.f32 %v6338, %v6356
        %v6358 = vsub.f32 1.0, %v6357
        %v6359 = vmul.f32 %v6356, %v6358
        %v6360 = vadd.f32 %v6356, %v6359
        %vm6361 = vweird.f32 %v6338
        %vm6362 = vweird.f32 %v6356
        %vm6363 = vmor %vm6361, %vm6362
        %v6364 = vsel %vm6363, %v6356, %v6360
        %v6365 = vand.u32 2147483647, %v6338
        %vm6366 = vcmp.eq.f32.partialorder %v6365, 8.507059e+37
        %v6367 = vand.u32 %v6338, 2147483648
        %v6368 = vor.u32 1.1754944e-38, %v6367
        %v6369 = vsel %vm6366, %v6368, %v6364
        %v6370 = vmul.f32 1.0, %v6369
        %v6371 = vrcp.pop %v6339
        %v6372 = vmul.f32 %v6339, %v6371
        %v6373 = vsub.f32 1.0, %v6372
        %v6374 = vmul.f32 %v6371, %v6373
        %v6375 = vadd.f32 %v6371, %v6374
        %vm6376 = vweird.f32 %v6339
        %vm6377 = vweird.f32 %v6371
        %vm6378 = vmor %vm6376, %vm6377
        %v6379 = vsel %vm6378, %v6371, %v6375
        %v6380 = vand.u32 2147483647, %v6339
        %vm6381 = vcmp.eq.f32.partialorder %v6380, 8.507059e+37
        %v6382 = vand.u32 %v6339, 2147483648
        %v6383 = vor.u32 1.1754944e-38, %v6382
        %v6384 = vsel %vm6381, %v6383, %v6379
        %v6385 = vmul.f32 1.0, %v6384
        %v6386 = vrcp.pop %v6340
        %v6387 = vmul.f32 %v6340, %v6386
        %v6388 = vsub.f32 1.0, %v6387
        %v6389 = vmul.f32 %v6386, %v6388
        %v6390 = vadd.f32 %v6386, %v6389
        %vm6391 = vweird.f32 %v6340
        %vm6392 = vweird.f32 %v6386
        %vm6393 = vmor %vm6391, %vm6392
        %v6394 = vsel %vm6393, %v6386, %v6390
        %v6395 = vand.u32 2147483647, %v6340
        %vm6396 = vcmp.eq.f32.partialorder %v6395, 8.507059e+37
        %v6397 = vand.u32 %v6340, 2147483648
        %v6398 = vor.u32 1.1754944e-38, %v6397
        %v6399 = vsel %vm6396, %v6398, %v6394
        %v6400 = vmul.f32 1.0, %v6399
        %v6401 = vtanh.pop %v6322
        %v6402 = vtanh.pop %v6324
        %v6403 = vmul.f32 %v6355, %v6260
        %v6404 = vmul.f32 %v6385, %v6261
        %6407 = vrot.lane.b32.xlu0 %v6401, 64
        %v6408 = vpop.permute.xlu0 %6407
        %6409 = vrot.lane.b32.xlu0 %v6402, 64
        %v6410 = vpop.permute.xlu0 %6409
        %v6413 = vmul.f32 %v6355, %v6408
        %v6414 = vmul.f32 %v6385, %v6410
        %6417 = vrot.lane.b32.xlu0 %v6413, 64
        %v6418 = vpop.permute.xlu0 %6417
        %6419 = vrot.lane.b32.xlu0 %v6414, 64
        %v6420 = vpop.permute.xlu0 %6419
        %v6423 = vadd.f32 %v6403, %v6418
        %v6424 = vadd.f32 %v6404, %v6420
        %v6425 = vtanh.pop %v6423
        %v6426 = vtanh.pop %v6424
        %6429 = vrot.lane.b32.xlu0 %v6425, 64
        %v6430 = vpop.permute.xlu0 %6429
        %6431 = vrot.lane.b32.xlu0 %v6426, 64
        %v6432 = vpop.permute.xlu0 %6431
        %v6435 = vmul.f32 %v6370, %v6430
        %v6436 = vmul.f32 %v6400, %v6432
        %v6437 = vpack.c.bf16 %v6435, %v6435
        %v6438 = vpack.c.bf16 %v6436, %v6436
        %s6439 = scalar_lea.vmem [#allocation4], 120
        %6440 = vst.msk [vmem:[%s6439] sm:$0xf] %vm571, %v6437
        %6441 = vst.msk [vmem:[%s6439 + $0x4] sm:$0xf] %vm571, %v6438
        %v6442 = vld [vmem:[#allocation4] sm:$0xf]
        %v6443 = vld [vmem:[#allocation4 + $0x4] sm:$0xf]
        %vm6444 = vcmask 257024
        %6445 = vst.msk [vmem:[%s363] sm:$0xf] %vm6444, %v6442
        %6446 = vst.msk [vmem:[%s363 + $0x4] sm:$0xf] %vm6444, %v6443
        %v6447 = vld [vmem:[%s6439] sm:$0xf]
        %v6448 = vld [vmem:[%s6439 + $0x4] sm:$0xf]
        %vm6449 = vcmask 519424
        %6450 = vst.msk [vmem:[%s363] sm:$0xf] %vm6449, %v6447
        %6451 = vst.msk [vmem:[%s363 + $0x4] sm:$0xf] %vm6449, %v6448
        %v6452 = vld [vmem:[%s4157] sm:$0xf]
        %v6453 = vld [vmem:[%s4157 + $0x4] sm:$0xf]
        %s6454 = scalar_lea.vmem %s363, 8 [#allocation14]
        %6455 = vst.msk [vmem:[%s6454] sm:$0xf] %vm6444, %v6452
        %6456 = vst.msk [vmem:[%s6454 + $0x4] sm:$0xf] %vm6444, %v6453
        %v6457 = vld [vmem:[%s6276] sm:$0xf]
        %v6458 = vld [vmem:[%s6276 + $0x4] sm:$0xf]
        %6459 = vst.msk [vmem:[%s6454] sm:$0xf] %vm6449, %v6457
        %6460 = vst.msk [vmem:[%s6454 + $0x4] sm:$0xf] %vm6449, %v6458
        %v6461 = vld [vmem:[%s4320] sm:$0xf]
        %v6462 = vld [vmem:[%s4320 + $0x4] sm:$0xf]
        %s6463 = scalar_lea.vmem %s363, 16 [#allocation14]
        %6464 = vst.msk [vmem:[%s6463] sm:$0xf] %vm6444, %v6461
        %6465 = vst.msk [vmem:[%s6463 + $0x4] sm:$0xf] %vm6444, %v6462
        %v6466 = vld [vmem:[%s6113] sm:$0xf]
        %v6467 = vld [vmem:[%s6113 + $0x4] sm:$0xf]
        %6468 = vst.msk [vmem:[%s6463] sm:$0xf] %vm6449, %v6466
        %6469 = vst.msk [vmem:[%s6463 + $0x4] sm:$0xf] %vm6449, %v6467
        %v6470 = vld [vmem:[%s4483] sm:$0xf]
        %v6471 = vld [vmem:[%s4483 + $0x4] sm:$0xf]
        %s6472 = scalar_lea.vmem %s363, 24 [#allocation14]
        %6473 = vst.msk [vmem:[%s6472] sm:$0xf] %vm6444, %v6470
        %6474 = vst.msk [vmem:[%s6472 + $0x4] sm:$0xf] %vm6444, %v6471
        %v6475 = vld [vmem:[%s5950] sm:$0xf]
        %v6476 = vld [vmem:[%s5950 + $0x4] sm:$0xf]
        %6477 = vst.msk [vmem:[%s6472] sm:$0xf] %vm6449, %v6475
        %6478 = vst.msk [vmem:[%s6472 + $0x4] sm:$0xf] %vm6449, %v6476
        %v6479 = vld [vmem:[%s4646] sm:$0xf]
        %v6480 = vld [vmem:[%s4646 + $0x4] sm:$0xf]
        %s6481 = scalar_lea.vmem %s363, 32 [#allocation14]
        %6482 = vst.msk [vmem:[%s6481] sm:$0xf] %vm6444, %v6479
        %6483 = vst.msk [vmem:[%s6481 + $0x4] sm:$0xf] %vm6444, %v6480
        %v6484 = vld [vmem:[%s5787] sm:$0xf]
        %v6485 = vld [vmem:[%s5787 + $0x4] sm:$0xf]
        %6486 = vst.msk [vmem:[%s6481] sm:$0xf] %vm6449, %v6484
        %6487 = vst.msk [vmem:[%s6481 + $0x4] sm:$0xf] %vm6449, %v6485
        %v6488 = vld [vmem:[%s4809] sm:$0xf]
        %v6489 = vld [vmem:[%s4809 + $0x4] sm:$0xf]
        %s6490 = scalar_lea.vmem %s363, 40 [#allocation14]
        %6491 = vst.msk [vmem:[%s6490] sm:$0xf] %vm6444, %v6488
        %6492 = vst.msk [vmem:[%s6490 + $0x4] sm:$0xf] %vm6444, %v6489
        %v6493 = vld [vmem:[%s5624] sm:$0xf]
        %v6494 = vld [vmem:[%s5624 + $0x4] sm:$0xf]
        %6495 = vst.msk [vmem:[%s6490] sm:$0xf] %vm6449, %v6493
        %6496 = vst.msk [vmem:[%s6490 + $0x4] sm:$0xf] %vm6449, %v6494
        %v6497 = vld [vmem:[%s4972] sm:$0xf]
        %v6498 = vld [vmem:[%s4972 + $0x4] sm:$0xf]
        %s6499 = scalar_lea.vmem %s363, 48 [#allocation14]
        %6500 = vst.msk [vmem:[%s6499] sm:$0xf] %vm6444, %v6497
        %6501 = vst.msk [vmem:[%s6499 + $0x4] sm:$0xf] %vm6444, %v6498
        %v6502 = vld [vmem:[%s5461] sm:$0xf]
        %v6503 = vld [vmem:[%s5461 + $0x4] sm:$0xf]
        %6504 = vst.msk [vmem:[%s6499] sm:$0xf] %vm6449, %v6502
        %6505 = vst.msk [vmem:[%s6499 + $0x4] sm:$0xf] %vm6449, %v6503
        %v6506 = vld [vmem:[%s5135] sm:$0xf]
        %v6507 = vld [vmem:[%s5135 + $0x4] sm:$0xf]
        %s6508 = scalar_lea.vmem %s363, 56 [#allocation14]
        %6509 = vst.msk [vmem:[%s6508] sm:$0xf] %vm6444, %v6506
        %6510 = vst.msk [vmem:[%s6508 + $0x4] sm:$0xf] %vm6444, %v6507
        %v6511 = vld [vmem:[%s5298] sm:$0xf]
        %v6512 = vld [vmem:[%s5298 + $0x4] sm:$0xf]
        %6513 = vst.msk [vmem:[%s6508] sm:$0xf] %vm6449, %v6511
        %6514 = vst.msk [vmem:[%s6508 + $0x4] sm:$0xf] %vm6449, %v6512
        %v6515 = vld [vmem:[%s5298] sm:$0xf]
        %v6516 = vld [vmem:[%s5298 + $0x4] sm:$0xf]
        %s6517 = scalar_lea.vmem %s363, 64 [#allocation14]
        %6518 = vst.msk [vmem:[%s6517] sm:$0xf] %vm6444, %v6515
        %6519 = vst.msk [vmem:[%s6517 + $0x4] sm:$0xf] %vm6444, %v6516
        %v6520 = vld [vmem:[%s5135] sm:$0xf]
        %v6521 = vld [vmem:[%s5135 + $0x4] sm:$0xf]
        %6522 = vst.msk [vmem:[%s6517] sm:$0xf] %vm6449, %v6520
        %6523 = vst.msk [vmem:[%s6517 + $0x4] sm:$0xf] %vm6449, %v6521
        %v6524 = vld [vmem:[%s5461] sm:$0xf]
        %v6525 = vld [vmem:[%s5461 + $0x4] sm:$0xf]
        %s6526 = scalar_lea.vmem %s363, 72 [#allocation14]
        %6527 = vst.msk [vmem:[%s6526] sm:$0xf] %vm6444, %v6524
        %6528 = vst.msk [vmem:[%s6526 + $0x4] sm:$0xf] %vm6444, %v6525
        %v6529 = vld [vmem:[%s4972] sm:$0xf]
        %v6530 = vld [vmem:[%s4972 + $0x4] sm:$0xf]
        %6531 = vst.msk [vmem:[%s6526] sm:$0xf] %vm6449, %v6529
        %6532 = vst.msk [vmem:[%s6526 + $0x4] sm:$0xf] %vm6449, %v6530
        %v6533 = vld [vmem:[%s5624] sm:$0xf]
        %v6534 = vld [vmem:[%s5624 + $0x4] sm:$0xf]
        %s6535 = scalar_lea.vmem %s363, 80 [#allocation14]
        %6536 = vst.msk [vmem:[%s6535] sm:$0xf] %vm6444, %v6533
        %6537 = vst.msk [vmem:[%s6535 + $0x4] sm:$0xf] %vm6444, %v6534
        %v6538 = vld [vmem:[%s4809] sm:$0xf]
        %v6539 = vld [vmem:[%s4809 + $0x4] sm:$0xf]
        %6540 = vst.msk [vmem:[%s6535] sm:$0xf] %vm6449, %v6538
        %6541 = vst.msk [vmem:[%s6535 + $0x4] sm:$0xf] %vm6449, %v6539
        %v6542 = vld [vmem:[%s5787] sm:$0xf]
        %v6543 = vld [vmem:[%s5787 + $0x4] sm:$0xf]
        %s6544 = scalar_lea.vmem %s363, 88 [#allocation14]
        %6545 = vst.msk [vmem:[%s6544] sm:$0xf] %vm6444, %v6542
        %6546 = vst.msk [vmem:[%s6544 + $0x4] sm:$0xf] %vm6444, %v6543
        %v6547 = vld [vmem:[%s4646] sm:$0xf]
        %v6548 = vld [vmem:[%s4646 + $0x4] sm:$0xf]
        %6549 = vst.msk [vmem:[%s6544] sm:$0xf] %vm6449, %v6547
        %6550 = vst.msk [vmem:[%s6544 + $0x4] sm:$0xf] %vm6449, %v6548
        %v6551 = vld [vmem:[%s5950] sm:$0xf]
        %v6552 = vld [vmem:[%s5950 + $0x4] sm:$0xf]
        %s6553 = scalar_lea.vmem %s363, 96 [#allocation14]
        %6554 = vst.msk [vmem:[%s6553] sm:$0xf] %vm6444, %v6551
        %6555 = vst.msk [vmem:[%s6553 + $0x4] sm:$0xf] %vm6444, %v6552
        %v6556 = vld [vmem:[%s4483] sm:$0xf]
        %v6557 = vld [vmem:[%s4483 + $0x4] sm:$0xf]
        %6558 = vst.msk [vmem:[%s6553] sm:$0xf] %vm6449, %v6556
        %6559 = vst.msk [vmem:[%s6553 + $0x4] sm:$0xf] %vm6449, %v6557
        %v6560 = vld [vmem:[%s6113] sm:$0xf]
        %v6561 = vld [vmem:[%s6113 + $0x4] sm:$0xf]
        %s6562 = scalar_lea.vmem %s363, 104 [#allocation14]
        %6563 = vst.msk [vmem:[%s6562] sm:$0xf] %vm6444, %v6560
        %6564 = vst.msk [vmem:[%s6562 + $0x4] sm:$0xf] %vm6444, %v6561
        %v6565 = vld [vmem:[%s4320] sm:$0xf]
        %v6566 = vld [vmem:[%s4320 + $0x4] sm:$0xf]
        %6567 = vst.msk [vmem:[%s6562] sm:$0xf] %vm6449, %v6565
        %6568 = vst.msk [vmem:[%s6562 + $0x4] sm:$0xf] %vm6449, %v6566
        %v6569 = vld [vmem:[%s6276] sm:$0xf]
        %v6570 = vld [vmem:[%s6276 + $0x4] sm:$0xf]
        %s6571 = scalar_lea.vmem %s363, 112 [#allocation14]
        %6572 = vst.msk [vmem:[%s6571] sm:$0xf] %vm6444, %v6569
        %6573 = vst.msk [vmem:[%s6571 + $0x4] sm:$0xf] %vm6444, %v6570
        %v6574 = vld [vmem:[%s4157] sm:$0xf]
        %v6575 = vld [vmem:[%s4157 + $0x4] sm:$0xf]
        %6576 = vst.msk [vmem:[%s6571] sm:$0xf] %vm6449, %v6574
        %6577 = vst.msk [vmem:[%s6571 + $0x4] sm:$0xf] %vm6449, %v6575
        %v6578 = vld [vmem:[%s6439] sm:$0xf]
        %v6579 = vld [vmem:[%s6439 + $0x4] sm:$0xf]
        %s6580 = scalar_lea.vmem %s363, 120 [#allocation14]
        %6581 = vst.msk [vmem:[%s6580] sm:$0xf] %vm6444, %v6578
        %6582 = vst.msk [vmem:[%s6580 + $0x4] sm:$0xf] %vm6444, %v6579
        %v6583 = vld [vmem:[#allocation4] sm:$0xf]
        %v6584 = vld [vmem:[#allocation4 + $0x4] sm:$0xf]
        %6585 = vst.msk [vmem:[%s6580] sm:$0xf] %vm6449, %v6583
        %6586 = vst.msk [vmem:[%s6580 + $0x4] sm:$0xf] %vm6449, %v6584
        %s6587 = sand.u32 %s164, 1
        %s6588 = scalar_lea.sflag [#allocation7], %s6587
        %s6589 = sand.u32 %s164, 1
        %s6590 = smul.addr %s6589, 128
        %s6591 = scalar_lea.vmem [#allocation14], %s6590
        // Predicated region
        $region65: #{tpu_custom_call.1} parent=43 // pred_check
          %p6592 = pneg %p174
        $region66: #{tpu_custom_call.1} parent=43 // pred_check_branch
          %6594 = sbr.rel (%p6592) target = $region68
        $region67: #{tpu_custom_call.1} parent=43 // pred_region
          #allocation18 [shape = 'u32[6]{0}', space=smem, size = 0x18, scoped, tag = 'DMA stride descriptor']
          %s6595 = smul.u32 2, %s25
          %6597 = vsyncadd %s6588, 0
          %s6598 = smul.addr %s6595, 4
          %s6599 = scalar_lea.hbm %s6, %s6598
          %s6601 = sshll.u32 1, 14
          %s6602 = sxor.u32 4294967295, %s6601
          %s6605 = sshll.u32 7, 18
          %s6606 = sxor.u32 4294967295, %s6605
          %s6607 = sand.u32 0, %s6606
          %s6609 = sor.u32 %s6607, 0
          %s6610 = sshll.u32 %s6591, 4
          %s6611 = int_to_ptr.vmem [resolvable:$true] %s6610
          %s6612 = sshll.u32 %s6599, 4
          %s6613 = int_to_ptr.hbm [resolvable:$true] %s6612
          %6619 = sst [smem:[#allocation18]] 128
          %s6620 = scalar_lea.smem [#allocation18], 1
          %6621 = sst [smem:[%s6620]] 256
          %s6622 = scalar_lea.smem [#allocation18], 2
          %6623 = sst [smem:[%s6622]] 2
          %s6624 = scalar_lea.smem [#allocation18], 3
          %6625 = sst [smem:[%s6624]] 64
          %s6626 = scalar_lea.smem [#allocation18], 4
          %6627 = sst [smem:[%s6626]] 64
          %s6628 = scalar_lea.smem [#allocation18], 5
          %6629 = sst [smem:[%s6628]] 4
          %6631 = dma.general %s6611, 2048, %s6613, %s6588, [#allocation17], [#allocation18], %s6609, 0
        $region68: #{tpu_custom_call.1} parent=43 // pred_fallthru
          _
      $region44: #{tpu_custom_call.1} parent=5 // pred_fallthru
        _
      %p6632 = scmp.le.s32.totalorder 2, %s20
      // Predicated region
      $region69: #{tpu_custom_call.1} parent=5 // pred_check
        %p6633 = pneg %p6632
      $region70: #{tpu_custom_call.1} parent=5 // pred_check_branch
        %6635 = sbr.rel (%p6633) target = $region72
      $region71: #{tpu_custom_call.1} parent=5 // pred_region
        %s6636 = ssub.s32 %s20, 2
        // Predicated region
        $region73: #{tpu_custom_call.1} parent=71 // pred_check
          %p6637 = pneg %p180
        $region74: #{tpu_custom_call.1} parent=71 // pred_check_branch
          %6639 = sbr.rel (%p6637) target = $region76
        $region75: #{tpu_custom_call.1} parent=71 // pred_region
          %s6640 = sand.u32 %s165, 1
          %s6641 = scalar_lea.sflag [#allocation7], %s6640
          %s6642 = sand.u32 %s165, 1
          %s6643 = smul.addr %s6642, 128
          %s6644 = scalar_lea.vmem [#allocation14], %s6643
          %6646 = dma.done %s6641, 2048
        $region76: #{tpu_custom_call.1} parent=71 // pred_fallthru
          _
      $region72: #{tpu_custom_call.1} parent=5 // pred_fallthru
        _
    $region6: #{tpu_custom_call.1} parent=1 // loop_footer
      %s24 = sadd.s32 1, %s20
    $region7: #{tpu_custom_call.1} parent=1 // loop_footer_branch
      %19 = sbr.rel target = $region3
    $region8: #{tpu_custom_call.1} parent=1 // loop_exit
      _
    %6647 = vsyncpa [#allocation6], 1
    %s6648 = scalar_lea.sflag [#allocation6], 1
    %6649 = vsyncpa %s6648, 1
    %6650 = vsyncpa [#allocation9], 1
    %6651 = vsyncpa [#allocation12], 1
    %6652 = vsyncpa [#allocation7], 1
    %s6653 = scalar_lea.sflag [#allocation7], 1
    %6654 = vsyncpa %s6653, 1

</llo_original>
